<compile_context>
chip_gen: v6e
topology: v6e:2x2x1
jax: 0.10.0
libtpu: 0.0.40
codegen_flags: <defaults>
</compile_context>

<pallas_src>
import functools

import jax
import jax.numpy as jnp
from jax.experimental import pallas as pl
from jax.experimental.pallas import tpu as pltpu


def _sigmoid(x):
    # exp and approximate reciprocal both land on the EUP slot.
    return pl.reciprocal(1.0 + jnp.exp(-x), approx=True)


def _conv_module_kernel(x_hbm, ln_g_ref, ln_b_ref, w1_ref, b1_ref,
                        wdw_ref, bdw_ref, w2_ref, b2_ref,
                        o_ref, xwin_ref, dma_sem, y_win_ref,
                        *, seq_len, tile_t, pad, kernel_size, half):
    """One (batch, seq-tile) step over a haloed window of TILE_T+2*PAD rows."""
    b = pl.program_id(0)
    t = pl.program_id(1)
    nt = pl.num_programs(1)
    win = tile_t + 2 * pad
    slot = t % 2

    def window_copy(tt, sl):
        return pltpu.make_async_copy(
            x_hbm.at[b, pl.ds(tt * tile_t, win), :],
            xwin_ref.at[sl], dma_sem.at[sl])

    @pl.when(t == 0)                       # first tile of this batch row
    def _():
        window_copy(t, slot).start()

    @pl.when(t + 1 < nt)                   # prefetch next tile of same row
    def _():
        window_copy(t + 1, 1 - slot).start()

    window_copy(t, slot).wait()
    xw = xwin_ref[slot]                    # (win, D) f32, incl. halo rows

    # ---- LayerNorm over D (halo rows recomputed redundantly) ---------------
    mean = jnp.mean(xw, axis=-1, keepdims=True)
    var = jnp.mean(jnp.square(xw - mean), axis=-1, keepdims=True)
    xn = (xw - mean) * jax.lax.rsqrt(var + 1e-5)
    xn = xn * ln_g_ref[...] + ln_b_ref[...]

    # ---- pointwise conv1: fused (D, 2*half) matmul, then GLU ---------------
    ag = jnp.dot(xn.astype(jnp.bfloat16), w1_ref[...],
                 preferred_element_type=jnp.float32) + b1_ref[...]
    y = ag[:, :half] * _sigmoid(ag[:, half:])        # (win, half)

    # ---- Conv1d 'same' zero padding: only edge tiles need the row mask -----
    needs_mask = jnp.logical_or(t == 0, (t + 1) * tile_t + pad > seq_len)

    @pl.when(needs_mask)
    def _():
        row = jax.lax.broadcasted_iota(jnp.int32, (win, 1), 0)
        gidx = t * tile_t - pad + row
        valid = jnp.logical_and(gidx >= 0, gidx < seq_len)
        y_win_ref[...] = jnp.where(valid, y, 0.0).astype(y_win_ref.dtype)

    @pl.when(jnp.logical_not(needs_mask))
    def _():
        y_win_ref[...] = y.astype(y_win_ref.dtype)

    # ---- depthwise conv: K shifted reads of the bf16-staged GLU output -----
    # (BatchNorm eval scale/shift already folded into taps/bias.)
    taps = wdw_ref[...]                    # (K, half), loaded once
    off0 = pad - kernel_size // 2          # static
    acc = jnp.zeros((tile_t, half), jnp.float32)
    for k in range(kernel_size):           # static K -> unrolled
        yk = y_win_ref[pl.ds(off0 + k, tile_t), :].astype(jnp.float32)
        acc = acc + yk * taps[k:k + 1, :]
    acc = acc + bdw_ref[...]

    # ---- SiLU ----------------------------------------------------------------
    acc = acc * _sigmoid(acc)

    # ---- pointwise conv2 + residual (dropout == identity at inference) -----
    out = jnp.dot(acc.astype(jnp.bfloat16), w2_ref[...],
                  preferred_element_type=jnp.float32) + b2_ref[...]
    out = out + xw[pad:pad + tile_t, :]
    o_ref[0] = out.astype(o_ref.dtype)


def conv_module_forward(x, kparams, *, tile_t=256, pad=16):
    """x: (B, T, D) float32.  kparams: kernel-ready params (see prepare_*)."""
    B, T, D = x.shape
    K, half = kparams["wdw_t"].shape
    assert pad >= K // 2, "kernel_size too large for halo padding"
    n_t = pl.cdiv(T, tile_t)
    t_pad = n_t * tile_t
    win = tile_t + 2 * pad

    # Pad ONCE (front/back halo + tile remainder); the overlapping windows
    # are DMA'd inside the kernel -- no stacked/expanded HBM copy.
    x_p = jnp.pad(x, ((0, 0), (pad, pad + t_pad - T), (0, 0)))

    kernel = functools.partial(
        _conv_module_kernel, seq_len=T, tile_t=tile_t, pad=pad,
        kernel_size=K, half=half)

    # Constant weight/bias blocks (index map always (0, 0) -> fetched once).
    wspec = lambda a: pl.BlockSpec(a.shape, lambda b, t: (0, 0))

    in_specs = [
        pl.BlockSpec(memory_space=pl.ANY),          # padded x stays in HBM
        wspec(kparams["ln_g"]), wspec(kparams["ln_b"]),
        wspec(kparams["w1_t"]), wspec(kparams["b1"]),
        wspec(kparams["wdw_t"]), wspec(kparams["bdw"]),
        wspec(kparams["w2_t"]), wspec(kparams["b2"]),
    ]
    out_spec = pl.BlockSpec((1, tile_t, D), lambda b, t: (b, t, 0))

    # Right-size the VMEM budget from the real working set (v7x: 64 MiB/TC).
    const_bytes = sum(int(v.size) * v.dtype.itemsize for v in kparams.values())
    work_bytes = (2 * win * D * 4          # x window double buffer (f32)
                  + win * half * 2         # bf16 GLU staging scratch
                  + 2 * tile_t * D * 4     # output double buffer
                  + 2 * const_bytes)       # constants (default double-buffer)
    vmem_limit = int(min(max(4 * work_bytes, 16 * 1024 * 1024),
                         32 * 1024 * 1024))

    out = pl.pallas_call(
        kernel,
        out_shape=jax.ShapeDtypeStruct((B, t_pad, D), x.dtype),
        grid=(B, n_t),
        in_specs=in_specs,
        out_specs=out_spec,
        scratch_shapes=[
            pltpu.VMEM((2, win, D), jnp.float32),    # haloed x windows (2 slots)
            pltpu.SemaphoreType.DMA((2,)),           # per-slot DMA semaphores
            pltpu.VMEM((win, half), jnp.bfloat16),   # staged GLU output
        ],
        compiler_params=pltpu.CompilerParams(
            # b axis parallel (megacore on v7x); t axis sequential so the
            # in-kernel window prefetch stays valid.
            dimension_semantics=("parallel", "arbitrary"),
            vmem_limit_bytes=vmem_limit),
    )(x_p, kparams["ln_g"], kparams["ln_b"], kparams["w1_t"], kparams["b1"],
      kparams["wdw_t"], kparams["bdw"], kparams["w2_t"], kparams["b2"])
    return out if t_pad == T else out[:, :T, :]


def prepare_kernel_params(raw, bn_eps=1e-5):
    """Fold/transpose raw (PyTorch-layout) params into kernel-ready arrays."""
    d_model = raw["w2"].shape[0]
    half = raw["wdw"].shape[0]
    bn_scale = raw["bn_gamma"] * jax.lax.rsqrt(raw["bn_var"] + bn_eps)
    bn_shift = raw["bn_beta"] - raw["bn_mean"] * bn_scale
    return {
        "ln_g": raw["ln_g"].reshape(1, d_model),
        "ln_b": raw["ln_b"].reshape(1, d_model),
        # Fused pw1: columns [0:half) = GLU value, [half:2*half) = GLU gate.
        "w1_t": raw["w1"].T.astype(jnp.bfloat16),               # (D, 2*half)
        "b1": raw["b1"].reshape(1, 2 * half),
        # BatchNorm (eval) folded into the depthwise weights/bias.
        "wdw_t": raw["wdw"].T * bn_scale[None, :],              # (K, half) f32
        "bdw": (raw["bdw"] * bn_scale + bn_shift).reshape(1, half),
        "w2_t": raw["w2"].T.astype(jnp.bfloat16),               # (half, D)
        "b2": raw["b2"].reshape(1, d_model),
    }


def conv_module_reference(x, raw, ln_eps=1e-5, bn_eps=1e-5):
    """Pure-JAX f32 reference matching the PyTorch module (eval mode)."""
    T = x.shape[1]
    half, K = raw["wdw"].shape
    mean = jnp.mean(x, axis=-1, keepdims=True)
    var = jnp.mean(jnp.square(x - mean), axis=-1, keepdims=True)
    xn = (x - mean) * jax.lax.rsqrt(var + ln_eps) * raw["ln_g"] + raw["ln_b"]
    z = xn @ raw["w1"].T + raw["b1"]
    y = z[..., :half] * jax.nn.sigmoid(z[..., half:])           # GLU
    y_pad = jnp.pad(y, ((0, 0), (K // 2, K // 2), (0, 0)))
    acc = sum(y_pad[:, k:k + T, :] * raw["wdw"][:, k] for k in range(K))
    acc = acc + raw["bdw"]
    acc = ((acc - raw["bn_mean"])
           * raw["bn_gamma"] * jax.lax.rsqrt(raw["bn_var"] + bn_eps)
           + raw["bn_beta"])
    acc = acc * jax.nn.sigmoid(acc)                             # SiLU
    return acc @ raw["w2"].T + raw["b2"] + x


def init_params(key, d_model, kernel_size=31, expansion_factor=2):
    """Deterministic raw params mirroring the PyTorch module's shapes."""
    inner = d_model * expansion_factor
    half = inner // 2
    ks = jax.random.split(key, 12)
    f32 = jnp.float32
    return {
        "ln_g": 1.0 + 0.05 * jax.random.normal(ks[0], (d_model,), f32),
        "ln_b": 0.05 * jax.random.normal(ks[1], (d_model,), f32),
        "w1": 0.1 * jax.random.normal(ks[2], (inner, d_model), f32),   # Conv1d(D,2D,1)
        "b1": 0.1 * jax.random.normal(ks[3], (inner,), f32),
        "wdw": 0.1 * jax.random.normal(ks[4], (half, kernel_size), f32),  # depthwise
        "bdw": 0.1 * jax.random.normal(ks[5], (half,), f32),
        "bn_gamma": 1.0 + 0.05 * jax.random.normal(ks[6], (half,), f32),
        "bn_beta": 0.05 * jax.random.normal(ks[7], (half,), f32),
        "bn_mean": 0.1 * jax.random.normal(ks[8], (half,), f32),
        "bn_var": 1.0 + 0.1 * jnp.abs(jax.random.normal(ks[9], (half,), f32)),
        "w2": 0.1 * jax.random.normal(ks[10], (d_model, half), f32),   # Conv1d(D,D,1)
        "b2": 0.1 * jax.random.normal(ks[11], (d_model,), f32),
    }


if __name__ == "__main__":
    B, T, D = 2, 512, 128          # D lane-dense (128); T tiled by 256
    kernel_size = 31

    key = jax.random.PRNGKey(0)
    kx, kp = jax.random.split(key)
    x = jax.random.normal(kx, (B, T, D), jnp.float32)
    raw = init_params(kp, D, kernel_size=kernel_size)
    kparams = prepare_kernel_params(raw)

    out = conv_module_forward(x, kparams, tile_t=256)
    out = jax.block_until_ready(out)
    assert out.shape == (B, T, D) and out.dtype == jnp.float32

    ref = conv_module_reference(x, raw)
    max_err = float(jnp.max(jnp.abs(out - ref)))
    assert max_err < 0.1, f"max abs err too large: {max_err}"
    print("KERNEL_OK")
</pallas_src>

<mosaic_0001>
module attributes {stable_mosaic.version = 11 : i64} {
  func.func @_conv_module_kernel(%arg0: i32, %arg1: i32, %arg2: memref<2x544x128xf32, #tpu.memory_space<any>>, %arg3: memref<1x128xf32, #tpu.memory_space<vmem>>, %arg4: memref<1x128xf32, #tpu.memory_space<vmem>>, %arg5: memref<128x256xbf16, #tpu.memory_space<vmem>>, %arg6: memref<1x256xf32, #tpu.memory_space<vmem>>, %arg7: memref<31x128xf32, #tpu.memory_space<vmem>>, %arg8: memref<1x128xf32, #tpu.memory_space<vmem>>, %arg9: memref<128x128xbf16, #tpu.memory_space<vmem>>, %arg10: memref<1x128xf32, #tpu.memory_space<vmem>>, %arg11: memref<1x256x128xf32, #tpu.memory_space<vmem>>, %arg12: memref<2x288x128xf32, #tpu.memory_space<vmem>>, %arg13: memref<2x!tpu.dma_semaphore, #tpu.memory_space<semaphore_mem>>, %arg14: memref<288x128xbf16, #tpu.memory_space<vmem>>) attributes {dimension_semantics = [#tpu.dimension_semantics<parallel>, #tpu.dimension_semantics<arbitrary>], iteration_bounds = array<i64: 2, 2>, scalar_prefetch = 0 : i64, scratch_operands = 3 : i64, tpu.core_type = #tpu.core_type<tc>, window_params = [{}, {pipeline_mode = #tpu.pipeline_mode<synchronous>, transform_indices = @transform_1, window_bounds = array<i64: 1, 128>}, {pipeline_mode = #tpu.pipeline_mode<synchronous>, transform_indices = @transform_2, window_bounds = array<i64: 1, 128>}, {pipeline_mode = #tpu.pipeline_mode<synchronous>, transform_indices = @transform_3, window_bounds = array<i64: 128, 256>}, {pipeline_mode = #tpu.pipeline_mode<synchronous>, transform_indices = @transform_4, window_bounds = array<i64: 1, 256>}, {pipeline_mode = #tpu.pipeline_mode<synchronous>, transform_indices = @transform_5, window_bounds = array<i64: 31, 128>}, {pipeline_mode = #tpu.pipeline_mode<synchronous>, transform_indices = @transform_6, window_bounds = array<i64: 1, 128>}, {pipeline_mode = #tpu.pipeline_mode<synchronous>, transform_indices = @transform_7, window_bounds = array<i64: 128, 128>}, {pipeline_mode = #tpu.pipeline_mode<synchronous>, transform_indices = @transform_8, window_bounds = array<i64: 1, 128>}, {transform_indices = @transform_9, window_bounds = array<i64: 1, 256, 128>}]} {
    %c2_i32 = arith.constant 2 : i32
    %c0_i32 = arith.constant 0 : i32
    %0 = arith.cmpi eq, %c2_i32, %c0_i32 : i32
    %c1_i32 = arith.constant 1 : i32
    %1 = arith.select %0, %c1_i32, %c2_i32 : i32
    %2 = arith.remsi %arg1, %1 : i32
    %c0_i32_0 = arith.constant 0 : i32
    %3 = arith.cmpi ne, %2, %c0_i32_0 : i32
    %c0_i32_1 = arith.constant 0 : i32
    %4 = arith.cmpi slt, %2, %c0_i32_1 : i32
    %c0_i32_2 = arith.constant 0 : i32
    %5 = arith.cmpi slt, %1, %c0_i32_2 : i32
    %6 = arith.xori %4, %5 : i1
    %7 = arith.andi %6, %3 : i1
    %8 = arith.addi %2, %1 : i32
    %9 = arith.select %7, %8, %2 : i32
    %c0_i32_3 = arith.constant 0 : i32
    %10 = arith.cmpi eq, %arg1, %c0_i32_3 : i32
    %11 = arith.extui %10 : i1 to i32
    %c0_i32_4 = arith.constant 0 : i32
    %12 = arith.cmpi ne, %11, %c0_i32_4 : i32
    scf.if %12 {
      %c256_i32_78 = arith.constant 256 : i32
      %286 = arith.muli %arg1, %c256_i32_78 : i32
      %c0_i32_79 = arith.constant 0 : i32
      %287 = tpu.memref_slice %arg2[%arg0, %286, %c0_i32_79] : memref<2x544x128xf32, #tpu.memory_space<any>> -> memref<1x288x128xf32, #tpu.memory_space<any>>
      %288 = tpu.memref_squeeze %287 : memref<1x288x128xf32, #tpu.memory_space<any>> -> memref<288x128xf32, #tpu.memory_space<any>>
      %c0_i32_80 = arith.constant 0 : i32
      %c0_i32_81 = arith.constant 0 : i32
      %289 = tpu.memref_slice %arg12[%9, %c0_i32_80, %c0_i32_81] : memref<2x288x128xf32, #tpu.memory_space<vmem>> -> memref<1x288x128xf32, #tpu.memory_space<vmem>>
      %290 = tpu.memref_squeeze %289 : memref<1x288x128xf32, #tpu.memory_space<vmem>> -> memref<288x128xf32, #tpu.memory_space<vmem>>
      %291 = tpu.memref_slice %arg13[%9] : memref<2x!tpu.dma_semaphore, #tpu.memory_space<semaphore_mem>> -> memref<1x!tpu.dma_semaphore, #tpu.memory_space<semaphore_mem>>
      %292 = tpu.memref_squeeze %291 : memref<1x!tpu.dma_semaphore, #tpu.memory_space<semaphore_mem>> -> memref<!tpu.dma_semaphore, #tpu.memory_space<semaphore_mem>>
      tpu.enqueue_dma source(%288 : memref<288x128xf32, #tpu.memory_space<any>>) target(%290 : memref<288x128xf32, #tpu.memory_space<vmem>>) target_semaphore(%292 : memref<!tpu.dma_semaphore, #tpu.memory_space<semaphore_mem>>)
    } else {
    }
    %c1_i32_5 = arith.constant 1 : i32
    %13 = arith.addi %arg1, %c1_i32_5 : i32
    %c2_i32_6 = arith.constant 2 : i32
    %14 = arith.cmpi slt, %13, %c2_i32_6 : i32
    %15 = arith.extui %14 : i1 to i32
    %c0_i32_7 = arith.constant 0 : i32
    %16 = arith.cmpi ne, %15, %c0_i32_7 : i32
    scf.if %16 {
      %c1_i32_78 = arith.constant 1 : i32
      %286 = arith.addi %arg1, %c1_i32_78 : i32
      %c1_i32_79 = arith.constant 1 : i32
      %287 = arith.subi %c1_i32_79, %9 : i32
      %c256_i32_80 = arith.constant 256 : i32
      %288 = arith.muli %286, %c256_i32_80 : i32
      %c0_i32_81 = arith.constant 0 : i32
      %289 = tpu.memref_slice %arg2[%arg0, %288, %c0_i32_81] : memref<2x544x128xf32, #tpu.memory_space<any>> -> memref<1x288x128xf32, #tpu.memory_space<any>>
      %290 = tpu.memref_squeeze %289 : memref<1x288x128xf32, #tpu.memory_space<any>> -> memref<288x128xf32, #tpu.memory_space<any>>
      %c0_i32_82 = arith.constant 0 : i32
      %c0_i32_83 = arith.constant 0 : i32
      %291 = tpu.memref_slice %arg12[%287, %c0_i32_82, %c0_i32_83] : memref<2x288x128xf32, #tpu.memory_space<vmem>> -> memref<1x288x128xf32, #tpu.memory_space<vmem>>
      %292 = tpu.memref_squeeze %291 : memref<1x288x128xf32, #tpu.memory_space<vmem>> -> memref<288x128xf32, #tpu.memory_space<vmem>>
      %293 = tpu.memref_slice %arg13[%287] : memref<2x!tpu.dma_semaphore, #tpu.memory_space<semaphore_mem>> -> memref<1x!tpu.dma_semaphore, #tpu.memory_space<semaphore_mem>>
      %294 = tpu.memref_squeeze %293 : memref<1x!tpu.dma_semaphore, #tpu.memory_space<semaphore_mem>> -> memref<!tpu.dma_semaphore, #tpu.memory_space<semaphore_mem>>
      tpu.enqueue_dma source(%290 : memref<288x128xf32, #tpu.memory_space<any>>) target(%292 : memref<288x128xf32, #tpu.memory_space<vmem>>) target_semaphore(%294 : memref<!tpu.dma_semaphore, #tpu.memory_space<semaphore_mem>>)
    } else {
    }
    %c256_i32 = arith.constant 256 : i32
    %17 = arith.muli %arg1, %c256_i32 : i32
    %c0_i32_8 = arith.constant 0 : i32
    %18 = tpu.memref_slice %arg2[%arg0, %17, %c0_i32_8] : memref<2x544x128xf32, #tpu.memory_space<any>> -> memref<1x288x128xf32, #tpu.memory_space<any>>
    %19 = tpu.memref_squeeze %18 : memref<1x288x128xf32, #tpu.memory_space<any>> -> memref<288x128xf32, #tpu.memory_space<any>>
    %c0_i32_9 = arith.constant 0 : i32
    %c0_i32_10 = arith.constant 0 : i32
    %20 = tpu.memref_slice %arg12[%9, %c0_i32_9, %c0_i32_10] : memref<2x288x128xf32, #tpu.memory_space<vmem>> -> memref<1x288x128xf32, #tpu.memory_space<vmem>>
    %21 = tpu.memref_squeeze %20 : memref<1x288x128xf32, #tpu.memory_space<vmem>> -> memref<288x128xf32, #tpu.memory_space<vmem>>
    %22 = tpu.memref_slice %arg13[%9] : memref<2x!tpu.dma_semaphore, #tpu.memory_space<semaphore_mem>> -> memref<1x!tpu.dma_semaphore, #tpu.memory_space<semaphore_mem>>
    %23 = tpu.memref_squeeze %22 : memref<1x!tpu.dma_semaphore, #tpu.memory_space<semaphore_mem>> -> memref<!tpu.dma_semaphore, #tpu.memory_space<semaphore_mem>>
    tpu.wait_dma2 semaphore(%23 : memref<!tpu.dma_semaphore, #tpu.memory_space<semaphore_mem>>) src(%19 : memref<288x128xf32, #tpu.memory_space<any>>) dst(%21 : memref<288x128xf32, #tpu.memory_space<vmem>>)
    %24 = arith.index_cast %9 : i32 to index
    %c0 = arith.constant 0 : index
    %c0_11 = arith.constant 0 : index
    %25 = vector.load %arg12[%24, %c0, %c0_11] : memref<2x288x128xf32, #tpu.memory_space<vmem>>, vector<1x288x128xf32>
    %26 = vector.shape_cast %25 : vector<1x288x128xf32> to vector<288x128xf32>
    %cst = arith.constant dense<0.000000e+00> : vector<288xf32>
    %27 = vector.multi_reduction <add>, %26, %cst [1] : vector<288x128xf32> to vector<288xf32>
    %28 = vector.shape_cast %27 : vector<288xf32> to vector<288x1xf32>
    %cst_12 = arith.constant 1.280000e+02 : f32
    %29 = vector.broadcast %cst_12 : f32 to vector<288x1xf32>
    %30 = arith.divf %28, %29 : vector<288x1xf32>
    %31 = vector.broadcast %30 : vector<288x1xf32> to vector<288x128xf32>
    %32 = arith.subf %26, %31 : vector<288x128xf32>
    %33 = arith.mulf %32, %32 : vector<288x128xf32>
    %cst_13 = arith.constant dense<0.000000e+00> : vector<288xf32>
    %34 = vector.multi_reduction <add>, %33, %cst_13 [1] : vector<288x128xf32> to vector<288xf32>
    %35 = vector.shape_cast %34 : vector<288xf32> to vector<288x1xf32>
    %cst_14 = arith.constant 1.280000e+02 : f32
    %36 = vector.broadcast %cst_14 : f32 to vector<288x1xf32>
    %37 = arith.divf %35, %36 : vector<288x1xf32>
    %38 = vector.broadcast %30 : vector<288x1xf32> to vector<288x128xf32>
    %39 = arith.subf %26, %38 : vector<288x128xf32>
    %cst_15 = arith.constant 9.99999974E-6 : f32
    %40 = vector.broadcast %cst_15 : f32 to vector<288x1xf32>
    %41 = arith.addf %37, %40 : vector<288x1xf32>
    %42 = math.rsqrt %41 : vector<288x1xf32>
    %43 = vector.broadcast %42 : vector<288x1xf32> to vector<288x128xf32>
    %44 = arith.mulf %39, %43 : vector<288x128xf32>
    %c0_16 = arith.constant 0 : index
    %c0_17 = arith.constant 0 : index
    %45 = vector.load %arg3[%c0_16, %c0_17] : memref<1x128xf32, #tpu.memory_space<vmem>>, vector<1x128xf32>
    %46 = vector.broadcast %45 : vector<1x128xf32> to vector<288x128xf32>
    %47 = arith.mulf %44, %46 : vector<288x128xf32>
    %c0_18 = arith.constant 0 : index
    %c0_19 = arith.constant 0 : index
    %48 = vector.load %arg4[%c0_18, %c0_19] : memref<1x128xf32, #tpu.memory_space<vmem>>, vector<1x128xf32>
    %49 = vector.broadcast %48 : vector<1x128xf32> to vector<288x128xf32>
    %50 = arith.addf %47, %49 : vector<288x128xf32>
    %51 = arith.truncf %50 : vector<288x128xf32> to vector<288x128xbf16>
    %c0_20 = arith.constant 0 : index
    %c0_21 = arith.constant 0 : index
    %52 = vector.load %arg5[%c0_20, %c0_21] : memref<128x256xbf16, #tpu.memory_space<vmem>>, vector<128x256xbf16>
    %cst_22 = arith.constant dense<0.000000e+00> : vector<288x256xf32>
    %53 = tpu.matmul %51, %52, %cst_22 {dimension_numbers = #tpu.dot_dimension_numbers<[1], [0], [0], [1], [0, 0, 1, 1], [], []>} : vector<288x128xbf16>, vector<128x256xbf16>, vector<288x256xf32> -> vector<288x256xf32>
    %c0_23 = arith.constant 0 : index
    %c0_24 = arith.constant 0 : index
    %54 = vector.load %arg6[%c0_23, %c0_24] : memref<1x256xf32, #tpu.memory_space<vmem>>, vector<1x256xf32>
    %55 = vector.broadcast %54 : vector<1x256xf32> to vector<288x256xf32>
    %56 = arith.addf %53, %55 : vector<288x256xf32>
    %57 = vector.extract_strided_slice %56 {offsets = [0, 0], sizes = [288, 128], strides = [1, 1]} : vector<288x256xf32> to vector<288x128xf32>
    %58 = vector.extract_strided_slice %56 {offsets = [0, 128], sizes = [288, 128], strides = [1, 1]} : vector<288x256xf32> to vector<288x128xf32>
    %cst_25 = arith.constant 0.000000e+00 : f32
    %59 = vector.broadcast %cst_25 : f32 to vector<288x128xf32>
    %60 = arith.subf %59, %58 : vector<288x128xf32>
    %61 = math.exp %60 : vector<288x128xf32>
    %cst_26 = arith.constant 1.000000e+00 : f32
    %62 = vector.broadcast %cst_26 : f32 to vector<288x128xf32>
    %63 = arith.addf %62, %61 : vector<288x128xf32>
    %64 = tpu.reciprocal %63 {approx = true} : vector<288x128xf32> -> vector<288x128xf32>
    %65 = arith.mulf %57, %64 : vector<288x128xf32>
    %c0_i32_27 = arith.constant 0 : i32
    %66 = arith.cmpi eq, %arg1, %c0_i32_27 : i32
    %c1_i32_28 = arith.constant 1 : i32
    %67 = arith.addi %arg1, %c1_i32_28 : i32
    %c256_i32_29 = arith.constant 256 : i32
    %68 = arith.muli %67, %c256_i32_29 : i32
    %c16_i32 = arith.constant 16 : i32
    %69 = arith.addi %68, %c16_i32 : i32
    %c512_i32 = arith.constant 512 : i32
    %70 = arith.cmpi sgt, %69, %c512_i32 : i32
    %71 = arith.ori %66, %70 : i1
    %72 = arith.extui %71 : i1 to i32
    %c0_i32_30 = arith.constant 0 : i32
    %73 = arith.cmpi ne, %72, %c0_i32_30 : i32
    scf.if %73 {
      %286 = tpu.iota {dimensions = array<i32: 0>} : vector<288x1xi32>
      %c256_i32_78 = arith.constant 256 : i32
      %287 = arith.muli %arg1, %c256_i32_78 : i32
      %c16_i32_79 = arith.constant 16 : i32
      %288 = arith.subi %287, %c16_i32_79 : i32
      %289 = vector.broadcast %288 : i32 to vector<288x1xi32>
      %290 = arith.addi %289, %286 : vector<288x1xi32>
      %c0_i32_80 = arith.constant 0 : i32
      %291 = vector.broadcast %c0_i32_80 : i32 to vector<288x1xi32>
      %292 = arith.cmpi sge, %290, %291 : vector<288x1xi32>
      %c512_i32_81 = arith.constant 512 : i32
      %293 = vector.broadcast %c512_i32_81 : i32 to vector<288x1xi32>
      %294 = arith.cmpi slt, %290, %293 : vector<288x1xi32>
      %295 = arith.andi %292, %294 : vector<288x1xi1>
      %cst_82 = arith.constant 0.000000e+00 : f32
      %296 = vector.shape_cast %295 : vector<288x1xi1> to vector<288x1xi1>
      %297 = vector.broadcast %296 : vector<288x1xi1> to vector<288x128xi1>
      %298 = vector.broadcast %cst_82 : f32 to vector<288x128xf32>
      %299 = arith.select %297, %65, %298 : vector<288x128xi1>, vector<288x128xf32>
      %300 = arith.truncf %299 : vector<288x128xf32> to vector<288x128xbf16>
      %c0_83 = arith.constant 0 : index
      %c0_84 = arith.constant 0 : index
      %301 = vector.load %arg14[%c0_83, %c0_84] : memref<288x128xbf16, #tpu.memory_space<vmem>>, vector<288x128xbf16>
      tpu.vector_store %arg14[%c0_83, %c0_84], %300 {strides = array<i32>} : memref<288x128xbf16, #tpu.memory_space<vmem>>, vector<288x128xbf16>,
    } else {
    }
    %true = arith.constant true
    %74 = arith.xori %71, %true : i1
    %75 = arith.extui %74 : i1 to i32
    %c0_i32_31 = arith.constant 0 : i32
    %76 = arith.cmpi ne, %75, %c0_i32_31 : i32
    scf.if %76 {
      %286 = arith.truncf %65 : vector<288x128xf32> to vector<288x128xbf16>
      %c0_78 = arith.constant 0 : index
      %c0_79 = arith.constant 0 : index
      %287 = vector.load %arg14[%c0_78, %c0_79] : memref<288x128xbf16, #tpu.memory_space<vmem>>, vector<288x128xbf16>
      tpu.vector_store %arg14[%c0_78, %c0_79], %286 {strides = array<i32>} : memref<288x128xbf16, #tpu.memory_space<vmem>>, vector<288x128xbf16>,
    } else {
    }
    %c0_32 = arith.constant 0 : index
    %c0_33 = arith.constant 0 : index
    %77 = vector.load %arg7[%c0_32, %c0_33] : memref<31x128xf32, #tpu.memory_space<vmem>>, vector<31x128xf32>
    %cst_34 = arith.constant 0.000000e+00 : f32
    %78 = vector.broadcast %cst_34 : f32 to vector<256x128xf32>
    %c1 = arith.constant 1 : index
    %c0_35 = arith.constant 0 : index
    %79 = vector.load %arg14[%c1, %c0_35] : memref<288x128xbf16, #tpu.memory_space<vmem>>, vector<256x128xbf16>
    %80 = arith.extf %79 : vector<256x128xbf16> to vector<256x128xf32>
    %81 = vector.extract_strided_slice %77 {offsets = [0, 0], sizes = [1, 128], strides = [1, 1]} : vector<31x128xf32> to vector<1x128xf32>
    %82 = vector.broadcast %81 : vector<1x128xf32> to vector<256x128xf32>
    %83 = arith.mulf %80, %82 : vector<256x128xf32>
    %84 = arith.addf %78, %83 : vector<256x128xf32>
    %c2 = arith.constant 2 : index
    %c0_36 = arith.constant 0 : index
    %85 = vector.load %arg14[%c2, %c0_36] : memref<288x128xbf16, #tpu.memory_space<vmem>>, vector<256x128xbf16>
    %86 = arith.extf %85 : vector<256x128xbf16> to vector<256x128xf32>
    %87 = vector.extract_strided_slice %77 {offsets = [1, 0], sizes = [1, 128], strides = [1, 1]} : vector<31x128xf32> to vector<1x128xf32>
    %88 = vector.broadcast %87 : vector<1x128xf32> to vector<256x128xf32>
    %89 = arith.mulf %86, %88 : vector<256x128xf32>
    %90 = arith.addf %84, %89 : vector<256x128xf32>
    %c3 = arith.constant 3 : index
    %c0_37 = arith.constant 0 : index
    %91 = vector.load %arg14[%c3, %c0_37] : memref<288x128xbf16, #tpu.memory_space<vmem>>, vector<256x128xbf16>
    %92 = arith.extf %91 : vector<256x128xbf16> to vector<256x128xf32>
    %93 = vector.extract_strided_slice %77 {offsets = [2, 0], sizes = [1, 128], strides = [1, 1]} : vector<31x128xf32> to vector<1x128xf32>
    %94 = vector.broadcast %93 : vector<1x128xf32> to vector<256x128xf32>
    %95 = arith.mulf %92, %94 : vector<256x128xf32>
    %96 = arith.addf %90, %95 : vector<256x128xf32>
    %c4 = arith.constant 4 : index
    %c0_38 = arith.constant 0 : index
    %97 = vector.load %arg14[%c4, %c0_38] : memref<288x128xbf16, #tpu.memory_space<vmem>>, vector<256x128xbf16>
    %98 = arith.extf %97 : vector<256x128xbf16> to vector<256x128xf32>
    %99 = vector.extract_strided_slice %77 {offsets = [3, 0], sizes = [1, 128], strides = [1, 1]} : vector<31x128xf32> to vector<1x128xf32>
    %100 = vector.broadcast %99 : vector<1x128xf32> to vector<256x128xf32>
    %101 = arith.mulf %98, %100 : vector<256x128xf32>
    %102 = arith.addf %96, %101 : vector<256x128xf32>
    %c5 = arith.constant 5 : index
    %c0_39 = arith.constant 0 : index
    %103 = vector.load %arg14[%c5, %c0_39] : memref<288x128xbf16, #tpu.memory_space<vmem>>, vector<256x128xbf16>
    %104 = arith.extf %103 : vector<256x128xbf16> to vector<256x128xf32>
    %105 = vector.extract_strided_slice %77 {offsets = [4, 0], sizes = [1, 128], strides = [1, 1]} : vector<31x128xf32> to vector<1x128xf32>
    %106 = vector.broadcast %105 : vector<1x128xf32> to vector<256x128xf32>
    %107 = arith.mulf %104, %106 : vector<256x128xf32>
    %108 = arith.addf %102, %107 : vector<256x128xf32>
    %c6 = arith.constant 6 : index
    %c0_40 = arith.constant 0 : index
    %109 = vector.load %arg14[%c6, %c0_40] : memref<288x128xbf16, #tpu.memory_space<vmem>>, vector<256x128xbf16>
    %110 = arith.extf %109 : vector<256x128xbf16> to vector<256x128xf32>
    %111 = vector.extract_strided_slice %77 {offsets = [5, 0], sizes = [1, 128], strides = [1, 1]} : vector<31x128xf32> to vector<1x128xf32>
    %112 = vector.broadcast %111 : vector<1x128xf32> to vector<256x128xf32>
    %113 = arith.mulf %110, %112 : vector<256x128xf32>
    %114 = arith.addf %108, %113 : vector<256x128xf32>
    %c7 = arith.constant 7 : index
    %c0_41 = arith.constant 0 : index
    %115 = vector.load %arg14[%c7, %c0_41] : memref<288x128xbf16, #tpu.memory_space<vmem>>, vector<256x128xbf16>
    %116 = arith.extf %115 : vector<256x128xbf16> to vector<256x128xf32>
    %117 = vector.extract_strided_slice %77 {offsets = [6, 0], sizes = [1, 128], strides = [1, 1]} : vector<31x128xf32> to vector<1x128xf32>
    %118 = vector.broadcast %117 : vector<1x128xf32> to vector<256x128xf32>
    %119 = arith.mulf %116, %118 : vector<256x128xf32>
    %120 = arith.addf %114, %119 : vector<256x128xf32>
    %c8 = arith.constant 8 : index
    %c0_42 = arith.constant 0 : index
    %121 = vector.load %arg14[%c8, %c0_42] : memref<288x128xbf16, #tpu.memory_space<vmem>>, vector<256x128xbf16>
    %122 = arith.extf %121 : vector<256x128xbf16> to vector<256x128xf32>
    %123 = vector.extract_strided_slice %77 {offsets = [7, 0], sizes = [1, 128], strides = [1, 1]} : vector<31x128xf32> to vector<1x128xf32>
    %124 = vector.broadcast %123 : vector<1x128xf32> to vector<256x128xf32>
    %125 = arith.mulf %122, %124 : vector<256x128xf32>
    %126 = arith.addf %120, %125 : vector<256x128xf32>
    %c9 = arith.constant 9 : index
    %c0_43 = arith.constant 0 : index
    %127 = vector.load %arg14[%c9, %c0_43] : memref<288x128xbf16, #tpu.memory_space<vmem>>, vector<256x128xbf16>
    %128 = arith.extf %127 : vector<256x128xbf16> to vector<256x128xf32>
    %129 = vector.extract_strided_slice %77 {offsets = [8, 0], sizes = [1, 128], strides = [1, 1]} : vector<31x128xf32> to vector<1x128xf32>
    %130 = vector.broadcast %129 : vector<1x128xf32> to vector<256x128xf32>
    %131 = arith.mulf %128, %130 : vector<256x128xf32>
    %132 = arith.addf %126, %131 : vector<256x128xf32>
    %c10 = arith.constant 10 : index
    %c0_44 = arith.constant 0 : index
    %133 = vector.load %arg14[%c10, %c0_44] : memref<288x128xbf16, #tpu.memory_space<vmem>>, vector<256x128xbf16>
    %134 = arith.extf %133 : vector<256x128xbf16> to vector<256x128xf32>
    %135 = vector.extract_strided_slice %77 {offsets = [9, 0], sizes = [1, 128], strides = [1, 1]} : vector<31x128xf32> to vector<1x128xf32>
    %136 = vector.broadcast %135 : vector<1x128xf32> to vector<256x128xf32>
    %137 = arith.mulf %134, %136 : vector<256x128xf32>
    %138 = arith.addf %132, %137 : vector<256x128xf32>
    %c11 = arith.constant 11 : index
    %c0_45 = arith.constant 0 : index
    %139 = vector.load %arg14[%c11, %c0_45] : memref<288x128xbf16, #tpu.memory_space<vmem>>, vector<256x128xbf16>
    %140 = arith.extf %139 : vector<256x128xbf16> to vector<256x128xf32>
    %141 = vector.extract_strided_slice %77 {offsets = [10, 0], sizes = [1, 128], strides = [1, 1]} : vector<31x128xf32> to vector<1x128xf32>
    %142 = vector.broadcast %141 : vector<1x128xf32> to vector<256x128xf32>
    %143 = arith.mulf %140, %142 : vector<256x128xf32>
    %144 = arith.addf %138, %143 : vector<256x128xf32>
    %c12 = arith.constant 12 : index
    %c0_46 = arith.constant 0 : index
    %145 = vector.load %arg14[%c12, %c0_46] : memref<288x128xbf16, #tpu.memory_space<vmem>>, vector<256x128xbf16>
    %146 = arith.extf %145 : vector<256x128xbf16> to vector<256x128xf32>
    %147 = vector.extract_strided_slice %77 {offsets = [11, 0], sizes = [1, 128], strides = [1, 1]} : vector<31x128xf32> to vector<1x128xf32>
    %148 = vector.broadcast %147 : vector<1x128xf32> to vector<256x128xf32>
    %149 = arith.mulf %146, %148 : vector<256x128xf32>
    %150 = arith.addf %144, %149 : vector<256x128xf32>
    %c13 = arith.constant 13 : index
    %c0_47 = arith.constant 0 : index
    %151 = vector.load %arg14[%c13, %c0_47] : memref<288x128xbf16, #tpu.memory_space<vmem>>, vector<256x128xbf16>
    %152 = arith.extf %151 : vector<256x128xbf16> to vector<256x128xf32>
    %153 = vector.extract_strided_slice %77 {offsets = [12, 0], sizes = [1, 128], strides = [1, 1]} : vector<31x128xf32> to vector<1x128xf32>
    %154 = vector.broadcast %153 : vector<1x128xf32> to vector<256x128xf32>
    %155 = arith.mulf %152, %154 : vector<256x128xf32>
    %156 = arith.addf %150, %155 : vector<256x128xf32>
    %c14 = arith.constant 14 : index
    %c0_48 = arith.constant 0 : index
    %157 = vector.load %arg14[%c14, %c0_48] : memref<288x128xbf16, #tpu.memory_space<vmem>>, vector<256x128xbf16>
    %158 = arith.extf %157 : vector<256x128xbf16> to vector<256x128xf32>
    %159 = vector.extract_strided_slice %77 {offsets = [13, 0], sizes = [1, 128], strides = [1, 1]} : vector<31x128xf32> to vector<1x128xf32>
    %160 = vector.broadcast %159 : vector<1x128xf32> to vector<256x128xf32>
    %161 = arith.mulf %158, %160 : vector<256x128xf32>
    %162 = arith.addf %156, %161 : vector<256x128xf32>
    %c15 = arith.constant 15 : index
    %c0_49 = arith.constant 0 : index
    %163 = vector.load %arg14[%c15, %c0_49] : memref<288x128xbf16, #tpu.memory_space<vmem>>, vector<256x128xbf16>
    %164 = arith.extf %163 : vector<256x128xbf16> to vector<256x128xf32>
    %165 = vector.extract_strided_slice %77 {offsets = [14, 0], sizes = [1, 128], strides = [1, 1]} : vector<31x128xf32> to vector<1x128xf32>
    %166 = vector.broadcast %165 : vector<1x128xf32> to vector<256x128xf32>
    %167 = arith.mulf %164, %166 : vector<256x128xf32>
    %168 = arith.addf %162, %167 : vector<256x128xf32>
    %c16 = arith.constant 16 : index
    %c0_50 = arith.constant 0 : index
    %169 = vector.load %arg14[%c16, %c0_50] : memref<288x128xbf16, #tpu.memory_space<vmem>>, vector<256x128xbf16>
    %170 = arith.extf %169 : vector<256x128xbf16> to vector<256x128xf32>
    %171 = vector.extract_strided_slice %77 {offsets = [15, 0], sizes = [1, 128], strides = [1, 1]} : vector<31x128xf32> to vector<1x128xf32>
    %172 = vector.broadcast %171 : vector<1x128xf32> to vector<256x128xf32>
    %173 = arith.mulf %170, %172 : vector<256x128xf32>
    %174 = arith.addf %168, %173 : vector<256x128xf32>
    %c17 = arith.constant 17 : index
    %c0_51 = arith.constant 0 : index
    %175 = vector.load %arg14[%c17, %c0_51] : memref<288x128xbf16, #tpu.memory_space<vmem>>, vector<256x128xbf16>
    %176 = arith.extf %175 : vector<256x128xbf16> to vector<256x128xf32>
    %177 = vector.extract_strided_slice %77 {offsets = [16, 0], sizes = [1, 128], strides = [1, 1]} : vector<31x128xf32> to vector<1x128xf32>
    %178 = vector.broadcast %177 : vector<1x128xf32> to vector<256x128xf32>
    %179 = arith.mulf %176, %178 : vector<256x128xf32>
    %180 = arith.addf %174, %179 : vector<256x128xf32>
    %c18 = arith.constant 18 : index
    %c0_52 = arith.constant 0 : index
    %181 = vector.load %arg14[%c18, %c0_52] : memref<288x128xbf16, #tpu.memory_space<vmem>>, vector<256x128xbf16>
    %182 = arith.extf %181 : vector<256x128xbf16> to vector<256x128xf32>
    %183 = vector.extract_strided_slice %77 {offsets = [17, 0], sizes = [1, 128], strides = [1, 1]} : vector<31x128xf32> to vector<1x128xf32>
    %184 = vector.broadcast %183 : vector<1x128xf32> to vector<256x128xf32>
    %185 = arith.mulf %182, %184 : vector<256x128xf32>
    %186 = arith.addf %180, %185 : vector<256x128xf32>
    %c19 = arith.constant 19 : index
    %c0_53 = arith.constant 0 : index
    %187 = vector.load %arg14[%c19, %c0_53] : memref<288x128xbf16, #tpu.memory_space<vmem>>, vector<256x128xbf16>
    %188 = arith.extf %187 : vector<256x128xbf16> to vector<256x128xf32>
    %189 = vector.extract_strided_slice %77 {offsets = [18, 0], sizes = [1, 128], strides = [1, 1]} : vector<31x128xf32> to vector<1x128xf32>
    %190 = vector.broadcast %189 : vector<1x128xf32> to vector<256x128xf32>
    %191 = arith.mulf %188, %190 : vector<256x128xf32>
    %192 = arith.addf %186, %191 : vector<256x128xf32>
    %c20 = arith.constant 20 : index
    %c0_54 = arith.constant 0 : index
    %193 = vector.load %arg14[%c20, %c0_54] : memref<288x128xbf16, #tpu.memory_space<vmem>>, vector<256x128xbf16>
    %194 = arith.extf %193 : vector<256x128xbf16> to vector<256x128xf32>
    %195 = vector.extract_strided_slice %77 {offsets = [19, 0], sizes = [1, 128], strides = [1, 1]} : vector<31x128xf32> to vector<1x128xf32>
    %196 = vector.broadcast %195 : vector<1x128xf32> to vector<256x128xf32>
    %197 = arith.mulf %194, %196 : vector<256x128xf32>
    %198 = arith.addf %192, %197 : vector<256x128xf32>
    %c21 = arith.constant 21 : index
    %c0_55 = arith.constant 0 : index
    %199 = vector.load %arg14[%c21, %c0_55] : memref<288x128xbf16, #tpu.memory_space<vmem>>, vector<256x128xbf16>
    %200 = arith.extf %199 : vector<256x128xbf16> to vector<256x128xf32>
    %201 = vector.extract_strided_slice %77 {offsets = [20, 0], sizes = [1, 128], strides = [1, 1]} : vector<31x128xf32> to vector<1x128xf32>
    %202 = vector.broadcast %201 : vector<1x128xf32> to vector<256x128xf32>
    %203 = arith.mulf %200, %202 : vector<256x128xf32>
    %204 = arith.addf %198, %203 : vector<256x128xf32>
    %c22 = arith.constant 22 : index
    %c0_56 = arith.constant 0 : index
    %205 = vector.load %arg14[%c22, %c0_56] : memref<288x128xbf16, #tpu.memory_space<vmem>>, vector<256x128xbf16>
    %206 = arith.extf %205 : vector<256x128xbf16> to vector<256x128xf32>
    %207 = vector.extract_strided_slice %77 {offsets = [21, 0], sizes = [1, 128], strides = [1, 1]} : vector<31x128xf32> to vector<1x128xf32>
    %208 = vector.broadcast %207 : vector<1x128xf32> to vector<256x128xf32>
    %209 = arith.mulf %206, %208 : vector<256x128xf32>
    %210 = arith.addf %204, %209 : vector<256x128xf32>
    %c23 = arith.constant 23 : index
    %c0_57 = arith.constant 0 : index
    %211 = vector.load %arg14[%c23, %c0_57] : memref<288x128xbf16, #tpu.memory_space<vmem>>, vector<256x128xbf16>
    %212 = arith.extf %211 : vector<256x128xbf16> to vector<256x128xf32>
    %213 = vector.extract_strided_slice %77 {offsets = [22, 0], sizes = [1, 128], strides = [1, 1]} : vector<31x128xf32> to vector<1x128xf32>
    %214 = vector.broadcast %213 : vector<1x128xf32> to vector<256x128xf32>
    %215 = arith.mulf %212, %214 : vector<256x128xf32>
    %216 = arith.addf %210, %215 : vector<256x128xf32>
    %c24 = arith.constant 24 : index
    %c0_58 = arith.constant 0 : index
    %217 = vector.load %arg14[%c24, %c0_58] : memref<288x128xbf16, #tpu.memory_space<vmem>>, vector<256x128xbf16>
    %218 = arith.extf %217 : vector<256x128xbf16> to vector<256x128xf32>
    %219 = vector.extract_strided_slice %77 {offsets = [23, 0], sizes = [1, 128], strides = [1, 1]} : vector<31x128xf32> to vector<1x128xf32>
    %220 = vector.broadcast %219 : vector<1x128xf32> to vector<256x128xf32>
    %221 = arith.mulf %218, %220 : vector<256x128xf32>
    %222 = arith.addf %216, %221 : vector<256x128xf32>
    %c25 = arith.constant 25 : index
    %c0_59 = arith.constant 0 : index
    %223 = vector.load %arg14[%c25, %c0_59] : memref<288x128xbf16, #tpu.memory_space<vmem>>, vector<256x128xbf16>
    %224 = arith.extf %223 : vector<256x128xbf16> to vector<256x128xf32>
    %225 = vector.extract_strided_slice %77 {offsets = [24, 0], sizes = [1, 128], strides = [1, 1]} : vector<31x128xf32> to vector<1x128xf32>
    %226 = vector.broadcast %225 : vector<1x128xf32> to vector<256x128xf32>
    %227 = arith.mulf %224, %226 : vector<256x128xf32>
    %228 = arith.addf %222, %227 : vector<256x128xf32>
    %c26 = arith.constant 26 : index
    %c0_60 = arith.constant 0 : index
    %229 = vector.load %arg14[%c26, %c0_60] : memref<288x128xbf16, #tpu.memory_space<vmem>>, vector<256x128xbf16>
    %230 = arith.extf %229 : vector<256x128xbf16> to vector<256x128xf32>
    %231 = vector.extract_strided_slice %77 {offsets = [25, 0], sizes = [1, 128], strides = [1, 1]} : vector<31x128xf32> to vector<1x128xf32>
    %232 = vector.broadcast %231 : vector<1x128xf32> to vector<256x128xf32>
    %233 = arith.mulf %230, %232 : vector<256x128xf32>
    %234 = arith.addf %228, %233 : vector<256x128xf32>
    %c27 = arith.constant 27 : index
    %c0_61 = arith.constant 0 : index
    %235 = vector.load %arg14[%c27, %c0_61] : memref<288x128xbf16, #tpu.memory_space<vmem>>, vector<256x128xbf16>
    %236 = arith.extf %235 : vector<256x128xbf16> to vector<256x128xf32>
    %237 = vector.extract_strided_slice %77 {offsets = [26, 0], sizes = [1, 128], strides = [1, 1]} : vector<31x128xf32> to vector<1x128xf32>
    %238 = vector.broadcast %237 : vector<1x128xf32> to vector<256x128xf32>
    %239 = arith.mulf %236, %238 : vector<256x128xf32>
    %240 = arith.addf %234, %239 : vector<256x128xf32>
    %c28 = arith.constant 28 : index
    %c0_62 = arith.constant 0 : index
    %241 = vector.load %arg14[%c28, %c0_62] : memref<288x128xbf16, #tpu.memory_space<vmem>>, vector<256x128xbf16>
    %242 = arith.extf %241 : vector<256x128xbf16> to vector<256x128xf32>
    %243 = vector.extract_strided_slice %77 {offsets = [27, 0], sizes = [1, 128], strides = [1, 1]} : vector<31x128xf32> to vector<1x128xf32>
    %244 = vector.broadcast %243 : vector<1x128xf32> to vector<256x128xf32>
    %245 = arith.mulf %242, %244 : vector<256x128xf32>
    %246 = arith.addf %240, %245 : vector<256x128xf32>
    %c29 = arith.constant 29 : index
    %c0_63 = arith.constant 0 : index
    %247 = vector.load %arg14[%c29, %c0_63] : memref<288x128xbf16, #tpu.memory_space<vmem>>, vector<256x128xbf16>
    %248 = arith.extf %247 : vector<256x128xbf16> to vector<256x128xf32>
    %249 = vector.extract_strided_slice %77 {offsets = [28, 0], sizes = [1, 128], strides = [1, 1]} : vector<31x128xf32> to vector<1x128xf32>
    %250 = vector.broadcast %249 : vector<1x128xf32> to vector<256x128xf32>
    %251 = arith.mulf %248, %250 : vector<256x128xf32>
    %252 = arith.addf %246, %251 : vector<256x128xf32>
    %c30 = arith.constant 30 : index
    %c0_64 = arith.constant 0 : index
    %253 = vector.load %arg14[%c30, %c0_64] : memref<288x128xbf16, #tpu.memory_space<vmem>>, vector<256x128xbf16>
    %254 = arith.extf %253 : vector<256x128xbf16> to vector<256x128xf32>
    %255 = vector.extract_strided_slice %77 {offsets = [29, 0], sizes = [1, 128], strides = [1, 1]} : vector<31x128xf32> to vector<1x128xf32>
    %256 = vector.broadcast %255 : vector<1x128xf32> to vector<256x128xf32>
    %257 = arith.mulf %254, %256 : vector<256x128xf32>
    %258 = arith.addf %252, %257 : vector<256x128xf32>
    %c31 = arith.constant 31 : index
    %c0_65 = arith.constant 0 : index
    %259 = vector.load %arg14[%c31, %c0_65] : memref<288x128xbf16, #tpu.memory_space<vmem>>, vector<256x128xbf16>
    %260 = arith.extf %259 : vector<256x128xbf16> to vector<256x128xf32>
    %261 = vector.extract_strided_slice %77 {offsets = [30, 0], sizes = [1, 128], strides = [1, 1]} : vector<31x128xf32> to vector<1x128xf32>
    %262 = vector.broadcast %261 : vector<1x128xf32> to vector<256x128xf32>
    %263 = arith.mulf %260, %262 : vector<256x128xf32>
    %264 = arith.addf %258, %263 : vector<256x128xf32>
    %c0_66 = arith.constant 0 : index
    %c0_67 = arith.constant 0 : index
    %265 = vector.load %arg8[%c0_66, %c0_67] : memref<1x128xf32, #tpu.memory_space<vmem>>, vector<1x128xf32>
    %266 = vector.broadcast %265 : vector<1x128xf32> to vector<256x128xf32>
    %267 = arith.addf %264, %266 : vector<256x128xf32>
    %cst_68 = arith.constant 0.000000e+00 : f32
    %268 = vector.broadcast %cst_68 : f32 to vector<256x128xf32>
    %269 = arith.subf %268, %267 : vector<256x128xf32>
    %270 = math.exp %269 : vector<256x128xf32>
    %cst_69 = arith.constant 1.000000e+00 : f32
    %271 = vector.broadcast %cst_69 : f32 to vector<256x128xf32>
    %272 = arith.addf %271, %270 : vector<256x128xf32>
    %273 = tpu.reciprocal %272 {approx = true} : vector<256x128xf32> -> vector<256x128xf32>
    %274 = arith.mulf %267, %273 : vector<256x128xf32>
    %275 = arith.truncf %274 : vector<256x128xf32> to vector<256x128xbf16>
    %c0_70 = arith.constant 0 : index
    %c0_71 = arith.constant 0 : index
    %276 = vector.load %arg9[%c0_70, %c0_71] : memref<128x128xbf16, #tpu.memory_space<vmem>>, vector<128x128xbf16>
    %cst_72 = arith.constant dense<0.000000e+00> : vector<256x128xf32>
    %277 = tpu.matmul %275, %276, %cst_72 {dimension_numbers = #tpu.dot_dimension_numbers<[1], [0], [0], [1], [0, 0, 1, 1], [], []>} : vector<256x128xbf16>, vector<128x128xbf16>, vector<256x128xf32> -> vector<256x128xf32>
    %c0_73 = arith.constant 0 : index
    %c0_74 = arith.constant 0 : index
    %278 = vector.load %arg10[%c0_73, %c0_74] : memref<1x128xf32, #tpu.memory_space<vmem>>, vector<1x128xf32>
    %279 = vector.broadcast %278 : vector<1x128xf32> to vector<256x128xf32>
    %280 = arith.addf %277, %279 : vector<256x128xf32>
    %281 = vector.extract_strided_slice %26 {offsets = [16, 0], sizes = [256, 128], strides = [1, 1]} : vector<288x128xf32> to vector<256x128xf32>
    %282 = arith.addf %280, %281 : vector<256x128xf32>
    %c0_75 = arith.constant 0 : index
    %c0_76 = arith.constant 0 : index
    %c0_77 = arith.constant 0 : index
    %283 = vector.load %arg11[%c0_75, %c0_76, %c0_77] : memref<1x256x128xf32, #tpu.memory_space<vmem>>, vector<1x256x128xf32>
    %284 = vector.shape_cast %283 : vector<1x256x128xf32> to vector<256x128xf32>
    %285 = vector.shape_cast %282 : vector<256x128xf32> to vector<1x256x128xf32>
    tpu.vector_store %arg11[%c0_75, %c0_76, %c0_77], %285 {strides = array<i32>} : memref<1x256x128xf32, #tpu.memory_space<vmem>>, vector<1x256x128xf32>,
    return
  }
  func.func @transform_1(%arg0: i32, %arg1: i32) -> (i32, i32) {
    %c0_i32 = arith.constant 0 : i32
    %c0_i32_0 = arith.constant 0 : i32
    %c0_i32_1 = arith.constant 0 : i32
    return %c0_i32, %c0_i32_0 : i32, i32
  }
  func.func @transform_2(%arg0: i32, %arg1: i32) -> (i32, i32) {
    %c0_i32 = arith.constant 0 : i32
    %c0_i32_0 = arith.constant 0 : i32
    %c0_i32_1 = arith.constant 0 : i32
    return %c0_i32, %c0_i32_0 : i32, i32
  }
  func.func @transform_3(%arg0: i32, %arg1: i32) -> (i32, i32) {
    %c0_i32 = arith.constant 0 : i32
    %c0_i32_0 = arith.constant 0 : i32
    %c0_i32_1 = arith.constant 0 : i32
    return %c0_i32, %c0_i32_0 : i32, i32
  }
  func.func @transform_4(%arg0: i32, %arg1: i32) -> (i32, i32) {
    %c0_i32 = arith.constant 0 : i32
    %c0_i32_0 = arith.constant 0 : i32
    %c0_i32_1 = arith.constant 0 : i32
    return %c0_i32, %c0_i32_0 : i32, i32
  }
  func.func @transform_5(%arg0: i32, %arg1: i32) -> (i32, i32) {
    %c0_i32 = arith.constant 0 : i32
    %c0_i32_0 = arith.constant 0 : i32
    %c0_i32_1 = arith.constant 0 : i32
    return %c0_i32, %c0_i32_0 : i32, i32
  }
  func.func @transform_6(%arg0: i32, %arg1: i32) -> (i32, i32) {
    %c0_i32 = arith.constant 0 : i32
    %c0_i32_0 = arith.constant 0 : i32
    %c0_i32_1 = arith.constant 0 : i32
    return %c0_i32, %c0_i32_0 : i32, i32
  }
  func.func @transform_7(%arg0: i32, %arg1: i32) -> (i32, i32) {
    %c0_i32 = arith.constant 0 : i32
    %c0_i32_0 = arith.constant 0 : i32
    %c0_i32_1 = arith.constant 0 : i32
    return %c0_i32, %c0_i32_0 : i32, i32
  }
  func.func @transform_8(%arg0: i32, %arg1: i32) -> (i32, i32) {
    %c0_i32 = arith.constant 0 : i32
    %c0_i32_0 = arith.constant 0 : i32
    %c0_i32_1 = arith.constant 0 : i32
    return %c0_i32, %c0_i32_0 : i32, i32
  }
  func.func @transform_9(%arg0: i32, %arg1: i32) -> (i32, i32, i32) {
    %c0_i32 = arith.constant 0 : i32
    %c0_i32_0 = arith.constant 0 : i32
    return %arg0, %arg1, %c0_i32 : i32, i32, i32
  }
}

</mosaic_0001>

<llo_original>
// kernel: tpu_custom_call.1
$region0: #{tpu_custom_call.1}
  #allocation0 [shape = 'u32[]', space=smem, size = 0x4, offset = 0x4, fixed_abs, tag = 'smem constant byte address 0x4 - core index']
  #allocation1 [shape = 'u32[144,128]{1,0:T(1,128)}', space=vmem, size = 0x12000, scoped, tag = 'internal scratch']
  #allocation2 [shape = 'f32[2,288,128]{2,1,0:T(8,128)}', space=vmem, size = 0x48000, scoped, tag = 'scratch operand']
  #allocation3 [shape = 's32[2]{0}', space=sflag, size = 0x8, scoped, tag = 'scratch operand']
  #allocation4 [shape = 'bf16[288,128]{1,0:T(8,128)(2,1)}', space=vmem, size = 0x12000, scoped, tag = 'scratch operand']
  #allocation14 [shape = 's32[]', space=sflag, size = 0x4, offset = 0, fixed_abs, tag = 'sflag constant byte address 0x0 - dummy sync flag']
  #allocation15 [shape = 's32[]', space=sflag, size = 0x4, offset = 0, fixed_abs, tag = 'sflag constant byte address 0x0 - dummy sync flag']
  #allocation16 [shape = 'u32[]', space=smem, size = 0x4, offset = 0x44, fixed_abs, tag = 'smem constant byte address 0x44 - assertion arg 0']
  #allocation17 [shape = 'u32[]', space=smem, size = 0x4, offset = 0x48, fixed_abs, tag = 'smem constant byte address 0x48 - assertion arg 1']
  #allocation18 [shape = 's32[]', space=sflag, size = 0x4, offset = 0, fixed_abs, tag = 'sflag constant byte address 0x0 - dummy sync flag']
  #allocation19 [shape = 's32[]', space=sflag, size = 0x4, offset = 0, fixed_abs, tag = 'sflag constant byte address 0x0 - dummy sync flag']
  %s0 = inlined_call_operand.hbm [shape: f32[2,544,128], index: 0, kind: input, shape index: {}]
  %s1 = inlined_call_operand.vmem [shape: f32[1,128], index: 1, kind: input, shape index: {}]
  %s2 = inlined_call_operand.hbm [shape: f32[1,128], index: 2, kind: input, shape index: {}]
  %s3 = inlined_call_operand.hbm [shape: bf16[128,256], index: 3, kind: input, shape index: {}]
  %s4 = inlined_call_operand.vmem [shape: f32[1,256], index: 4, kind: input, shape index: {}]
  %s5 = inlined_call_operand.hbm [shape: f32[31,128], index: 5, kind: input, shape index: {}]
  %s6 = inlined_call_operand.vmem [shape: f32[1,128], index: 6, kind: input, shape index: {}]
  %s7 = inlined_call_operand.hbm [shape: bf16[128,128], index: 7, kind: input, shape index: {}]
  %s8 = inlined_call_operand.vmem [shape: f32[1,128], index: 8, kind: input, shape index: {}]
  %s9 = inlined_call_operand.hbm [shape: f32[2,512,128], index: 9, kind: output, shape index: {}]
  %s10 = sld [smem:[#allocation0]]
  $region105: #{tpu_custom_call.1} parent=0
    _
  %s12 = ssub.s32 1, %s10
  %s13 = scalar_select 0, %s12, %s10
  $region1: #{tpu_custom_call.1} parent=0
    #allocation5 [shape = 'u8[512]{0}', space=vmem, size = 0x400, scoped, tag = 'input window, operand 2, single buffered']
    #allocation6 [shape = 's32[2]{0}', space=sflag, size = 0x8, scoped, tag = 'scoped memory for tpu_custom_call.1']
    #allocation7 [shape = 's32[2]{0}', space=sflag, size = 0x8, scoped, tag = 'scoped memory for tpu_custom_call.1']
    #allocation8 [shape = 'u8[65536]{0}', space=vmem, size = 0x10000, scoped, tag = 'input window, operand 3, single buffered']
    #allocation9 [shape = 's32[1]{0}', space=sflag, size = 0x4, scoped, tag = 'scoped memory for tpu_custom_call.1']
    #allocation10 [shape = 'u8[16384]{0}', space=vmem, size = 0x4000, scoped, tag = 'input window, operand 5, single buffered']
    #allocation11 [shape = 'u8[32768]{0}', space=vmem, size = 0x8000, scoped, tag = 'input window, operand 7, single buffered']
    #allocation12 [shape = 's32[1]{0}', space=sflag, size = 0x4, scoped, tag = 'scoped memory for tpu_custom_call.1']
    #allocation13 [shape = 'u8[262144]{0}', space=vmem, size = 0x40000, scoped, tag = 'output window, operand 0']
    %14 = vsyncpa [#allocation6], 0
    %15 = vsyncpa [#allocation9], 0
    %16 = vsyncpa [#allocation12], 0
    %17 = vsyncpa [#allocation7], 0
    %s18 = scalar_lea.sflag [#allocation7], 1
    %19 = vsyncpa %s18, 0
    loop: start=0, step=1, limit=6
    $region2: #{tpu_custom_call.1} parent=1 // loop_pre_header
      _
    $region3: #{tpu_custom_call.1} parent=1 // loop_header
      %s21 = sphi 0, %s25
      %p22 = scmp.ge.s32.totalorder %s21, 6
      %s28 = sphi 0, %s40
      %s29 = sphi 0, %s36
      %s30 = sphi 0, %s28
      %s31 = sphi 0, %s29
      %s32 = sphi 0, %s30
      %s33 = sphi 0, %s31
      %s41 = sphi 0, %s41
      %s43 = sphi 0, %s41
      %s44 = sphi 0, %s43
      %s58 = sphi 0, %s44
      %s62 = sphi 0, %s62
      %s64 = sphi 0, %s62
      %s65 = sphi 0, %s64
      %s79 = sphi 0, %s65
      %s83 = sphi 0, %s83
      %s85 = sphi 0, %s83
      %s86 = sphi 0, %s85
      %s100 = sphi 0, %s86
      %s104 = sphi 0, %s104
      %s106 = sphi 0, %s104
      %s107 = sphi 0, %s106
      %s121 = sphi 0, %s107
      %s125 = sphi 0, %s125
      %s127 = sphi 0, %s125
      %s128 = sphi 0, %s127
      %s142 = sphi 0, %s128
      %s146 = sphi 0, %s146
      %s148 = sphi 0, %s146
      %s149 = sphi 0, %s148
      %s163 = sphi 0, %s149
      %s167 = sphi 0, %s167
      %s169 = sphi 0, %s167
      %s170 = sphi 0, %s169
      %s184 = sphi 0, %s170
      %s188 = sphi 0, %s188
      %s190 = sphi 0, %s188
      %s191 = sphi 0, %s190
      %s205 = sphi 0, %s191
      %s213 = sphi 0, %s215
      %s216 = sphi 0, %s213
      %s217 = sphi 0, %s216
      %s233 = sphi 0, %s217
    $region4: #{tpu_custom_call.1} parent=1 // loop_header_branch
      %24 = sbr.rel (%p22) target = $region8
    $region5: #{tpu_custom_call.1} parent=1 // loop_body
      %s26 = ssub.s32 %s21, 1
      %s27 = ssub.s32 %s21, 2
      %s34 = sadd.s32 1, %s29
      %p35 = scmp.ge.s32.totalorder %s34, 2
      %s36 = scalar_select %p35, 0, %s34
      %s37 = sadd.s32 1, %s28
      %s38 = scalar_select %p35, %s37, %s28
      %p39 = scmp.ge.s32.totalorder %s38, 2
      %s40 = scalar_select %p39, 0, %s38
      %s42 = sadd.s32 %s41, 1
      %p45 = scmp.eq.s32.totalorder %s21, 3
      %p46 = scmp.ne.s32.totalorder %s41, %s43
      %p47 = scmp.eq.s32.totalorder %s21, 0
      %p48 = por %p46, %p47
      %p49 = scmp.ne.s32.totalorder %s41, %s43
      %p50 = scmp.eq.s32.totalorder %s26, 3
      %p51 = por %p49, %p50
      %p52 = scmp.ne.s32.totalorder %s43, %s44
      %p53 = scmp.eq.s32.totalorder %s26, 0
      %p54 = por %p52, %p53
      %p55 = scmp.ne.s32.totalorder %s43, %s44
      %p56 = scmp.eq.s32.totalorder %s27, 3
      %p57 = por %p55, %p56
      %p59 = scmp.ne.s32.totalorder %s44, %s58
      %p60 = scmp.eq.s32.totalorder %s27, 0
      %p61 = por %p59, %p60
      %s63 = sadd.s32 %s62, 1
      %p66 = scmp.eq.s32.totalorder %s21, 3
      %p67 = scmp.ne.s32.totalorder %s62, %s64
      %p68 = scmp.eq.s32.totalorder %s21, 0
      %p69 = por %p67, %p68
      %p70 = scmp.ne.s32.totalorder %s62, %s64
      %p71 = scmp.eq.s32.totalorder %s26, 3
      %p72 = por %p70, %p71
      %p73 = scmp.ne.s32.totalorder %s64, %s65
      %p74 = scmp.eq.s32.totalorder %s26, 0
      %p75 = por %p73, %p74
      %p76 = scmp.ne.s32.totalorder %s64, %s65
      %p77 = scmp.eq.s32.totalorder %s27, 3
      %p78 = por %p76, %p77
      %p80 = scmp.ne.s32.totalorder %s65, %s79
      %p81 = scmp.eq.s32.totalorder %s27, 0
      %p82 = por %p80, %p81
      %s84 = sadd.s32 %s83, 1
      %p87 = scmp.eq.s32.totalorder %s21, 3
      %p88 = scmp.ne.s32.totalorder %s83, %s85
      %p89 = scmp.eq.s32.totalorder %s21, 0
      %p90 = por %p88, %p89
      %p91 = scmp.ne.s32.totalorder %s83, %s85
      %p92 = scmp.eq.s32.totalorder %s26, 3
      %p93 = por %p91, %p92
      %p94 = scmp.ne.s32.totalorder %s85, %s86
      %p95 = scmp.eq.s32.totalorder %s26, 0
      %p96 = por %p94, %p95
      %p97 = scmp.ne.s32.totalorder %s85, %s86
      %p98 = scmp.eq.s32.totalorder %s27, 3
      %p99 = por %p97, %p98
      %p101 = scmp.ne.s32.totalorder %s86, %s100
      %p102 = scmp.eq.s32.totalorder %s27, 0
      %p103 = por %p101, %p102
      %s105 = sadd.s32 %s104, 1
      %p108 = scmp.eq.s32.totalorder %s21, 3
      %p109 = scmp.ne.s32.totalorder %s104, %s106
      %p110 = scmp.eq.s32.totalorder %s21, 0
      %p111 = por %p109, %p110
      %p112 = scmp.ne.s32.totalorder %s104, %s106
      %p113 = scmp.eq.s32.totalorder %s26, 3
      %p114 = por %p112, %p113
      %p115 = scmp.ne.s32.totalorder %s106, %s107
      %p116 = scmp.eq.s32.totalorder %s26, 0
      %p117 = por %p115, %p116
      %p118 = scmp.ne.s32.totalorder %s106, %s107
      %p119 = scmp.eq.s32.totalorder %s27, 3
      %p120 = por %p118, %p119
      %p122 = scmp.ne.s32.totalorder %s107, %s121
      %p123 = scmp.eq.s32.totalorder %s27, 0
      %p124 = por %p122, %p123
      %s126 = sadd.s32 %s125, 1
      %p129 = scmp.eq.s32.totalorder %s21, 3
      %p130 = scmp.ne.s32.totalorder %s125, %s127
      %p131 = scmp.eq.s32.totalorder %s21, 0
      %p132 = por %p130, %p131
      %p133 = scmp.ne.s32.totalorder %s125, %s127
      %p134 = scmp.eq.s32.totalorder %s26, 3
      %p135 = por %p133, %p134
      %p136 = scmp.ne.s32.totalorder %s127, %s128
      %p137 = scmp.eq.s32.totalorder %s26, 0
      %p138 = por %p136, %p137
      %p139 = scmp.ne.s32.totalorder %s127, %s128
      %p140 = scmp.eq.s32.totalorder %s27, 3
      %p141 = por %p139, %p140
      %p143 = scmp.ne.s32.totalorder %s128, %s142
      %p144 = scmp.eq.s32.totalorder %s27, 0
      %p145 = por %p143, %p144
      %s147 = sadd.s32 %s146, 1
      %p150 = scmp.eq.s32.totalorder %s21, 3
      %p151 = scmp.ne.s32.totalorder %s146, %s148
      %p152 = scmp.eq.s32.totalorder %s21, 0
      %p153 = por %p151, %p152
      %p154 = scmp.ne.s32.totalorder %s146, %s148
      %p155 = scmp.eq.s32.totalorder %s26, 3
      %p156 = por %p154, %p155
      %p157 = scmp.ne.s32.totalorder %s148, %s149
      %p158 = scmp.eq.s32.totalorder %s26, 0
      %p159 = por %p157, %p158
      %p160 = scmp.ne.s32.totalorder %s148, %s149
      %p161 = scmp.eq.s32.totalorder %s27, 3
      %p162 = por %p160, %p161
      %p164 = scmp.ne.s32.totalorder %s149, %s163
      %p165 = scmp.eq.s32.totalorder %s27, 0
      %p166 = por %p164, %p165
      %s168 = sadd.s32 %s167, 1
      %p171 = scmp.eq.s32.totalorder %s21, 3
      %p172 = scmp.ne.s32.totalorder %s167, %s169
      %p173 = scmp.eq.s32.totalorder %s21, 0
      %p174 = por %p172, %p173
      %p175 = scmp.ne.s32.totalorder %s167, %s169
      %p176 = scmp.eq.s32.totalorder %s26, 3
      %p177 = por %p175, %p176
      %p178 = scmp.ne.s32.totalorder %s169, %s170
      %p179 = scmp.eq.s32.totalorder %s26, 0
      %p180 = por %p178, %p179
      %p181 = scmp.ne.s32.totalorder %s169, %s170
      %p182 = scmp.eq.s32.totalorder %s27, 3
      %p183 = por %p181, %p182
      %p185 = scmp.ne.s32.totalorder %s170, %s184
      %p186 = scmp.eq.s32.totalorder %s27, 0
      %p187 = por %p185, %p186
      %s189 = sadd.s32 %s188, 1
      %p192 = scmp.eq.s32.totalorder %s21, 3
      %p193 = scmp.ne.s32.totalorder %s188, %s190
      %p194 = scmp.eq.s32.totalorder %s21, 0
      %p195 = por %p193, %p194
      %p196 = scmp.ne.s32.totalorder %s188, %s190
      %p197 = scmp.eq.s32.totalorder %s26, 3
      %p198 = por %p196, %p197
      %p199 = scmp.ne.s32.totalorder %s190, %s191
      %p200 = scmp.eq.s32.totalorder %s26, 0
      %p201 = por %p199, %p200
      %p202 = scmp.ne.s32.totalorder %s190, %s191
      %p203 = scmp.eq.s32.totalorder %s27, 3
      %p204 = por %p202, %p203
      %p206 = scmp.ne.s32.totalorder %s191, %s205
      %p207 = scmp.eq.s32.totalorder %s27, 0
      %p208 = por %p206, %p207
      %s209 = ssub.s32 %s28, %s40
      %s210 = ssub.s32 %s29, %s36
      %s211 = sor.u32 %s209, %s210
      %p212 = scmp.eq.s32.totalorder %s211, 0
      %s214 = sadd.s32 %s213, 1
      %s215 = scalar_select %p212, %s213, %s214
      %p218 = pneg %p212
      %p219 = scmp.eq.s32.totalorder %s21, 3
      %p220 = por %p218, %p219
      %p221 = scmp.ne.s32.totalorder %s213, %s216
      %p222 = scmp.eq.s32.totalorder %s21, 0
      %p223 = por %p221, %p222
      %p224 = scmp.ne.s32.totalorder %s213, %s216
      %p225 = scmp.eq.s32.totalorder %s26, 3
      %p226 = por %p224, %p225
      %p227 = scmp.ne.s32.totalorder %s216, %s217
      %p228 = scmp.eq.s32.totalorder %s26, 0
      %p229 = por %p227, %p228
      %p230 = scmp.ne.s32.totalorder %s216, %s217
      %p231 = scmp.eq.s32.totalorder %s27, 3
      %p232 = por %p230, %p231
      %p234 = scmp.ne.s32.totalorder %s217, %s233
      %p235 = scmp.eq.s32.totalorder %s27, 0
      %p236 = por %p234, %p235
      %p237 = scmp.le.s32.totalorder 1, %s21
      %p238 = scmp.lt.s32.totalorder %s21, 5
      %p239 = pnand %p237, %p238
      %p240 = pneg %p239
      // Predicated region
      $region9: #{tpu_custom_call.1} parent=5 // pred_check
        _
      $region10: #{tpu_custom_call.1} parent=5 // pred_check_branch
        %242 = sbr.rel (%p239) target = $region12
      $region11: #{tpu_custom_call.1} parent=5 // pred_region
        %s243 = ssub.s32 %s21, 1
        // Predicated region
        $region13: #{tpu_custom_call.1} parent=11 // pred_check
          %p244 = pneg %p54
        $region14: #{tpu_custom_call.1} parent=11 // pred_check_branch
          %246 = sbr.rel (%p244) target = $region16
        $region15: #{tpu_custom_call.1} parent=11 // pred_region
          _
        $region16: #{tpu_custom_call.1} parent=11 // pred_fallthru
          _
        // Predicated region
        $region17: #{tpu_custom_call.1} parent=11 // pred_check
          %p247 = pneg %p75
        $region18: #{tpu_custom_call.1} parent=11 // pred_check_branch
          %249 = sbr.rel (%p247) target = $region20
        $region19: #{tpu_custom_call.1} parent=11 // pred_region
          %s251 = ssub.s32 16, 16
          %252 = vsyncadd [#allocation6], %s251
          %s254 = sshll.u32 [#allocation5], 4
          %s255 = int_to_ptr.vmem [resolvable:$true] %s254
          %257 = dma.hbm_to_vmem [thread:$0]  %s2, 16, %s255, [#allocation6]
        $region20: #{tpu_custom_call.1} parent=11 // pred_fallthru
          _
        // Predicated region
        $region21: #{tpu_custom_call.1} parent=11 // pred_check
          %p258 = pneg %p96
        $region22: #{tpu_custom_call.1} parent=11 // pred_check_branch
          %260 = sbr.rel (%p258) target = $region24
        $region23: #{tpu_custom_call.1} parent=11 // pred_region
          %s262 = ssub.s32 2048, 2048
          %263 = vsyncadd [#allocation9], %s262
          %s264 = sshll.u32 [#allocation8], 4
          %s265 = int_to_ptr.vmem [resolvable:$true] %s264
          %270 = dma.hbm_to_vmem [thread:$0]  %s3, 2048, %s265, [#allocation9], 128, 128, 8
        $region24: #{tpu_custom_call.1} parent=11 // pred_fallthru
          _
        // Predicated region
        $region25: #{tpu_custom_call.1} parent=11 // pred_check
          %p271 = pneg %p117
        $region26: #{tpu_custom_call.1} parent=11 // pred_check_branch
          %273 = sbr.rel (%p271) target = $region28
        $region27: #{tpu_custom_call.1} parent=11 // pred_region
          _
        $region28: #{tpu_custom_call.1} parent=11 // pred_fallthru
          _
        // Predicated region
        $region29: #{tpu_custom_call.1} parent=11 // pred_check
          %p274 = pneg %p138
        $region30: #{tpu_custom_call.1} parent=11 // pred_check_branch
          %276 = sbr.rel (%p274) target = $region32
        $region31: #{tpu_custom_call.1} parent=11 // pred_region
          %s278 = ssub.s32 512, 512
          %279 = vsyncadd [#allocation9], %s278
          %s280 = sshll.u32 [#allocation10], 4
          %s281 = int_to_ptr.vmem [resolvable:$true] %s280
          %286 = dma.hbm_to_vmem [thread:$0]  %s5, 512, %s281, [#allocation9], 128, 128, 8
        $region32: #{tpu_custom_call.1} parent=11 // pred_fallthru
          _
        // Predicated region
        $region33: #{tpu_custom_call.1} parent=11 // pred_check
          %p287 = pneg %p159
        $region34: #{tpu_custom_call.1} parent=11 // pred_check_branch
          %289 = sbr.rel (%p287) target = $region36
        $region35: #{tpu_custom_call.1} parent=11 // pred_region
          _
        $region36: #{tpu_custom_call.1} parent=11 // pred_fallthru
          _
        // Predicated region
        $region37: #{tpu_custom_call.1} parent=11 // pred_check
          %p290 = pneg %p180
        $region38: #{tpu_custom_call.1} parent=11 // pred_check_branch
          %292 = sbr.rel (%p290) target = $region40
        $region39: #{tpu_custom_call.1} parent=11 // pred_region
          %s294 = ssub.s32 1024, 1024
          %295 = vsyncadd [#allocation12], %s294
          %s296 = sshll.u32 [#allocation11], 4
          %s297 = int_to_ptr.vmem [resolvable:$true] %s296
          %302 = dma.hbm_to_vmem [thread:$0]  %s7, 1024, %s297, [#allocation12], 64, 64, 4
        $region40: #{tpu_custom_call.1} parent=11 // pred_fallthru
          _
        // Predicated region
        $region41: #{tpu_custom_call.1} parent=11 // pred_check
          %p303 = pneg %p201
        $region42: #{tpu_custom_call.1} parent=11 // pred_check_branch
          %305 = sbr.rel (%p303) target = $region44
        $region43: #{tpu_custom_call.1} parent=11 // pred_region
          _
        $region44: #{tpu_custom_call.1} parent=11 // pred_fallthru
          _
      $region12: #{tpu_custom_call.1} parent=5 // pred_fallthru
        _
      %p306 = scmp.lt.s32.totalorder %s21, 4
      // Predicated region
      $region45: #{tpu_custom_call.1} parent=5 // pred_check
        %p307 = pneg %p306
      $region46: #{tpu_custom_call.1} parent=5 // pred_check_branch
        %309 = sbr.rel (%p307) target = $region48
      $region47: #{tpu_custom_call.1} parent=5 // pred_region
        _
      $region48: #{tpu_custom_call.1} parent=5 // pred_fallthru
        _
      %p310 = scmp.le.s32.totalorder 1, %s21
      %p311 = scmp.lt.s32.totalorder %s21, 5
      %p312 = pnand %p310, %p311
      %p313 = pneg %p312
      // Predicated region
      $region49: #{tpu_custom_call.1} parent=5 // pred_check
        _
      $region50: #{tpu_custom_call.1} parent=5 // pred_check_branch
        %315 = sbr.rel (%p312) target = $region52
      $region51: #{tpu_custom_call.1} parent=5 // pred_region
        %s316 = ssub.s32 %s21, 1
        // Predicated region
        $region53: #{tpu_custom_call.1} parent=51 // pred_check
          %p317 = pneg %p75
        $region54: #{tpu_custom_call.1} parent=51 // pred_check_branch
          %319 = sbr.rel (%p317) target = $region56
        $region55: #{tpu_custom_call.1} parent=51 // pred_region
          %320 = dma.done [#allocation6], 16
        $region56: #{tpu_custom_call.1} parent=51 // pred_fallthru
          _
        // Predicated region
        $region57: #{tpu_custom_call.1} parent=51 // pred_check
          %p321 = pneg %p96
        $region58: #{tpu_custom_call.1} parent=51 // pred_check_branch
          %323 = sbr.rel (%p321) target = $region60
        $region59: #{tpu_custom_call.1} parent=51 // pred_region
          %324 = dma.done [#allocation9], 2048
        $region60: #{tpu_custom_call.1} parent=51 // pred_fallthru
          _
        // Predicated region
        $region61: #{tpu_custom_call.1} parent=51 // pred_check
          %p325 = pneg %p138
        $region62: #{tpu_custom_call.1} parent=51 // pred_check_branch
          %327 = sbr.rel (%p325) target = $region64
        $region63: #{tpu_custom_call.1} parent=51 // pred_region
          %328 = dma.done [#allocation9], 512
        $region64: #{tpu_custom_call.1} parent=51 // pred_fallthru
          _
        // Predicated region
        $region65: #{tpu_custom_call.1} parent=51 // pred_check
          %p329 = pneg %p180
        $region66: #{tpu_custom_call.1} parent=51 // pred_check_branch
          %331 = sbr.rel (%p329) target = $region68
        $region67: #{tpu_custom_call.1} parent=51 // pred_region
          %332 = dma.done [#allocation12], 1024
        $region68: #{tpu_custom_call.1} parent=51 // pred_fallthru
          _
        %p333 = pneg %p54
        %p334 = pneg %p51
        %p335 = pneg %p75
        %p336 = pneg %p72
        %p337 = pneg %p96
        %p338 = pneg %p93
        %p339 = pneg %p117
        %p340 = pneg %p114
        %p341 = pneg %p138
        %p342 = pneg %p135
        %p343 = pneg %p159
        %p344 = pneg %p156
        %p345 = pneg %p180
        %p346 = pneg %p177
        %p347 = pneg %p201
        %p348 = pneg %p198
        %p349 = pneg %p229
        %p350 = pneg %p226
        %s351 = sand.u32 %s216, 1
        %s352 = scalar_lea.sflag [#allocation7], %s351
        %s353 = sand.u32 %s216, 1
        %s354 = smul.addr %s353, 256
        %s355 = scalar_lea.vmem [#allocation13], %s354
        %s356 = smul.u32 32, %s31
        %p358 = scmp.lt.s32.totalorder %s31, 0
        %s359 = ssub.s32 0, %s31
        %s360 = scalar_select %p358, %s359, %s31
        %s361 = sand.u32 %s360, 1
        %s362 = ssub.s32 0, %s361
        %s363 = scalar_select %p358, %s362, %s361
        %p364 = scmp.ne.s32.totalorder %s363, 0
        %p365 = scmp.lt.s32.totalorder %s363, 0
        %p366 = pnand %p365, %p364
        %p367 = pneg %p366
        %s368 = sadd.s32 %s363, 2
        %s369 = scalar_select %p367, %s368, %s363
        %p370 = scmp.eq.s32.totalorder %s31, 0
        // Predicated region
        $region69: #{tpu_custom_call.1} parent=51 // pred_check
          %p371 = pneg %p370
        $region70: #{tpu_custom_call.1} parent=51 // pred_check_branch
          %373 = sbr.rel (%p371) target = $region72
        $region71: #{tpu_custom_call.1} parent=51 // pred_region
          %s374 = smul.u32 %s31, 256
          %s375 = smul.u32 %s30, 544
          %s376 = sadd.s32 %s374, %s375
          %s377 = smul.addr %s376, 16
          %s378 = scalar_lea.hbm %s0, %s377
          %s379 = smul.u32 %s369, 288
          %s380 = scalar_lea.vmem [#allocation2], %s379
          %s381 = scalar_lea.sflag [#allocation3], %s369
          // Predicated region
          $region73: #{tpu_custom_call.1} parent=71 // pred_check
            _
          $region74: #{tpu_custom_call.1} parent=71 // pred_check_branch
            %383 = sbr.rel target = $region76
          $region75: #{tpu_custom_call.1} parent=71 // pred_region
            %384 = sst [smem:[#allocation16]] [#allocation15]
            %385 = sst [smem:[#allocation17]] [#allocation14]
          $region76: #{tpu_custom_call.1} parent=71 // pred_fallthru
            _
          %387 = shalt.err (0)
          %s389 = sshll.u32 %s380, 4
          %s390 = int_to_ptr.vmem [resolvable:$true] %s389
          %392 = dma.hbm_to_vmem [thread:$0]  %s378, 4608, %s390, %s381
        $region72: #{tpu_custom_call.1} parent=51 // pred_fallthru
          _
        %s393 = sadd.s32 %s31, 1
        %p394 = scmp.lt.s32.totalorder %s393, 2
        // Predicated region
        $region77: #{tpu_custom_call.1} parent=51 // pred_check
          %p395 = pneg %p394
        $region78: #{tpu_custom_call.1} parent=51 // pred_check_branch
          %397 = sbr.rel (%p395) target = $region80
        $region79: #{tpu_custom_call.1} parent=51 // pred_region
          %s398 = ssub.s32 1, %s369
          %s399 = smul.u32 %s393, 256
          %s400 = smul.u32 %s30, 544
          %s401 = sadd.s32 %s399, %s400
          %s402 = smul.addr %s401, 16
          %s403 = scalar_lea.hbm %s0, %s402
          %s404 = smul.u32 %s398, 288
          %s405 = scalar_lea.vmem [#allocation2], %s404
          %s406 = scalar_lea.sflag [#allocation3], %s398
          // Predicated region
          $region81: #{tpu_custom_call.1} parent=79 // pred_check
            _
          $region82: #{tpu_custom_call.1} parent=79 // pred_check_branch
            %408 = sbr.rel target = $region84
          $region83: #{tpu_custom_call.1} parent=79 // pred_region
            %409 = sst [smem:[#allocation16]] [#allocation19]
            %410 = sst [smem:[#allocation17]] [#allocation18]
          $region84: #{tpu_custom_call.1} parent=79 // pred_fallthru
            _
          %412 = shalt.err (0)
          %s414 = sshll.u32 %s405, 4
          %s415 = int_to_ptr.vmem [resolvable:$true] %s414
          %417 = dma.hbm_to_vmem [thread:$0]  %s403, 4608, %s415, %s406
        $region80: #{tpu_custom_call.1} parent=51 // pred_fallthru
          _
        %s418 = smul.u32 %s31, 256
        %s419 = smul.u32 %s369, 288
        %s420 = scalar_lea.vmem [#allocation2], %s419
        %s421 = scalar_lea.sflag [#allocation3], %s369
        %s422 = smul.u32 288, 1
        %s423 = sshll.u32 %s422, 4
        %424 = dma.done %s421, %s423
        %v425 = vld [vmem:[%s420] sm:$0xff]
        %v426 = vld [vmem:[%s420 + $0x8] sm:$0xff]
        %v427 = vld [vmem:[%s420 + $0x10] sm:$0xff]
        %v428 = vld [vmem:[%s420 + $0x18] sm:$0xff]
        %v429 = vld [vmem:[%s420 + $0x20] sm:$0xff]
        %v430 = vld [vmem:[%s420 + $0x28] sm:$0xff]
        %v431 = vld [vmem:[%s420 + $0x30] sm:$0xff]
        %v432 = vld [vmem:[%s420 + $0x38] sm:$0xff]
        %v433 = vld [vmem:[%s420 + $0x40] sm:$0xff]
        %v434 = vld [vmem:[%s420 + $0x48] sm:$0xff]
        %v435 = vld [vmem:[%s420 + $0x50] sm:$0xff]
        %v436 = vld [vmem:[%s420 + $0x58] sm:$0xff]
        %v437 = vld [vmem:[%s420 + $0x60] sm:$0xff]
        %v438 = vld [vmem:[%s420 + $0x68] sm:$0xff]
        %v439 = vld [vmem:[%s420 + $0x70] sm:$0xff]
        %v440 = vld [vmem:[%s420 + $0x78] sm:$0xff]
        %v441 = vld [vmem:[%s420 + $0x80] sm:$0xff]
        %v442 = vld [vmem:[%s420 + $0x88] sm:$0xff]
        %v443 = vld [vmem:[%s420 + $0x90] sm:$0xff]
        %v444 = vld [vmem:[%s420 + $0x98] sm:$0xff]
        %v445 = vld [vmem:[%s420 + $0xa0] sm:$0xff]
        %v446 = vld [vmem:[%s420 + $0xa8] sm:$0xff]
        %v447 = vld [vmem:[%s420 + $0xb0] sm:$0xff]
        %v448 = vld [vmem:[%s420 + $0xb8] sm:$0xff]
        %v449 = vld [vmem:[%s420 + $0xc0] sm:$0xff]
        %v450 = vld [vmem:[%s420 + $0xc8] sm:$0xff]
        %v451 = vld [vmem:[%s420 + $0xd0] sm:$0xff]
        %v452 = vld [vmem:[%s420 + $0xd8] sm:$0xff]
        %v453 = vld [vmem:[%s420 + $0xe0] sm:$0xff]
        %v454 = vld [vmem:[%s420 + $0xe8] sm:$0xff]
        %v455 = vld [vmem:[%s420 + $0xf0] sm:$0xff]
        %v456 = vld [vmem:[%s420 + $0xf8] sm:$0xff]
        %v457 = vld [vmem:[%s420 + $0x100] sm:$0xff]
        %v458 = vld [vmem:[%s420 + $0x108] sm:$0xff]
        %v459 = vld [vmem:[%s420 + $0x110] sm:$0xff]
        %v460 = vld [vmem:[%s420 + $0x118] sm:$0xff]
        %461 = vadd.xlane.f32.xlu0 %v425
        %v462 = vpop.xlane.xlu0 %461
        %463 = vadd.xlane.f32.xlu0 %v426
        %v464 = vpop.xlane.xlu0 %463
        %465 = vadd.xlane.f32.xlu0 %v427
        %v466 = vpop.xlane.xlu0 %465
        %467 = vadd.xlane.f32.xlu0 %v428
        %v468 = vpop.xlane.xlu0 %467
        %469 = vadd.xlane.f32.xlu0 %v429
        %v470 = vpop.xlane.xlu0 %469
        %471 = vadd.xlane.f32.xlu0 %v430
        %v472 = vpop.xlane.xlu0 %471
        %473 = vadd.xlane.f32.xlu0 %v431
        %v474 = vpop.xlane.xlu0 %473
        %475 = vadd.xlane.f32.xlu0 %v432
        %v476 = vpop.xlane.xlu0 %475
        %477 = vadd.xlane.f32.xlu0 %v433
        %v478 = vpop.xlane.xlu0 %477
        %479 = vadd.xlane.f32.xlu0 %v434
        %v480 = vpop.xlane.xlu0 %479
        %481 = vadd.xlane.f32.xlu0 %v435
        %v482 = vpop.xlane.xlu0 %481
        %483 = vadd.xlane.f32.xlu0 %v436
        %v484 = vpop.xlane.xlu0 %483
        %485 = vadd.xlane.f32.xlu0 %v437
        %v486 = vpop.xlane.xlu0 %485
        %487 = vadd.xlane.f32.xlu0 %v438
        %v488 = vpop.xlane.xlu0 %487
        %489 = vadd.xlane.f32.xlu0 %v439
        %v490 = vpop.xlane.xlu0 %489
        %491 = vadd.xlane.f32.xlu0 %v440
        %v492 = vpop.xlane.xlu0 %491
        %493 = vadd.xlane.f32.xlu0 %v441
        %v494 = vpop.xlane.xlu0 %493
        %495 = vadd.xlane.f32.xlu0 %v442
        %v496 = vpop.xlane.xlu0 %495
        %497 = vadd.xlane.f32.xlu0 %v443
        %v498 = vpop.xlane.xlu0 %497
        %499 = vadd.xlane.f32.xlu0 %v444
        %v500 = vpop.xlane.xlu0 %499
        %501 = vadd.xlane.f32.xlu0 %v445
        %v502 = vpop.xlane.xlu0 %501
        %503 = vadd.xlane.f32.xlu0 %v446
        %v504 = vpop.xlane.xlu0 %503
        %505 = vadd.xlane.f32.xlu0 %v447
        %v506 = vpop.xlane.xlu0 %505
        %507 = vadd.xlane.f32.xlu0 %v448
        %v508 = vpop.xlane.xlu0 %507
        %509 = vadd.xlane.f32.xlu0 %v449
        %v510 = vpop.xlane.xlu0 %509
        %511 = vadd.xlane.f32.xlu0 %v450
        %v512 = vpop.xlane.xlu0 %511
        %513 = vadd.xlane.f32.xlu0 %v451
        %v514 = vpop.xlane.xlu0 %513
        %515 = vadd.xlane.f32.xlu0 %v452
        %v516 = vpop.xlane.xlu0 %515
        %517 = vadd.xlane.f32.xlu0 %v453
        %v518 = vpop.xlane.xlu0 %517
        %519 = vadd.xlane.f32.xlu0 %v454
        %v520 = vpop.xlane.xlu0 %519
        %521 = vadd.xlane.f32.xlu0 %v455
        %v522 = vpop.xlane.xlu0 %521
        %523 = vadd.xlane.f32.xlu0 %v456
        %v524 = vpop.xlane.xlu0 %523
        %525 = vadd.xlane.f32.xlu0 %v457
        %v526 = vpop.xlane.xlu0 %525
        %527 = vadd.xlane.f32.xlu0 %v458
        %v528 = vpop.xlane.xlu0 %527
        %529 = vadd.xlane.f32.xlu0 %v459
        %v530 = vpop.xlane.xlu0 %529
        %531 = vadd.xlane.f32.xlu0 %v460
        %v532 = vpop.xlane.xlu0 %531
        %v533 = vrcp.pop 128.0
        %v534 = vmul.f32 %v462, %v533
        %v535 = vmul.f32 %v464, %v533
        %v536 = vmul.f32 %v466, %v533
        %v537 = vmul.f32 %v468, %v533
        %v538 = vmul.f32 %v470, %v533
        %v539 = vmul.f32 %v472, %v533
        %v540 = vmul.f32 %v474, %v533
        %v541 = vmul.f32 %v476, %v533
        %v542 = vmul.f32 %v478, %v533
        %v543 = vmul.f32 %v480, %v533
        %v544 = vmul.f32 %v482, %v533
        %v545 = vmul.f32 %v484, %v533
        %v546 = vmul.f32 %v486, %v533
        %v547 = vmul.f32 %v488, %v533
        %v548 = vmul.f32 %v490, %v533
        %v549 = vmul.f32 %v492, %v533
        %v550 = vmul.f32 %v494, %v533
        %v551 = vmul.f32 %v496, %v533
        %v552 = vmul.f32 %v498, %v533
        %v553 = vmul.f32 %v500, %v533
        %v554 = vmul.f32 %v502, %v533
        %v555 = vmul.f32 %v504, %v533
        %v556 = vmul.f32 %v506, %v533
        %v557 = vmul.f32 %v508, %v533
        %v558 = vmul.f32 %v510, %v533
        %v559 = vmul.f32 %v512, %v533
        %v560 = vmul.f32 %v514, %v533
        %v561 = vmul.f32 %v516, %v533
        %v562 = vmul.f32 %v518, %v533
        %v563 = vmul.f32 %v520, %v533
        %v564 = vmul.f32 %v522, %v533
        %v565 = vmul.f32 %v524, %v533
        %v566 = vmul.f32 %v526, %v533
        %v567 = vmul.f32 %v528, %v533
        %v568 = vmul.f32 %v530, %v533
        %v569 = vmul.f32 %v532, %v533
        %v570 = vsub.f32 %v425, %v534
        %v571 = vsub.f32 %v426, %v535
        %v572 = vsub.f32 %v427, %v536
        %v573 = vsub.f32 %v428, %v537
        %v574 = vsub.f32 %v429, %v538
        %v575 = vsub.f32 %v430, %v539
        %v576 = vsub.f32 %v431, %v540
        %v577 = vsub.f32 %v432, %v541
        %v578 = vsub.f32 %v433, %v542
        %v579 = vsub.f32 %v434, %v543
        %v580 = vsub.f32 %v435, %v544
        %v581 = vsub.f32 %v436, %v545
        %v582 = vsub.f32 %v437, %v546
        %v583 = vsub.f32 %v438, %v547
        %v584 = vsub.f32 %v439, %v548
        %v585 = vsub.f32 %v440, %v549
        %v586 = vsub.f32 %v441, %v550
        %v587 = vsub.f32 %v442, %v551
        %v588 = vsub.f32 %v443, %v552
        %v589 = vsub.f32 %v444, %v553
        %v590 = vsub.f32 %v445, %v554
        %v591 = vsub.f32 %v446, %v555
        %v592 = vsub.f32 %v447, %v556
        %v593 = vsub.f32 %v448, %v557
        %v594 = vsub.f32 %v449, %v558
        %v595 = vsub.f32 %v450, %v559
        %v596 = vsub.f32 %v451, %v560
        %v597 = vsub.f32 %v452, %v561
        %v598 = vsub.f32 %v453, %v562
        %v599 = vsub.f32 %v454, %v563
        %v600 = vsub.f32 %v455, %v564
        %v601 = vsub.f32 %v456, %v565
        %v602 = vsub.f32 %v457, %v566
        %v603 = vsub.f32 %v458, %v567
        %v604 = vsub.f32 %v459, %v568
        %v605 = vsub.f32 %v460, %v569
        %v606 = vmul.f32 %v570, %v570
        %v607 = vmul.f32 %v571, %v571
        %v608 = vmul.f32 %v572, %v572
        %v609 = vmul.f32 %v573, %v573
        %v610 = vmul.f32 %v574, %v574
        %v611 = vmul.f32 %v575, %v575
        %v612 = vmul.f32 %v576, %v576
        %v613 = vmul.f32 %v577, %v577
        %v614 = vmul.f32 %v578, %v578
        %v615 = vmul.f32 %v579, %v579
        %v616 = vmul.f32 %v580, %v580
        %v617 = vmul.f32 %v581, %v581
        %v618 = vmul.f32 %v582, %v582
        %v619 = vmul.f32 %v583, %v583
        %v620 = vmul.f32 %v584, %v584
        %v621 = vmul.f32 %v585, %v585
        %v622 = vmul.f32 %v586, %v586
        %v623 = vmul.f32 %v587, %v587
        %v624 = vmul.f32 %v588, %v588
        %v625 = vmul.f32 %v589, %v589
        %v626 = vmul.f32 %v590, %v590
        %v627 = vmul.f32 %v591, %v591
        %v628 = vmul.f32 %v592, %v592
        %v629 = vmul.f32 %v593, %v593
        %v630 = vmul.f32 %v594, %v594
        %v631 = vmul.f32 %v595, %v595
        %v632 = vmul.f32 %v596, %v596
        %v633 = vmul.f32 %v597, %v597
        %v634 = vmul.f32 %v598, %v598
        %v635 = vmul.f32 %v599, %v599
        %v636 = vmul.f32 %v600, %v600
        %v637 = vmul.f32 %v601, %v601
        %v638 = vmul.f32 %v602, %v602
        %v639 = vmul.f32 %v603, %v603
        %v640 = vmul.f32 %v604, %v604
        %v641 = vmul.f32 %v605, %v605
        %642 = vadd.xlane.f32.xlu0 %v606
        %v643 = vpop.xlane.xlu0 %642
        %644 = vadd.xlane.f32.xlu0 %v607
        %v645 = vpop.xlane.xlu0 %644
        %646 = vadd.xlane.f32.xlu0 %v608
        %v647 = vpop.xlane.xlu0 %646
        %648 = vadd.xlane.f32.xlu0 %v609
        %v649 = vpop.xlane.xlu0 %648
        %650 = vadd.xlane.f32.xlu0 %v610
        %v651 = vpop.xlane.xlu0 %650
        %652 = vadd.xlane.f32.xlu0 %v611
        %v653 = vpop.xlane.xlu0 %652
        %654 = vadd.xlane.f32.xlu0 %v612
        %v655 = vpop.xlane.xlu0 %654
        %656 = vadd.xlane.f32.xlu0 %v613
        %v657 = vpop.xlane.xlu0 %656
        %658 = vadd.xlane.f32.xlu0 %v614
        %v659 = vpop.xlane.xlu0 %658
        %660 = vadd.xlane.f32.xlu0 %v615
        %v661 = vpop.xlane.xlu0 %660
        %662 = vadd.xlane.f32.xlu0 %v616
        %v663 = vpop.xlane.xlu0 %662
        %664 = vadd.xlane.f32.xlu0 %v617
        %v665 = vpop.xlane.xlu0 %664
        %666 = vadd.xlane.f32.xlu0 %v618
        %v667 = vpop.xlane.xlu0 %666
        %668 = vadd.xlane.f32.xlu0 %v619
        %v669 = vpop.xlane.xlu0 %668
        %670 = vadd.xlane.f32.xlu0 %v620
        %v671 = vpop.xlane.xlu0 %670
        %672 = vadd.xlane.f32.xlu0 %v621
        %v673 = vpop.xlane.xlu0 %672
        %674 = vadd.xlane.f32.xlu0 %v622
        %v675 = vpop.xlane.xlu0 %674
        %676 = vadd.xlane.f32.xlu0 %v623
        %v677 = vpop.xlane.xlu0 %676
        %678 = vadd.xlane.f32.xlu0 %v624
        %v679 = vpop.xlane.xlu0 %678
        %680 = vadd.xlane.f32.xlu0 %v625
        %v681 = vpop.xlane.xlu0 %680
        %682 = vadd.xlane.f32.xlu0 %v626
        %v683 = vpop.xlane.xlu0 %682
        %684 = vadd.xlane.f32.xlu0 %v627
        %v685 = vpop.xlane.xlu0 %684
        %686 = vadd.xlane.f32.xlu0 %v628
        %v687 = vpop.xlane.xlu0 %686
        %688 = vadd.xlane.f32.xlu0 %v629
        %v689 = vpop.xlane.xlu0 %688
        %690 = vadd.xlane.f32.xlu0 %v630
        %v691 = vpop.xlane.xlu0 %690
        %692 = vadd.xlane.f32.xlu0 %v631
        %v693 = vpop.xlane.xlu0 %692
        %694 = vadd.xlane.f32.xlu0 %v632
        %v695 = vpop.xlane.xlu0 %694
        %696 = vadd.xlane.f32.xlu0 %v633
        %v697 = vpop.xlane.xlu0 %696
        %698 = vadd.xlane.f32.xlu0 %v634
        %v699 = vpop.xlane.xlu0 %698
        %700 = vadd.xlane.f32.xlu0 %v635
        %v701 = vpop.xlane.xlu0 %700
        %702 = vadd.xlane.f32.xlu0 %v636
        %v703 = vpop.xlane.xlu0 %702
        %704 = vadd.xlane.f32.xlu0 %v637
        %v705 = vpop.xlane.xlu0 %704
        %706 = vadd.xlane.f32.xlu0 %v638
        %v707 = vpop.xlane.xlu0 %706
        %708 = vadd.xlane.f32.xlu0 %v639
        %v709 = vpop.xlane.xlu0 %708
        %710 = vadd.xlane.f32.xlu0 %v640
        %v711 = vpop.xlane.xlu0 %710
        %712 = vadd.xlane.f32.xlu0 %v641
        %v713 = vpop.xlane.xlu0 %712
        %v714 = vmul.f32 %v643, %v533
        %v715 = vmul.f32 %v645, %v533
        %v716 = vmul.f32 %v647, %v533
        %v717 = vmul.f32 %v649, %v533
        %v718 = vmul.f32 %v651, %v533
        %v719 = vmul.f32 %v653, %v533
        %v720 = vmul.f32 %v655, %v533
        %v721 = vmul.f32 %v657, %v533
        %v722 = vmul.f32 %v659, %v533
        %v723 = vmul.f32 %v661, %v533
        %v724 = vmul.f32 %v663, %v533
        %v725 = vmul.f32 %v665, %v533
        %v726 = vmul.f32 %v667, %v533
        %v727 = vmul.f32 %v669, %v533
        %v728 = vmul.f32 %v671, %v533
        %v729 = vmul.f32 %v673, %v533
        %v730 = vmul.f32 %v675, %v533
        %v731 = vmul.f32 %v677, %v533
        %v732 = vmul.f32 %v679, %v533
        %v733 = vmul.f32 %v681, %v533
        %v734 = vmul.f32 %v683, %v533
        %v735 = vmul.f32 %v685, %v533
        %v736 = vmul.f32 %v687, %v533
        %v737 = vmul.f32 %v689, %v533
        %v738 = vmul.f32 %v691, %v533
        %v739 = vmul.f32 %v693, %v533
        %v740 = vmul.f32 %v695, %v533
        %v741 = vmul.f32 %v697, %v533
        %v742 = vmul.f32 %v699, %v533
        %v743 = vmul.f32 %v701, %v533
        %v744 = vmul.f32 %v703, %v533
        %v745 = vmul.f32 %v705, %v533
        %v746 = vmul.f32 %v707, %v533
        %v747 = vmul.f32 %v709, %v533
        %v748 = vmul.f32 %v711, %v533
        %v749 = vmul.f32 %v713, %v533
        %v750 = vadd.f32 %v714, 1e-05
        %v751 = vadd.f32 %v715, 1e-05
        %v752 = vadd.f32 %v716, 1e-05
        %v753 = vadd.f32 %v717, 1e-05
        %v754 = vadd.f32 %v718, 1e-05
        %v755 = vadd.f32 %v719, 1e-05
        %v756 = vadd.f32 %v720, 1e-05
        %v757 = vadd.f32 %v721, 1e-05
        %v758 = vadd.f32 %v722, 1e-05
        %v759 = vadd.f32 %v723, 1e-05
        %v760 = vadd.f32 %v724, 1e-05
        %v761 = vadd.f32 %v725, 1e-05
        %v762 = vadd.f32 %v726, 1e-05
        %v763 = vadd.f32 %v727, 1e-05
        %v764 = vadd.f32 %v728, 1e-05
        %v765 = vadd.f32 %v729, 1e-05
        %v766 = vadd.f32 %v730, 1e-05
        %v767 = vadd.f32 %v731, 1e-05
        %v768 = vadd.f32 %v732, 1e-05
        %v769 = vadd.f32 %v733, 1e-05
        %v770 = vadd.f32 %v734, 1e-05
        %v771 = vadd.f32 %v735, 1e-05
        %v772 = vadd.f32 %v736, 1e-05
        %v773 = vadd.f32 %v737, 1e-05
        %v774 = vadd.f32 %v738, 1e-05
        %v775 = vadd.f32 %v739, 1e-05
        %v776 = vadd.f32 %v740, 1e-05
        %v777 = vadd.f32 %v741, 1e-05
        %v778 = vadd.f32 %v742, 1e-05
        %v779 = vadd.f32 %v743, 1e-05
        %v780 = vadd.f32 %v744, 1e-05
        %v781 = vadd.f32 %v745, 1e-05
        %v782 = vadd.f32 %v746, 1e-05
        %v783 = vadd.f32 %v747, 1e-05
        %v784 = vadd.f32 %v748, 1e-05
        %v785 = vadd.f32 %v749, 1e-05
        %v786 = vrsqrt.pop %v750
        %v787 = vrsqrt.pop %v751
        %v788 = vrsqrt.pop %v752
        %v789 = vrsqrt.pop %v753
        %v790 = vrsqrt.pop %v754
        %v791 = vrsqrt.pop %v755
        %v792 = vrsqrt.pop %v756
        %v793 = vrsqrt.pop %v757
        %v794 = vrsqrt.pop %v758
        %v795 = vrsqrt.pop %v759
        %v796 = vrsqrt.pop %v760
        %v797 = vrsqrt.pop %v761
        %v798 = vrsqrt.pop %v762
        %v799 = vrsqrt.pop %v763
        %v800 = vrsqrt.pop %v764
        %v801 = vrsqrt.pop %v765
        %v802 = vrsqrt.pop %v766
        %v803 = vrsqrt.pop %v767
        %v804 = vrsqrt.pop %v768
        %v805 = vrsqrt.pop %v769
        %v806 = vrsqrt.pop %v770
        %v807 = vrsqrt.pop %v771
        %v808 = vrsqrt.pop %v772
        %v809 = vrsqrt.pop %v773
        %v810 = vrsqrt.pop %v774
        %v811 = vrsqrt.pop %v775
        %v812 = vrsqrt.pop %v776
        %v813 = vrsqrt.pop %v777
        %v814 = vrsqrt.pop %v778
        %v815 = vrsqrt.pop %v779
        %v816 = vrsqrt.pop %v780
        %v817 = vrsqrt.pop %v781
        %v818 = vrsqrt.pop %v782
        %v819 = vrsqrt.pop %v783
        %v820 = vrsqrt.pop %v784
        %v821 = vrsqrt.pop %v785
        %v822 = vmul.f32 %v570, %v786
        %v823 = vmul.f32 %v571, %v787
        %v824 = vmul.f32 %v572, %v788
        %v825 = vmul.f32 %v573, %v789
        %v826 = vmul.f32 %v574, %v790
        %v827 = vmul.f32 %v575, %v791
        %v828 = vmul.f32 %v576, %v792
        %v829 = vmul.f32 %v577, %v793
        %v830 = vmul.f32 %v578, %v794
        %v831 = vmul.f32 %v579, %v795
        %v832 = vmul.f32 %v580, %v796
        %v833 = vmul.f32 %v581, %v797
        %v834 = vmul.f32 %v582, %v798
        %v835 = vmul.f32 %v583, %v799
        %v836 = vmul.f32 %v584, %v800
        %v837 = vmul.f32 %v585, %v801
        %v838 = vmul.f32 %v586, %v802
        %v839 = vmul.f32 %v587, %v803
        %v840 = vmul.f32 %v588, %v804
        %v841 = vmul.f32 %v589, %v805
        %v842 = vmul.f32 %v590, %v806
        %v843 = vmul.f32 %v591, %v807
        %v844 = vmul.f32 %v592, %v808
        %v845 = vmul.f32 %v593, %v809
        %v846 = vmul.f32 %v594, %v810
        %v847 = vmul.f32 %v595, %v811
        %v848 = vmul.f32 %v596, %v812
        %v849 = vmul.f32 %v597, %v813
        %v850 = vmul.f32 %v598, %v814
        %v851 = vmul.f32 %v599, %v815
        %v852 = vmul.f32 %v600, %v816
        %v853 = vmul.f32 %v601, %v817
        %v854 = vmul.f32 %v602, %v818
        %v855 = vmul.f32 %v603, %v819
        %v856 = vmul.f32 %v604, %v820
        %v857 = vmul.f32 %v605, %v821
        %v858 = vld [vmem:[%s1] sm:$0x1]
        %v860 = vlaneseq
        %v861 = vshrl.u32 %v860, 7
        %v862 = vsub.s32 0, %v861
        %v863 = vrot.slane %v858, %v862
        %v865 = vmul.f32 %v822, %v863
        %v866 = vmul.f32 %v823, %v863
        %v867 = vmul.f32 %v824, %v863
        %v868 = vmul.f32 %v825, %v863
        %v869 = vmul.f32 %v826, %v863
        %v870 = vmul.f32 %v827, %v863
        %v871 = vmul.f32 %v828, %v863
        %v872 = vmul.f32 %v829, %v863
        %v873 = vmul.f32 %v830, %v863
        %v874 = vmul.f32 %v831, %v863
        %v875 = vmul.f32 %v832, %v863
        %v876 = vmul.f32 %v833, %v863
        %v877 = vmul.f32 %v834, %v863
        %v878 = vmul.f32 %v835, %v863
        %v879 = vmul.f32 %v836, %v863
        %v880 = vmul.f32 %v837, %v863
        %v881 = vmul.f32 %v838, %v863
        %v882 = vmul.f32 %v839, %v863
        %v883 = vmul.f32 %v840, %v863
        %v884 = vmul.f32 %v841, %v863
        %v885 = vmul.f32 %v842, %v863
        %v886 = vmul.f32 %v843, %v863
        %v887 = vmul.f32 %v844, %v863
        %v888 = vmul.f32 %v845, %v863
        %v889 = vmul.f32 %v846, %v863
        %v890 = vmul.f32 %v847, %v863
        %v891 = vmul.f32 %v848, %v863
        %v892 = vmul.f32 %v849, %v863
        %v893 = vmul.f32 %v850, %v863
        %v894 = vmul.f32 %v851, %v863
        %v895 = vmul.f32 %v852, %v863
        %v896 = vmul.f32 %v853, %v863
        %v897 = vmul.f32 %v854, %v863
        %v898 = vmul.f32 %v855, %v863
        %v899 = vmul.f32 %v856, %v863
        %v900 = vmul.f32 %v857, %v863
        %v901 = vld [vmem:[#allocation5] sm:$0x1]
        %v903 = vlaneseq
        %v904 = vshrl.u32 %v903, 7
        %v905 = vsub.s32 0, %v904
        %v906 = vrot.slane %v901, %v905
        %v908 = vadd.f32 %v865, %v906
        %v909 = vadd.f32 %v866, %v906
        %v910 = vadd.f32 %v867, %v906
        %v911 = vadd.f32 %v868, %v906
        %v912 = vadd.f32 %v869, %v906
        %v913 = vadd.f32 %v870, %v906
        %v914 = vadd.f32 %v871, %v906
        %v915 = vadd.f32 %v872, %v906
        %v916 = vadd.f32 %v873, %v906
        %v917 = vadd.f32 %v874, %v906
        %v918 = vadd.f32 %v875, %v906
        %v919 = vadd.f32 %v876, %v906
        %v920 = vadd.f32 %v877, %v906
        %v921 = vadd.f32 %v878, %v906
        %v922 = vadd.f32 %v879, %v906
        %v923 = vadd.f32 %v880, %v906
        %v924 = vadd.f32 %v881, %v906
        %v925 = vadd.f32 %v882, %v906
        %v926 = vadd.f32 %v883, %v906
        %v927 = vadd.f32 %v884, %v906
        %v928 = vadd.f32 %v885, %v906
        %v929 = vadd.f32 %v886, %v906
        %v930 = vadd.f32 %v887, %v906
        %v931 = vadd.f32 %v888, %v906
        %v932 = vadd.f32 %v889, %v906
        %v933 = vadd.f32 %v890, %v906
        %v934 = vadd.f32 %v891, %v906
        %v935 = vadd.f32 %v892, %v906
        %v936 = vadd.f32 %v893, %v906
        %v937 = vadd.f32 %v894, %v906
        %v938 = vadd.f32 %v895, %v906
        %v939 = vadd.f32 %v896, %v906
        %v940 = vadd.f32 %v897, %v906
        %v941 = vadd.f32 %v898, %v906
        %v942 = vadd.f32 %v899, %v906
        %v943 = vadd.f32 %v900, %v906
        %v944 = vpack.c.bf16 %v909, %v908
        %v945 = vpack.c.bf16 %v911, %v910
        %v946 = vpack.c.bf16 %v913, %v912
        %v947 = vpack.c.bf16 %v915, %v914
        %v948 = vpack.c.bf16 %v917, %v916
        %v949 = vpack.c.bf16 %v919, %v918
        %v950 = vpack.c.bf16 %v921, %v920
        %v951 = vpack.c.bf16 %v923, %v922
        %v952 = vpack.c.bf16 %v925, %v924
        %v953 = vpack.c.bf16 %v927, %v926
        %v954 = vpack.c.bf16 %v929, %v928
        %v955 = vpack.c.bf16 %v931, %v930
        %v956 = vpack.c.bf16 %v933, %v932
        %v957 = vpack.c.bf16 %v935, %v934
        %v958 = vpack.c.bf16 %v937, %v936
        %v959 = vpack.c.bf16 %v939, %v938
        %v960 = vpack.c.bf16 %v941, %v940
        %v961 = vpack.c.bf16 %v943, %v942
        %v962 = vld [vmem:[#allocation8] sm:$0xff]
        %v963 = vld [vmem:[#allocation8 + $0x8] sm:$0xff]
        %v964 = vld [vmem:[#allocation8 + $0x10] sm:$0xff]
        %v965 = vld [vmem:[#allocation8 + $0x18] sm:$0xff]
        %v966 = vld [vmem:[#allocation8 + $0x20] sm:$0xff]
        %v967 = vld [vmem:[#allocation8 + $0x28] sm:$0xff]
        %v968 = vld [vmem:[#allocation8 + $0x30] sm:$0xff]
        %v969 = vld [vmem:[#allocation8 + $0x38] sm:$0xff]
        %v970 = vld [vmem:[#allocation8 + $0x40] sm:$0xff]
        %v971 = vld [vmem:[#allocation8 + $0x48] sm:$0xff]
        %v972 = vld [vmem:[#allocation8 + $0x50] sm:$0xff]
        %v973 = vld [vmem:[#allocation8 + $0x58] sm:$0xff]
        %v974 = vld [vmem:[#allocation8 + $0x60] sm:$0xff]
        %v975 = vld [vmem:[#allocation8 + $0x68] sm:$0xff]
        %v976 = vld [vmem:[#allocation8 + $0x70] sm:$0xff]
        %v977 = vld [vmem:[#allocation8 + $0x78] sm:$0xff]
        %v978 = vld [vmem:[%s4] sm:$0x3]
        %v980 = vlaneseq
        %v981 = vshrl.u32 %v980, 7
        %v982 = vsub.s32 0, %v981
        %v983 = vrot.slane %v978, %v982
        %v984 = vlaneseq
        %v985 = vshrl.u32 %v984, 7
        %v986 = vsub.s32 1, %v985
        %v987 = vrot.slane %v978, %v986
        %v1006 = vunpack.c.l.b16 %v962
        %v1007 = vunpack.c.h.b16 %v962
        %v1008 = vunpack.c.l.b16 %v963
        %v1009 = vunpack.c.h.b16 %v963
        %v1010 = vunpack.c.l.b16 %v964
        %v1011 = vunpack.c.h.b16 %v964
        %v1012 = vunpack.c.l.b16 %v965
        %v1013 = vunpack.c.h.b16 %v965
        %v1014 = vunpack.c.l.b16 %v966
        %v1015 = vunpack.c.h.b16 %v966
        %v1016 = vunpack.c.l.b16 %v967
        %v1017 = vunpack.c.h.b16 %v967
        %v1018 = vunpack.c.l.b16 %v968
        %v1019 = vunpack.c.h.b16 %v968
        %v1020 = vunpack.c.l.b16 %v969
        %v1021 = vunpack.c.h.b16 %v969
        %v1022 = vunpack.c.l.b16 %v970
        %v1023 = vunpack.c.h.b16 %v970
        %v1024 = vunpack.c.l.b16 %v971
        %v1025 = vunpack.c.h.b16 %v971
        %v1026 = vunpack.c.l.b16 %v972
        %v1027 = vunpack.c.h.b16 %v972
        %v1028 = vunpack.c.l.b16 %v973
        %v1029 = vunpack.c.h.b16 %v973
        %v1030 = vunpack.c.l.b16 %v974
        %v1031 = vunpack.c.h.b16 %v974
        %v1032 = vunpack.c.l.b16 %v975
        %v1033 = vunpack.c.h.b16 %v975
        %v1034 = vunpack.c.l.b16 %v976
        %v1035 = vunpack.c.h.b16 %v976
        %v1036 = vunpack.c.l.b16 %v977
        %v1037 = vunpack.c.h.b16 %v977
        %v1038 = vpack.c.b16 %v1008, %v1006
        %v1039 = vpack.c.b16 %v1009, %v1007
        %v1040 = vpack.c.b16 %v1012, %v1010
        %v1041 = vpack.c.b16 %v1013, %v1011
        %v1042 = vpack.c.b16 %v1016, %v1014
        %v1043 = vpack.c.b16 %v1017, %v1015
        %v1044 = vpack.c.b16 %v1020, %v1018
        %v1045 = vpack.c.b16 %v1021, %v1019
        %v1046 = vpack.c.b16 %v1024, %v1022
        %v1047 = vpack.c.b16 %v1025, %v1023
        %v1048 = vpack.c.b16 %v1028, %v1026
        %v1049 = vpack.c.b16 %v1029, %v1027
        %v1050 = vpack.c.b16 %v1032, %v1030
        %v1051 = vpack.c.b16 %v1033, %v1031
        %v1052 = vpack.c.b16 %v1036, %v1034
        %v1053 = vpack.c.b16 %v1037, %v1035
        %1070 = vmatprep.subr.bf16.mxu0 %v1053
        %1071 = vmatpush1.bf16.msra.mxu0 %v1052
        %1072 = vmatprep.subr.bf16.mxu0 %v1051
        %1073 = vmatpush1.bf16.msra.mxu0 %v1050
        %1074 = vmatprep.subr.bf16.mxu0 %v1049
        %1075 = vmatpush1.bf16.msra.mxu0 %v1048
        %1076 = vmatprep.subr.bf16.mxu0 %v1047
        %1077 = vmatpush1.bf16.msra.mxu0 %v1046
        %1078 = vmatprep.subr.bf16.mxu0 %v1045
        %1079 = vmatpush1.bf16.msra.mxu0 %v1044
        %1080 = vmatprep.subr.bf16.mxu0 %v1043
        %1081 = vmatpush1.bf16.msra.mxu0 %v1042
        %1082 = vmatprep.subr.bf16.mxu0 %v1041
        %1083 = vmatpush1.bf16.msra.mxu0 %v1040
        %1084 = vmatprep.subr.bf16.mxu0 %v1039
        %1085 = vmatpush1.bf16.msra.mxu0 %v1038
        %1086 = vmatprep.subr.bf16.mxu0 0
        %1087 = vmatpush2.bf16.msra.mxu0 0
        %1088 = vmatprep.subr.bf16.mxu0 0
        %1089 = vmatpush2.bf16.msra.mxu0 0
        %1090 = vmatprep.subr.bf16.mxu0 0
        %1091 = vmatpush2.bf16.msra.mxu0 0
        %1092 = vmatprep.subr.bf16.mxu0 0
        %1093 = vmatpush2.bf16.msra.mxu0 0
        %1094 = vmatprep.subr.bf16.mxu0 0
        %1095 = vmatpush2.bf16.msra.mxu0 0
        %1096 = vmatprep.subr.bf16.mxu0 0
        %1097 = vmatpush2.bf16.msra.mxu0 0
        %1098 = vmatprep.subr.bf16.mxu0 0
        %1099 = vmatpush2.bf16.msra.mxu0 0
        %1100 = vmatprep.subr.bf16.mxu0 0
        %1101 = vmatpush2.bf16.msra.mxu0 0
        %1102 = vmatprep.mubr.bf16.mxu0 0
        %1103 = vmatmul.mubr.bf16.gmra.mxu0 %v944
        %v1104 = vpop.f32.mrf.mxu0
        %v1105 = vadd.f32 %v983, %v1104
        %v1106 = vpop.f32.mrf.mxu0
        %v1107 = vadd.f32 %v987, %v1106
        %v1108 = vpop.f32.mrf.mxu0
        %v1109 = vadd.f32 %v983, %v1108
        %v1110 = vpop.f32.mrf.mxu0
        %v1111 = vadd.f32 %v987, %v1110
        %1112 = vmatprep.mubr.bf16.mxu0 0
        %1113 = vmatmul.mubr.bf16.gmra.mxu0 %v945
        %v1114 = vpop.f32.mrf.mxu0
        %v1115 = vadd.f32 %v983, %v1114
        %v1116 = vpop.f32.mrf.mxu0
        %v1117 = vadd.f32 %v987, %v1116
        %v1118 = vpop.f32.mrf.mxu0
        %v1119 = vadd.f32 %v983, %v1118
        %v1120 = vpop.f32.mrf.mxu0
        %v1121 = vadd.f32 %v987, %v1120
        %1122 = vmatprep.mubr.bf16.mxu0 0
        %1123 = vmatmul.mubr.bf16.gmra.mxu0 %v946
        %v1124 = vpop.f32.mrf.mxu0
        %v1125 = vadd.f32 %v983, %v1124
        %v1126 = vpop.f32.mrf.mxu0
        %v1127 = vadd.f32 %v987, %v1126
        %v1128 = vpop.f32.mrf.mxu0
        %v1129 = vadd.f32 %v983, %v1128
        %v1130 = vpop.f32.mrf.mxu0
        %v1131 = vadd.f32 %v987, %v1130
        %1132 = vmatprep.mubr.bf16.mxu0 0
        %1133 = vmatmul.mubr.bf16.gmra.mxu0 %v947
        %v1134 = vpop.f32.mrf.mxu0
        %v1135 = vadd.f32 %v983, %v1134
        %v1136 = vpop.f32.mrf.mxu0
        %v1137 = vadd.f32 %v987, %v1136
        %v1138 = vpop.f32.mrf.mxu0
        %v1139 = vadd.f32 %v983, %v1138
        %v1140 = vpop.f32.mrf.mxu0
        %v1141 = vadd.f32 %v987, %v1140
        %1142 = vmatprep.mubr.bf16.mxu0 0
        %1143 = vmatmul.mubr.bf16.gmra.mxu0 %v948
        %v1144 = vpop.f32.mrf.mxu0
        %v1145 = vadd.f32 %v983, %v1144
        %v1146 = vpop.f32.mrf.mxu0
        %v1147 = vadd.f32 %v987, %v1146
        %v1148 = vpop.f32.mrf.mxu0
        %v1149 = vadd.f32 %v983, %v1148
        %v1150 = vpop.f32.mrf.mxu0
        %v1151 = vadd.f32 %v987, %v1150
        %1152 = vmatprep.mubr.bf16.mxu0 0
        %1153 = vmatmul.mubr.bf16.gmra.mxu0 %v949
        %v1154 = vpop.f32.mrf.mxu0
        %v1155 = vadd.f32 %v983, %v1154
        %v1156 = vpop.f32.mrf.mxu0
        %v1157 = vadd.f32 %v987, %v1156
        %v1158 = vpop.f32.mrf.mxu0
        %v1159 = vadd.f32 %v983, %v1158
        %v1160 = vpop.f32.mrf.mxu0
        %v1161 = vadd.f32 %v987, %v1160
        %1162 = vmatprep.mubr.bf16.mxu0 0
        %1163 = vmatmul.mubr.bf16.gmra.mxu0 %v950
        %v1164 = vpop.f32.mrf.mxu0
        %v1165 = vadd.f32 %v983, %v1164
        %v1166 = vpop.f32.mrf.mxu0
        %v1167 = vadd.f32 %v987, %v1166
        %v1168 = vpop.f32.mrf.mxu0
        %v1169 = vadd.f32 %v983, %v1168
        %v1170 = vpop.f32.mrf.mxu0
        %v1171 = vadd.f32 %v987, %v1170
        %1172 = vmatprep.mubr.bf16.mxu0 0
        %1173 = vmatmul.mubr.bf16.gmra.mxu0 %v951
        %v1174 = vpop.f32.mrf.mxu0
        %v1175 = vadd.f32 %v983, %v1174
        %v1176 = vpop.f32.mrf.mxu0
        %v1177 = vadd.f32 %v987, %v1176
        %v1178 = vpop.f32.mrf.mxu0
        %v1179 = vadd.f32 %v983, %v1178
        %v1180 = vpop.f32.mrf.mxu0
        %v1181 = vadd.f32 %v987, %v1180
        %1182 = vmatprep.mubr.bf16.mxu0 0
        %1183 = vmatmul.mubr.bf16.gmra.mxu0 %v952
        %v1184 = vpop.f32.mrf.mxu0
        %v1185 = vadd.f32 %v983, %v1184
        %v1186 = vpop.f32.mrf.mxu0
        %v1187 = vadd.f32 %v987, %v1186
        %v1188 = vpop.f32.mrf.mxu0
        %v1189 = vadd.f32 %v983, %v1188
        %v1190 = vpop.f32.mrf.mxu0
        %v1191 = vadd.f32 %v987, %v1190
        %1192 = vmatprep.mubr.bf16.mxu0 0
        %1193 = vmatmul.mubr.bf16.gmra.mxu0 %v953
        %v1194 = vpop.f32.mrf.mxu0
        %v1195 = vadd.f32 %v983, %v1194
        %v1196 = vpop.f32.mrf.mxu0
        %v1197 = vadd.f32 %v987, %v1196
        %v1198 = vpop.f32.mrf.mxu0
        %v1199 = vadd.f32 %v983, %v1198
        %v1200 = vpop.f32.mrf.mxu0
        %v1201 = vadd.f32 %v987, %v1200
        %1202 = vmatprep.mubr.bf16.mxu0 0
        %1203 = vmatmul.mubr.bf16.gmra.mxu0 %v954
        %v1204 = vpop.f32.mrf.mxu0
        %v1205 = vadd.f32 %v983, %v1204
        %v1206 = vpop.f32.mrf.mxu0
        %v1207 = vadd.f32 %v987, %v1206
        %v1208 = vpop.f32.mrf.mxu0
        %v1209 = vadd.f32 %v983, %v1208
        %v1210 = vpop.f32.mrf.mxu0
        %v1211 = vadd.f32 %v987, %v1210
        %1212 = vmatprep.mubr.bf16.mxu0 0
        %1213 = vmatmul.mubr.bf16.gmra.mxu0 %v955
        %v1214 = vpop.f32.mrf.mxu0
        %v1215 = vadd.f32 %v983, %v1214
        %v1216 = vpop.f32.mrf.mxu0
        %v1217 = vadd.f32 %v987, %v1216
        %v1218 = vpop.f32.mrf.mxu0
        %v1219 = vadd.f32 %v983, %v1218
        %v1220 = vpop.f32.mrf.mxu0
        %v1221 = vadd.f32 %v987, %v1220
        %1222 = vmatprep.mubr.bf16.mxu0 0
        %1223 = vmatmul.mubr.bf16.gmra.mxu0 %v956
        %v1224 = vpop.f32.mrf.mxu0
        %v1225 = vadd.f32 %v983, %v1224
        %v1226 = vpop.f32.mrf.mxu0
        %v1227 = vadd.f32 %v987, %v1226
        %v1228 = vpop.f32.mrf.mxu0
        %v1229 = vadd.f32 %v983, %v1228
        %v1230 = vpop.f32.mrf.mxu0
        %v1231 = vadd.f32 %v987, %v1230
        %1232 = vmatprep.mubr.bf16.mxu0 0
        %1233 = vmatmul.mubr.bf16.gmra.mxu0 %v957
        %v1234 = vpop.f32.mrf.mxu0
        %v1235 = vadd.f32 %v983, %v1234
        %v1236 = vpop.f32.mrf.mxu0
        %v1237 = vadd.f32 %v987, %v1236
        %v1238 = vpop.f32.mrf.mxu0
        %v1239 = vadd.f32 %v983, %v1238
        %v1240 = vpop.f32.mrf.mxu0
        %v1241 = vadd.f32 %v987, %v1240
        %1242 = vmatprep.mubr.bf16.mxu0 0
        %1243 = vmatmul.mubr.bf16.gmra.mxu0 %v958
        %v1244 = vpop.f32.mrf.mxu0
        %v1245 = vadd.f32 %v983, %v1244
        %v1246 = vpop.f32.mrf.mxu0
        %v1247 = vadd.f32 %v987, %v1246
        %v1248 = vpop.f32.mrf.mxu0
        %v1249 = vadd.f32 %v983, %v1248
        %v1250 = vpop.f32.mrf.mxu0
        %v1251 = vadd.f32 %v987, %v1250
        %1252 = vmatprep.mubr.bf16.mxu0 0
        %1253 = vmatmul.mubr.bf16.gmra.mxu0 %v959
        %v1254 = vpop.f32.mrf.mxu0
        %v1255 = vadd.f32 %v983, %v1254
        %v1256 = vpop.f32.mrf.mxu0
        %v1257 = vadd.f32 %v987, %v1256
        %v1258 = vpop.f32.mrf.mxu0
        %v1259 = vadd.f32 %v983, %v1258
        %v1260 = vpop.f32.mrf.mxu0
        %v1261 = vadd.f32 %v987, %v1260
        %1262 = vmatprep.mubr.bf16.mxu0 0
        %1263 = vmatmul.mubr.bf16.gmra.mxu0 %v960
        %v1264 = vpop.f32.mrf.mxu0
        %v1265 = vadd.f32 %v983, %v1264
        %v1266 = vpop.f32.mrf.mxu0
        %v1267 = vadd.f32 %v987, %v1266
        %v1268 = vpop.f32.mrf.mxu0
        %v1269 = vadd.f32 %v983, %v1268
        %v1270 = vpop.f32.mrf.mxu0
        %v1271 = vadd.f32 %v987, %v1270
        %1272 = vmatprep.mubr.bf16.mxu0 0
        %1273 = vmatmul.mubr.bf16.gmra.mxu0 %v961
        %v1274 = vpop.f32.mrf.mxu0
        %v1275 = vadd.f32 %v983, %v1274
        %v1276 = vpop.f32.mrf.mxu0
        %v1277 = vadd.f32 %v987, %v1276
        %v1278 = vpop.f32.mrf.mxu0
        %v1279 = vadd.f32 %v983, %v1278
        %v1280 = vpop.f32.mrf.mxu0
        %v1281 = vadd.f32 %v987, %v1280
        %1282 = vdwg.mxu0
        %v1283 = vsub.f32 0.0, %v1107
        %v1284 = vsub.f32 0.0, %v1111
        %v1285 = vsub.f32 0.0, %v1117
        %v1286 = vsub.f32 0.0, %v1121
        %v1287 = vsub.f32 0.0, %v1127
        %v1288 = vsub.f32 0.0, %v1131
        %v1289 = vsub.f32 0.0, %v1137
        %v1290 = vsub.f32 0.0, %v1141
        %v1291 = vsub.f32 0.0, %v1147
        %v1292 = vsub.f32 0.0, %v1151
        %v1293 = vsub.f32 0.0, %v1157
        %v1294 = vsub.f32 0.0, %v1161
        %v1295 = vsub.f32 0.0, %v1167
        %v1296 = vsub.f32 0.0, %v1171
        %v1297 = vsub.f32 0.0, %v1177
        %v1298 = vsub.f32 0.0, %v1181
        %v1299 = vsub.f32 0.0, %v1187
        %v1300 = vsub.f32 0.0, %v1191
        %v1301 = vsub.f32 0.0, %v1197
        %v1302 = vsub.f32 0.0, %v1201
        %v1303 = vsub.f32 0.0, %v1207
        %v1304 = vsub.f32 0.0, %v1211
        %v1305 = vsub.f32 0.0, %v1217
        %v1306 = vsub.f32 0.0, %v1221
        %v1307 = vsub.f32 0.0, %v1227
        %v1308 = vsub.f32 0.0, %v1231
        %v1309 = vsub.f32 0.0, %v1237
        %v1310 = vsub.f32 0.0, %v1241
        %v1311 = vsub.f32 0.0, %v1247
        %v1312 = vsub.f32 0.0, %v1251
        %v1313 = vsub.f32 0.0, %v1257
        %v1314 = vsub.f32 0.0, %v1261
        %v1315 = vsub.f32 0.0, %v1267
        %v1316 = vsub.f32 0.0, %v1271
        %v1317 = vsub.f32 0.0, %v1277
        %v1318 = vsub.f32 0.0, %v1281
        %v1319 = vmul.f32 %v1283, 1.442695
        %v1320 = vpow.pop %v1319
        %v1321 = vmul.f32 %v1284, 1.442695
        %v1322 = vpow.pop %v1321
        %v1323 = vmul.f32 %v1285, 1.442695
        %v1324 = vpow.pop %v1323
        %v1325 = vmul.f32 %v1286, 1.442695
        %v1326 = vpow.pop %v1325
        %v1327 = vmul.f32 %v1287, 1.442695
        %v1328 = vpow.pop %v1327
        %v1329 = vmul.f32 %v1288, 1.442695
        %v1330 = vpow.pop %v1329
        %v1331 = vmul.f32 %v1289, 1.442695
        %v1332 = vpow.pop %v1331
        %v1333 = vmul.f32 %v1290, 1.442695
        %v1334 = vpow.pop %v1333
        %v1335 = vmul.f32 %v1291, 1.442695
        %v1336 = vpow.pop %v1335
        %v1337 = vmul.f32 %v1292, 1.442695
        %v1338 = vpow.pop %v1337
        %v1339 = vmul.f32 %v1293, 1.442695
        %v1340 = vpow.pop %v1339
        %v1341 = vmul.f32 %v1294, 1.442695
        %v1342 = vpow.pop %v1341
        %v1343 = vmul.f32 %v1295, 1.442695
        %v1344 = vpow.pop %v1343
        %v1345 = vmul.f32 %v1296, 1.442695
        %v1346 = vpow.pop %v1345
        %v1347 = vmul.f32 %v1297, 1.442695
        %v1348 = vpow.pop %v1347
        %v1349 = vmul.f32 %v1298, 1.442695
        %v1350 = vpow.pop %v1349
        %v1351 = vmul.f32 %v1299, 1.442695
        %v1352 = vpow.pop %v1351
        %v1353 = vmul.f32 %v1300, 1.442695
        %v1354 = vpow.pop %v1353
        %v1355 = vmul.f32 %v1301, 1.442695
        %v1356 = vpow.pop %v1355
        %v1357 = vmul.f32 %v1302, 1.442695
        %v1358 = vpow.pop %v1357
        %v1359 = vmul.f32 %v1303, 1.442695
        %v1360 = vpow.pop %v1359
        %v1361 = vmul.f32 %v1304, 1.442695
        %v1362 = vpow.pop %v1361
        %v1363 = vmul.f32 %v1305, 1.442695
        %v1364 = vpow.pop %v1363
        %v1365 = vmul.f32 %v1306, 1.442695
        %v1366 = vpow.pop %v1365
        %v1367 = vmul.f32 %v1307, 1.442695
        %v1368 = vpow.pop %v1367
        %v1369 = vmul.f32 %v1308, 1.442695
        %v1370 = vpow.pop %v1369
        %v1371 = vmul.f32 %v1309, 1.442695
        %v1372 = vpow.pop %v1371
        %v1373 = vmul.f32 %v1310, 1.442695
        %v1374 = vpow.pop %v1373
        %v1375 = vmul.f32 %v1311, 1.442695
        %v1376 = vpow.pop %v1375
        %v1377 = vmul.f32 %v1312, 1.442695
        %v1378 = vpow.pop %v1377
        %v1379 = vmul.f32 %v1313, 1.442695
        %v1380 = vpow.pop %v1379
        %v1381 = vmul.f32 %v1314, 1.442695
        %v1382 = vpow.pop %v1381
        %v1383 = vmul.f32 %v1315, 1.442695
        %v1384 = vpow.pop %v1383
        %v1385 = vmul.f32 %v1316, 1.442695
        %v1386 = vpow.pop %v1385
        %v1387 = vmul.f32 %v1317, 1.442695
        %v1388 = vpow.pop %v1387
        %v1389 = vmul.f32 %v1318, 1.442695
        %v1390 = vpow.pop %v1389
        %v1391 = vadd.f32 %v1320, 1.0
        %v1392 = vadd.f32 %v1322, 1.0
        %v1393 = vadd.f32 %v1324, 1.0
        %v1394 = vadd.f32 %v1326, 1.0
        %v1395 = vadd.f32 %v1328, 1.0
        %v1396 = vadd.f32 %v1330, 1.0
        %v1397 = vadd.f32 %v1332, 1.0
        %v1398 = vadd.f32 %v1334, 1.0
        %v1399 = vadd.f32 %v1336, 1.0
        %v1400 = vadd.f32 %v1338, 1.0
        %v1401 = vadd.f32 %v1340, 1.0
        %v1402 = vadd.f32 %v1342, 1.0
        %v1403 = vadd.f32 %v1344, 1.0
        %v1404 = vadd.f32 %v1346, 1.0
        %v1405 = vadd.f32 %v1348, 1.0
        %v1406 = vadd.f32 %v1350, 1.0
        %v1407 = vadd.f32 %v1352, 1.0
        %v1408 = vadd.f32 %v1354, 1.0
        %v1409 = vadd.f32 %v1356, 1.0
        %v1410 = vadd.f32 %v1358, 1.0
        %v1411 = vadd.f32 %v1360, 1.0
        %v1412 = vadd.f32 %v1362, 1.0
        %v1413 = vadd.f32 %v1364, 1.0
        %v1414 = vadd.f32 %v1366, 1.0
        %v1415 = vadd.f32 %v1368, 1.0
        %v1416 = vadd.f32 %v1370, 1.0
        %v1417 = vadd.f32 %v1372, 1.0
        %v1418 = vadd.f32 %v1374, 1.0
        %v1419 = vadd.f32 %v1376, 1.0
        %v1420 = vadd.f32 %v1378, 1.0
        %v1421 = vadd.f32 %v1380, 1.0
        %v1422 = vadd.f32 %v1382, 1.0
        %v1423 = vadd.f32 %v1384, 1.0
        %v1424 = vadd.f32 %v1386, 1.0
        %v1425 = vadd.f32 %v1388, 1.0
        %v1426 = vadd.f32 %v1390, 1.0
        %v1427 = vrcp.pop %v1391
        %v1428 = vrcp.pop %v1392
        %v1429 = vrcp.pop %v1393
        %v1430 = vrcp.pop %v1394
        %v1431 = vrcp.pop %v1395
        %v1432 = vrcp.pop %v1396
        %v1433 = vrcp.pop %v1397
        %v1434 = vrcp.pop %v1398
        %v1435 = vrcp.pop %v1399
        %v1436 = vrcp.pop %v1400
        %v1437 = vrcp.pop %v1401
        %v1438 = vrcp.pop %v1402
        %v1439 = vrcp.pop %v1403
        %v1440 = vrcp.pop %v1404
        %v1441 = vrcp.pop %v1405
        %v1442 = vrcp.pop %v1406
        %v1443 = vrcp.pop %v1407
        %v1444 = vrcp.pop %v1408
        %v1445 = vrcp.pop %v1409
        %v1446 = vrcp.pop %v1410
        %v1447 = vrcp.pop %v1411
        %v1448 = vrcp.pop %v1412
        %v1449 = vrcp.pop %v1413
        %v1450 = vrcp.pop %v1414
        %v1451 = vrcp.pop %v1415
        %v1452 = vrcp.pop %v1416
        %v1453 = vrcp.pop %v1417
        %v1454 = vrcp.pop %v1418
        %v1455 = vrcp.pop %v1419
        %v1456 = vrcp.pop %v1420
        %v1457 = vrcp.pop %v1421
        %v1458 = vrcp.pop %v1422
        %v1459 = vrcp.pop %v1423
        %v1460 = vrcp.pop %v1424
        %v1461 = vrcp.pop %v1425
        %v1462 = vrcp.pop %v1426
        %v1463 = vmul.f32 %v1105, %v1427
        %v1464 = vmul.f32 %v1109, %v1428
        %v1465 = vmul.f32 %v1115, %v1429
        %v1466 = vmul.f32 %v1119, %v1430
        %v1467 = vmul.f32 %v1125, %v1431
        %v1468 = vmul.f32 %v1129, %v1432
        %v1469 = vmul.f32 %v1135, %v1433
        %v1470 = vmul.f32 %v1139, %v1434
        %v1471 = vmul.f32 %v1145, %v1435
        %v1472 = vmul.f32 %v1149, %v1436
        %v1473 = vmul.f32 %v1155, %v1437
        %v1474 = vmul.f32 %v1159, %v1438
        %v1475 = vmul.f32 %v1165, %v1439
        %v1476 = vmul.f32 %v1169, %v1440
        %v1477 = vmul.f32 %v1175, %v1441
        %v1478 = vmul.f32 %v1179, %v1442
        %v1479 = vmul.f32 %v1185, %v1443
        %v1480 = vmul.f32 %v1189, %v1444
        %v1481 = vmul.f32 %v1195, %v1445
        %v1482 = vmul.f32 %v1199, %v1446
        %v1483 = vmul.f32 %v1205, %v1447
        %v1484 = vmul.f32 %v1209, %v1448
        %v1485 = vmul.f32 %v1215, %v1449
        %v1486 = vmul.f32 %v1219, %v1450
        %v1487 = vmul.f32 %v1225, %v1451
        %v1488 = vmul.f32 %v1229, %v1452
        %v1489 = vmul.f32 %v1235, %v1453
        %v1490 = vmul.f32 %v1239, %v1454
        %v1491 = vmul.f32 %v1245, %v1455
        %v1492 = vmul.f32 %v1249, %v1456
        %v1493 = vmul.f32 %v1255, %v1457
        %v1494 = vmul.f32 %v1259, %v1458
        %v1495 = vmul.f32 %v1265, %v1459
        %v1496 = vmul.f32 %v1269, %v1460
        %v1497 = vmul.f32 %v1275, %v1461
        %v1498 = vmul.f32 %v1279, %v1462
        %s1499 = smul.u32 %s393, 256
        %s1500 = sadd.s32 %s1499, 16
        %p1501 = scmp.gt.s32.totalorder %s1500, 512
        %p1502 = por %p370, %p1501
        // Predicated region
        $region85: #{tpu_custom_call.1} parent=51 // pred_check
          %p1503 = pneg %p1502
        $region86: #{tpu_custom_call.1} parent=51 // pred_check_branch
          %1505 = sbr.rel (%p1503) target = $region88
        $region87: #{tpu_custom_call.1} parent=51 // pred_region
          %v1506 = vlaneseq
          %v1507 = vshrl.u32 %v1506, 7
          %v1508 = vadd.s32 %v1507, 8
          %v1509 = vadd.s32 %v1507, 16
          %v1510 = vadd.s32 %v1507, 24
          %v1511 = vadd.s32 %v1507, 32
          %v1512 = vadd.s32 %v1507, 40
          %v1513 = vadd.s32 %v1507, 48
          %v1514 = vadd.s32 %v1507, 56
          %v1515 = vadd.s32 %v1507, 64
          %v1516 = vadd.s32 %v1507, 72
          %v1517 = vadd.s32 %v1507, 80
          %v1518 = vadd.s32 %v1507, 88
          %v1519 = vadd.s32 %v1507, 96
          %v1520 = vadd.s32 %v1507, 104
          %v1521 = vadd.s32 %v1507, 112
          %v1522 = vadd.s32 %v1507, 120
          %v1523 = vadd.s32 %v1507, 128
          %v1524 = vadd.s32 %v1507, 136
          %v1525 = vadd.s32 %v1507, 144
          %v1526 = vadd.s32 %v1507, 152
          %v1527 = vadd.s32 %v1507, 160
          %v1528 = vadd.s32 %v1507, 168
          %v1529 = vadd.s32 %v1507, 176
          %v1530 = vadd.s32 %v1507, 184
          %v1531 = vadd.s32 %v1507, 192
          %v1532 = vadd.s32 %v1507, 200
          %v1533 = vadd.s32 %v1507, 208
          %v1534 = vadd.s32 %v1507, 216
          %v1535 = vadd.s32 %v1507, 224
          %v1536 = vadd.s32 %v1507, 232
          %v1537 = vadd.s32 %v1507, 240
          %v1538 = vadd.s32 %v1507, 248
          %v1539 = vadd.s32 %v1507, 256
          %v1540 = vadd.s32 %v1507, 264
          %v1541 = vadd.s32 %v1507, 272
          %v1542 = vadd.s32 %v1507, 280
          %s1543 = ssub.s32 %s418, 16
          %v1544 = vstv %s1543
          %v1545 = vadd.s32 %v1544, %v1507
          %v1546 = vadd.s32 %v1544, %v1508
          %v1547 = vadd.s32 %v1544, %v1509
          %v1548 = vadd.s32 %v1544, %v1510
          %v1549 = vadd.s32 %v1544, %v1511
          %v1550 = vadd.s32 %v1544, %v1512
          %v1551 = vadd.s32 %v1544, %v1513
          %v1552 = vadd.s32 %v1544, %v1514
          %v1553 = vadd.s32 %v1544, %v1515
          %v1554 = vadd.s32 %v1544, %v1516
          %v1555 = vadd.s32 %v1544, %v1517
          %v1556 = vadd.s32 %v1544, %v1518
          %v1557 = vadd.s32 %v1544, %v1519
          %v1558 = vadd.s32 %v1544, %v1520
          %v1559 = vadd.s32 %v1544, %v1521
          %v1560 = vadd.s32 %v1544, %v1522
          %v1561 = vadd.s32 %v1544, %v1523
          %v1562 = vadd.s32 %v1544, %v1524
          %v1563 = vadd.s32 %v1544, %v1525
          %v1564 = vadd.s32 %v1544, %v1526
          %v1565 = vadd.s32 %v1544, %v1527
          %v1566 = vadd.s32 %v1544, %v1528
          %v1567 = vadd.s32 %v1544, %v1529
          %v1568 = vadd.s32 %v1544, %v1530
          %v1569 = vadd.s32 %v1544, %v1531
          %v1570 = vadd.s32 %v1544, %v1532
          %v1571 = vadd.s32 %v1544, %v1533
          %v1572 = vadd.s32 %v1544, %v1534
          %v1573 = vadd.s32 %v1544, %v1535
          %v1574 = vadd.s32 %v1544, %v1536
          %v1575 = vadd.s32 %v1544, %v1537
          %v1576 = vadd.s32 %v1544, %v1538
          %v1577 = vadd.s32 %v1544, %v1539
          %v1578 = vadd.s32 %v1544, %v1540
          %v1579 = vadd.s32 %v1544, %v1541
          %v1580 = vadd.s32 %v1544, %v1542
          %vm1581 = vcmp.ge.s32.totalorder %v1545, 0
          %vm1582 = vcmp.ge.s32.totalorder %v1546, 0
          %vm1583 = vcmp.ge.s32.totalorder %v1547, 0
          %vm1584 = vcmp.ge.s32.totalorder %v1548, 0
          %vm1585 = vcmp.ge.s32.totalorder %v1549, 0
          %vm1586 = vcmp.ge.s32.totalorder %v1550, 0
          %vm1587 = vcmp.ge.s32.totalorder %v1551, 0
          %vm1588 = vcmp.ge.s32.totalorder %v1552, 0
          %vm1589 = vcmp.ge.s32.totalorder %v1553, 0
          %vm1590 = vcmp.ge.s32.totalorder %v1554, 0
          %vm1591 = vcmp.ge.s32.totalorder %v1555, 0
          %vm1592 = vcmp.ge.s32.totalorder %v1556, 0
          %vm1593 = vcmp.ge.s32.totalorder %v1557, 0
          %vm1594 = vcmp.ge.s32.totalorder %v1558, 0
          %vm1595 = vcmp.ge.s32.totalorder %v1559, 0
          %vm1596 = vcmp.ge.s32.totalorder %v1560, 0
          %vm1597 = vcmp.ge.s32.totalorder %v1561, 0
          %vm1598 = vcmp.ge.s32.totalorder %v1562, 0
          %vm1599 = vcmp.ge.s32.totalorder %v1563, 0
          %vm1600 = vcmp.ge.s32.totalorder %v1564, 0
          %vm1601 = vcmp.ge.s32.totalorder %v1565, 0
          %vm1602 = vcmp.ge.s32.totalorder %v1566, 0
          %vm1603 = vcmp.ge.s32.totalorder %v1567, 0
          %vm1604 = vcmp.ge.s32.totalorder %v1568, 0
          %vm1605 = vcmp.ge.s32.totalorder %v1569, 0
          %vm1606 = vcmp.ge.s32.totalorder %v1570, 0
          %vm1607 = vcmp.ge.s32.totalorder %v1571, 0
          %vm1608 = vcmp.ge.s32.totalorder %v1572, 0
          %vm1609 = vcmp.ge.s32.totalorder %v1573, 0
          %vm1610 = vcmp.ge.s32.totalorder %v1574, 0
          %vm1611 = vcmp.ge.s32.totalorder %v1575, 0
          %vm1612 = vcmp.ge.s32.totalorder %v1576, 0
          %vm1613 = vcmp.ge.s32.totalorder %v1577, 0
          %vm1614 = vcmp.ge.s32.totalorder %v1578, 0
          %vm1615 = vcmp.ge.s32.totalorder %v1579, 0
          %vm1616 = vcmp.ge.s32.totalorder %v1580, 0
          %vm1617 = vcmp.lt.s32.totalorder %v1545, 512
          %vm1618 = vcmp.lt.s32.totalorder %v1546, 512
          %vm1619 = vcmp.lt.s32.totalorder %v1547, 512
          %vm1620 = vcmp.lt.s32.totalorder %v1548, 512
          %vm1621 = vcmp.lt.s32.totalorder %v1549, 512
          %vm1622 = vcmp.lt.s32.totalorder %v1550, 512
          %vm1623 = vcmp.lt.s32.totalorder %v1551, 512
          %vm1624 = vcmp.lt.s32.totalorder %v1552, 512
          %vm1625 = vcmp.lt.s32.totalorder %v1553, 512
          %vm1626 = vcmp.lt.s32.totalorder %v1554, 512
          %vm1627 = vcmp.lt.s32.totalorder %v1555, 512
          %vm1628 = vcmp.lt.s32.totalorder %v1556, 512
          %vm1629 = vcmp.lt.s32.totalorder %v1557, 512
          %vm1630 = vcmp.lt.s32.totalorder %v1558, 512
          %vm1631 = vcmp.lt.s32.totalorder %v1559, 512
          %vm1632 = vcmp.lt.s32.totalorder %v1560, 512
          %vm1633 = vcmp.lt.s32.totalorder %v1561, 512
          %vm1634 = vcmp.lt.s32.totalorder %v1562, 512
          %vm1635 = vcmp.lt.s32.totalorder %v1563, 512
          %vm1636 = vcmp.lt.s32.totalorder %v1564, 512
          %vm1637 = vcmp.lt.s32.totalorder %v1565, 512
          %vm1638 = vcmp.lt.s32.totalorder %v1566, 512
          %vm1639 = vcmp.lt.s32.totalorder %v1567, 512
          %vm1640 = vcmp.lt.s32.totalorder %v1568, 512
          %vm1641 = vcmp.lt.s32.totalorder %v1569, 512
          %vm1642 = vcmp.lt.s32.totalorder %v1570, 512
          %vm1643 = vcmp.lt.s32.totalorder %v1571, 512
          %vm1644 = vcmp.lt.s32.totalorder %v1572, 512
          %vm1645 = vcmp.lt.s32.totalorder %v1573, 512
          %vm1646 = vcmp.lt.s32.totalorder %v1574, 512
          %vm1647 = vcmp.lt.s32.totalorder %v1575, 512
          %vm1648 = vcmp.lt.s32.totalorder %v1576, 512
          %vm1649 = vcmp.lt.s32.totalorder %v1577, 512
          %vm1650 = vcmp.lt.s32.totalorder %v1578, 512
          %vm1651 = vcmp.lt.s32.totalorder %v1579, 512
          %vm1652 = vcmp.lt.s32.totalorder %v1580, 512
          %vm1653 = vmand %vm1581, %vm1617
          %vm1654 = vmand %vm1582, %vm1618
          %vm1655 = vmand %vm1583, %vm1619
          %vm1656 = vmand %vm1584, %vm1620
          %vm1657 = vmand %vm1585, %vm1621
          %vm1658 = vmand %vm1586, %vm1622
          %vm1659 = vmand %vm1587, %vm1623
          %vm1660 = vmand %vm1588, %vm1624
          %vm1661 = vmand %vm1589, %vm1625
          %vm1662 = vmand %vm1590, %vm1626
          %vm1663 = vmand %vm1591, %vm1627
          %vm1664 = vmand %vm1592, %vm1628
          %vm1665 = vmand %vm1593, %vm1629
          %vm1666 = vmand %vm1594, %vm1630
          %vm1667 = vmand %vm1595, %vm1631
          %vm1668 = vmand %vm1596, %vm1632
          %vm1669 = vmand %vm1597, %vm1633
          %vm1670 = vmand %vm1598, %vm1634
          %vm1671 = vmand %vm1599, %vm1635
          %vm1672 = vmand %vm1600, %vm1636
          %vm1673 = vmand %vm1601, %vm1637
          %vm1674 = vmand %vm1602, %vm1638
          %vm1675 = vmand %vm1603, %vm1639
          %vm1676 = vmand %vm1604, %vm1640
          %vm1677 = vmand %vm1605, %vm1641
          %vm1678 = vmand %vm1606, %vm1642
          %vm1679 = vmand %vm1607, %vm1643
          %vm1680 = vmand %vm1608, %vm1644
          %vm1681 = vmand %vm1609, %vm1645
          %vm1682 = vmand %vm1610, %vm1646
          %vm1683 = vmand %vm1611, %vm1647
          %vm1684 = vmand %vm1612, %vm1648
          %vm1685 = vmand %vm1613, %vm1649
          %vm1686 = vmand %vm1614, %vm1650
          %vm1687 = vmand %vm1615, %vm1651
          %vm1688 = vmand %vm1616, %vm1652
          %v1689 = vsel %vm1653, 1, 0
          %v1690 = vsel %vm1654, 1, 0
          %v1691 = vsel %vm1655, 1, 0
          %v1692 = vsel %vm1656, 1, 0
          %v1693 = vsel %vm1657, 1, 0
          %v1694 = vsel %vm1658, 1, 0
          %v1695 = vsel %vm1659, 1, 0
          %v1696 = vsel %vm1660, 1, 0
          %v1697 = vsel %vm1661, 1, 0
          %v1698 = vsel %vm1662, 1, 0
          %v1699 = vsel %vm1663, 1, 0
          %v1700 = vsel %vm1664, 1, 0
          %v1701 = vsel %vm1665, 1, 0
          %v1702 = vsel %vm1666, 1, 0
          %v1703 = vsel %vm1667, 1, 0
          %v1704 = vsel %vm1668, 1, 0
          %v1705 = vsel %vm1669, 1, 0
          %v1706 = vsel %vm1670, 1, 0
          %v1707 = vsel %vm1671, 1, 0
          %v1708 = vsel %vm1672, 1, 0
          %v1709 = vsel %vm1673, 1, 0
          %v1710 = vsel %vm1674, 1, 0
          %v1711 = vsel %vm1675, 1, 0
          %v1712 = vsel %vm1676, 1, 0
          %v1713 = vsel %vm1677, 1, 0
          %v1714 = vsel %vm1678, 1, 0
          %v1715 = vsel %vm1679, 1, 0
          %v1716 = vsel %vm1680, 1, 0
          %v1717 = vsel %vm1681, 1, 0
          %v1718 = vsel %vm1682, 1, 0
          %v1719 = vsel %vm1683, 1, 0
          %v1720 = vsel %vm1684, 1, 0
          %v1721 = vsel %vm1685, 1, 0
          %v1722 = vsel %vm1686, 1, 0
          %v1723 = vsel %vm1687, 1, 0
          %v1724 = vsel %vm1688, 1, 0
          %vm1725 = vcmp.eq.s32.totalorder %v1689, 1
          %vm1726 = vcmp.eq.s32.totalorder %v1690, 1
          %vm1727 = vcmp.eq.s32.totalorder %v1691, 1
          %vm1728 = vcmp.eq.s32.totalorder %v1692, 1
          %vm1729 = vcmp.eq.s32.totalorder %v1693, 1
          %vm1730 = vcmp.eq.s32.totalorder %v1694, 1
          %vm1731 = vcmp.eq.s32.totalorder %v1695, 1
          %vm1732 = vcmp.eq.s32.totalorder %v1696, 1
          %vm1733 = vcmp.eq.s32.totalorder %v1697, 1
          %vm1734 = vcmp.eq.s32.totalorder %v1698, 1
          %vm1735 = vcmp.eq.s32.totalorder %v1699, 1
          %vm1736 = vcmp.eq.s32.totalorder %v1700, 1
          %vm1737 = vcmp.eq.s32.totalorder %v1701, 1
          %vm1738 = vcmp.eq.s32.totalorder %v1702, 1
          %vm1739 = vcmp.eq.s32.totalorder %v1703, 1
          %vm1740 = vcmp.eq.s32.totalorder %v1704, 1
          %vm1741 = vcmp.eq.s32.totalorder %v1705, 1
          %vm1742 = vcmp.eq.s32.totalorder %v1706, 1
          %vm1743 = vcmp.eq.s32.totalorder %v1707, 1
          %vm1744 = vcmp.eq.s32.totalorder %v1708, 1
          %vm1745 = vcmp.eq.s32.totalorder %v1709, 1
          %vm1746 = vcmp.eq.s32.totalorder %v1710, 1
          %vm1747 = vcmp.eq.s32.totalorder %v1711, 1
          %vm1748 = vcmp.eq.s32.totalorder %v1712, 1
          %vm1749 = vcmp.eq.s32.totalorder %v1713, 1
          %vm1750 = vcmp.eq.s32.totalorder %v1714, 1
          %vm1751 = vcmp.eq.s32.totalorder %v1715, 1
          %vm1752 = vcmp.eq.s32.totalorder %v1716, 1
          %vm1753 = vcmp.eq.s32.totalorder %v1717, 1
          %vm1754 = vcmp.eq.s32.totalorder %v1718, 1
          %vm1755 = vcmp.eq.s32.totalorder %v1719, 1
          %vm1756 = vcmp.eq.s32.totalorder %v1720, 1
          %vm1757 = vcmp.eq.s32.totalorder %v1721, 1
          %vm1758 = vcmp.eq.s32.totalorder %v1722, 1
          %vm1759 = vcmp.eq.s32.totalorder %v1723, 1
          %vm1760 = vcmp.eq.s32.totalorder %v1724, 1
          %v1761 = vsel %vm1725, %v1463, 0.0
          %v1762 = vsel %vm1726, %v1464, 0.0
          %v1763 = vsel %vm1727, %v1465, 0.0
          %v1764 = vsel %vm1728, %v1466, 0.0
          %v1765 = vsel %vm1729, %v1467, 0.0
          %v1766 = vsel %vm1730, %v1468, 0.0
          %v1767 = vsel %vm1731, %v1469, 0.0
          %v1768 = vsel %vm1732, %v1470, 0.0
          %v1769 = vsel %vm1733, %v1471, 0.0
          %v1770 = vsel %vm1734, %v1472, 0.0
          %v1771 = vsel %vm1735, %v1473, 0.0
          %v1772 = vsel %vm1736, %v1474, 0.0
          %v1773 = vsel %vm1737, %v1475, 0.0
          %v1774 = vsel %vm1738, %v1476, 0.0
          %v1775 = vsel %vm1739, %v1477, 0.0
          %v1776 = vsel %vm1740, %v1478, 0.0
          %v1777 = vsel %vm1741, %v1479, 0.0
          %v1778 = vsel %vm1742, %v1480, 0.0
          %v1779 = vsel %vm1743, %v1481, 0.0
          %v1780 = vsel %vm1744, %v1482, 0.0
          %v1781 = vsel %vm1745, %v1483, 0.0
          %v1782 = vsel %vm1746, %v1484, 0.0
          %v1783 = vsel %vm1747, %v1485, 0.0
          %v1784 = vsel %vm1748, %v1486, 0.0
          %v1785 = vsel %vm1749, %v1487, 0.0
          %v1786 = vsel %vm1750, %v1488, 0.0
          %v1787 = vsel %vm1751, %v1489, 0.0
          %v1788 = vsel %vm1752, %v1490, 0.0
          %v1789 = vsel %vm1753, %v1491, 0.0
          %v1790 = vsel %vm1754, %v1492, 0.0
          %v1791 = vsel %vm1755, %v1493, 0.0
          %v1792 = vsel %vm1756, %v1494, 0.0
          %v1793 = vsel %vm1757, %v1495, 0.0
          %v1794 = vsel %vm1758, %v1496, 0.0
          %v1795 = vsel %vm1759, %v1497, 0.0
          %v1796 = vsel %vm1760, %v1498, 0.0
          %v1797 = vpack.c.bf16 %v1762, %v1761
          %v1798 = vpack.c.bf16 %v1764, %v1763
          %v1799 = vpack.c.bf16 %v1766, %v1765
          %v1800 = vpack.c.bf16 %v1768, %v1767
          %v1801 = vpack.c.bf16 %v1770, %v1769
          %v1802 = vpack.c.bf16 %v1772, %v1771
          %v1803 = vpack.c.bf16 %v1774, %v1773
          %v1804 = vpack.c.bf16 %v1776, %v1775
          %v1805 = vpack.c.bf16 %v1778, %v1777
          %v1806 = vpack.c.bf16 %v1780, %v1779
          %v1807 = vpack.c.bf16 %v1782, %v1781
          %v1808 = vpack.c.bf16 %v1784, %v1783
          %v1809 = vpack.c.bf16 %v1786, %v1785
          %v1810 = vpack.c.bf16 %v1788, %v1787
          %v1811 = vpack.c.bf16 %v1790, %v1789
          %v1812 = vpack.c.bf16 %v1792, %v1791
          %v1813 = vpack.c.bf16 %v1794, %v1793
          %v1814 = vpack.c.bf16 %v1796, %v1795
          %v1833 = vunpack.c.l.b16 %v1797
          %v1834 = vunpack.c.h.b16 %v1797
          %v1835 = vunpack.c.l.b16 %v1798
          %v1836 = vunpack.c.h.b16 %v1798
          %v1837 = vunpack.c.l.b16 %v1799
          %v1838 = vunpack.c.h.b16 %v1799
          %v1839 = vunpack.c.l.b16 %v1800
          %v1840 = vunpack.c.h.b16 %v1800
          %v1841 = vunpack.c.l.b16 %v1801
          %v1842 = vunpack.c.h.b16 %v1801
          %v1843 = vunpack.c.l.b16 %v1802
          %v1844 = vunpack.c.h.b16 %v1802
          %v1845 = vunpack.c.l.b16 %v1803
          %v1846 = vunpack.c.h.b16 %v1803
          %v1847 = vunpack.c.l.b16 %v1804
          %v1848 = vunpack.c.h.b16 %v1804
          %v1849 = vunpack.c.l.b16 %v1805
          %v1850 = vunpack.c.h.b16 %v1805
          %v1851 = vunpack.c.l.b16 %v1806
          %v1852 = vunpack.c.h.b16 %v1806
          %v1853 = vunpack.c.l.b16 %v1807
          %v1854 = vunpack.c.h.b16 %v1807
          %v1855 = vunpack.c.l.b16 %v1808
          %v1856 = vunpack.c.h.b16 %v1808
          %v1857 = vunpack.c.l.b16 %v1809
          %v1858 = vunpack.c.h.b16 %v1809
          %v1859 = vunpack.c.l.b16 %v1810
          %v1860 = vunpack.c.h.b16 %v1810
          %v1861 = vunpack.c.l.b16 %v1811
          %v1862 = vunpack.c.h.b16 %v1811
          %v1863 = vunpack.c.l.b16 %v1812
          %v1864 = vunpack.c.h.b16 %v1812
          %v1865 = vunpack.c.l.b16 %v1813
          %v1866 = vunpack.c.h.b16 %v1813
          %v1867 = vunpack.c.l.b16 %v1814
          %v1868 = vunpack.c.h.b16 %v1814
          %v1869 = vpack.c.b16 %v1833, %v1833
          %v1870 = vpack.c.b16 %v1834, %v1834
          %v1871 = vpack.c.b16 %v1835, %v1835
          %v1872 = vpack.c.b16 %v1836, %v1836
          %v1873 = vpack.c.b16 %v1837, %v1837
          %v1874 = vpack.c.b16 %v1838, %v1838
          %v1875 = vpack.c.b16 %v1839, %v1839
          %v1876 = vpack.c.b16 %v1840, %v1840
          %v1877 = vpack.c.b16 %v1841, %v1841
          %v1878 = vpack.c.b16 %v1842, %v1842
          %v1879 = vpack.c.b16 %v1843, %v1843
          %v1880 = vpack.c.b16 %v1844, %v1844
          %v1881 = vpack.c.b16 %v1845, %v1845
          %v1882 = vpack.c.b16 %v1846, %v1846
          %v1883 = vpack.c.b16 %v1847, %v1847
          %v1884 = vpack.c.b16 %v1848, %v1848
          %v1885 = vpack.c.b16 %v1849, %v1849
          %v1886 = vpack.c.b16 %v1850, %v1850
          %v1887 = vpack.c.b16 %v1851, %v1851
          %v1888 = vpack.c.b16 %v1852, %v1852
          %v1889 = vpack.c.b16 %v1853, %v1853
          %v1890 = vpack.c.b16 %v1854, %v1854
          %v1891 = vpack.c.b16 %v1855, %v1855
          %v1892 = vpack.c.b16 %v1856, %v1856
          %v1893 = vpack.c.b16 %v1857, %v1857
          %v1894 = vpack.c.b16 %v1858, %v1858
          %v1895 = vpack.c.b16 %v1859, %v1859
          %v1896 = vpack.c.b16 %v1860, %v1860
          %v1897 = vpack.c.b16 %v1861, %v1861
          %v1898 = vpack.c.b16 %v1862, %v1862
          %v1899 = vpack.c.b16 %v1863, %v1863
          %v1900 = vpack.c.b16 %v1864, %v1864
          %v1901 = vpack.c.b16 %v1865, %v1865
          %v1902 = vpack.c.b16 %v1866, %v1866
          %v1903 = vpack.c.b16 %v1867, %v1867
          %v1904 = vpack.c.b16 %v1868, %v1868
          %1941 = vst [vmem:[#allocation4] sm:$0xf] %v1869
          %1942 = vst [vmem:[#allocation4 + $0x4] sm:$0xf] %v1870
          %1943 = vst [vmem:[#allocation4 + $0x8] sm:$0xf] %v1871
          %1944 = vst [vmem:[#allocation4 + $0xc] sm:$0xf] %v1872
          %1945 = vst [vmem:[#allocation4 + $0x10] sm:$0xf] %v1873
          %1946 = vst [vmem:[#allocation4 + $0x14] sm:$0xf] %v1874
          %1947 = vst [vmem:[#allocation4 + $0x18] sm:$0xf] %v1875
          %1948 = vst [vmem:[#allocation4 + $0x1c] sm:$0xf] %v1876
          %1949 = vst [vmem:[#allocation4 + $0x20] sm:$0xf] %v1877
          %1950 = vst [vmem:[#allocation4 + $0x24] sm:$0xf] %v1878
          %1951 = vst [vmem:[#allocation4 + $0x28] sm:$0xf] %v1879
          %1952 = vst [vmem:[#allocation4 + $0x2c] sm:$0xf] %v1880
          %1953 = vst [vmem:[#allocation4 + $0x30] sm:$0xf] %v1881
          %1954 = vst [vmem:[#allocation4 + $0x34] sm:$0xf] %v1882
          %1955 = vst [vmem:[#allocation4 + $0x38] sm:$0xf] %v1883
          %1956 = vst [vmem:[#allocation4 + $0x3c] sm:$0xf] %v1884
          %1957 = vst [vmem:[#allocation4 + $0x40] sm:$0xf] %v1885
          %1958 = vst [vmem:[#allocation4 + $0x44] sm:$0xf] %v1886
          %1959 = vst [vmem:[#allocation4 + $0x48] sm:$0xf] %v1887
          %1960 = vst [vmem:[#allocation4 + $0x4c] sm:$0xf] %v1888
          %1961 = vst [vmem:[#allocation4 + $0x50] sm:$0xf] %v1889
          %1962 = vst [vmem:[#allocation4 + $0x54] sm:$0xf] %v1890
          %1963 = vst [vmem:[#allocation4 + $0x58] sm:$0xf] %v1891
          %1964 = vst [vmem:[#allocation4 + $0x5c] sm:$0xf] %v1892
          %1965 = vst [vmem:[#allocation4 + $0x60] sm:$0xf] %v1893
          %1966 = vst [vmem:[#allocation4 + $0x64] sm:$0xf] %v1894
          %1967 = vst [vmem:[#allocation4 + $0x68] sm:$0xf] %v1895
          %1968 = vst [vmem:[#allocation4 + $0x6c] sm:$0xf] %v1896
          %1969 = vst [vmem:[#allocation4 + $0x70] sm:$0xf] %v1897
          %1970 = vst [vmem:[#allocation4 + $0x74] sm:$0xf] %v1898
          %1971 = vst [vmem:[#allocation4 + $0x78] sm:$0xf] %v1899
          %1972 = vst [vmem:[#allocation4 + $0x7c] sm:$0xf] %v1900
          %1973 = vst [vmem:[#allocation4 + $0x80] sm:$0xf] %v1901
          %1974 = vst [vmem:[#allocation4 + $0x84] sm:$0xf] %v1902
          %1975 = vst [vmem:[#allocation4 + $0x88] sm:$0xf] %v1903
          %1976 = vst [vmem:[#allocation4 + $0x8c] sm:$0xf] %v1904
        $region88: #{tpu_custom_call.1} parent=51 // pred_fallthru
          _
        %p1977 = pneg %p1502
        // Predicated region
        $region89: #{tpu_custom_call.1} parent=51 // pred_check
          _
        $region90: #{tpu_custom_call.1} parent=51 // pred_check_branch
          %1979 = sbr.rel (%p1502) target = $region92
        $region91: #{tpu_custom_call.1} parent=51 // pred_region
          %v1980 = vpack.c.bf16 %v1464, %v1463
          %v1981 = vpack.c.bf16 %v1466, %v1465
          %v1982 = vpack.c.bf16 %v1468, %v1467
          %v1983 = vpack.c.bf16 %v1470, %v1469
          %v1984 = vpack.c.bf16 %v1472, %v1471
          %v1985 = vpack.c.bf16 %v1474, %v1473
          %v1986 = vpack.c.bf16 %v1476, %v1475
          %v1987 = vpack.c.bf16 %v1478, %v1477
          %v1988 = vpack.c.bf16 %v1480, %v1479
          %v1989 = vpack.c.bf16 %v1482, %v1481
          %v1990 = vpack.c.bf16 %v1484, %v1483
          %v1991 = vpack.c.bf16 %v1486, %v1485
          %v1992 = vpack.c.bf16 %v1488, %v1487
          %v1993 = vpack.c.bf16 %v1490, %v1489
          %v1994 = vpack.c.bf16 %v1492, %v1491
          %v1995 = vpack.c.bf16 %v1494, %v1493
          %v1996 = vpack.c.bf16 %v1496, %v1495
          %v1997 = vpack.c.bf16 %v1498, %v1497
          %v2016 = vunpack.c.l.b16 %v1980
          %v2017 = vunpack.c.h.b16 %v1980
          %v2018 = vunpack.c.l.b16 %v1981
          %v2019 = vunpack.c.h.b16 %v1981
          %v2020 = vunpack.c.l.b16 %v1982
          %v2021 = vunpack.c.h.b16 %v1982
          %v2022 = vunpack.c.l.b16 %v1983
          %v2023 = vunpack.c.h.b16 %v1983
          %v2024 = vunpack.c.l.b16 %v1984
          %v2025 = vunpack.c.h.b16 %v1984
          %v2026 = vunpack.c.l.b16 %v1985
          %v2027 = vunpack.c.h.b16 %v1985
          %v2028 = vunpack.c.l.b16 %v1986
          %v2029 = vunpack.c.h.b16 %v1986
          %v2030 = vunpack.c.l.b16 %v1987
          %v2031 = vunpack.c.h.b16 %v1987
          %v2032 = vunpack.c.l.b16 %v1988
          %v2033 = vunpack.c.h.b16 %v1988
          %v2034 = vunpack.c.l.b16 %v1989
          %v2035 = vunpack.c.h.b16 %v1989
          %v2036 = vunpack.c.l.b16 %v1990
          %v2037 = vunpack.c.h.b16 %v1990
          %v2038 = vunpack.c.l.b16 %v1991
          %v2039 = vunpack.c.h.b16 %v1991
          %v2040 = vunpack.c.l.b16 %v1992
          %v2041 = vunpack.c.h.b16 %v1992
          %v2042 = vunpack.c.l.b16 %v1993
          %v2043 = vunpack.c.h.b16 %v1993
          %v2044 = vunpack.c.l.b16 %v1994
          %v2045 = vunpack.c.h.b16 %v1994
          %v2046 = vunpack.c.l.b16 %v1995
          %v2047 = vunpack.c.h.b16 %v1995
          %v2048 = vunpack.c.l.b16 %v1996
          %v2049 = vunpack.c.h.b16 %v1996
          %v2050 = vunpack.c.l.b16 %v1997
          %v2051 = vunpack.c.h.b16 %v1997
          %v2052 = vpack.c.b16 %v2016, %v2016
          %v2053 = vpack.c.b16 %v2017, %v2017
          %v2054 = vpack.c.b16 %v2018, %v2018
          %v2055 = vpack.c.b16 %v2019, %v2019
          %v2056 = vpack.c.b16 %v2020, %v2020
          %v2057 = vpack.c.b16 %v2021, %v2021
          %v2058 = vpack.c.b16 %v2022, %v2022
          %v2059 = vpack.c.b16 %v2023, %v2023
          %v2060 = vpack.c.b16 %v2024, %v2024
          %v2061 = vpack.c.b16 %v2025, %v2025
          %v2062 = vpack.c.b16 %v2026, %v2026
          %v2063 = vpack.c.b16 %v2027, %v2027
          %v2064 = vpack.c.b16 %v2028, %v2028
          %v2065 = vpack.c.b16 %v2029, %v2029
          %v2066 = vpack.c.b16 %v2030, %v2030
          %v2067 = vpack.c.b16 %v2031, %v2031
          %v2068 = vpack.c.b16 %v2032, %v2032
          %v2069 = vpack.c.b16 %v2033, %v2033
          %v2070 = vpack.c.b16 %v2034, %v2034
          %v2071 = vpack.c.b16 %v2035, %v2035
          %v2072 = vpack.c.b16 %v2036, %v2036
          %v2073 = vpack.c.b16 %v2037, %v2037
          %v2074 = vpack.c.b16 %v2038, %v2038
          %v2075 = vpack.c.b16 %v2039, %v2039
          %v2076 = vpack.c.b16 %v2040, %v2040
          %v2077 = vpack.c.b16 %v2041, %v2041
          %v2078 = vpack.c.b16 %v2042, %v2042
          %v2079 = vpack.c.b16 %v2043, %v2043
          %v2080 = vpack.c.b16 %v2044, %v2044
          %v2081 = vpack.c.b16 %v2045, %v2045
          %v2082 = vpack.c.b16 %v2046, %v2046
          %v2083 = vpack.c.b16 %v2047, %v2047
          %v2084 = vpack.c.b16 %v2048, %v2048
          %v2085 = vpack.c.b16 %v2049, %v2049
          %v2086 = vpack.c.b16 %v2050, %v2050
          %v2087 = vpack.c.b16 %v2051, %v2051
          %2124 = vst [vmem:[#allocation4] sm:$0xf] %v2052
          %2125 = vst [vmem:[#allocation4 + $0x4] sm:$0xf] %v2053
          %2126 = vst [vmem:[#allocation4 + $0x8] sm:$0xf] %v2054
          %2127 = vst [vmem:[#allocation4 + $0xc] sm:$0xf] %v2055
          %2128 = vst [vmem:[#allocation4 + $0x10] sm:$0xf] %v2056
          %2129 = vst [vmem:[#allocation4 + $0x14] sm:$0xf] %v2057
          %2130 = vst [vmem:[#allocation4 + $0x18] sm:$0xf] %v2058
          %2131 = vst [vmem:[#allocation4 + $0x1c] sm:$0xf] %v2059
          %2132 = vst [vmem:[#allocation4 + $0x20] sm:$0xf] %v2060
          %2133 = vst [vmem:[#allocation4 + $0x24] sm:$0xf] %v2061
          %2134 = vst [vmem:[#allocation4 + $0x28] sm:$0xf] %v2062
          %2135 = vst [vmem:[#allocation4 + $0x2c] sm:$0xf] %v2063
          %2136 = vst [vmem:[#allocation4 + $0x30] sm:$0xf] %v2064
          %2137 = vst [vmem:[#allocation4 + $0x34] sm:$0xf] %v2065
          %2138 = vst [vmem:[#allocation4 + $0x38] sm:$0xf] %v2066
          %2139 = vst [vmem:[#allocation4 + $0x3c] sm:$0xf] %v2067
          %2140 = vst [vmem:[#allocation4 + $0x40] sm:$0xf] %v2068
          %2141 = vst [vmem:[#allocation4 + $0x44] sm:$0xf] %v2069
          %2142 = vst [vmem:[#allocation4 + $0x48] sm:$0xf] %v2070
          %2143 = vst [vmem:[#allocation4 + $0x4c] sm:$0xf] %v2071
          %2144 = vst [vmem:[#allocation4 + $0x50] sm:$0xf] %v2072
          %2145 = vst [vmem:[#allocation4 + $0x54] sm:$0xf] %v2073
          %2146 = vst [vmem:[#allocation4 + $0x58] sm:$0xf] %v2074
          %2147 = vst [vmem:[#allocation4 + $0x5c] sm:$0xf] %v2075
          %2148 = vst [vmem:[#allocation4 + $0x60] sm:$0xf] %v2076
          %2149 = vst [vmem:[#allocation4 + $0x64] sm:$0xf] %v2077
          %2150 = vst [vmem:[#allocation4 + $0x68] sm:$0xf] %v2078
          %2151 = vst [vmem:[#allocation4 + $0x6c] sm:$0xf] %v2079
          %2152 = vst [vmem:[#allocation4 + $0x70] sm:$0xf] %v2080
          %2153 = vst [vmem:[#allocation4 + $0x74] sm:$0xf] %v2081
          %2154 = vst [vmem:[#allocation4 + $0x78] sm:$0xf] %v2082
          %2155 = vst [vmem:[#allocation4 + $0x7c] sm:$0xf] %v2083
          %2156 = vst [vmem:[#allocation4 + $0x80] sm:$0xf] %v2084
          %2157 = vst [vmem:[#allocation4 + $0x84] sm:$0xf] %v2085
          %2158 = vst [vmem:[#allocation4 + $0x88] sm:$0xf] %v2086
          %2159 = vst [vmem:[#allocation4 + $0x8c] sm:$0xf] %v2087
        $region92: #{tpu_custom_call.1} parent=51 // pred_fallthru
          _
        %v2160 = vld [vmem:[#allocation10] sm:$0xff]
        %v2161 = vld [vmem:[#allocation10 + $0x8] sm:$0xff]
        %v2162 = vld [vmem:[#allocation10 + $0x10] sm:$0xff]
        %v2163 = vld [vmem:[#allocation10 + $0x18] sm:$0x7f]
        %v2164 = vld [vmem:[#allocation4] sm:$0xf]
        %v2165 = vld [vmem:[#allocation4 + $0x4] sm:$0xf]
        %v2166 = vld [vmem:[#allocation4 + $0x8] sm:$0xf]
        %v2167 = vld [vmem:[#allocation4 + $0xc] sm:$0xf]
        %v2168 = vld [vmem:[#allocation4 + $0x10] sm:$0xf]
        %v2169 = vld [vmem:[#allocation4 + $0x14] sm:$0xf]
        %v2170 = vld [vmem:[#allocation4 + $0x18] sm:$0xf]
        %v2171 = vld [vmem:[#allocation4 + $0x1c] sm:$0xf]
        %v2172 = vld [vmem:[#allocation4 + $0x20] sm:$0xf]
        %v2173 = vld [vmem:[#allocation4 + $0x24] sm:$0xf]
        %v2174 = vld [vmem:[#allocation4 + $0x28] sm:$0xf]
        %v2175 = vld [vmem:[#allocation4 + $0x2c] sm:$0xf]
        %v2176 = vld [vmem:[#allocation4 + $0x30] sm:$0xf]
        %v2177 = vld [vmem:[#allocation4 + $0x34] sm:$0xf]
        %v2178 = vld [vmem:[#allocation4 + $0x38] sm:$0xf]
        %v2179 = vld [vmem:[#allocation4 + $0x3c] sm:$0xf]
        %v2180 = vld [vmem:[#allocation4 + $0x40] sm:$0xf]
        %v2181 = vld [vmem:[#allocation4 + $0x44] sm:$0xf]
        %v2182 = vld [vmem:[#allocation4 + $0x48] sm:$0xf]
        %v2183 = vld [vmem:[#allocation4 + $0x4c] sm:$0xf]
        %v2184 = vld [vmem:[#allocation4 + $0x50] sm:$0xf]
        %v2185 = vld [vmem:[#allocation4 + $0x54] sm:$0xf]
        %v2186 = vld [vmem:[#allocation4 + $0x58] sm:$0xf]
        %v2187 = vld [vmem:[#allocation4 + $0x5c] sm:$0xf]
        %v2188 = vld [vmem:[#allocation4 + $0x60] sm:$0xf]
        %v2189 = vld [vmem:[#allocation4 + $0x64] sm:$0xf]
        %v2190 = vld [vmem:[#allocation4 + $0x68] sm:$0xf]
        %v2191 = vld [vmem:[#allocation4 + $0x6c] sm:$0xf]
        %v2192 = vld [vmem:[#allocation4 + $0x70] sm:$0xf]
        %v2193 = vld [vmem:[#allocation4 + $0x74] sm:$0xf]
        %v2194 = vld [vmem:[#allocation4 + $0x78] sm:$0xf]
        %v2195 = vld [vmem:[#allocation4 + $0x7c] sm:$0xf]
        %v2196 = vld [vmem:[#allocation4 + $0x80] sm:$0x1]
        %v2197 = vunpack.c.l.bf16 %v2164
        %v2198 = vunpack.c.l.bf16 %v2165
        %v2199 = vunpack.c.l.bf16 %v2166
        %v2200 = vunpack.c.l.bf16 %v2167
        %v2201 = vunpack.c.l.bf16 %v2168
        %v2202 = vunpack.c.l.bf16 %v2169
        %v2203 = vunpack.c.l.bf16 %v2170
        %v2204 = vunpack.c.l.bf16 %v2171
        %v2205 = vunpack.c.l.bf16 %v2172
        %v2206 = vunpack.c.l.bf16 %v2173
        %v2207 = vunpack.c.l.bf16 %v2174
        %v2208 = vunpack.c.l.bf16 %v2175
        %v2209 = vunpack.c.l.bf16 %v2176
        %v2210 = vunpack.c.l.bf16 %v2177
        %v2211 = vunpack.c.l.bf16 %v2178
        %v2212 = vunpack.c.l.bf16 %v2179
        %v2213 = vunpack.c.l.bf16 %v2180
        %v2214 = vunpack.c.l.bf16 %v2181
        %v2215 = vunpack.c.l.bf16 %v2182
        %v2216 = vunpack.c.l.bf16 %v2183
        %v2217 = vunpack.c.l.bf16 %v2184
        %v2218 = vunpack.c.l.bf16 %v2185
        %v2219 = vunpack.c.l.bf16 %v2186
        %v2220 = vunpack.c.l.bf16 %v2187
        %v2221 = vunpack.c.l.bf16 %v2188
        %v2222 = vunpack.c.l.bf16 %v2189
        %v2223 = vunpack.c.l.bf16 %v2190
        %v2224 = vunpack.c.l.bf16 %v2191
        %v2225 = vunpack.c.l.bf16 %v2192
        %v2226 = vunpack.c.l.bf16 %v2193
        %v2227 = vunpack.c.l.bf16 %v2194
        %v2228 = vunpack.c.l.bf16 %v2195
        %v2229 = vunpack.c.l.bf16 %v2196
        %v2230 = vlaneseq
        %v2231 = vshrl.u32 %v2230, 7
        %v2232 = vsub.s32 0, %v2231
        %v2233 = vrot.slane %v2160, %v2232
        %v2234 = vmul.f32 %v2197, %v2233
        %v2235 = vmul.f32 %v2198, %v2233
        %v2236 = vmul.f32 %v2199, %v2233
        %v2237 = vmul.f32 %v2200, %v2233
        %v2238 = vmul.f32 %v2201, %v2233
        %v2239 = vmul.f32 %v2202, %v2233
        %v2240 = vmul.f32 %v2203, %v2233
        %v2241 = vmul.f32 %v2204, %v2233
        %v2242 = vmul.f32 %v2205, %v2233
        %v2243 = vmul.f32 %v2206, %v2233
        %v2244 = vmul.f32 %v2207, %v2233
        %v2245 = vmul.f32 %v2208, %v2233
        %v2246 = vmul.f32 %v2209, %v2233
        %v2247 = vmul.f32 %v2210, %v2233
        %v2248 = vmul.f32 %v2211, %v2233
        %v2249 = vmul.f32 %v2212, %v2233
        %v2250 = vmul.f32 %v2213, %v2233
        %v2251 = vmul.f32 %v2214, %v2233
        %v2252 = vmul.f32 %v2215, %v2233
        %v2253 = vmul.f32 %v2216, %v2233
        %v2254 = vmul.f32 %v2217, %v2233
        %v2255 = vmul.f32 %v2218, %v2233
        %v2256 = vmul.f32 %v2219, %v2233
        %v2257 = vmul.f32 %v2220, %v2233
        %v2258 = vmul.f32 %v2221, %v2233
        %v2259 = vmul.f32 %v2222, %v2233
        %v2260 = vmul.f32 %v2223, %v2233
        %v2261 = vmul.f32 %v2224, %v2233
        %v2262 = vmul.f32 %v2225, %v2233
        %v2263 = vmul.f32 %v2226, %v2233
        %v2264 = vmul.f32 %v2227, %v2233
        %v2265 = vmul.f32 %v2228, %v2233
        %v2266 = vmul.f32 %v2229, %v2233
        %v2267 = vadd.f32 %v2234, 0.0
        %v2268 = vadd.f32 %v2235, 0.0
        %v2269 = vadd.f32 %v2236, 0.0
        %v2270 = vadd.f32 %v2237, 0.0
        %v2271 = vadd.f32 %v2238, 0.0
        %v2272 = vadd.f32 %v2239, 0.0
        %v2273 = vadd.f32 %v2240, 0.0
        %v2274 = vadd.f32 %v2241, 0.0
        %v2275 = vadd.f32 %v2242, 0.0
        %v2276 = vadd.f32 %v2243, 0.0
        %v2277 = vadd.f32 %v2244, 0.0
        %v2278 = vadd.f32 %v2245, 0.0
        %v2279 = vadd.f32 %v2246, 0.0
        %v2280 = vadd.f32 %v2247, 0.0
        %v2281 = vadd.f32 %v2248, 0.0
        %v2282 = vadd.f32 %v2249, 0.0
        %v2283 = vadd.f32 %v2250, 0.0
        %v2284 = vadd.f32 %v2251, 0.0
        %v2285 = vadd.f32 %v2252, 0.0
        %v2286 = vadd.f32 %v2253, 0.0
        %v2287 = vadd.f32 %v2254, 0.0
        %v2288 = vadd.f32 %v2255, 0.0
        %v2289 = vadd.f32 %v2256, 0.0
        %v2290 = vadd.f32 %v2257, 0.0
        %v2291 = vadd.f32 %v2258, 0.0
        %v2292 = vadd.f32 %v2259, 0.0
        %v2293 = vadd.f32 %v2260, 0.0
        %v2294 = vadd.f32 %v2261, 0.0
        %v2295 = vadd.f32 %v2262, 0.0
        %v2296 = vadd.f32 %v2263, 0.0
        %v2297 = vadd.f32 %v2264, 0.0
        %v2298 = vadd.f32 %v2265, 0.0
        %v2299 = vadd.f32 %v2266, 0.0
        %v2300 = vld [vmem:[#allocation4] sm:$0xe]
        %v2301 = vunpack.c.l.bf16 %v2300
        %v2302 = vlaneseq
        %v2303 = vshrl.u32 %v2302, 7
        %v2304 = vsub.s32 1, %v2303
        %v2305 = vrot.slane %v2160, %v2304
        %v2306 = vmul.f32 %v2301, %v2305
        %v2307 = vmul.f32 %v2198, %v2305
        %v2308 = vmul.f32 %v2199, %v2305
        %v2309 = vmul.f32 %v2200, %v2305
        %v2310 = vmul.f32 %v2201, %v2305
        %v2311 = vmul.f32 %v2202, %v2305
        %v2312 = vmul.f32 %v2203, %v2305
        %v2313 = vmul.f32 %v2204, %v2305
        %v2314 = vmul.f32 %v2205, %v2305
        %v2315 = vmul.f32 %v2206, %v2305
        %v2316 = vmul.f32 %v2207, %v2305
        %v2317 = vmul.f32 %v2208, %v2305
        %v2318 = vmul.f32 %v2209, %v2305
        %v2319 = vmul.f32 %v2210, %v2305
        %v2320 = vmul.f32 %v2211, %v2305
        %v2321 = vmul.f32 %v2212, %v2305
        %v2322 = vmul.f32 %v2213, %v2305
        %v2323 = vmul.f32 %v2214, %v2305
        %v2324 = vmul.f32 %v2215, %v2305
        %v2325 = vmul.f32 %v2216, %v2305
        %v2326 = vmul.f32 %v2217, %v2305
        %v2327 = vmul.f32 %v2218, %v2305
        %v2328 = vmul.f32 %v2219, %v2305
        %v2329 = vmul.f32 %v2220, %v2305
        %v2330 = vmul.f32 %v2221, %v2305
        %v2331 = vmul.f32 %v2222, %v2305
        %v2332 = vmul.f32 %v2223, %v2305
        %v2333 = vmul.f32 %v2224, %v2305
        %v2334 = vmul.f32 %v2225, %v2305
        %v2335 = vmul.f32 %v2226, %v2305
        %v2336 = vmul.f32 %v2227, %v2305
        %v2337 = vmul.f32 %v2228, %v2305
        %v2338 = vmul.f32 %v2229, %v2305
        %vm2372 = vcmask 1046528
        %v2373 = vrot.slane %v2306, 1
        %v2374 = vrot.slane %v2307, 1
        %v2375 = vsel %vm2372, %v2373, %v2374
        %v2376 = vrot.slane %v2308, 1
        %v2377 = vsel %vm2372, %v2374, %v2376
        %v2378 = vrot.slane %v2309, 1
        %v2379 = vsel %vm2372, %v2376, %v2378
        %v2380 = vrot.slane %v2310, 1
        %v2381 = vsel %vm2372, %v2378, %v2380
        %v2382 = vrot.slane %v2311, 1
        %v2383 = vsel %vm2372, %v2380, %v2382
        %v2384 = vrot.slane %v2312, 1
        %v2385 = vsel %vm2372, %v2382, %v2384
        %v2386 = vrot.slane %v2313, 1
        %v2387 = vsel %vm2372, %v2384, %v2386
        %v2388 = vrot.slane %v2314, 1
        %v2389 = vsel %vm2372, %v2386, %v2388
        %v2390 = vrot.slane %v2315, 1
        %v2391 = vsel %vm2372, %v2388, %v2390
        %v2392 = vrot.slane %v2316, 1
        %v2393 = vsel %vm2372, %v2390, %v2392
        %v2394 = vrot.slane %v2317, 1
        %v2395 = vsel %vm2372, %v2392, %v2394
        %v2396 = vrot.slane %v2318, 1
        %v2397 = vsel %vm2372, %v2394, %v2396
        %v2398 = vrot.slane %v2319, 1
        %v2399 = vsel %vm2372, %v2396, %v2398
        %v2400 = vrot.slane %v2320, 1
        %v2401 = vsel %vm2372, %v2398, %v2400
        %v2402 = vrot.slane %v2321, 1
        %v2403 = vsel %vm2372, %v2400, %v2402
        %v2404 = vrot.slane %v2322, 1
        %v2405 = vsel %vm2372, %v2402, %v2404
        %v2406 = vrot.slane %v2323, 1
        %v2407 = vsel %vm2372, %v2404, %v2406
        %v2408 = vrot.slane %v2324, 1
        %v2409 = vsel %vm2372, %v2406, %v2408
        %v2410 = vrot.slane %v2325, 1
        %v2411 = vsel %vm2372, %v2408, %v2410
        %v2412 = vrot.slane %v2326, 1
        %v2413 = vsel %vm2372, %v2410, %v2412
        %v2414 = vrot.slane %v2327, 1
        %v2415 = vsel %vm2372, %v2412, %v2414
        %v2416 = vrot.slane %v2328, 1
        %v2417 = vsel %vm2372, %v2414, %v2416
        %v2418 = vrot.slane %v2329, 1
        %v2419 = vsel %vm2372, %v2416, %v2418
        %v2420 = vrot.slane %v2330, 1
        %v2421 = vsel %vm2372, %v2418, %v2420
        %v2422 = vrot.slane %v2331, 1
        %v2423 = vsel %vm2372, %v2420, %v2422
        %v2424 = vrot.slane %v2332, 1
        %v2425 = vsel %vm2372, %v2422, %v2424
        %v2426 = vrot.slane %v2333, 1
        %v2427 = vsel %vm2372, %v2424, %v2426
        %v2428 = vrot.slane %v2334, 1
        %v2429 = vsel %vm2372, %v2426, %v2428
        %v2430 = vrot.slane %v2335, 1
        %v2431 = vsel %vm2372, %v2428, %v2430
        %v2432 = vrot.slane %v2336, 1
        %v2433 = vsel %vm2372, %v2430, %v2432
        %v2434 = vrot.slane %v2337, 1
        %v2435 = vsel %vm2372, %v2432, %v2434
        %v2436 = vrot.slane %v2338, 1
        %v2437 = vsel %vm2372, %v2434, %v2436
        %v2471 = vadd.f32 %v2267, %v2375
        %v2472 = vadd.f32 %v2268, %v2377
        %v2473 = vadd.f32 %v2269, %v2379
        %v2474 = vadd.f32 %v2270, %v2381
        %v2475 = vadd.f32 %v2271, %v2383
        %v2476 = vadd.f32 %v2272, %v2385
        %v2477 = vadd.f32 %v2273, %v2387
        %v2478 = vadd.f32 %v2274, %v2389
        %v2479 = vadd.f32 %v2275, %v2391
        %v2480 = vadd.f32 %v2276, %v2393
        %v2481 = vadd.f32 %v2277, %v2395
        %v2482 = vadd.f32 %v2278, %v2397
        %v2483 = vadd.f32 %v2279, %v2399
        %v2484 = vadd.f32 %v2280, %v2401
        %v2485 = vadd.f32 %v2281, %v2403
        %v2486 = vadd.f32 %v2282, %v2405
        %v2487 = vadd.f32 %v2283, %v2407
        %v2488 = vadd.f32 %v2284, %v2409
        %v2489 = vadd.f32 %v2285, %v2411
        %v2490 = vadd.f32 %v2286, %v2413
        %v2491 = vadd.f32 %v2287, %v2415
        %v2492 = vadd.f32 %v2288, %v2417
        %v2493 = vadd.f32 %v2289, %v2419
        %v2494 = vadd.f32 %v2290, %v2421
        %v2495 = vadd.f32 %v2291, %v2423
        %v2496 = vadd.f32 %v2292, %v2425
        %v2497 = vadd.f32 %v2293, %v2427
        %v2498 = vadd.f32 %v2294, %v2429
        %v2499 = vadd.f32 %v2295, %v2431
        %v2500 = vadd.f32 %v2296, %v2433
        %v2501 = vadd.f32 %v2297, %v2435
        %v2502 = vadd.f32 %v2298, %v2437
        %v2503 = vadd.f32 %v2299, %v2436
        %v2504 = vld [vmem:[#allocation4 + $0x80] sm:$0x3]
        %v2505 = vunpack.c.l.bf16 %v2504
        %v2506 = vlaneseq
        %v2507 = vshrl.u32 %v2506, 7
        %v2508 = vsub.s32 2, %v2507
        %v2509 = vrot.slane %v2160, %v2508
        %v2510 = vmul.f32 %v2301, %v2509
        %v2511 = vmul.f32 %v2198, %v2509
        %v2512 = vmul.f32 %v2199, %v2509
        %v2513 = vmul.f32 %v2200, %v2509
        %v2514 = vmul.f32 %v2201, %v2509
        %v2515 = vmul.f32 %v2202, %v2509
        %v2516 = vmul.f32 %v2203, %v2509
        %v2517 = vmul.f32 %v2204, %v2509
        %v2518 = vmul.f32 %v2205, %v2509
        %v2519 = vmul.f32 %v2206, %v2509
        %v2520 = vmul.f32 %v2207, %v2509
        %v2521 = vmul.f32 %v2208, %v2509
        %v2522 = vmul.f32 %v2209, %v2509
        %v2523 = vmul.f32 %v2210, %v2509
        %v2524 = vmul.f32 %v2211, %v2509
        %v2525 = vmul.f32 %v2212, %v2509
        %v2526 = vmul.f32 %v2213, %v2509
        %v2527 = vmul.f32 %v2214, %v2509
        %v2528 = vmul.f32 %v2215, %v2509
        %v2529 = vmul.f32 %v2216, %v2509
        %v2530 = vmul.f32 %v2217, %v2509
        %v2531 = vmul.f32 %v2218, %v2509
        %v2532 = vmul.f32 %v2219, %v2509
        %v2533 = vmul.f32 %v2220, %v2509
        %v2534 = vmul.f32 %v2221, %v2509
        %v2535 = vmul.f32 %v2222, %v2509
        %v2536 = vmul.f32 %v2223, %v2509
        %v2537 = vmul.f32 %v2224, %v2509
        %v2538 = vmul.f32 %v2225, %v2509
        %v2539 = vmul.f32 %v2226, %v2509
        %v2540 = vmul.f32 %v2227, %v2509
        %v2541 = vmul.f32 %v2228, %v2509
        %v2542 = vmul.f32 %v2505, %v2509
        %vm2576 = vcmask 1045504
        %v2577 = vrot.slane %v2510, 2
        %v2578 = vrot.slane %v2511, 2
        %v2579 = vsel %vm2576, %v2577, %v2578
        %v2580 = vrot.slane %v2512, 2
        %v2581 = vsel %vm2576, %v2578, %v2580
        %v2582 = vrot.slane %v2513, 2
        %v2583 = vsel %vm2576, %v2580, %v2582
        %v2584 = vrot.slane %v2514, 2
        %v2585 = vsel %vm2576, %v2582, %v2584
        %v2586 = vrot.slane %v2515, 2
        %v2587 = vsel %vm2576, %v2584, %v2586
        %v2588 = vrot.slane %v2516, 2
        %v2589 = vsel %vm2576, %v2586, %v2588
        %v2590 = vrot.slane %v2517, 2
        %v2591 = vsel %vm2576, %v2588, %v2590
        %v2592 = vrot.slane %v2518, 2
        %v2593 = vsel %vm2576, %v2590, %v2592
        %v2594 = vrot.slane %v2519, 2
        %v2595 = vsel %vm2576, %v2592, %v2594
        %v2596 = vrot.slane %v2520, 2
        %v2597 = vsel %vm2576, %v2594, %v2596
        %v2598 = vrot.slane %v2521, 2
        %v2599 = vsel %vm2576, %v2596, %v2598
        %v2600 = vrot.slane %v2522, 2
        %v2601 = vsel %vm2576, %v2598, %v2600
        %v2602 = vrot.slane %v2523, 2
        %v2603 = vsel %vm2576, %v2600, %v2602
        %v2604 = vrot.slane %v2524, 2
        %v2605 = vsel %vm2576, %v2602, %v2604
        %v2606 = vrot.slane %v2525, 2
        %v2607 = vsel %vm2576, %v2604, %v2606
        %v2608 = vrot.slane %v2526, 2
        %v2609 = vsel %vm2576, %v2606, %v2608
        %v2610 = vrot.slane %v2527, 2
        %v2611 = vsel %vm2576, %v2608, %v2610
        %v2612 = vrot.slane %v2528, 2
        %v2613 = vsel %vm2576, %v2610, %v2612
        %v2614 = vrot.slane %v2529, 2
        %v2615 = vsel %vm2576, %v2612, %v2614
        %v2616 = vrot.slane %v2530, 2
        %v2617 = vsel %vm2576, %v2614, %v2616
        %v2618 = vrot.slane %v2531, 2
        %v2619 = vsel %vm2576, %v2616, %v2618
        %v2620 = vrot.slane %v2532, 2
        %v2621 = vsel %vm2576, %v2618, %v2620
        %v2622 = vrot.slane %v2533, 2
        %v2623 = vsel %vm2576, %v2620, %v2622
        %v2624 = vrot.slane %v2534, 2
        %v2625 = vsel %vm2576, %v2622, %v2624
        %v2626 = vrot.slane %v2535, 2
        %v2627 = vsel %vm2576, %v2624, %v2626
        %v2628 = vrot.slane %v2536, 2
        %v2629 = vsel %vm2576, %v2626, %v2628
        %v2630 = vrot.slane %v2537, 2
        %v2631 = vsel %vm2576, %v2628, %v2630
        %v2632 = vrot.slane %v2538, 2
        %v2633 = vsel %vm2576, %v2630, %v2632
        %v2634 = vrot.slane %v2539, 2
        %v2635 = vsel %vm2576, %v2632, %v2634
        %v2636 = vrot.slane %v2540, 2
        %v2637 = vsel %vm2576, %v2634, %v2636
        %v2638 = vrot.slane %v2541, 2
        %v2639 = vsel %vm2576, %v2636, %v2638
        %v2640 = vrot.slane %v2542, 2
        %v2641 = vsel %vm2576, %v2638, %v2640
        %v2675 = vadd.f32 %v2471, %v2579
        %v2676 = vadd.f32 %v2472, %v2581
        %v2677 = vadd.f32 %v2473, %v2583
        %v2678 = vadd.f32 %v2474, %v2585
        %v2679 = vadd.f32 %v2475, %v2587
        %v2680 = vadd.f32 %v2476, %v2589
        %v2681 = vadd.f32 %v2477, %v2591
        %v2682 = vadd.f32 %v2478, %v2593
        %v2683 = vadd.f32 %v2479, %v2595
        %v2684 = vadd.f32 %v2480, %v2597
        %v2685 = vadd.f32 %v2481, %v2599
        %v2686 = vadd.f32 %v2482, %v2601
        %v2687 = vadd.f32 %v2483, %v2603
        %v2688 = vadd.f32 %v2484, %v2605
        %v2689 = vadd.f32 %v2485, %v2607
        %v2690 = vadd.f32 %v2486, %v2609
        %v2691 = vadd.f32 %v2487, %v2611
        %v2692 = vadd.f32 %v2488, %v2613
        %v2693 = vadd.f32 %v2489, %v2615
        %v2694 = vadd.f32 %v2490, %v2617
        %v2695 = vadd.f32 %v2491, %v2619
        %v2696 = vadd.f32 %v2492, %v2621
        %v2697 = vadd.f32 %v2493, %v2623
        %v2698 = vadd.f32 %v2494, %v2625
        %v2699 = vadd.f32 %v2495, %v2627
        %v2700 = vadd.f32 %v2496, %v2629
        %v2701 = vadd.f32 %v2497, %v2631
        %v2702 = vadd.f32 %v2498, %v2633
        %v2703 = vadd.f32 %v2499, %v2635
        %v2704 = vadd.f32 %v2500, %v2637
        %v2705 = vadd.f32 %v2501, %v2639
        %v2706 = vadd.f32 %v2502, %v2641
        %v2707 = vadd.f32 %v2503, %v2640
        %v2708 = vld [vmem:[#allocation4] sm:$0xc]
        %v2709 = vunpack.c.l.bf16 %v2708
        %v2710 = vlaneseq
        %v2711 = vshrl.u32 %v2710, 7
        %v2712 = vsub.s32 3, %v2711
        %v2713 = vrot.slane %v2160, %v2712
        %v2714 = vmul.f32 %v2709, %v2713
        %v2715 = vmul.f32 %v2198, %v2713
        %v2716 = vmul.f32 %v2199, %v2713
        %v2717 = vmul.f32 %v2200, %v2713
        %v2718 = vmul.f32 %v2201, %v2713
        %v2719 = vmul.f32 %v2202, %v2713
        %v2720 = vmul.f32 %v2203, %v2713
        %v2721 = vmul.f32 %v2204, %v2713
        %v2722 = vmul.f32 %v2205, %v2713
        %v2723 = vmul.f32 %v2206, %v2713
        %v2724 = vmul.f32 %v2207, %v2713
        %v2725 = vmul.f32 %v2208, %v2713
        %v2726 = vmul.f32 %v2209, %v2713
        %v2727 = vmul.f32 %v2210, %v2713
        %v2728 = vmul.f32 %v2211, %v2713
        %v2729 = vmul.f32 %v2212, %v2713
        %v2730 = vmul.f32 %v2213, %v2713
        %v2731 = vmul.f32 %v2214, %v2713
        %v2732 = vmul.f32 %v2215, %v2713
        %v2733 = vmul.f32 %v2216, %v2713
        %v2734 = vmul.f32 %v2217, %v2713
        %v2735 = vmul.f32 %v2218, %v2713
        %v2736 = vmul.f32 %v2219, %v2713
        %v2737 = vmul.f32 %v2220, %v2713
        %v2738 = vmul.f32 %v2221, %v2713
        %v2739 = vmul.f32 %v2222, %v2713
        %v2740 = vmul.f32 %v2223, %v2713
        %v2741 = vmul.f32 %v2224, %v2713
        %v2742 = vmul.f32 %v2225, %v2713
        %v2743 = vmul.f32 %v2226, %v2713
        %v2744 = vmul.f32 %v2227, %v2713
        %v2745 = vmul.f32 %v2228, %v2713
        %v2746 = vmul.f32 %v2505, %v2713
        %vm2780 = vcmask 1044480
        %v2781 = vrot.slane %v2714, 3
        %v2782 = vrot.slane %v2715, 3
        %v2783 = vsel %vm2780, %v2781, %v2782
        %v2784 = vrot.slane %v2716, 3
        %v2785 = vsel %vm2780, %v2782, %v2784
        %v2786 = vrot.slane %v2717, 3
        %v2787 = vsel %vm2780, %v2784, %v2786
        %v2788 = vrot.slane %v2718, 3
        %v2789 = vsel %vm2780, %v2786, %v2788
        %v2790 = vrot.slane %v2719, 3
        %v2791 = vsel %vm2780, %v2788, %v2790
        %v2792 = vrot.slane %v2720, 3
        %v2793 = vsel %vm2780, %v2790, %v2792
        %v2794 = vrot.slane %v2721, 3
        %v2795 = vsel %vm2780, %v2792, %v2794
        %v2796 = vrot.slane %v2722, 3
        %v2797 = vsel %vm2780, %v2794, %v2796
        %v2798 = vrot.slane %v2723, 3
        %v2799 = vsel %vm2780, %v2796, %v2798
        %v2800 = vrot.slane %v2724, 3
        %v2801 = vsel %vm2780, %v2798, %v2800
        %v2802 = vrot.slane %v2725, 3
        %v2803 = vsel %vm2780, %v2800, %v2802
        %v2804 = vrot.slane %v2726, 3
        %v2805 = vsel %vm2780, %v2802, %v2804
        %v2806 = vrot.slane %v2727, 3
        %v2807 = vsel %vm2780, %v2804, %v2806
        %v2808 = vrot.slane %v2728, 3
        %v2809 = vsel %vm2780, %v2806, %v2808
        %v2810 = vrot.slane %v2729, 3
        %v2811 = vsel %vm2780, %v2808, %v2810
        %v2812 = vrot.slane %v2730, 3
        %v2813 = vsel %vm2780, %v2810, %v2812
        %v2814 = vrot.slane %v2731, 3
        %v2815 = vsel %vm2780, %v2812, %v2814
        %v2816 = vrot.slane %v2732, 3
        %v2817 = vsel %vm2780, %v2814, %v2816
        %v2818 = vrot.slane %v2733, 3
        %v2819 = vsel %vm2780, %v2816, %v2818
        %v2820 = vrot.slane %v2734, 3
        %v2821 = vsel %vm2780, %v2818, %v2820
        %v2822 = vrot.slane %v2735, 3
        %v2823 = vsel %vm2780, %v2820, %v2822
        %v2824 = vrot.slane %v2736, 3
        %v2825 = vsel %vm2780, %v2822, %v2824
        %v2826 = vrot.slane %v2737, 3
        %v2827 = vsel %vm2780, %v2824, %v2826
        %v2828 = vrot.slane %v2738, 3
        %v2829 = vsel %vm2780, %v2826, %v2828
        %v2830 = vrot.slane %v2739, 3
        %v2831 = vsel %vm2780, %v2828, %v2830
        %v2832 = vrot.slane %v2740, 3
        %v2833 = vsel %vm2780, %v2830, %v2832
        %v2834 = vrot.slane %v2741, 3
        %v2835 = vsel %vm2780, %v2832, %v2834
        %v2836 = vrot.slane %v2742, 3
        %v2837 = vsel %vm2780, %v2834, %v2836
        %v2838 = vrot.slane %v2743, 3
        %v2839 = vsel %vm2780, %v2836, %v2838
        %v2840 = vrot.slane %v2744, 3
        %v2841 = vsel %vm2780, %v2838, %v2840
        %v2842 = vrot.slane %v2745, 3
        %v2843 = vsel %vm2780, %v2840, %v2842
        %v2844 = vrot.slane %v2746, 3
        %v2845 = vsel %vm2780, %v2842, %v2844
        %v2879 = vadd.f32 %v2675, %v2783
        %v2880 = vadd.f32 %v2676, %v2785
        %v2881 = vadd.f32 %v2677, %v2787
        %v2882 = vadd.f32 %v2678, %v2789
        %v2883 = vadd.f32 %v2679, %v2791
        %v2884 = vadd.f32 %v2680, %v2793
        %v2885 = vadd.f32 %v2681, %v2795
        %v2886 = vadd.f32 %v2682, %v2797
        %v2887 = vadd.f32 %v2683, %v2799
        %v2888 = vadd.f32 %v2684, %v2801
        %v2889 = vadd.f32 %v2685, %v2803
        %v2890 = vadd.f32 %v2686, %v2805
        %v2891 = vadd.f32 %v2687, %v2807
        %v2892 = vadd.f32 %v2688, %v2809
        %v2893 = vadd.f32 %v2689, %v2811
        %v2894 = vadd.f32 %v2690, %v2813
        %v2895 = vadd.f32 %v2691, %v2815
        %v2896 = vadd.f32 %v2692, %v2817
        %v2897 = vadd.f32 %v2693, %v2819
        %v2898 = vadd.f32 %v2694, %v2821
        %v2899 = vadd.f32 %v2695, %v2823
        %v2900 = vadd.f32 %v2696, %v2825
        %v2901 = vadd.f32 %v2697, %v2827
        %v2902 = vadd.f32 %v2698, %v2829
        %v2903 = vadd.f32 %v2699, %v2831
        %v2904 = vadd.f32 %v2700, %v2833
        %v2905 = vadd.f32 %v2701, %v2835
        %v2906 = vadd.f32 %v2702, %v2837
        %v2907 = vadd.f32 %v2703, %v2839
        %v2908 = vadd.f32 %v2704, %v2841
        %v2909 = vadd.f32 %v2705, %v2843
        %v2910 = vadd.f32 %v2706, %v2845
        %v2911 = vadd.f32 %v2707, %v2844
        %v2912 = vld [vmem:[#allocation4 + $0x80] sm:$0x7]
        %v2913 = vunpack.c.l.bf16 %v2912
        %v2914 = vlaneseq
        %v2915 = vshrl.u32 %v2914, 7
        %v2916 = vsub.s32 4, %v2915
        %v2917 = vrot.slane %v2160, %v2916
        %v2918 = vmul.f32 %v2709, %v2917
        %v2919 = vmul.f32 %v2198, %v2917
        %v2920 = vmul.f32 %v2199, %v2917
        %v2921 = vmul.f32 %v2200, %v2917
        %v2922 = vmul.f32 %v2201, %v2917
        %v2923 = vmul.f32 %v2202, %v2917
        %v2924 = vmul.f32 %v2203, %v2917
        %v2925 = vmul.f32 %v2204, %v2917
        %v2926 = vmul.f32 %v2205, %v2917
        %v2927 = vmul.f32 %v2206, %v2917
        %v2928 = vmul.f32 %v2207, %v2917
        %v2929 = vmul.f32 %v2208, %v2917
        %v2930 = vmul.f32 %v2209, %v2917
        %v2931 = vmul.f32 %v2210, %v2917
        %v2932 = vmul.f32 %v2211, %v2917
        %v2933 = vmul.f32 %v2212, %v2917
        %v2934 = vmul.f32 %v2213, %v2917
        %v2935 = vmul.f32 %v2214, %v2917
        %v2936 = vmul.f32 %v2215, %v2917
        %v2937 = vmul.f32 %v2216, %v2917
        %v2938 = vmul.f32 %v2217, %v2917
        %v2939 = vmul.f32 %v2218, %v2917
        %v2940 = vmul.f32 %v2219, %v2917
        %v2941 = vmul.f32 %v2220, %v2917
        %v2942 = vmul.f32 %v2221, %v2917
        %v2943 = vmul.f32 %v2222, %v2917
        %v2944 = vmul.f32 %v2223, %v2917
        %v2945 = vmul.f32 %v2224, %v2917
        %v2946 = vmul.f32 %v2225, %v2917
        %v2947 = vmul.f32 %v2226, %v2917
        %v2948 = vmul.f32 %v2227, %v2917
        %v2949 = vmul.f32 %v2228, %v2917
        %v2950 = vmul.f32 %v2913, %v2917
        %vm2984 = vcmask 1043456
        %v2985 = vrot.slane %v2918, 4
        %v2986 = vrot.slane %v2919, 4
        %v2987 = vsel %vm2984, %v2985, %v2986
        %v2988 = vrot.slane %v2920, 4
        %v2989 = vsel %vm2984, %v2986, %v2988
        %v2990 = vrot.slane %v2921, 4
        %v2991 = vsel %vm2984, %v2988, %v2990
        %v2992 = vrot.slane %v2922, 4
        %v2993 = vsel %vm2984, %v2990, %v2992
        %v2994 = vrot.slane %v2923, 4
        %v2995 = vsel %vm2984, %v2992, %v2994
        %v2996 = vrot.slane %v2924, 4
        %v2997 = vsel %vm2984, %v2994, %v2996
        %v2998 = vrot.slane %v2925, 4
        %v2999 = vsel %vm2984, %v2996, %v2998
        %v3000 = vrot.slane %v2926, 4
        %v3001 = vsel %vm2984, %v2998, %v3000
        %v3002 = vrot.slane %v2927, 4
        %v3003 = vsel %vm2984, %v3000, %v3002
        %v3004 = vrot.slane %v2928, 4
        %v3005 = vsel %vm2984, %v3002, %v3004
        %v3006 = vrot.slane %v2929, 4
        %v3007 = vsel %vm2984, %v3004, %v3006
        %v3008 = vrot.slane %v2930, 4
        %v3009 = vsel %vm2984, %v3006, %v3008
        %v3010 = vrot.slane %v2931, 4
        %v3011 = vsel %vm2984, %v3008, %v3010
        %v3012 = vrot.slane %v2932, 4
        %v3013 = vsel %vm2984, %v3010, %v3012
        %v3014 = vrot.slane %v2933, 4
        %v3015 = vsel %vm2984, %v3012, %v3014
        %v3016 = vrot.slane %v2934, 4
        %v3017 = vsel %vm2984, %v3014, %v3016
        %v3018 = vrot.slane %v2935, 4
        %v3019 = vsel %vm2984, %v3016, %v3018
        %v3020 = vrot.slane %v2936, 4
        %v3021 = vsel %vm2984, %v3018, %v3020
        %v3022 = vrot.slane %v2937, 4
        %v3023 = vsel %vm2984, %v3020, %v3022
        %v3024 = vrot.slane %v2938, 4
        %v3025 = vsel %vm2984, %v3022, %v3024
        %v3026 = vrot.slane %v2939, 4
        %v3027 = vsel %vm2984, %v3024, %v3026
        %v3028 = vrot.slane %v2940, 4
        %v3029 = vsel %vm2984, %v3026, %v3028
        %v3030 = vrot.slane %v2941, 4
        %v3031 = vsel %vm2984, %v3028, %v3030
        %v3032 = vrot.slane %v2942, 4
        %v3033 = vsel %vm2984, %v3030, %v3032
        %v3034 = vrot.slane %v2943, 4
        %v3035 = vsel %vm2984, %v3032, %v3034
        %v3036 = vrot.slane %v2944, 4
        %v3037 = vsel %vm2984, %v3034, %v3036
        %v3038 = vrot.slane %v2945, 4
        %v3039 = vsel %vm2984, %v3036, %v3038
        %v3040 = vrot.slane %v2946, 4
        %v3041 = vsel %vm2984, %v3038, %v3040
        %v3042 = vrot.slane %v2947, 4
        %v3043 = vsel %vm2984, %v3040, %v3042
        %v3044 = vrot.slane %v2948, 4
        %v3045 = vsel %vm2984, %v3042, %v3044
        %v3046 = vrot.slane %v2949, 4
        %v3047 = vsel %vm2984, %v3044, %v3046
        %v3048 = vrot.slane %v2950, 4
        %v3049 = vsel %vm2984, %v3046, %v3048
        %v3083 = vadd.f32 %v2879, %v2987
        %v3084 = vadd.f32 %v2880, %v2989
        %v3085 = vadd.f32 %v2881, %v2991
        %v3086 = vadd.f32 %v2882, %v2993
        %v3087 = vadd.f32 %v2883, %v2995
        %v3088 = vadd.f32 %v2884, %v2997
        %v3089 = vadd.f32 %v2885, %v2999
        %v3090 = vadd.f32 %v2886, %v3001
        %v3091 = vadd.f32 %v2887, %v3003
        %v3092 = vadd.f32 %v2888, %v3005
        %v3093 = vadd.f32 %v2889, %v3007
        %v3094 = vadd.f32 %v2890, %v3009
        %v3095 = vadd.f32 %v2891, %v3011
        %v3096 = vadd.f32 %v2892, %v3013
        %v3097 = vadd.f32 %v2893, %v3015
        %v3098 = vadd.f32 %v2894, %v3017
        %v3099 = vadd.f32 %v2895, %v3019
        %v3100 = vadd.f32 %v2896, %v3021
        %v3101 = vadd.f32 %v2897, %v3023
        %v3102 = vadd.f32 %v2898, %v3025
        %v3103 = vadd.f32 %v2899, %v3027
        %v3104 = vadd.f32 %v2900, %v3029
        %v3105 = vadd.f32 %v2901, %v3031
        %v3106 = vadd.f32 %v2902, %v3033
        %v3107 = vadd.f32 %v2903, %v3035
        %v3108 = vadd.f32 %v2904, %v3037
        %v3109 = vadd.f32 %v2905, %v3039
        %v3110 = vadd.f32 %v2906, %v3041
        %v3111 = vadd.f32 %v2907, %v3043
        %v3112 = vadd.f32 %v2908, %v3045
        %v3113 = vadd.f32 %v2909, %v3047
        %v3114 = vadd.f32 %v2910, %v3049
        %v3115 = vadd.f32 %v2911, %v3048
        %v3116 = vld [vmem:[#allocation4] sm:$0x8]
        %v3117 = vunpack.c.l.bf16 %v3116
        %v3118 = vlaneseq
        %v3119 = vshrl.u32 %v3118, 7
        %v3120 = vsub.s32 5, %v3119
        %v3121 = vrot.slane %v2160, %v3120
        %v3122 = vmul.f32 %v3117, %v3121
        %v3123 = vmul.f32 %v2198, %v3121
        %v3124 = vmul.f32 %v2199, %v3121
        %v3125 = vmul.f32 %v2200, %v3121
        %v3126 = vmul.f32 %v2201, %v3121
        %v3127 = vmul.f32 %v2202, %v3121
        %v3128 = vmul.f32 %v2203, %v3121
        %v3129 = vmul.f32 %v2204, %v3121
        %v3130 = vmul.f32 %v2205, %v3121
        %v3131 = vmul.f32 %v2206, %v3121
        %v3132 = vmul.f32 %v2207, %v3121
        %v3133 = vmul.f32 %v2208, %v3121
        %v3134 = vmul.f32 %v2209, %v3121
        %v3135 = vmul.f32 %v2210, %v3121
        %v3136 = vmul.f32 %v2211, %v3121
        %v3137 = vmul.f32 %v2212, %v3121
        %v3138 = vmul.f32 %v2213, %v3121
        %v3139 = vmul.f32 %v2214, %v3121
        %v3140 = vmul.f32 %v2215, %v3121
        %v3141 = vmul.f32 %v2216, %v3121
        %v3142 = vmul.f32 %v2217, %v3121
        %v3143 = vmul.f32 %v2218, %v3121
        %v3144 = vmul.f32 %v2219, %v3121
        %v3145 = vmul.f32 %v2220, %v3121
        %v3146 = vmul.f32 %v2221, %v3121
        %v3147 = vmul.f32 %v2222, %v3121
        %v3148 = vmul.f32 %v2223, %v3121
        %v3149 = vmul.f32 %v2224, %v3121
        %v3150 = vmul.f32 %v2225, %v3121
        %v3151 = vmul.f32 %v2226, %v3121
        %v3152 = vmul.f32 %v2227, %v3121
        %v3153 = vmul.f32 %v2228, %v3121
        %v3154 = vmul.f32 %v2913, %v3121
        %vm3188 = vcmask 1042432
        %v3189 = vrot.slane %v3122, 5
        %v3190 = vrot.slane %v3123, 5
        %v3191 = vsel %vm3188, %v3189, %v3190
        %v3192 = vrot.slane %v3124, 5
        %v3193 = vsel %vm3188, %v3190, %v3192
        %v3194 = vrot.slane %v3125, 5
        %v3195 = vsel %vm3188, %v3192, %v3194
        %v3196 = vrot.slane %v3126, 5
        %v3197 = vsel %vm3188, %v3194, %v3196
        %v3198 = vrot.slane %v3127, 5
        %v3199 = vsel %vm3188, %v3196, %v3198
        %v3200 = vrot.slane %v3128, 5
        %v3201 = vsel %vm3188, %v3198, %v3200
        %v3202 = vrot.slane %v3129, 5
        %v3203 = vsel %vm3188, %v3200, %v3202
        %v3204 = vrot.slane %v3130, 5
        %v3205 = vsel %vm3188, %v3202, %v3204
        %v3206 = vrot.slane %v3131, 5
        %v3207 = vsel %vm3188, %v3204, %v3206
        %v3208 = vrot.slane %v3132, 5
        %v3209 = vsel %vm3188, %v3206, %v3208
        %v3210 = vrot.slane %v3133, 5
        %v3211 = vsel %vm3188, %v3208, %v3210
        %v3212 = vrot.slane %v3134, 5
        %v3213 = vsel %vm3188, %v3210, %v3212
        %v3214 = vrot.slane %v3135, 5
        %v3215 = vsel %vm3188, %v3212, %v3214
        %v3216 = vrot.slane %v3136, 5
        %v3217 = vsel %vm3188, %v3214, %v3216
        %v3218 = vrot.slane %v3137, 5
        %v3219 = vsel %vm3188, %v3216, %v3218
        %v3220 = vrot.slane %v3138, 5
        %v3221 = vsel %vm3188, %v3218, %v3220
        %v3222 = vrot.slane %v3139, 5
        %v3223 = vsel %vm3188, %v3220, %v3222
        %v3224 = vrot.slane %v3140, 5
        %v3225 = vsel %vm3188, %v3222, %v3224
        %v3226 = vrot.slane %v3141, 5
        %v3227 = vsel %vm3188, %v3224, %v3226
        %v3228 = vrot.slane %v3142, 5
        %v3229 = vsel %vm3188, %v3226, %v3228
        %v3230 = vrot.slane %v3143, 5
        %v3231 = vsel %vm3188, %v3228, %v3230
        %v3232 = vrot.slane %v3144, 5
        %v3233 = vsel %vm3188, %v3230, %v3232
        %v3234 = vrot.slane %v3145, 5
        %v3235 = vsel %vm3188, %v3232, %v3234
        %v3236 = vrot.slane %v3146, 5
        %v3237 = vsel %vm3188, %v3234, %v3236
        %v3238 = vrot.slane %v3147, 5
        %v3239 = vsel %vm3188, %v3236, %v3238
        %v3240 = vrot.slane %v3148, 5
        %v3241 = vsel %vm3188, %v3238, %v3240
        %v3242 = vrot.slane %v3149, 5
        %v3243 = vsel %vm3188, %v3240, %v3242
        %v3244 = vrot.slane %v3150, 5
        %v3245 = vsel %vm3188, %v3242, %v3244
        %v3246 = vrot.slane %v3151, 5
        %v3247 = vsel %vm3188, %v3244, %v3246
        %v3248 = vrot.slane %v3152, 5
        %v3249 = vsel %vm3188, %v3246, %v3248
        %v3250 = vrot.slane %v3153, 5
        %v3251 = vsel %vm3188, %v3248, %v3250
        %v3252 = vrot.slane %v3154, 5
        %v3253 = vsel %vm3188, %v3250, %v3252
        %v3287 = vadd.f32 %v3083, %v3191
        %v3288 = vadd.f32 %v3084, %v3193
        %v3289 = vadd.f32 %v3085, %v3195
        %v3290 = vadd.f32 %v3086, %v3197
        %v3291 = vadd.f32 %v3087, %v3199
        %v3292 = vadd.f32 %v3088, %v3201
        %v3293 = vadd.f32 %v3089, %v3203
        %v3294 = vadd.f32 %v3090, %v3205
        %v3295 = vadd.f32 %v3091, %v3207
        %v3296 = vadd.f32 %v3092, %v3209
        %v3297 = vadd.f32 %v3093, %v3211
        %v3298 = vadd.f32 %v3094, %v3213
        %v3299 = vadd.f32 %v3095, %v3215
        %v3300 = vadd.f32 %v3096, %v3217
        %v3301 = vadd.f32 %v3097, %v3219
        %v3302 = vadd.f32 %v3098, %v3221
        %v3303 = vadd.f32 %v3099, %v3223
        %v3304 = vadd.f32 %v3100, %v3225
        %v3305 = vadd.f32 %v3101, %v3227
        %v3306 = vadd.f32 %v3102, %v3229
        %v3307 = vadd.f32 %v3103, %v3231
        %v3308 = vadd.f32 %v3104, %v3233
        %v3309 = vadd.f32 %v3105, %v3235
        %v3310 = vadd.f32 %v3106, %v3237
        %v3311 = vadd.f32 %v3107, %v3239
        %v3312 = vadd.f32 %v3108, %v3241
        %v3313 = vadd.f32 %v3109, %v3243
        %v3314 = vadd.f32 %v3110, %v3245
        %v3315 = vadd.f32 %v3111, %v3247
        %v3316 = vadd.f32 %v3112, %v3249
        %v3317 = vadd.f32 %v3113, %v3251
        %v3318 = vadd.f32 %v3114, %v3253
        %v3319 = vadd.f32 %v3115, %v3252
        %v3320 = vld [vmem:[#allocation4 + $0x80] sm:$0xf]
        %v3321 = vunpack.c.l.bf16 %v3320
        %v3322 = vlaneseq
        %v3323 = vshrl.u32 %v3322, 7
        %v3324 = vsub.s32 6, %v3323
        %v3325 = vrot.slane %v2160, %v3324
        %v3326 = vmul.f32 %v3117, %v3325
        %v3327 = vmul.f32 %v2198, %v3325
        %v3328 = vmul.f32 %v2199, %v3325
        %v3329 = vmul.f32 %v2200, %v3325
        %v3330 = vmul.f32 %v2201, %v3325
        %v3331 = vmul.f32 %v2202, %v3325
        %v3332 = vmul.f32 %v2203, %v3325
        %v3333 = vmul.f32 %v2204, %v3325
        %v3334 = vmul.f32 %v2205, %v3325
        %v3335 = vmul.f32 %v2206, %v3325
        %v3336 = vmul.f32 %v2207, %v3325
        %v3337 = vmul.f32 %v2208, %v3325
        %v3338 = vmul.f32 %v2209, %v3325
        %v3339 = vmul.f32 %v2210, %v3325
        %v3340 = vmul.f32 %v2211, %v3325
        %v3341 = vmul.f32 %v2212, %v3325
        %v3342 = vmul.f32 %v2213, %v3325
        %v3343 = vmul.f32 %v2214, %v3325
        %v3344 = vmul.f32 %v2215, %v3325
        %v3345 = vmul.f32 %v2216, %v3325
        %v3346 = vmul.f32 %v2217, %v3325
        %v3347 = vmul.f32 %v2218, %v3325
        %v3348 = vmul.f32 %v2219, %v3325
        %v3349 = vmul.f32 %v2220, %v3325
        %v3350 = vmul.f32 %v2221, %v3325
        %v3351 = vmul.f32 %v2222, %v3325
        %v3352 = vmul.f32 %v2223, %v3325
        %v3353 = vmul.f32 %v2224, %v3325
        %v3354 = vmul.f32 %v2225, %v3325
        %v3355 = vmul.f32 %v2226, %v3325
        %v3356 = vmul.f32 %v2227, %v3325
        %v3357 = vmul.f32 %v2228, %v3325
        %v3358 = vmul.f32 %v3321, %v3325
        %vm3392 = vcmask 1041408
        %v3393 = vrot.slane %v3326, 6
        %v3394 = vrot.slane %v3327, 6
        %v3395 = vsel %vm3392, %v3393, %v3394
        %v3396 = vrot.slane %v3328, 6
        %v3397 = vsel %vm3392, %v3394, %v3396
        %v3398 = vrot.slane %v3329, 6
        %v3399 = vsel %vm3392, %v3396, %v3398
        %v3400 = vrot.slane %v3330, 6
        %v3401 = vsel %vm3392, %v3398, %v3400
        %v3402 = vrot.slane %v3331, 6
        %v3403 = vsel %vm3392, %v3400, %v3402
        %v3404 = vrot.slane %v3332, 6
        %v3405 = vsel %vm3392, %v3402, %v3404
        %v3406 = vrot.slane %v3333, 6
        %v3407 = vsel %vm3392, %v3404, %v3406
        %v3408 = vrot.slane %v3334, 6
        %v3409 = vsel %vm3392, %v3406, %v3408
        %v3410 = vrot.slane %v3335, 6
        %v3411 = vsel %vm3392, %v3408, %v3410
        %v3412 = vrot.slane %v3336, 6
        %v3413 = vsel %vm3392, %v3410, %v3412
        %v3414 = vrot.slane %v3337, 6
        %v3415 = vsel %vm3392, %v3412, %v3414
        %v3416 = vrot.slane %v3338, 6
        %v3417 = vsel %vm3392, %v3414, %v3416
        %v3418 = vrot.slane %v3339, 6
        %v3419 = vsel %vm3392, %v3416, %v3418
        %v3420 = vrot.slane %v3340, 6
        %v3421 = vsel %vm3392, %v3418, %v3420
        %v3422 = vrot.slane %v3341, 6
        %v3423 = vsel %vm3392, %v3420, %v3422
        %v3424 = vrot.slane %v3342, 6
        %v3425 = vsel %vm3392, %v3422, %v3424
        %v3426 = vrot.slane %v3343, 6
        %v3427 = vsel %vm3392, %v3424, %v3426
        %v3428 = vrot.slane %v3344, 6
        %v3429 = vsel %vm3392, %v3426, %v3428
        %v3430 = vrot.slane %v3345, 6
        %v3431 = vsel %vm3392, %v3428, %v3430
        %v3432 = vrot.slane %v3346, 6
        %v3433 = vsel %vm3392, %v3430, %v3432
        %v3434 = vrot.slane %v3347, 6
        %v3435 = vsel %vm3392, %v3432, %v3434
        %v3436 = vrot.slane %v3348, 6
        %v3437 = vsel %vm3392, %v3434, %v3436
        %v3438 = vrot.slane %v3349, 6
        %v3439 = vsel %vm3392, %v3436, %v3438
        %v3440 = vrot.slane %v3350, 6
        %v3441 = vsel %vm3392, %v3438, %v3440
        %v3442 = vrot.slane %v3351, 6
        %v3443 = vsel %vm3392, %v3440, %v3442
        %v3444 = vrot.slane %v3352, 6
        %v3445 = vsel %vm3392, %v3442, %v3444
        %v3446 = vrot.slane %v3353, 6
        %v3447 = vsel %vm3392, %v3444, %v3446
        %v3448 = vrot.slane %v3354, 6
        %v3449 = vsel %vm3392, %v3446, %v3448
        %v3450 = vrot.slane %v3355, 6
        %v3451 = vsel %vm3392, %v3448, %v3450
        %v3452 = vrot.slane %v3356, 6
        %v3453 = vsel %vm3392, %v3450, %v3452
        %v3454 = vrot.slane %v3357, 6
        %v3455 = vsel %vm3392, %v3452, %v3454
        %v3456 = vrot.slane %v3358, 6
        %v3457 = vsel %vm3392, %v3454, %v3456
        %v3491 = vadd.f32 %v3287, %v3395
        %v3492 = vadd.f32 %v3288, %v3397
        %v3493 = vadd.f32 %v3289, %v3399
        %v3494 = vadd.f32 %v3290, %v3401
        %v3495 = vadd.f32 %v3291, %v3403
        %v3496 = vadd.f32 %v3292, %v3405
        %v3497 = vadd.f32 %v3293, %v3407
        %v3498 = vadd.f32 %v3294, %v3409
        %v3499 = vadd.f32 %v3295, %v3411
        %v3500 = vadd.f32 %v3296, %v3413
        %v3501 = vadd.f32 %v3297, %v3415
        %v3502 = vadd.f32 %v3298, %v3417
        %v3503 = vadd.f32 %v3299, %v3419
        %v3504 = vadd.f32 %v3300, %v3421
        %v3505 = vadd.f32 %v3301, %v3423
        %v3506 = vadd.f32 %v3302, %v3425
        %v3507 = vadd.f32 %v3303, %v3427
        %v3508 = vadd.f32 %v3304, %v3429
        %v3509 = vadd.f32 %v3305, %v3431
        %v3510 = vadd.f32 %v3306, %v3433
        %v3511 = vadd.f32 %v3307, %v3435
        %v3512 = vadd.f32 %v3308, %v3437
        %v3513 = vadd.f32 %v3309, %v3439
        %v3514 = vadd.f32 %v3310, %v3441
        %v3515 = vadd.f32 %v3311, %v3443
        %v3516 = vadd.f32 %v3312, %v3445
        %v3517 = vadd.f32 %v3313, %v3447
        %v3518 = vadd.f32 %v3314, %v3449
        %v3519 = vadd.f32 %v3315, %v3451
        %v3520 = vadd.f32 %v3316, %v3453
        %v3521 = vadd.f32 %v3317, %v3455
        %v3522 = vadd.f32 %v3318, %v3457
        %v3523 = vadd.f32 %v3319, %v3456
        %v3524 = vlaneseq
        %v3525 = vshrl.u32 %v3524, 7
        %v3526 = vsub.s32 7, %v3525
        %v3527 = vrot.slane %v2160, %v3526
        %v3528 = vmul.f32 %v2198, %v3527
        %v3529 = vmul.f32 %v2199, %v3527
        %v3530 = vmul.f32 %v2200, %v3527
        %v3531 = vmul.f32 %v2201, %v3527
        %v3532 = vmul.f32 %v2202, %v3527
        %v3533 = vmul.f32 %v2203, %v3527
        %v3534 = vmul.f32 %v2204, %v3527
        %v3535 = vmul.f32 %v2205, %v3527
        %v3536 = vmul.f32 %v2206, %v3527
        %v3537 = vmul.f32 %v2207, %v3527
        %v3538 = vmul.f32 %v2208, %v3527
        %v3539 = vmul.f32 %v2209, %v3527
        %v3540 = vmul.f32 %v2210, %v3527
        %v3541 = vmul.f32 %v2211, %v3527
        %v3542 = vmul.f32 %v2212, %v3527
        %v3543 = vmul.f32 %v2213, %v3527
        %v3544 = vmul.f32 %v2214, %v3527
        %v3545 = vmul.f32 %v2215, %v3527
        %v3546 = vmul.f32 %v2216, %v3527
        %v3547 = vmul.f32 %v2217, %v3527
        %v3548 = vmul.f32 %v2218, %v3527
        %v3549 = vmul.f32 %v2219, %v3527
        %v3550 = vmul.f32 %v2220, %v3527
        %v3551 = vmul.f32 %v2221, %v3527
        %v3552 = vmul.f32 %v2222, %v3527
        %v3553 = vmul.f32 %v2223, %v3527
        %v3554 = vmul.f32 %v2224, %v3527
        %v3555 = vmul.f32 %v2225, %v3527
        %v3556 = vmul.f32 %v2226, %v3527
        %v3557 = vmul.f32 %v2227, %v3527
        %v3558 = vmul.f32 %v2228, %v3527
        %v3559 = vmul.f32 %v3321, %v3527
        %vm3592 = vcmask 1040384
        %v3593 = vrot.slane %v3528, 7
        %v3594 = vrot.slane %v3529, 7
        %v3595 = vsel %vm3592, %v3593, %v3594
        %v3596 = vrot.slane %v3530, 7
        %v3597 = vsel %vm3592, %v3594, %v3596
        %v3598 = vrot.slane %v3531, 7
        %v3599 = vsel %vm3592, %v3596, %v3598
        %v3600 = vrot.slane %v3532, 7
        %v3601 = vsel %vm3592, %v3598, %v3600
        %v3602 = vrot.slane %v3533, 7
        %v3603 = vsel %vm3592, %v3600, %v3602
        %v3604 = vrot.slane %v3534, 7
        %v3605 = vsel %vm3592, %v3602, %v3604
        %v3606 = vrot.slane %v3535, 7
        %v3607 = vsel %vm3592, %v3604, %v3606
        %v3608 = vrot.slane %v3536, 7
        %v3609 = vsel %vm3592, %v3606, %v3608
        %v3610 = vrot.slane %v3537, 7
        %v3611 = vsel %vm3592, %v3608, %v3610
        %v3612 = vrot.slane %v3538, 7
        %v3613 = vsel %vm3592, %v3610, %v3612
        %v3614 = vrot.slane %v3539, 7
        %v3615 = vsel %vm3592, %v3612, %v3614
        %v3616 = vrot.slane %v3540, 7
        %v3617 = vsel %vm3592, %v3614, %v3616
        %v3618 = vrot.slane %v3541, 7
        %v3619 = vsel %vm3592, %v3616, %v3618
        %v3620 = vrot.slane %v3542, 7
        %v3621 = vsel %vm3592, %v3618, %v3620
        %v3622 = vrot.slane %v3543, 7
        %v3623 = vsel %vm3592, %v3620, %v3622
        %v3624 = vrot.slane %v3544, 7
        %v3625 = vsel %vm3592, %v3622, %v3624
        %v3626 = vrot.slane %v3545, 7
        %v3627 = vsel %vm3592, %v3624, %v3626
        %v3628 = vrot.slane %v3546, 7
        %v3629 = vsel %vm3592, %v3626, %v3628
        %v3630 = vrot.slane %v3547, 7
        %v3631 = vsel %vm3592, %v3628, %v3630
        %v3632 = vrot.slane %v3548, 7
        %v3633 = vsel %vm3592, %v3630, %v3632
        %v3634 = vrot.slane %v3549, 7
        %v3635 = vsel %vm3592, %v3632, %v3634
        %v3636 = vrot.slane %v3550, 7
        %v3637 = vsel %vm3592, %v3634, %v3636
        %v3638 = vrot.slane %v3551, 7
        %v3639 = vsel %vm3592, %v3636, %v3638
        %v3640 = vrot.slane %v3552, 7
        %v3641 = vsel %vm3592, %v3638, %v3640
        %v3642 = vrot.slane %v3553, 7
        %v3643 = vsel %vm3592, %v3640, %v3642
        %v3644 = vrot.slane %v3554, 7
        %v3645 = vsel %vm3592, %v3642, %v3644
        %v3646 = vrot.slane %v3555, 7
        %v3647 = vsel %vm3592, %v3644, %v3646
        %v3648 = vrot.slane %v3556, 7
        %v3649 = vsel %vm3592, %v3646, %v3648
        %v3650 = vrot.slane %v3557, 7
        %v3651 = vsel %vm3592, %v3648, %v3650
        %v3652 = vrot.slane %v3558, 7
        %v3653 = vsel %vm3592, %v3650, %v3652
        %v3654 = vrot.slane %v3559, 7
        %v3655 = vsel %vm3592, %v3652, %v3654
        %v3689 = vadd.f32 %v3491, %v3593
        %v3690 = vadd.f32 %v3492, %v3595
        %v3691 = vadd.f32 %v3493, %v3597
        %v3692 = vadd.f32 %v3494, %v3599
        %v3693 = vadd.f32 %v3495, %v3601
        %v3694 = vadd.f32 %v3496, %v3603
        %v3695 = vadd.f32 %v3497, %v3605
        %v3696 = vadd.f32 %v3498, %v3607
        %v3697 = vadd.f32 %v3499, %v3609
        %v3698 = vadd.f32 %v3500, %v3611
        %v3699 = vadd.f32 %v3501, %v3613
        %v3700 = vadd.f32 %v3502, %v3615
        %v3701 = vadd.f32 %v3503, %v3617
        %v3702 = vadd.f32 %v3504, %v3619
        %v3703 = vadd.f32 %v3505, %v3621
        %v3704 = vadd.f32 %v3506, %v3623
        %v3705 = vadd.f32 %v3507, %v3625
        %v3706 = vadd.f32 %v3508, %v3627
        %v3707 = vadd.f32 %v3509, %v3629
        %v3708 = vadd.f32 %v3510, %v3631
        %v3709 = vadd.f32 %v3511, %v3633
        %v3710 = vadd.f32 %v3512, %v3635
        %v3711 = vadd.f32 %v3513, %v3637
        %v3712 = vadd.f32 %v3514, %v3639
        %v3713 = vadd.f32 %v3515, %v3641
        %v3714 = vadd.f32 %v3516, %v3643
        %v3715 = vadd.f32 %v3517, %v3645
        %v3716 = vadd.f32 %v3518, %v3647
        %v3717 = vadd.f32 %v3519, %v3649
        %v3718 = vadd.f32 %v3520, %v3651
        %v3719 = vadd.f32 %v3521, %v3653
        %v3720 = vadd.f32 %v3522, %v3655
        %v3721 = vadd.f32 %v3523, %v3654
        %v3722 = vld [vmem:[#allocation4 + $0x84] sm:$0x1]
        %v3723 = vunpack.c.l.bf16 %v3722
        %v3724 = vlaneseq
        %v3725 = vshrl.u32 %v3724, 7
        %v3726 = vsub.s32 0, %v3725
        %v3727 = vrot.slane %v2161, %v3726
        %v3728 = vmul.f32 %v2198, %v3727
        %v3729 = vmul.f32 %v2199, %v3727
        %v3730 = vmul.f32 %v2200, %v3727
        %v3731 = vmul.f32 %v2201, %v3727
        %v3732 = vmul.f32 %v2202, %v3727
        %v3733 = vmul.f32 %v2203, %v3727
        %v3734 = vmul.f32 %v2204, %v3727
        %v3735 = vmul.f32 %v2205, %v3727
        %v3736 = vmul.f32 %v2206, %v3727
        %v3737 = vmul.f32 %v2207, %v3727
        %v3738 = vmul.f32 %v2208, %v3727
        %v3739 = vmul.f32 %v2209, %v3727
        %v3740 = vmul.f32 %v2210, %v3727
        %v3741 = vmul.f32 %v2211, %v3727
        %v3742 = vmul.f32 %v2212, %v3727
        %v3743 = vmul.f32 %v2213, %v3727
        %v3744 = vmul.f32 %v2214, %v3727
        %v3745 = vmul.f32 %v2215, %v3727
        %v3746 = vmul.f32 %v2216, %v3727
        %v3747 = vmul.f32 %v2217, %v3727
        %v3748 = vmul.f32 %v2218, %v3727
        %v3749 = vmul.f32 %v2219, %v3727
        %v3750 = vmul.f32 %v2220, %v3727
        %v3751 = vmul.f32 %v2221, %v3727
        %v3752 = vmul.f32 %v2222, %v3727
        %v3753 = vmul.f32 %v2223, %v3727
        %v3754 = vmul.f32 %v2224, %v3727
        %v3755 = vmul.f32 %v2225, %v3727
        %v3756 = vmul.f32 %v2226, %v3727
        %v3757 = vmul.f32 %v2227, %v3727
        %v3758 = vmul.f32 %v2228, %v3727
        %v3759 = vmul.f32 %v3321, %v3727
        %v3760 = vmul.f32 %v3723, %v3727
        %v3761 = vadd.f32 %v3689, %v3728
        %v3762 = vadd.f32 %v3690, %v3729
        %v3763 = vadd.f32 %v3691, %v3730
        %v3764 = vadd.f32 %v3692, %v3731
        %v3765 = vadd.f32 %v3693, %v3732
        %v3766 = vadd.f32 %v3694, %v3733
        %v3767 = vadd.f32 %v3695, %v3734
        %v3768 = vadd.f32 %v3696, %v3735
        %v3769 = vadd.f32 %v3697, %v3736
        %v3770 = vadd.f32 %v3698, %v3737
        %v3771 = vadd.f32 %v3699, %v3738
        %v3772 = vadd.f32 %v3700, %v3739
        %v3773 = vadd.f32 %v3701, %v3740
        %v3774 = vadd.f32 %v3702, %v3741
        %v3775 = vadd.f32 %v3703, %v3742
        %v3776 = vadd.f32 %v3704, %v3743
        %v3777 = vadd.f32 %v3705, %v3744
        %v3778 = vadd.f32 %v3706, %v3745
        %v3779 = vadd.f32 %v3707, %v3746
        %v3780 = vadd.f32 %v3708, %v3747
        %v3781 = vadd.f32 %v3709, %v3748
        %v3782 = vadd.f32 %v3710, %v3749
        %v3783 = vadd.f32 %v3711, %v3750
        %v3784 = vadd.f32 %v3712, %v3751
        %v3785 = vadd.f32 %v3713, %v3752
        %v3786 = vadd.f32 %v3714, %v3753
        %v3787 = vadd.f32 %v3715, %v3754
        %v3788 = vadd.f32 %v3716, %v3755
        %v3789 = vadd.f32 %v3717, %v3756
        %v3790 = vadd.f32 %v3718, %v3757
        %v3791 = vadd.f32 %v3719, %v3758
        %v3792 = vadd.f32 %v3720, %v3759
        %v3793 = vadd.f32 %v3721, %v3760
        %v3794 = vld [vmem:[#allocation4 + $0x4] sm:$0xe]
        %v3795 = vunpack.c.l.bf16 %v3794
        %v3796 = vlaneseq
        %v3797 = vshrl.u32 %v3796, 7
        %v3798 = vsub.s32 1, %v3797
        %v3799 = vrot.slane %v2161, %v3798
        %v3800 = vmul.f32 %v3795, %v3799
        %v3801 = vmul.f32 %v2199, %v3799
        %v3802 = vmul.f32 %v2200, %v3799
        %v3803 = vmul.f32 %v2201, %v3799
        %v3804 = vmul.f32 %v2202, %v3799
        %v3805 = vmul.f32 %v2203, %v3799
        %v3806 = vmul.f32 %v2204, %v3799
        %v3807 = vmul.f32 %v2205, %v3799
        %v3808 = vmul.f32 %v2206, %v3799
        %v3809 = vmul.f32 %v2207, %v3799
        %v3810 = vmul.f32 %v2208, %v3799
        %v3811 = vmul.f32 %v2209, %v3799
        %v3812 = vmul.f32 %v2210, %v3799
        %v3813 = vmul.f32 %v2211, %v3799
        %v3814 = vmul.f32 %v2212, %v3799
        %v3815 = vmul.f32 %v2213, %v3799
        %v3816 = vmul.f32 %v2214, %v3799
        %v3817 = vmul.f32 %v2215, %v3799
        %v3818 = vmul.f32 %v2216, %v3799
        %v3819 = vmul.f32 %v2217, %v3799
        %v3820 = vmul.f32 %v2218, %v3799
        %v3821 = vmul.f32 %v2219, %v3799
        %v3822 = vmul.f32 %v2220, %v3799
        %v3823 = vmul.f32 %v2221, %v3799
        %v3824 = vmul.f32 %v2222, %v3799
        %v3825 = vmul.f32 %v2223, %v3799
        %v3826 = vmul.f32 %v2224, %v3799
        %v3827 = vmul.f32 %v2225, %v3799
        %v3828 = vmul.f32 %v2226, %v3799
        %v3829 = vmul.f32 %v2227, %v3799
        %v3830 = vmul.f32 %v2228, %v3799
        %v3831 = vmul.f32 %v3321, %v3799
        %v3832 = vmul.f32 %v3723, %v3799
        %v3866 = vrot.slane %v3800, 1
        %v3867 = vrot.slane %v3801, 1
        %v3868 = vsel %vm2372, %v3866, %v3867
        %v3869 = vrot.slane %v3802, 1
        %v3870 = vsel %vm2372, %v3867, %v3869
        %v3871 = vrot.slane %v3803, 1
        %v3872 = vsel %vm2372, %v3869, %v3871
        %v3873 = vrot.slane %v3804, 1
        %v3874 = vsel %vm2372, %v3871, %v3873
        %v3875 = vrot.slane %v3805, 1
        %v3876 = vsel %vm2372, %v3873, %v3875
        %v3877 = vrot.slane %v3806, 1
        %v3878 = vsel %vm2372, %v3875, %v3877
        %v3879 = vrot.slane %v3807, 1
        %v3880 = vsel %vm2372, %v3877, %v3879
        %v3881 = vrot.slane %v3808, 1
        %v3882 = vsel %vm2372, %v3879, %v3881
        %v3883 = vrot.slane %v3809, 1
        %v3884 = vsel %vm2372, %v3881, %v3883
        %v3885 = vrot.slane %v3810, 1
        %v3886 = vsel %vm2372, %v3883, %v3885
        %v3887 = vrot.slane %v3811, 1
        %v3888 = vsel %vm2372, %v3885, %v3887
        %v3889 = vrot.slane %v3812, 1
        %v3890 = vsel %vm2372, %v3887, %v3889
        %v3891 = vrot.slane %v3813, 1
        %v3892 = vsel %vm2372, %v3889, %v3891
        %v3893 = vrot.slane %v3814, 1
        %v3894 = vsel %vm2372, %v3891, %v3893
        %v3895 = vrot.slane %v3815, 1
        %v3896 = vsel %vm2372, %v3893, %v3895
        %v3897 = vrot.slane %v3816, 1
        %v3898 = vsel %vm2372, %v3895, %v3897
        %v3899 = vrot.slane %v3817, 1
        %v3900 = vsel %vm2372, %v3897, %v3899
        %v3901 = vrot.slane %v3818, 1
        %v3902 = vsel %vm2372, %v3899, %v3901
        %v3903 = vrot.slane %v3819, 1
        %v3904 = vsel %vm2372, %v3901, %v3903
        %v3905 = vrot.slane %v3820, 1
        %v3906 = vsel %vm2372, %v3903, %v3905
        %v3907 = vrot.slane %v3821, 1
        %v3908 = vsel %vm2372, %v3905, %v3907
        %v3909 = vrot.slane %v3822, 1
        %v3910 = vsel %vm2372, %v3907, %v3909
        %v3911 = vrot.slane %v3823, 1
        %v3912 = vsel %vm2372, %v3909, %v3911
        %v3913 = vrot.slane %v3824, 1
        %v3914 = vsel %vm2372, %v3911, %v3913
        %v3915 = vrot.slane %v3825, 1
        %v3916 = vsel %vm2372, %v3913, %v3915
        %v3917 = vrot.slane %v3826, 1
        %v3918 = vsel %vm2372, %v3915, %v3917
        %v3919 = vrot.slane %v3827, 1
        %v3920 = vsel %vm2372, %v3917, %v3919
        %v3921 = vrot.slane %v3828, 1
        %v3922 = vsel %vm2372, %v3919, %v3921
        %v3923 = vrot.slane %v3829, 1
        %v3924 = vsel %vm2372, %v3921, %v3923
        %v3925 = vrot.slane %v3830, 1
        %v3926 = vsel %vm2372, %v3923, %v3925
        %v3927 = vrot.slane %v3831, 1
        %v3928 = vsel %vm2372, %v3925, %v3927
        %v3929 = vrot.slane %v3832, 1
        %v3930 = vsel %vm2372, %v3927, %v3929
        %v3964 = vadd.f32 %v3761, %v3868
        %v3965 = vadd.f32 %v3762, %v3870
        %v3966 = vadd.f32 %v3763, %v3872
        %v3967 = vadd.f32 %v3764, %v3874
        %v3968 = vadd.f32 %v3765, %v3876
        %v3969 = vadd.f32 %v3766, %v3878
        %v3970 = vadd.f32 %v3767, %v3880
        %v3971 = vadd.f32 %v3768, %v3882
        %v3972 = vadd.f32 %v3769, %v3884
        %v3973 = vadd.f32 %v3770, %v3886
        %v3974 = vadd.f32 %v3771, %v3888
        %v3975 = vadd.f32 %v3772, %v3890
        %v3976 = vadd.f32 %v3773, %v3892
        %v3977 = vadd.f32 %v3774, %v3894
        %v3978 = vadd.f32 %v3775, %v3896
        %v3979 = vadd.f32 %v3776, %v3898
        %v3980 = vadd.f32 %v3777, %v3900
        %v3981 = vadd.f32 %v3778, %v3902
        %v3982 = vadd.f32 %v3779, %v3904
        %v3983 = vadd.f32 %v3780, %v3906
        %v3984 = vadd.f32 %v3781, %v3908
        %v3985 = vadd.f32 %v3782, %v3910
        %v3986 = vadd.f32 %v3783, %v3912
        %v3987 = vadd.f32 %v3784, %v3914
        %v3988 = vadd.f32 %v3785, %v3916
        %v3989 = vadd.f32 %v3786, %v3918
        %v3990 = vadd.f32 %v3787, %v3920
        %v3991 = vadd.f32 %v3788, %v3922
        %v3992 = vadd.f32 %v3789, %v3924
        %v3993 = vadd.f32 %v3790, %v3926
        %v3994 = vadd.f32 %v3791, %v3928
        %v3995 = vadd.f32 %v3792, %v3930
        %v3996 = vadd.f32 %v3793, %v3929
        %v3997 = vld [vmem:[#allocation4 + $0x84] sm:$0x3]
        %v3998 = vunpack.c.l.bf16 %v3997
        %v3999 = vlaneseq
        %v4000 = vshrl.u32 %v3999, 7
        %v4001 = vsub.s32 2, %v4000
        %v4002 = vrot.slane %v2161, %v4001
        %v4003 = vmul.f32 %v3795, %v4002
        %v4004 = vmul.f32 %v2199, %v4002
        %v4005 = vmul.f32 %v2200, %v4002
        %v4006 = vmul.f32 %v2201, %v4002
        %v4007 = vmul.f32 %v2202, %v4002
        %v4008 = vmul.f32 %v2203, %v4002
        %v4009 = vmul.f32 %v2204, %v4002
        %v4010 = vmul.f32 %v2205, %v4002
        %v4011 = vmul.f32 %v2206, %v4002
        %v4012 = vmul.f32 %v2207, %v4002
        %v4013 = vmul.f32 %v2208, %v4002
        %v4014 = vmul.f32 %v2209, %v4002
        %v4015 = vmul.f32 %v2210, %v4002
        %v4016 = vmul.f32 %v2211, %v4002
        %v4017 = vmul.f32 %v2212, %v4002
        %v4018 = vmul.f32 %v2213, %v4002
        %v4019 = vmul.f32 %v2214, %v4002
        %v4020 = vmul.f32 %v2215, %v4002
        %v4021 = vmul.f32 %v2216, %v4002
        %v4022 = vmul.f32 %v2217, %v4002
        %v4023 = vmul.f32 %v2218, %v4002
        %v4024 = vmul.f32 %v2219, %v4002
        %v4025 = vmul.f32 %v2220, %v4002
        %v4026 = vmul.f32 %v2221, %v4002
        %v4027 = vmul.f32 %v2222, %v4002
        %v4028 = vmul.f32 %v2223, %v4002
        %v4029 = vmul.f32 %v2224, %v4002
        %v4030 = vmul.f32 %v2225, %v4002
        %v4031 = vmul.f32 %v2226, %v4002
        %v4032 = vmul.f32 %v2227, %v4002
        %v4033 = vmul.f32 %v2228, %v4002
        %v4034 = vmul.f32 %v3321, %v4002
        %v4035 = vmul.f32 %v3998, %v4002
        %v4069 = vrot.slane %v4003, 2
        %v4070 = vrot.slane %v4004, 2
        %v4071 = vsel %vm2576, %v4069, %v4070
        %v4072 = vrot.slane %v4005, 2
        %v4073 = vsel %vm2576, %v4070, %v4072
        %v4074 = vrot.slane %v4006, 2
        %v4075 = vsel %vm2576, %v4072, %v4074
        %v4076 = vrot.slane %v4007, 2
        %v4077 = vsel %vm2576, %v4074, %v4076
        %v4078 = vrot.slane %v4008, 2
        %v4079 = vsel %vm2576, %v4076, %v4078
        %v4080 = vrot.slane %v4009, 2
        %v4081 = vsel %vm2576, %v4078, %v4080
        %v4082 = vrot.slane %v4010, 2
        %v4083 = vsel %vm2576, %v4080, %v4082
        %v4084 = vrot.slane %v4011, 2
        %v4085 = vsel %vm2576, %v4082, %v4084
        %v4086 = vrot.slane %v4012, 2
        %v4087 = vsel %vm2576, %v4084, %v4086
        %v4088 = vrot.slane %v4013, 2
        %v4089 = vsel %vm2576, %v4086, %v4088
        %v4090 = vrot.slane %v4014, 2
        %v4091 = vsel %vm2576, %v4088, %v4090
        %v4092 = vrot.slane %v4015, 2
        %v4093 = vsel %vm2576, %v4090, %v4092
        %v4094 = vrot.slane %v4016, 2
        %v4095 = vsel %vm2576, %v4092, %v4094
        %v4096 = vrot.slane %v4017, 2
        %v4097 = vsel %vm2576, %v4094, %v4096
        %v4098 = vrot.slane %v4018, 2
        %v4099 = vsel %vm2576, %v4096, %v4098
        %v4100 = vrot.slane %v4019, 2
        %v4101 = vsel %vm2576, %v4098, %v4100
        %v4102 = vrot.slane %v4020, 2
        %v4103 = vsel %vm2576, %v4100, %v4102
        %v4104 = vrot.slane %v4021, 2
        %v4105 = vsel %vm2576, %v4102, %v4104
        %v4106 = vrot.slane %v4022, 2
        %v4107 = vsel %vm2576, %v4104, %v4106
        %v4108 = vrot.slane %v4023, 2
        %v4109 = vsel %vm2576, %v4106, %v4108
        %v4110 = vrot.slane %v4024, 2
        %v4111 = vsel %vm2576, %v4108, %v4110
        %v4112 = vrot.slane %v4025, 2
        %v4113 = vsel %vm2576, %v4110, %v4112
        %v4114 = vrot.slane %v4026, 2
        %v4115 = vsel %vm2576, %v4112, %v4114
        %v4116 = vrot.slane %v4027, 2
        %v4117 = vsel %vm2576, %v4114, %v4116
        %v4118 = vrot.slane %v4028, 2
        %v4119 = vsel %vm2576, %v4116, %v4118
        %v4120 = vrot.slane %v4029, 2
        %v4121 = vsel %vm2576, %v4118, %v4120
        %v4122 = vrot.slane %v4030, 2
        %v4123 = vsel %vm2576, %v4120, %v4122
        %v4124 = vrot.slane %v4031, 2
        %v4125 = vsel %vm2576, %v4122, %v4124
        %v4126 = vrot.slane %v4032, 2
        %v4127 = vsel %vm2576, %v4124, %v4126
        %v4128 = vrot.slane %v4033, 2
        %v4129 = vsel %vm2576, %v4126, %v4128
        %v4130 = vrot.slane %v4034, 2
        %v4131 = vsel %vm2576, %v4128, %v4130
        %v4132 = vrot.slane %v4035, 2
        %v4133 = vsel %vm2576, %v4130, %v4132
        %v4167 = vadd.f32 %v3964, %v4071
        %v4168 = vadd.f32 %v3965, %v4073
        %v4169 = vadd.f32 %v3966, %v4075
        %v4170 = vadd.f32 %v3967, %v4077
        %v4171 = vadd.f32 %v3968, %v4079
        %v4172 = vadd.f32 %v3969, %v4081
        %v4173 = vadd.f32 %v3970, %v4083
        %v4174 = vadd.f32 %v3971, %v4085
        %v4175 = vadd.f32 %v3972, %v4087
        %v4176 = vadd.f32 %v3973, %v4089
        %v4177 = vadd.f32 %v3974, %v4091
        %v4178 = vadd.f32 %v3975, %v4093
        %v4179 = vadd.f32 %v3976, %v4095
        %v4180 = vadd.f32 %v3977, %v4097
        %v4181 = vadd.f32 %v3978, %v4099
        %v4182 = vadd.f32 %v3979, %v4101
        %v4183 = vadd.f32 %v3980, %v4103
        %v4184 = vadd.f32 %v3981, %v4105
        %v4185 = vadd.f32 %v3982, %v4107
        %v4186 = vadd.f32 %v3983, %v4109
        %v4187 = vadd.f32 %v3984, %v4111
        %v4188 = vadd.f32 %v3985, %v4113
        %v4189 = vadd.f32 %v3986, %v4115
        %v4190 = vadd.f32 %v3987, %v4117
        %v4191 = vadd.f32 %v3988, %v4119
        %v4192 = vadd.f32 %v3989, %v4121
        %v4193 = vadd.f32 %v3990, %v4123
        %v4194 = vadd.f32 %v3991, %v4125
        %v4195 = vadd.f32 %v3992, %v4127
        %v4196 = vadd.f32 %v3993, %v4129
        %v4197 = vadd.f32 %v3994, %v4131
        %v4198 = vadd.f32 %v3995, %v4133
        %v4199 = vadd.f32 %v3996, %v4132
        %v4200 = vld [vmem:[#allocation4 + $0x4] sm:$0xc]
        %v4201 = vunpack.c.l.bf16 %v4200
        %v4202 = vlaneseq
        %v4203 = vshrl.u32 %v4202, 7
        %v4204 = vsub.s32 3, %v4203
        %v4205 = vrot.slane %v2161, %v4204
        %v4206 = vmul.f32 %v4201, %v4205
        %v4207 = vmul.f32 %v2199, %v4205
        %v4208 = vmul.f32 %v2200, %v4205
        %v4209 = vmul.f32 %v2201, %v4205
        %v4210 = vmul.f32 %v2202, %v4205
        %v4211 = vmul.f32 %v2203, %v4205
        %v4212 = vmul.f32 %v2204, %v4205
        %v4213 = vmul.f32 %v2205, %v4205
        %v4214 = vmul.f32 %v2206, %v4205
        %v4215 = vmul.f32 %v2207, %v4205
        %v4216 = vmul.f32 %v2208, %v4205
        %v4217 = vmul.f32 %v2209, %v4205
        %v4218 = vmul.f32 %v2210, %v4205
        %v4219 = vmul.f32 %v2211, %v4205
        %v4220 = vmul.f32 %v2212, %v4205
        %v4221 = vmul.f32 %v2213, %v4205
        %v4222 = vmul.f32 %v2214, %v4205
        %v4223 = vmul.f32 %v2215, %v4205
        %v4224 = vmul.f32 %v2216, %v4205
        %v4225 = vmul.f32 %v2217, %v4205
        %v4226 = vmul.f32 %v2218, %v4205
        %v4227 = vmul.f32 %v2219, %v4205
        %v4228 = vmul.f32 %v2220, %v4205
        %v4229 = vmul.f32 %v2221, %v4205
        %v4230 = vmul.f32 %v2222, %v4205
        %v4231 = vmul.f32 %v2223, %v4205
        %v4232 = vmul.f32 %v2224, %v4205
        %v4233 = vmul.f32 %v2225, %v4205
        %v4234 = vmul.f32 %v2226, %v4205
        %v4235 = vmul.f32 %v2227, %v4205
        %v4236 = vmul.f32 %v2228, %v4205
        %v4237 = vmul.f32 %v3321, %v4205
        %v4238 = vmul.f32 %v3998, %v4205
        %v4272 = vrot.slane %v4206, 3
        %v4273 = vrot.slane %v4207, 3
        %v4274 = vsel %vm2780, %v4272, %v4273
        %v4275 = vrot.slane %v4208, 3
        %v4276 = vsel %vm2780, %v4273, %v4275
        %v4277 = vrot.slane %v4209, 3
        %v4278 = vsel %vm2780, %v4275, %v4277
        %v4279 = vrot.slane %v4210, 3
        %v4280 = vsel %vm2780, %v4277, %v4279
        %v4281 = vrot.slane %v4211, 3
        %v4282 = vsel %vm2780, %v4279, %v4281
        %v4283 = vrot.slane %v4212, 3
        %v4284 = vsel %vm2780, %v4281, %v4283
        %v4285 = vrot.slane %v4213, 3
        %v4286 = vsel %vm2780, %v4283, %v4285
        %v4287 = vrot.slane %v4214, 3
        %v4288 = vsel %vm2780, %v4285, %v4287
        %v4289 = vrot.slane %v4215, 3
        %v4290 = vsel %vm2780, %v4287, %v4289
        %v4291 = vrot.slane %v4216, 3
        %v4292 = vsel %vm2780, %v4289, %v4291
        %v4293 = vrot.slane %v4217, 3
        %v4294 = vsel %vm2780, %v4291, %v4293
        %v4295 = vrot.slane %v4218, 3
        %v4296 = vsel %vm2780, %v4293, %v4295
        %v4297 = vrot.slane %v4219, 3
        %v4298 = vsel %vm2780, %v4295, %v4297
        %v4299 = vrot.slane %v4220, 3
        %v4300 = vsel %vm2780, %v4297, %v4299
        %v4301 = vrot.slane %v4221, 3
        %v4302 = vsel %vm2780, %v4299, %v4301
        %v4303 = vrot.slane %v4222, 3
        %v4304 = vsel %vm2780, %v4301, %v4303
        %v4305 = vrot.slane %v4223, 3
        %v4306 = vsel %vm2780, %v4303, %v4305
        %v4307 = vrot.slane %v4224, 3
        %v4308 = vsel %vm2780, %v4305, %v4307
        %v4309 = vrot.slane %v4225, 3
        %v4310 = vsel %vm2780, %v4307, %v4309
        %v4311 = vrot.slane %v4226, 3
        %v4312 = vsel %vm2780, %v4309, %v4311
        %v4313 = vrot.slane %v4227, 3
        %v4314 = vsel %vm2780, %v4311, %v4313
        %v4315 = vrot.slane %v4228, 3
        %v4316 = vsel %vm2780, %v4313, %v4315
        %v4317 = vrot.slane %v4229, 3
        %v4318 = vsel %vm2780, %v4315, %v4317
        %v4319 = vrot.slane %v4230, 3
        %v4320 = vsel %vm2780, %v4317, %v4319
        %v4321 = vrot.slane %v4231, 3
        %v4322 = vsel %vm2780, %v4319, %v4321
        %v4323 = vrot.slane %v4232, 3
        %v4324 = vsel %vm2780, %v4321, %v4323
        %v4325 = vrot.slane %v4233, 3
        %v4326 = vsel %vm2780, %v4323, %v4325
        %v4327 = vrot.slane %v4234, 3
        %v4328 = vsel %vm2780, %v4325, %v4327
        %v4329 = vrot.slane %v4235, 3
        %v4330 = vsel %vm2780, %v4327, %v4329
        %v4331 = vrot.slane %v4236, 3
        %v4332 = vsel %vm2780, %v4329, %v4331
        %v4333 = vrot.slane %v4237, 3
        %v4334 = vsel %vm2780, %v4331, %v4333
        %v4335 = vrot.slane %v4238, 3
        %v4336 = vsel %vm2780, %v4333, %v4335
        %v4370 = vadd.f32 %v4167, %v4274
        %v4371 = vadd.f32 %v4168, %v4276
        %v4372 = vadd.f32 %v4169, %v4278
        %v4373 = vadd.f32 %v4170, %v4280
        %v4374 = vadd.f32 %v4171, %v4282
        %v4375 = vadd.f32 %v4172, %v4284
        %v4376 = vadd.f32 %v4173, %v4286
        %v4377 = vadd.f32 %v4174, %v4288
        %v4378 = vadd.f32 %v4175, %v4290
        %v4379 = vadd.f32 %v4176, %v4292
        %v4380 = vadd.f32 %v4177, %v4294
        %v4381 = vadd.f32 %v4178, %v4296
        %v4382 = vadd.f32 %v4179, %v4298
        %v4383 = vadd.f32 %v4180, %v4300
        %v4384 = vadd.f32 %v4181, %v4302
        %v4385 = vadd.f32 %v4182, %v4304
        %v4386 = vadd.f32 %v4183, %v4306
        %v4387 = vadd.f32 %v4184, %v4308
        %v4388 = vadd.f32 %v4185, %v4310
        %v4389 = vadd.f32 %v4186, %v4312
        %v4390 = vadd.f32 %v4187, %v4314
        %v4391 = vadd.f32 %v4188, %v4316
        %v4392 = vadd.f32 %v4189, %v4318
        %v4393 = vadd.f32 %v4190, %v4320
        %v4394 = vadd.f32 %v4191, %v4322
        %v4395 = vadd.f32 %v4192, %v4324
        %v4396 = vadd.f32 %v4193, %v4326
        %v4397 = vadd.f32 %v4194, %v4328
        %v4398 = vadd.f32 %v4195, %v4330
        %v4399 = vadd.f32 %v4196, %v4332
        %v4400 = vadd.f32 %v4197, %v4334
        %v4401 = vadd.f32 %v4198, %v4336
        %v4402 = vadd.f32 %v4199, %v4335
        %v4403 = vld [vmem:[#allocation4 + $0x84] sm:$0x7]
        %v4404 = vunpack.c.l.bf16 %v4403
        %v4405 = vlaneseq
        %v4406 = vshrl.u32 %v4405, 7
        %v4407 = vsub.s32 4, %v4406
        %v4408 = vrot.slane %v2161, %v4407
        %v4409 = vmul.f32 %v4201, %v4408
        %v4410 = vmul.f32 %v2199, %v4408
        %v4411 = vmul.f32 %v2200, %v4408
        %v4412 = vmul.f32 %v2201, %v4408
        %v4413 = vmul.f32 %v2202, %v4408
        %v4414 = vmul.f32 %v2203, %v4408
        %v4415 = vmul.f32 %v2204, %v4408
        %v4416 = vmul.f32 %v2205, %v4408
        %v4417 = vmul.f32 %v2206, %v4408
        %v4418 = vmul.f32 %v2207, %v4408
        %v4419 = vmul.f32 %v2208, %v4408
        %v4420 = vmul.f32 %v2209, %v4408
        %v4421 = vmul.f32 %v2210, %v4408
        %v4422 = vmul.f32 %v2211, %v4408
        %v4423 = vmul.f32 %v2212, %v4408
        %v4424 = vmul.f32 %v2213, %v4408
        %v4425 = vmul.f32 %v2214, %v4408
        %v4426 = vmul.f32 %v2215, %v4408
        %v4427 = vmul.f32 %v2216, %v4408
        %v4428 = vmul.f32 %v2217, %v4408
        %v4429 = vmul.f32 %v2218, %v4408
        %v4430 = vmul.f32 %v2219, %v4408
        %v4431 = vmul.f32 %v2220, %v4408
        %v4432 = vmul.f32 %v2221, %v4408
        %v4433 = vmul.f32 %v2222, %v4408
        %v4434 = vmul.f32 %v2223, %v4408
        %v4435 = vmul.f32 %v2224, %v4408
        %v4436 = vmul.f32 %v2225, %v4408
        %v4437 = vmul.f32 %v2226, %v4408
        %v4438 = vmul.f32 %v2227, %v4408
        %v4439 = vmul.f32 %v2228, %v4408
        %v4440 = vmul.f32 %v3321, %v4408
        %v4441 = vmul.f32 %v4404, %v4408
        %v4475 = vrot.slane %v4409, 4
        %v4476 = vrot.slane %v4410, 4
        %v4477 = vsel %vm2984, %v4475, %v4476
        %v4478 = vrot.slane %v4411, 4
        %v4479 = vsel %vm2984, %v4476, %v4478
        %v4480 = vrot.slane %v4412, 4
        %v4481 = vsel %vm2984, %v4478, %v4480
        %v4482 = vrot.slane %v4413, 4
        %v4483 = vsel %vm2984, %v4480, %v4482
        %v4484 = vrot.slane %v4414, 4
        %v4485 = vsel %vm2984, %v4482, %v4484
        %v4486 = vrot.slane %v4415, 4
        %v4487 = vsel %vm2984, %v4484, %v4486
        %v4488 = vrot.slane %v4416, 4
        %v4489 = vsel %vm2984, %v4486, %v4488
        %v4490 = vrot.slane %v4417, 4
        %v4491 = vsel %vm2984, %v4488, %v4490
        %v4492 = vrot.slane %v4418, 4
        %v4493 = vsel %vm2984, %v4490, %v4492
        %v4494 = vrot.slane %v4419, 4
        %v4495 = vsel %vm2984, %v4492, %v4494
        %v4496 = vrot.slane %v4420, 4
        %v4497 = vsel %vm2984, %v4494, %v4496
        %v4498 = vrot.slane %v4421, 4
        %v4499 = vsel %vm2984, %v4496, %v4498
        %v4500 = vrot.slane %v4422, 4
        %v4501 = vsel %vm2984, %v4498, %v4500
        %v4502 = vrot.slane %v4423, 4
        %v4503 = vsel %vm2984, %v4500, %v4502
        %v4504 = vrot.slane %v4424, 4
        %v4505 = vsel %vm2984, %v4502, %v4504
        %v4506 = vrot.slane %v4425, 4
        %v4507 = vsel %vm2984, %v4504, %v4506
        %v4508 = vrot.slane %v4426, 4
        %v4509 = vsel %vm2984, %v4506, %v4508
        %v4510 = vrot.slane %v4427, 4
        %v4511 = vsel %vm2984, %v4508, %v4510
        %v4512 = vrot.slane %v4428, 4
        %v4513 = vsel %vm2984, %v4510, %v4512
        %v4514 = vrot.slane %v4429, 4
        %v4515 = vsel %vm2984, %v4512, %v4514
        %v4516 = vrot.slane %v4430, 4
        %v4517 = vsel %vm2984, %v4514, %v4516
        %v4518 = vrot.slane %v4431, 4
        %v4519 = vsel %vm2984, %v4516, %v4518
        %v4520 = vrot.slane %v4432, 4
        %v4521 = vsel %vm2984, %v4518, %v4520
        %v4522 = vrot.slane %v4433, 4
        %v4523 = vsel %vm2984, %v4520, %v4522
        %v4524 = vrot.slane %v4434, 4
        %v4525 = vsel %vm2984, %v4522, %v4524
        %v4526 = vrot.slane %v4435, 4
        %v4527 = vsel %vm2984, %v4524, %v4526
        %v4528 = vrot.slane %v4436, 4
        %v4529 = vsel %vm2984, %v4526, %v4528
        %v4530 = vrot.slane %v4437, 4
        %v4531 = vsel %vm2984, %v4528, %v4530
        %v4532 = vrot.slane %v4438, 4
        %v4533 = vsel %vm2984, %v4530, %v4532
        %v4534 = vrot.slane %v4439, 4
        %v4535 = vsel %vm2984, %v4532, %v4534
        %v4536 = vrot.slane %v4440, 4
        %v4537 = vsel %vm2984, %v4534, %v4536
        %v4538 = vrot.slane %v4441, 4
        %v4539 = vsel %vm2984, %v4536, %v4538
        %v4573 = vadd.f32 %v4370, %v4477
        %v4574 = vadd.f32 %v4371, %v4479
        %v4575 = vadd.f32 %v4372, %v4481
        %v4576 = vadd.f32 %v4373, %v4483
        %v4577 = vadd.f32 %v4374, %v4485
        %v4578 = vadd.f32 %v4375, %v4487
        %v4579 = vadd.f32 %v4376, %v4489
        %v4580 = vadd.f32 %v4377, %v4491
        %v4581 = vadd.f32 %v4378, %v4493
        %v4582 = vadd.f32 %v4379, %v4495
        %v4583 = vadd.f32 %v4380, %v4497
        %v4584 = vadd.f32 %v4381, %v4499
        %v4585 = vadd.f32 %v4382, %v4501
        %v4586 = vadd.f32 %v4383, %v4503
        %v4587 = vadd.f32 %v4384, %v4505
        %v4588 = vadd.f32 %v4385, %v4507
        %v4589 = vadd.f32 %v4386, %v4509
        %v4590 = vadd.f32 %v4387, %v4511
        %v4591 = vadd.f32 %v4388, %v4513
        %v4592 = vadd.f32 %v4389, %v4515
        %v4593 = vadd.f32 %v4390, %v4517
        %v4594 = vadd.f32 %v4391, %v4519
        %v4595 = vadd.f32 %v4392, %v4521
        %v4596 = vadd.f32 %v4393, %v4523
        %v4597 = vadd.f32 %v4394, %v4525
        %v4598 = vadd.f32 %v4395, %v4527
        %v4599 = vadd.f32 %v4396, %v4529
        %v4600 = vadd.f32 %v4397, %v4531
        %v4601 = vadd.f32 %v4398, %v4533
        %v4602 = vadd.f32 %v4399, %v4535
        %v4603 = vadd.f32 %v4400, %v4537
        %v4604 = vadd.f32 %v4401, %v4539
        %v4605 = vadd.f32 %v4402, %v4538
        %v4606 = vld [vmem:[#allocation4 + $0x4] sm:$0x8]
        %v4607 = vunpack.c.l.bf16 %v4606
        %v4608 = vlaneseq
        %v4609 = vshrl.u32 %v4608, 7
        %v4610 = vsub.s32 5, %v4609
        %v4611 = vrot.slane %v2161, %v4610
        %v4612 = vmul.f32 %v4607, %v4611
        %v4613 = vmul.f32 %v2199, %v4611
        %v4614 = vmul.f32 %v2200, %v4611
        %v4615 = vmul.f32 %v2201, %v4611
        %v4616 = vmul.f32 %v2202, %v4611
        %v4617 = vmul.f32 %v2203, %v4611
        %v4618 = vmul.f32 %v2204, %v4611
        %v4619 = vmul.f32 %v2205, %v4611
        %v4620 = vmul.f32 %v2206, %v4611
        %v4621 = vmul.f32 %v2207, %v4611
        %v4622 = vmul.f32 %v2208, %v4611
        %v4623 = vmul.f32 %v2209, %v4611
        %v4624 = vmul.f32 %v2210, %v4611
        %v4625 = vmul.f32 %v2211, %v4611
        %v4626 = vmul.f32 %v2212, %v4611
        %v4627 = vmul.f32 %v2213, %v4611
        %v4628 = vmul.f32 %v2214, %v4611
        %v4629 = vmul.f32 %v2215, %v4611
        %v4630 = vmul.f32 %v2216, %v4611
        %v4631 = vmul.f32 %v2217, %v4611
        %v4632 = vmul.f32 %v2218, %v4611
        %v4633 = vmul.f32 %v2219, %v4611
        %v4634 = vmul.f32 %v2220, %v4611
        %v4635 = vmul.f32 %v2221, %v4611
        %v4636 = vmul.f32 %v2222, %v4611
        %v4637 = vmul.f32 %v2223, %v4611
        %v4638 = vmul.f32 %v2224, %v4611
        %v4639 = vmul.f32 %v2225, %v4611
        %v4640 = vmul.f32 %v2226, %v4611
        %v4641 = vmul.f32 %v2227, %v4611
        %v4642 = vmul.f32 %v2228, %v4611
        %v4643 = vmul.f32 %v3321, %v4611
        %v4644 = vmul.f32 %v4404, %v4611
        %v4678 = vrot.slane %v4612, 5
        %v4679 = vrot.slane %v4613, 5
        %v4680 = vsel %vm3188, %v4678, %v4679
        %v4681 = vrot.slane %v4614, 5
        %v4682 = vsel %vm3188, %v4679, %v4681
        %v4683 = vrot.slane %v4615, 5
        %v4684 = vsel %vm3188, %v4681, %v4683
        %v4685 = vrot.slane %v4616, 5
        %v4686 = vsel %vm3188, %v4683, %v4685
        %v4687 = vrot.slane %v4617, 5
        %v4688 = vsel %vm3188, %v4685, %v4687
        %v4689 = vrot.slane %v4618, 5
        %v4690 = vsel %vm3188, %v4687, %v4689
        %v4691 = vrot.slane %v4619, 5
        %v4692 = vsel %vm3188, %v4689, %v4691
        %v4693 = vrot.slane %v4620, 5
        %v4694 = vsel %vm3188, %v4691, %v4693
        %v4695 = vrot.slane %v4621, 5
        %v4696 = vsel %vm3188, %v4693, %v4695
        %v4697 = vrot.slane %v4622, 5
        %v4698 = vsel %vm3188, %v4695, %v4697
        %v4699 = vrot.slane %v4623, 5
        %v4700 = vsel %vm3188, %v4697, %v4699
        %v4701 = vrot.slane %v4624, 5
        %v4702 = vsel %vm3188, %v4699, %v4701
        %v4703 = vrot.slane %v4625, 5
        %v4704 = vsel %vm3188, %v4701, %v4703
        %v4705 = vrot.slane %v4626, 5
        %v4706 = vsel %vm3188, %v4703, %v4705
        %v4707 = vrot.slane %v4627, 5
        %v4708 = vsel %vm3188, %v4705, %v4707
        %v4709 = vrot.slane %v4628, 5
        %v4710 = vsel %vm3188, %v4707, %v4709
        %v4711 = vrot.slane %v4629, 5
        %v4712 = vsel %vm3188, %v4709, %v4711
        %v4713 = vrot.slane %v4630, 5
        %v4714 = vsel %vm3188, %v4711, %v4713
        %v4715 = vrot.slane %v4631, 5
        %v4716 = vsel %vm3188, %v4713, %v4715
        %v4717 = vrot.slane %v4632, 5
        %v4718 = vsel %vm3188, %v4715, %v4717
        %v4719 = vrot.slane %v4633, 5
        %v4720 = vsel %vm3188, %v4717, %v4719
        %v4721 = vrot.slane %v4634, 5
        %v4722 = vsel %vm3188, %v4719, %v4721
        %v4723 = vrot.slane %v4635, 5
        %v4724 = vsel %vm3188, %v4721, %v4723
        %v4725 = vrot.slane %v4636, 5
        %v4726 = vsel %vm3188, %v4723, %v4725
        %v4727 = vrot.slane %v4637, 5
        %v4728 = vsel %vm3188, %v4725, %v4727
        %v4729 = vrot.slane %v4638, 5
        %v4730 = vsel %vm3188, %v4727, %v4729
        %v4731 = vrot.slane %v4639, 5
        %v4732 = vsel %vm3188, %v4729, %v4731
        %v4733 = vrot.slane %v4640, 5
        %v4734 = vsel %vm3188, %v4731, %v4733
        %v4735 = vrot.slane %v4641, 5
        %v4736 = vsel %vm3188, %v4733, %v4735
        %v4737 = vrot.slane %v4642, 5
        %v4738 = vsel %vm3188, %v4735, %v4737
        %v4739 = vrot.slane %v4643, 5
        %v4740 = vsel %vm3188, %v4737, %v4739
        %v4741 = vrot.slane %v4644, 5
        %v4742 = vsel %vm3188, %v4739, %v4741
        %v4776 = vadd.f32 %v4573, %v4680
        %v4777 = vadd.f32 %v4574, %v4682
        %v4778 = vadd.f32 %v4575, %v4684
        %v4779 = vadd.f32 %v4576, %v4686
        %v4780 = vadd.f32 %v4577, %v4688
        %v4781 = vadd.f32 %v4578, %v4690
        %v4782 = vadd.f32 %v4579, %v4692
        %v4783 = vadd.f32 %v4580, %v4694
        %v4784 = vadd.f32 %v4581, %v4696
        %v4785 = vadd.f32 %v4582, %v4698
        %v4786 = vadd.f32 %v4583, %v4700
        %v4787 = vadd.f32 %v4584, %v4702
        %v4788 = vadd.f32 %v4585, %v4704
        %v4789 = vadd.f32 %v4586, %v4706
        %v4790 = vadd.f32 %v4587, %v4708
        %v4791 = vadd.f32 %v4588, %v4710
        %v4792 = vadd.f32 %v4589, %v4712
        %v4793 = vadd.f32 %v4590, %v4714
        %v4794 = vadd.f32 %v4591, %v4716
        %v4795 = vadd.f32 %v4592, %v4718
        %v4796 = vadd.f32 %v4593, %v4720
        %v4797 = vadd.f32 %v4594, %v4722
        %v4798 = vadd.f32 %v4595, %v4724
        %v4799 = vadd.f32 %v4596, %v4726
        %v4800 = vadd.f32 %v4597, %v4728
        %v4801 = vadd.f32 %v4598, %v4730
        %v4802 = vadd.f32 %v4599, %v4732
        %v4803 = vadd.f32 %v4600, %v4734
        %v4804 = vadd.f32 %v4601, %v4736
        %v4805 = vadd.f32 %v4602, %v4738
        %v4806 = vadd.f32 %v4603, %v4740
        %v4807 = vadd.f32 %v4604, %v4742
        %v4808 = vadd.f32 %v4605, %v4741
        %v4809 = vld [vmem:[#allocation4 + $0x84] sm:$0xf]
        %v4810 = vunpack.c.l.bf16 %v4809
        %v4811 = vlaneseq
        %v4812 = vshrl.u32 %v4811, 7
        %v4813 = vsub.s32 6, %v4812
        %v4814 = vrot.slane %v2161, %v4813
        %v4815 = vmul.f32 %v4607, %v4814
        %v4816 = vmul.f32 %v2199, %v4814
        %v4817 = vmul.f32 %v2200, %v4814
        %v4818 = vmul.f32 %v2201, %v4814
        %v4819 = vmul.f32 %v2202, %v4814
        %v4820 = vmul.f32 %v2203, %v4814
        %v4821 = vmul.f32 %v2204, %v4814
        %v4822 = vmul.f32 %v2205, %v4814
        %v4823 = vmul.f32 %v2206, %v4814
        %v4824 = vmul.f32 %v2207, %v4814
        %v4825 = vmul.f32 %v2208, %v4814
        %v4826 = vmul.f32 %v2209, %v4814
        %v4827 = vmul.f32 %v2210, %v4814
        %v4828 = vmul.f32 %v2211, %v4814
        %v4829 = vmul.f32 %v2212, %v4814
        %v4830 = vmul.f32 %v2213, %v4814
        %v4831 = vmul.f32 %v2214, %v4814
        %v4832 = vmul.f32 %v2215, %v4814
        %v4833 = vmul.f32 %v2216, %v4814
        %v4834 = vmul.f32 %v2217, %v4814
        %v4835 = vmul.f32 %v2218, %v4814
        %v4836 = vmul.f32 %v2219, %v4814
        %v4837 = vmul.f32 %v2220, %v4814
        %v4838 = vmul.f32 %v2221, %v4814
        %v4839 = vmul.f32 %v2222, %v4814
        %v4840 = vmul.f32 %v2223, %v4814
        %v4841 = vmul.f32 %v2224, %v4814
        %v4842 = vmul.f32 %v2225, %v4814
        %v4843 = vmul.f32 %v2226, %v4814
        %v4844 = vmul.f32 %v2227, %v4814
        %v4845 = vmul.f32 %v2228, %v4814
        %v4846 = vmul.f32 %v3321, %v4814
        %v4847 = vmul.f32 %v4810, %v4814
        %v4881 = vrot.slane %v4815, 6
        %v4882 = vrot.slane %v4816, 6
        %v4883 = vsel %vm3392, %v4881, %v4882
        %v4884 = vrot.slane %v4817, 6
        %v4885 = vsel %vm3392, %v4882, %v4884
        %v4886 = vrot.slane %v4818, 6
        %v4887 = vsel %vm3392, %v4884, %v4886
        %v4888 = vrot.slane %v4819, 6
        %v4889 = vsel %vm3392, %v4886, %v4888
        %v4890 = vrot.slane %v4820, 6
        %v4891 = vsel %vm3392, %v4888, %v4890
        %v4892 = vrot.slane %v4821, 6
        %v4893 = vsel %vm3392, %v4890, %v4892
        %v4894 = vrot.slane %v4822, 6
        %v4895 = vsel %vm3392, %v4892, %v4894
        %v4896 = vrot.slane %v4823, 6
        %v4897 = vsel %vm3392, %v4894, %v4896
        %v4898 = vrot.slane %v4824, 6
        %v4899 = vsel %vm3392, %v4896, %v4898
        %v4900 = vrot.slane %v4825, 6
        %v4901 = vsel %vm3392, %v4898, %v4900
        %v4902 = vrot.slane %v4826, 6
        %v4903 = vsel %vm3392, %v4900, %v4902
        %v4904 = vrot.slane %v4827, 6
        %v4905 = vsel %vm3392, %v4902, %v4904
        %v4906 = vrot.slane %v4828, 6
        %v4907 = vsel %vm3392, %v4904, %v4906
        %v4908 = vrot.slane %v4829, 6
        %v4909 = vsel %vm3392, %v4906, %v4908
        %v4910 = vrot.slane %v4830, 6
        %v4911 = vsel %vm3392, %v4908, %v4910
        %v4912 = vrot.slane %v4831, 6
        %v4913 = vsel %vm3392, %v4910, %v4912
        %v4914 = vrot.slane %v4832, 6
        %v4915 = vsel %vm3392, %v4912, %v4914
        %v4916 = vrot.slane %v4833, 6
        %v4917 = vsel %vm3392, %v4914, %v4916
        %v4918 = vrot.slane %v4834, 6
        %v4919 = vsel %vm3392, %v4916, %v4918
        %v4920 = vrot.slane %v4835, 6
        %v4921 = vsel %vm3392, %v4918, %v4920
        %v4922 = vrot.slane %v4836, 6
        %v4923 = vsel %vm3392, %v4920, %v4922
        %v4924 = vrot.slane %v4837, 6
        %v4925 = vsel %vm3392, %v4922, %v4924
        %v4926 = vrot.slane %v4838, 6
        %v4927 = vsel %vm3392, %v4924, %v4926
        %v4928 = vrot.slane %v4839, 6
        %v4929 = vsel %vm3392, %v4926, %v4928
        %v4930 = vrot.slane %v4840, 6
        %v4931 = vsel %vm3392, %v4928, %v4930
        %v4932 = vrot.slane %v4841, 6
        %v4933 = vsel %vm3392, %v4930, %v4932
        %v4934 = vrot.slane %v4842, 6
        %v4935 = vsel %vm3392, %v4932, %v4934
        %v4936 = vrot.slane %v4843, 6
        %v4937 = vsel %vm3392, %v4934, %v4936
        %v4938 = vrot.slane %v4844, 6
        %v4939 = vsel %vm3392, %v4936, %v4938
        %v4940 = vrot.slane %v4845, 6
        %v4941 = vsel %vm3392, %v4938, %v4940
        %v4942 = vrot.slane %v4846, 6
        %v4943 = vsel %vm3392, %v4940, %v4942
        %v4944 = vrot.slane %v4847, 6
        %v4945 = vsel %vm3392, %v4942, %v4944
        %v4979 = vadd.f32 %v4776, %v4883
        %v4980 = vadd.f32 %v4777, %v4885
        %v4981 = vadd.f32 %v4778, %v4887
        %v4982 = vadd.f32 %v4779, %v4889
        %v4983 = vadd.f32 %v4780, %v4891
        %v4984 = vadd.f32 %v4781, %v4893
        %v4985 = vadd.f32 %v4782, %v4895
        %v4986 = vadd.f32 %v4783, %v4897
        %v4987 = vadd.f32 %v4784, %v4899
        %v4988 = vadd.f32 %v4785, %v4901
        %v4989 = vadd.f32 %v4786, %v4903
        %v4990 = vadd.f32 %v4787, %v4905
        %v4991 = vadd.f32 %v4788, %v4907
        %v4992 = vadd.f32 %v4789, %v4909
        %v4993 = vadd.f32 %v4790, %v4911
        %v4994 = vadd.f32 %v4791, %v4913
        %v4995 = vadd.f32 %v4792, %v4915
        %v4996 = vadd.f32 %v4793, %v4917
        %v4997 = vadd.f32 %v4794, %v4919
        %v4998 = vadd.f32 %v4795, %v4921
        %v4999 = vadd.f32 %v4796, %v4923
        %v5000 = vadd.f32 %v4797, %v4925
        %v5001 = vadd.f32 %v4798, %v4927
        %v5002 = vadd.f32 %v4799, %v4929
        %v5003 = vadd.f32 %v4800, %v4931
        %v5004 = vadd.f32 %v4801, %v4933
        %v5005 = vadd.f32 %v4802, %v4935
        %v5006 = vadd.f32 %v4803, %v4937
        %v5007 = vadd.f32 %v4804, %v4939
        %v5008 = vadd.f32 %v4805, %v4941
        %v5009 = vadd.f32 %v4806, %v4943
        %v5010 = vadd.f32 %v4807, %v4945
        %v5011 = vadd.f32 %v4808, %v4944
        %v5012 = vlaneseq
        %v5013 = vshrl.u32 %v5012, 7
        %v5014 = vsub.s32 7, %v5013
        %v5015 = vrot.slane %v2161, %v5014
        %v5016 = vmul.f32 %v2199, %v5015
        %v5017 = vmul.f32 %v2200, %v5015
        %v5018 = vmul.f32 %v2201, %v5015
        %v5019 = vmul.f32 %v2202, %v5015
        %v5020 = vmul.f32 %v2203, %v5015
        %v5021 = vmul.f32 %v2204, %v5015
        %v5022 = vmul.f32 %v2205, %v5015
        %v5023 = vmul.f32 %v2206, %v5015
        %v5024 = vmul.f32 %v2207, %v5015
        %v5025 = vmul.f32 %v2208, %v5015
        %v5026 = vmul.f32 %v2209, %v5015
        %v5027 = vmul.f32 %v2210, %v5015
        %v5028 = vmul.f32 %v2211, %v5015
        %v5029 = vmul.f32 %v2212, %v5015
        %v5030 = vmul.f32 %v2213, %v5015
        %v5031 = vmul.f32 %v2214, %v5015
        %v5032 = vmul.f32 %v2215, %v5015
        %v5033 = vmul.f32 %v2216, %v5015
        %v5034 = vmul.f32 %v2217, %v5015
        %v5035 = vmul.f32 %v2218, %v5015
        %v5036 = vmul.f32 %v2219, %v5015
        %v5037 = vmul.f32 %v2220, %v5015
        %v5038 = vmul.f32 %v2221, %v5015
        %v5039 = vmul.f32 %v2222, %v5015
        %v5040 = vmul.f32 %v2223, %v5015
        %v5041 = vmul.f32 %v2224, %v5015
        %v5042 = vmul.f32 %v2225, %v5015
        %v5043 = vmul.f32 %v2226, %v5015
        %v5044 = vmul.f32 %v2227, %v5015
        %v5045 = vmul.f32 %v2228, %v5015
        %v5046 = vmul.f32 %v3321, %v5015
        %v5047 = vmul.f32 %v4810, %v5015
        %v5080 = vrot.slane %v5016, 7
        %v5081 = vrot.slane %v5017, 7
        %v5082 = vsel %vm3592, %v5080, %v5081
        %v5083 = vrot.slane %v5018, 7
        %v5084 = vsel %vm3592, %v5081, %v5083
        %v5085 = vrot.slane %v5019, 7
        %v5086 = vsel %vm3592, %v5083, %v5085
        %v5087 = vrot.slane %v5020, 7
        %v5088 = vsel %vm3592, %v5085, %v5087
        %v5089 = vrot.slane %v5021, 7
        %v5090 = vsel %vm3592, %v5087, %v5089
        %v5091 = vrot.slane %v5022, 7
        %v5092 = vsel %vm3592, %v5089, %v5091
        %v5093 = vrot.slane %v5023, 7
        %v5094 = vsel %vm3592, %v5091, %v5093
        %v5095 = vrot.slane %v5024, 7
        %v5096 = vsel %vm3592, %v5093, %v5095
        %v5097 = vrot.slane %v5025, 7
        %v5098 = vsel %vm3592, %v5095, %v5097
        %v5099 = vrot.slane %v5026, 7
        %v5100 = vsel %vm3592, %v5097, %v5099
        %v5101 = vrot.slane %v5027, 7
        %v5102 = vsel %vm3592, %v5099, %v5101
        %v5103 = vrot.slane %v5028, 7
        %v5104 = vsel %vm3592, %v5101, %v5103
        %v5105 = vrot.slane %v5029, 7
        %v5106 = vsel %vm3592, %v5103, %v5105
        %v5107 = vrot.slane %v5030, 7
        %v5108 = vsel %vm3592, %v5105, %v5107
        %v5109 = vrot.slane %v5031, 7
        %v5110 = vsel %vm3592, %v5107, %v5109
        %v5111 = vrot.slane %v5032, 7
        %v5112 = vsel %vm3592, %v5109, %v5111
        %v5113 = vrot.slane %v5033, 7
        %v5114 = vsel %vm3592, %v5111, %v5113
        %v5115 = vrot.slane %v5034, 7
        %v5116 = vsel %vm3592, %v5113, %v5115
        %v5117 = vrot.slane %v5035, 7
        %v5118 = vsel %vm3592, %v5115, %v5117
        %v5119 = vrot.slane %v5036, 7
        %v5120 = vsel %vm3592, %v5117, %v5119
        %v5121 = vrot.slane %v5037, 7
        %v5122 = vsel %vm3592, %v5119, %v5121
        %v5123 = vrot.slane %v5038, 7
        %v5124 = vsel %vm3592, %v5121, %v5123
        %v5125 = vrot.slane %v5039, 7
        %v5126 = vsel %vm3592, %v5123, %v5125
        %v5127 = vrot.slane %v5040, 7
        %v5128 = vsel %vm3592, %v5125, %v5127
        %v5129 = vrot.slane %v5041, 7
        %v5130 = vsel %vm3592, %v5127, %v5129
        %v5131 = vrot.slane %v5042, 7
        %v5132 = vsel %vm3592, %v5129, %v5131
        %v5133 = vrot.slane %v5043, 7
        %v5134 = vsel %vm3592, %v5131, %v5133
        %v5135 = vrot.slane %v5044, 7
        %v5136 = vsel %vm3592, %v5133, %v5135
        %v5137 = vrot.slane %v5045, 7
        %v5138 = vsel %vm3592, %v5135, %v5137
        %v5139 = vrot.slane %v5046, 7
        %v5140 = vsel %vm3592, %v5137, %v5139
        %v5141 = vrot.slane %v5047, 7
        %v5142 = vsel %vm3592, %v5139, %v5141
        %v5176 = vadd.f32 %v4979, %v5080
        %v5177 = vadd.f32 %v4980, %v5082
        %v5178 = vadd.f32 %v4981, %v5084
        %v5179 = vadd.f32 %v4982, %v5086
        %v5180 = vadd.f32 %v4983, %v5088
        %v5181 = vadd.f32 %v4984, %v5090
        %v5182 = vadd.f32 %v4985, %v5092
        %v5183 = vadd.f32 %v4986, %v5094
        %v5184 = vadd.f32 %v4987, %v5096
        %v5185 = vadd.f32 %v4988, %v5098
        %v5186 = vadd.f32 %v4989, %v5100
        %v5187 = vadd.f32 %v4990, %v5102
        %v5188 = vadd.f32 %v4991, %v5104
        %v5189 = vadd.f32 %v4992, %v5106
        %v5190 = vadd.f32 %v4993, %v5108
        %v5191 = vadd.f32 %v4994, %v5110
        %v5192 = vadd.f32 %v4995, %v5112
        %v5193 = vadd.f32 %v4996, %v5114
        %v5194 = vadd.f32 %v4997, %v5116
        %v5195 = vadd.f32 %v4998, %v5118
        %v5196 = vadd.f32 %v4999, %v5120
        %v5197 = vadd.f32 %v5000, %v5122
        %v5198 = vadd.f32 %v5001, %v5124
        %v5199 = vadd.f32 %v5002, %v5126
        %v5200 = vadd.f32 %v5003, %v5128
        %v5201 = vadd.f32 %v5004, %v5130
        %v5202 = vadd.f32 %v5005, %v5132
        %v5203 = vadd.f32 %v5006, %v5134
        %v5204 = vadd.f32 %v5007, %v5136
        %v5205 = vadd.f32 %v5008, %v5138
        %v5206 = vadd.f32 %v5009, %v5140
        %v5207 = vadd.f32 %v5010, %v5142
        %v5208 = vadd.f32 %v5011, %v5141
        %v5209 = vld [vmem:[#allocation4 + $0x88] sm:$0x1]
        %v5210 = vunpack.c.l.bf16 %v5209
        %v5211 = vlaneseq
        %v5212 = vshrl.u32 %v5211, 7
        %v5213 = vsub.s32 0, %v5212
        %v5214 = vrot.slane %v2162, %v5213
        %v5215 = vmul.f32 %v2199, %v5214
        %v5216 = vmul.f32 %v2200, %v5214
        %v5217 = vmul.f32 %v2201, %v5214
        %v5218 = vmul.f32 %v2202, %v5214
        %v5219 = vmul.f32 %v2203, %v5214
        %v5220 = vmul.f32 %v2204, %v5214
        %v5221 = vmul.f32 %v2205, %v5214
        %v5222 = vmul.f32 %v2206, %v5214
        %v5223 = vmul.f32 %v2207, %v5214
        %v5224 = vmul.f32 %v2208, %v5214
        %v5225 = vmul.f32 %v2209, %v5214
        %v5226 = vmul.f32 %v2210, %v5214
        %v5227 = vmul.f32 %v2211, %v5214
        %v5228 = vmul.f32 %v2212, %v5214
        %v5229 = vmul.f32 %v2213, %v5214
        %v5230 = vmul.f32 %v2214, %v5214
        %v5231 = vmul.f32 %v2215, %v5214
        %v5232 = vmul.f32 %v2216, %v5214
        %v5233 = vmul.f32 %v2217, %v5214
        %v5234 = vmul.f32 %v2218, %v5214
        %v5235 = vmul.f32 %v2219, %v5214
        %v5236 = vmul.f32 %v2220, %v5214
        %v5237 = vmul.f32 %v2221, %v5214
        %v5238 = vmul.f32 %v2222, %v5214
        %v5239 = vmul.f32 %v2223, %v5214
        %v5240 = vmul.f32 %v2224, %v5214
        %v5241 = vmul.f32 %v2225, %v5214
        %v5242 = vmul.f32 %v2226, %v5214
        %v5243 = vmul.f32 %v2227, %v5214
        %v5244 = vmul.f32 %v2228, %v5214
        %v5245 = vmul.f32 %v3321, %v5214
        %v5246 = vmul.f32 %v4810, %v5214
        %v5247 = vmul.f32 %v5210, %v5214
        %v5248 = vadd.f32 %v5176, %v5215
        %v5249 = vadd.f32 %v5177, %v5216
        %v5250 = vadd.f32 %v5178, %v5217
        %v5251 = vadd.f32 %v5179, %v5218
        %v5252 = vadd.f32 %v5180, %v5219
        %v5253 = vadd.f32 %v5181, %v5220
        %v5254 = vadd.f32 %v5182, %v5221
        %v5255 = vadd.f32 %v5183, %v5222
        %v5256 = vadd.f32 %v5184, %v5223
        %v5257 = vadd.f32 %v5185, %v5224
        %v5258 = vadd.f32 %v5186, %v5225
        %v5259 = vadd.f32 %v5187, %v5226
        %v5260 = vadd.f32 %v5188, %v5227
        %v5261 = vadd.f32 %v5189, %v5228
        %v5262 = vadd.f32 %v5190, %v5229
        %v5263 = vadd.f32 %v5191, %v5230
        %v5264 = vadd.f32 %v5192, %v5231
        %v5265 = vadd.f32 %v5193, %v5232
        %v5266 = vadd.f32 %v5194, %v5233
        %v5267 = vadd.f32 %v5195, %v5234
        %v5268 = vadd.f32 %v5196, %v5235
        %v5269 = vadd.f32 %v5197, %v5236
        %v5270 = vadd.f32 %v5198, %v5237
        %v5271 = vadd.f32 %v5199, %v5238
        %v5272 = vadd.f32 %v5200, %v5239
        %v5273 = vadd.f32 %v5201, %v5240
        %v5274 = vadd.f32 %v5202, %v5241
        %v5275 = vadd.f32 %v5203, %v5242
        %v5276 = vadd.f32 %v5204, %v5243
        %v5277 = vadd.f32 %v5205, %v5244
        %v5278 = vadd.f32 %v5206, %v5245
        %v5279 = vadd.f32 %v5207, %v5246
        %v5280 = vadd.f32 %v5208, %v5247
        %v5281 = vld [vmem:[#allocation4 + $0x8] sm:$0xe]
        %v5282 = vunpack.c.l.bf16 %v5281
        %v5283 = vlaneseq
        %v5284 = vshrl.u32 %v5283, 7
        %v5285 = vsub.s32 1, %v5284
        %v5286 = vrot.slane %v2162, %v5285
        %v5287 = vmul.f32 %v5282, %v5286
        %v5288 = vmul.f32 %v2200, %v5286
        %v5289 = vmul.f32 %v2201, %v5286
        %v5290 = vmul.f32 %v2202, %v5286
        %v5291 = vmul.f32 %v2203, %v5286
        %v5292 = vmul.f32 %v2204, %v5286
        %v5293 = vmul.f32 %v2205, %v5286
        %v5294 = vmul.f32 %v2206, %v5286
        %v5295 = vmul.f32 %v2207, %v5286
        %v5296 = vmul.f32 %v2208, %v5286
        %v5297 = vmul.f32 %v2209, %v5286
        %v5298 = vmul.f32 %v2210, %v5286
        %v5299 = vmul.f32 %v2211, %v5286
        %v5300 = vmul.f32 %v2212, %v5286
        %v5301 = vmul.f32 %v2213, %v5286
        %v5302 = vmul.f32 %v2214, %v5286
        %v5303 = vmul.f32 %v2215, %v5286
        %v5304 = vmul.f32 %v2216, %v5286
        %v5305 = vmul.f32 %v2217, %v5286
        %v5306 = vmul.f32 %v2218, %v5286
        %v5307 = vmul.f32 %v2219, %v5286
        %v5308 = vmul.f32 %v2220, %v5286
        %v5309 = vmul.f32 %v2221, %v5286
        %v5310 = vmul.f32 %v2222, %v5286
        %v5311 = vmul.f32 %v2223, %v5286
        %v5312 = vmul.f32 %v2224, %v5286
        %v5313 = vmul.f32 %v2225, %v5286
        %v5314 = vmul.f32 %v2226, %v5286
        %v5315 = vmul.f32 %v2227, %v5286
        %v5316 = vmul.f32 %v2228, %v5286
        %v5317 = vmul.f32 %v3321, %v5286
        %v5318 = vmul.f32 %v4810, %v5286
        %v5319 = vmul.f32 %v5210, %v5286
        %v5353 = vrot.slane %v5287, 1
        %v5354 = vrot.slane %v5288, 1
        %v5355 = vsel %vm2372, %v5353, %v5354
        %v5356 = vrot.slane %v5289, 1
        %v5357 = vsel %vm2372, %v5354, %v5356
        %v5358 = vrot.slane %v5290, 1
        %v5359 = vsel %vm2372, %v5356, %v5358
        %v5360 = vrot.slane %v5291, 1
        %v5361 = vsel %vm2372, %v5358, %v5360
        %v5362 = vrot.slane %v5292, 1
        %v5363 = vsel %vm2372, %v5360, %v5362
        %v5364 = vrot.slane %v5293, 1
        %v5365 = vsel %vm2372, %v5362, %v5364
        %v5366 = vrot.slane %v5294, 1
        %v5367 = vsel %vm2372, %v5364, %v5366
        %v5368 = vrot.slane %v5295, 1
        %v5369 = vsel %vm2372, %v5366, %v5368
        %v5370 = vrot.slane %v5296, 1
        %v5371 = vsel %vm2372, %v5368, %v5370
        %v5372 = vrot.slane %v5297, 1
        %v5373 = vsel %vm2372, %v5370, %v5372
        %v5374 = vrot.slane %v5298, 1
        %v5375 = vsel %vm2372, %v5372, %v5374
        %v5376 = vrot.slane %v5299, 1
        %v5377 = vsel %vm2372, %v5374, %v5376
        %v5378 = vrot.slane %v5300, 1
        %v5379 = vsel %vm2372, %v5376, %v5378
        %v5380 = vrot.slane %v5301, 1
        %v5381 = vsel %vm2372, %v5378, %v5380
        %v5382 = vrot.slane %v5302, 1
        %v5383 = vsel %vm2372, %v5380, %v5382
        %v5384 = vrot.slane %v5303, 1
        %v5385 = vsel %vm2372, %v5382, %v5384
        %v5386 = vrot.slane %v5304, 1
        %v5387 = vsel %vm2372, %v5384, %v5386
        %v5388 = vrot.slane %v5305, 1
        %v5389 = vsel %vm2372, %v5386, %v5388
        %v5390 = vrot.slane %v5306, 1
        %v5391 = vsel %vm2372, %v5388, %v5390
        %v5392 = vrot.slane %v5307, 1
        %v5393 = vsel %vm2372, %v5390, %v5392
        %v5394 = vrot.slane %v5308, 1
        %v5395 = vsel %vm2372, %v5392, %v5394
        %v5396 = vrot.slane %v5309, 1
        %v5397 = vsel %vm2372, %v5394, %v5396
        %v5398 = vrot.slane %v5310, 1
        %v5399 = vsel %vm2372, %v5396, %v5398
        %v5400 = vrot.slane %v5311, 1
        %v5401 = vsel %vm2372, %v5398, %v5400
        %v5402 = vrot.slane %v5312, 1
        %v5403 = vsel %vm2372, %v5400, %v5402
        %v5404 = vrot.slane %v5313, 1
        %v5405 = vsel %vm2372, %v5402, %v5404
        %v5406 = vrot.slane %v5314, 1
        %v5407 = vsel %vm2372, %v5404, %v5406
        %v5408 = vrot.slane %v5315, 1
        %v5409 = vsel %vm2372, %v5406, %v5408
        %v5410 = vrot.slane %v5316, 1
        %v5411 = vsel %vm2372, %v5408, %v5410
        %v5412 = vrot.slane %v5317, 1
        %v5413 = vsel %vm2372, %v5410, %v5412
        %v5414 = vrot.slane %v5318, 1
        %v5415 = vsel %vm2372, %v5412, %v5414
        %v5416 = vrot.slane %v5319, 1
        %v5417 = vsel %vm2372, %v5414, %v5416
        %v5451 = vadd.f32 %v5248, %v5355
        %v5452 = vadd.f32 %v5249, %v5357
        %v5453 = vadd.f32 %v5250, %v5359
        %v5454 = vadd.f32 %v5251, %v5361
        %v5455 = vadd.f32 %v5252, %v5363
        %v5456 = vadd.f32 %v5253, %v5365
        %v5457 = vadd.f32 %v5254, %v5367
        %v5458 = vadd.f32 %v5255, %v5369
        %v5459 = vadd.f32 %v5256, %v5371
        %v5460 = vadd.f32 %v5257, %v5373
        %v5461 = vadd.f32 %v5258, %v5375
        %v5462 = vadd.f32 %v5259, %v5377
        %v5463 = vadd.f32 %v5260, %v5379
        %v5464 = vadd.f32 %v5261, %v5381
        %v5465 = vadd.f32 %v5262, %v5383
        %v5466 = vadd.f32 %v5263, %v5385
        %v5467 = vadd.f32 %v5264, %v5387
        %v5468 = vadd.f32 %v5265, %v5389
        %v5469 = vadd.f32 %v5266, %v5391
        %v5470 = vadd.f32 %v5267, %v5393
        %v5471 = vadd.f32 %v5268, %v5395
        %v5472 = vadd.f32 %v5269, %v5397
        %v5473 = vadd.f32 %v5270, %v5399
        %v5474 = vadd.f32 %v5271, %v5401
        %v5475 = vadd.f32 %v5272, %v5403
        %v5476 = vadd.f32 %v5273, %v5405
        %v5477 = vadd.f32 %v5274, %v5407
        %v5478 = vadd.f32 %v5275, %v5409
        %v5479 = vadd.f32 %v5276, %v5411
        %v5480 = vadd.f32 %v5277, %v5413
        %v5481 = vadd.f32 %v5278, %v5415
        %v5482 = vadd.f32 %v5279, %v5417
        %v5483 = vadd.f32 %v5280, %v5416
        %v5484 = vld [vmem:[#allocation4 + $0x88] sm:$0x3]
        %v5485 = vunpack.c.l.bf16 %v5484
        %v5486 = vlaneseq
        %v5487 = vshrl.u32 %v5486, 7
        %v5488 = vsub.s32 2, %v5487
        %v5489 = vrot.slane %v2162, %v5488
        %v5490 = vmul.f32 %v5282, %v5489
        %v5491 = vmul.f32 %v2200, %v5489
        %v5492 = vmul.f32 %v2201, %v5489
        %v5493 = vmul.f32 %v2202, %v5489
        %v5494 = vmul.f32 %v2203, %v5489
        %v5495 = vmul.f32 %v2204, %v5489
        %v5496 = vmul.f32 %v2205, %v5489
        %v5497 = vmul.f32 %v2206, %v5489
        %v5498 = vmul.f32 %v2207, %v5489
        %v5499 = vmul.f32 %v2208, %v5489
        %v5500 = vmul.f32 %v2209, %v5489
        %v5501 = vmul.f32 %v2210, %v5489
        %v5502 = vmul.f32 %v2211, %v5489
        %v5503 = vmul.f32 %v2212, %v5489
        %v5504 = vmul.f32 %v2213, %v5489
        %v5505 = vmul.f32 %v2214, %v5489
        %v5506 = vmul.f32 %v2215, %v5489
        %v5507 = vmul.f32 %v2216, %v5489
        %v5508 = vmul.f32 %v2217, %v5489
        %v5509 = vmul.f32 %v2218, %v5489
        %v5510 = vmul.f32 %v2219, %v5489
        %v5511 = vmul.f32 %v2220, %v5489
        %v5512 = vmul.f32 %v2221, %v5489
        %v5513 = vmul.f32 %v2222, %v5489
        %v5514 = vmul.f32 %v2223, %v5489
        %v5515 = vmul.f32 %v2224, %v5489
        %v5516 = vmul.f32 %v2225, %v5489
        %v5517 = vmul.f32 %v2226, %v5489
        %v5518 = vmul.f32 %v2227, %v5489
        %v5519 = vmul.f32 %v2228, %v5489
        %v5520 = vmul.f32 %v3321, %v5489
        %v5521 = vmul.f32 %v4810, %v5489
        %v5522 = vmul.f32 %v5485, %v5489
        %v5556 = vrot.slane %v5490, 2
        %v5557 = vrot.slane %v5491, 2
        %v5558 = vsel %vm2576, %v5556, %v5557
        %v5559 = vrot.slane %v5492, 2
        %v5560 = vsel %vm2576, %v5557, %v5559
        %v5561 = vrot.slane %v5493, 2
        %v5562 = vsel %vm2576, %v5559, %v5561
        %v5563 = vrot.slane %v5494, 2
        %v5564 = vsel %vm2576, %v5561, %v5563
        %v5565 = vrot.slane %v5495, 2
        %v5566 = vsel %vm2576, %v5563, %v5565
        %v5567 = vrot.slane %v5496, 2
        %v5568 = vsel %vm2576, %v5565, %v5567
        %v5569 = vrot.slane %v5497, 2
        %v5570 = vsel %vm2576, %v5567, %v5569
        %v5571 = vrot.slane %v5498, 2
        %v5572 = vsel %vm2576, %v5569, %v5571
        %v5573 = vrot.slane %v5499, 2
        %v5574 = vsel %vm2576, %v5571, %v5573
        %v5575 = vrot.slane %v5500, 2
        %v5576 = vsel %vm2576, %v5573, %v5575
        %v5577 = vrot.slane %v5501, 2
        %v5578 = vsel %vm2576, %v5575, %v5577
        %v5579 = vrot.slane %v5502, 2
        %v5580 = vsel %vm2576, %v5577, %v5579
        %v5581 = vrot.slane %v5503, 2
        %v5582 = vsel %vm2576, %v5579, %v5581
        %v5583 = vrot.slane %v5504, 2
        %v5584 = vsel %vm2576, %v5581, %v5583
        %v5585 = vrot.slane %v5505, 2
        %v5586 = vsel %vm2576, %v5583, %v5585
        %v5587 = vrot.slane %v5506, 2
        %v5588 = vsel %vm2576, %v5585, %v5587
        %v5589 = vrot.slane %v5507, 2
        %v5590 = vsel %vm2576, %v5587, %v5589
        %v5591 = vrot.slane %v5508, 2
        %v5592 = vsel %vm2576, %v5589, %v5591
        %v5593 = vrot.slane %v5509, 2
        %v5594 = vsel %vm2576, %v5591, %v5593
        %v5595 = vrot.slane %v5510, 2
        %v5596 = vsel %vm2576, %v5593, %v5595
        %v5597 = vrot.slane %v5511, 2
        %v5598 = vsel %vm2576, %v5595, %v5597
        %v5599 = vrot.slane %v5512, 2
        %v5600 = vsel %vm2576, %v5597, %v5599
        %v5601 = vrot.slane %v5513, 2
        %v5602 = vsel %vm2576, %v5599, %v5601
        %v5603 = vrot.slane %v5514, 2
        %v5604 = vsel %vm2576, %v5601, %v5603
        %v5605 = vrot.slane %v5515, 2
        %v5606 = vsel %vm2576, %v5603, %v5605
        %v5607 = vrot.slane %v5516, 2
        %v5608 = vsel %vm2576, %v5605, %v5607
        %v5609 = vrot.slane %v5517, 2
        %v5610 = vsel %vm2576, %v5607, %v5609
        %v5611 = vrot.slane %v5518, 2
        %v5612 = vsel %vm2576, %v5609, %v5611
        %v5613 = vrot.slane %v5519, 2
        %v5614 = vsel %vm2576, %v5611, %v5613
        %v5615 = vrot.slane %v5520, 2
        %v5616 = vsel %vm2576, %v5613, %v5615
        %v5617 = vrot.slane %v5521, 2
        %v5618 = vsel %vm2576, %v5615, %v5617
        %v5619 = vrot.slane %v5522, 2
        %v5620 = vsel %vm2576, %v5617, %v5619
        %v5654 = vadd.f32 %v5451, %v5558
        %v5655 = vadd.f32 %v5452, %v5560
        %v5656 = vadd.f32 %v5453, %v5562
        %v5657 = vadd.f32 %v5454, %v5564
        %v5658 = vadd.f32 %v5455, %v5566
        %v5659 = vadd.f32 %v5456, %v5568
        %v5660 = vadd.f32 %v5457, %v5570
        %v5661 = vadd.f32 %v5458, %v5572
        %v5662 = vadd.f32 %v5459, %v5574
        %v5663 = vadd.f32 %v5460, %v5576
        %v5664 = vadd.f32 %v5461, %v5578
        %v5665 = vadd.f32 %v5462, %v5580
        %v5666 = vadd.f32 %v5463, %v5582
        %v5667 = vadd.f32 %v5464, %v5584
        %v5668 = vadd.f32 %v5465, %v5586
        %v5669 = vadd.f32 %v5466, %v5588
        %v5670 = vadd.f32 %v5467, %v5590
        %v5671 = vadd.f32 %v5468, %v5592
        %v5672 = vadd.f32 %v5469, %v5594
        %v5673 = vadd.f32 %v5470, %v5596
        %v5674 = vadd.f32 %v5471, %v5598
        %v5675 = vadd.f32 %v5472, %v5600
        %v5676 = vadd.f32 %v5473, %v5602
        %v5677 = vadd.f32 %v5474, %v5604
        %v5678 = vadd.f32 %v5475, %v5606
        %v5679 = vadd.f32 %v5476, %v5608
        %v5680 = vadd.f32 %v5477, %v5610
        %v5681 = vadd.f32 %v5478, %v5612
        %v5682 = vadd.f32 %v5479, %v5614
        %v5683 = vadd.f32 %v5480, %v5616
        %v5684 = vadd.f32 %v5481, %v5618
        %v5685 = vadd.f32 %v5482, %v5620
        %v5686 = vadd.f32 %v5483, %v5619
        %v5687 = vld [vmem:[#allocation4 + $0x8] sm:$0xc]
        %v5688 = vunpack.c.l.bf16 %v5687
        %v5689 = vlaneseq
        %v5690 = vshrl.u32 %v5689, 7
        %v5691 = vsub.s32 3, %v5690
        %v5692 = vrot.slane %v2162, %v5691
        %v5693 = vmul.f32 %v5688, %v5692
        %v5694 = vmul.f32 %v2200, %v5692
        %v5695 = vmul.f32 %v2201, %v5692
        %v5696 = vmul.f32 %v2202, %v5692
        %v5697 = vmul.f32 %v2203, %v5692
        %v5698 = vmul.f32 %v2204, %v5692
        %v5699 = vmul.f32 %v2205, %v5692
        %v5700 = vmul.f32 %v2206, %v5692
        %v5701 = vmul.f32 %v2207, %v5692
        %v5702 = vmul.f32 %v2208, %v5692
        %v5703 = vmul.f32 %v2209, %v5692
        %v5704 = vmul.f32 %v2210, %v5692
        %v5705 = vmul.f32 %v2211, %v5692
        %v5706 = vmul.f32 %v2212, %v5692
        %v5707 = vmul.f32 %v2213, %v5692
        %v5708 = vmul.f32 %v2214, %v5692
        %v5709 = vmul.f32 %v2215, %v5692
        %v5710 = vmul.f32 %v2216, %v5692
        %v5711 = vmul.f32 %v2217, %v5692
        %v5712 = vmul.f32 %v2218, %v5692
        %v5713 = vmul.f32 %v2219, %v5692
        %v5714 = vmul.f32 %v2220, %v5692
        %v5715 = vmul.f32 %v2221, %v5692
        %v5716 = vmul.f32 %v2222, %v5692
        %v5717 = vmul.f32 %v2223, %v5692
        %v5718 = vmul.f32 %v2224, %v5692
        %v5719 = vmul.f32 %v2225, %v5692
        %v5720 = vmul.f32 %v2226, %v5692
        %v5721 = vmul.f32 %v2227, %v5692
        %v5722 = vmul.f32 %v2228, %v5692
        %v5723 = vmul.f32 %v3321, %v5692
        %v5724 = vmul.f32 %v4810, %v5692
        %v5725 = vmul.f32 %v5485, %v5692
        %v5759 = vrot.slane %v5693, 3
        %v5760 = vrot.slane %v5694, 3
        %v5761 = vsel %vm2780, %v5759, %v5760
        %v5762 = vrot.slane %v5695, 3
        %v5763 = vsel %vm2780, %v5760, %v5762
        %v5764 = vrot.slane %v5696, 3
        %v5765 = vsel %vm2780, %v5762, %v5764
        %v5766 = vrot.slane %v5697, 3
        %v5767 = vsel %vm2780, %v5764, %v5766
        %v5768 = vrot.slane %v5698, 3
        %v5769 = vsel %vm2780, %v5766, %v5768
        %v5770 = vrot.slane %v5699, 3
        %v5771 = vsel %vm2780, %v5768, %v5770
        %v5772 = vrot.slane %v5700, 3
        %v5773 = vsel %vm2780, %v5770, %v5772
        %v5774 = vrot.slane %v5701, 3
        %v5775 = vsel %vm2780, %v5772, %v5774
        %v5776 = vrot.slane %v5702, 3
        %v5777 = vsel %vm2780, %v5774, %v5776
        %v5778 = vrot.slane %v5703, 3
        %v5779 = vsel %vm2780, %v5776, %v5778
        %v5780 = vrot.slane %v5704, 3
        %v5781 = vsel %vm2780, %v5778, %v5780
        %v5782 = vrot.slane %v5705, 3
        %v5783 = vsel %vm2780, %v5780, %v5782
        %v5784 = vrot.slane %v5706, 3
        %v5785 = vsel %vm2780, %v5782, %v5784
        %v5786 = vrot.slane %v5707, 3
        %v5787 = vsel %vm2780, %v5784, %v5786
        %v5788 = vrot.slane %v5708, 3
        %v5789 = vsel %vm2780, %v5786, %v5788
        %v5790 = vrot.slane %v5709, 3
        %v5791 = vsel %vm2780, %v5788, %v5790
        %v5792 = vrot.slane %v5710, 3
        %v5793 = vsel %vm2780, %v5790, %v5792
        %v5794 = vrot.slane %v5711, 3
        %v5795 = vsel %vm2780, %v5792, %v5794
        %v5796 = vrot.slane %v5712, 3
        %v5797 = vsel %vm2780, %v5794, %v5796
        %v5798 = vrot.slane %v5713, 3
        %v5799 = vsel %vm2780, %v5796, %v5798
        %v5800 = vrot.slane %v5714, 3
        %v5801 = vsel %vm2780, %v5798, %v5800
        %v5802 = vrot.slane %v5715, 3
        %v5803 = vsel %vm2780, %v5800, %v5802
        %v5804 = vrot.slane %v5716, 3
        %v5805 = vsel %vm2780, %v5802, %v5804
        %v5806 = vrot.slane %v5717, 3
        %v5807 = vsel %vm2780, %v5804, %v5806
        %v5808 = vrot.slane %v5718, 3
        %v5809 = vsel %vm2780, %v5806, %v5808
        %v5810 = vrot.slane %v5719, 3
        %v5811 = vsel %vm2780, %v5808, %v5810
        %v5812 = vrot.slane %v5720, 3
        %v5813 = vsel %vm2780, %v5810, %v5812
        %v5814 = vrot.slane %v5721, 3
        %v5815 = vsel %vm2780, %v5812, %v5814
        %v5816 = vrot.slane %v5722, 3
        %v5817 = vsel %vm2780, %v5814, %v5816
        %v5818 = vrot.slane %v5723, 3
        %v5819 = vsel %vm2780, %v5816, %v5818
        %v5820 = vrot.slane %v5724, 3
        %v5821 = vsel %vm2780, %v5818, %v5820
        %v5822 = vrot.slane %v5725, 3
        %v5823 = vsel %vm2780, %v5820, %v5822
        %v5857 = vadd.f32 %v5654, %v5761
        %v5858 = vadd.f32 %v5655, %v5763
        %v5859 = vadd.f32 %v5656, %v5765
        %v5860 = vadd.f32 %v5657, %v5767
        %v5861 = vadd.f32 %v5658, %v5769
        %v5862 = vadd.f32 %v5659, %v5771
        %v5863 = vadd.f32 %v5660, %v5773
        %v5864 = vadd.f32 %v5661, %v5775
        %v5865 = vadd.f32 %v5662, %v5777
        %v5866 = vadd.f32 %v5663, %v5779
        %v5867 = vadd.f32 %v5664, %v5781
        %v5868 = vadd.f32 %v5665, %v5783
        %v5869 = vadd.f32 %v5666, %v5785
        %v5870 = vadd.f32 %v5667, %v5787
        %v5871 = vadd.f32 %v5668, %v5789
        %v5872 = vadd.f32 %v5669, %v5791
        %v5873 = vadd.f32 %v5670, %v5793
        %v5874 = vadd.f32 %v5671, %v5795
        %v5875 = vadd.f32 %v5672, %v5797
        %v5876 = vadd.f32 %v5673, %v5799
        %v5877 = vadd.f32 %v5674, %v5801
        %v5878 = vadd.f32 %v5675, %v5803
        %v5879 = vadd.f32 %v5676, %v5805
        %v5880 = vadd.f32 %v5677, %v5807
        %v5881 = vadd.f32 %v5678, %v5809
        %v5882 = vadd.f32 %v5679, %v5811
        %v5883 = vadd.f32 %v5680, %v5813
        %v5884 = vadd.f32 %v5681, %v5815
        %v5885 = vadd.f32 %v5682, %v5817
        %v5886 = vadd.f32 %v5683, %v5819
        %v5887 = vadd.f32 %v5684, %v5821
        %v5888 = vadd.f32 %v5685, %v5823
        %v5889 = vadd.f32 %v5686, %v5822
        %v5890 = vld [vmem:[#allocation4 + $0x88] sm:$0x7]
        %v5891 = vunpack.c.l.bf16 %v5890
        %v5892 = vlaneseq
        %v5893 = vshrl.u32 %v5892, 7
        %v5894 = vsub.s32 4, %v5893
        %v5895 = vrot.slane %v2162, %v5894
        %v5896 = vmul.f32 %v5688, %v5895
        %v5897 = vmul.f32 %v2200, %v5895
        %v5898 = vmul.f32 %v2201, %v5895
        %v5899 = vmul.f32 %v2202, %v5895
        %v5900 = vmul.f32 %v2203, %v5895
        %v5901 = vmul.f32 %v2204, %v5895
        %v5902 = vmul.f32 %v2205, %v5895
        %v5903 = vmul.f32 %v2206, %v5895
        %v5904 = vmul.f32 %v2207, %v5895
        %v5905 = vmul.f32 %v2208, %v5895
        %v5906 = vmul.f32 %v2209, %v5895
        %v5907 = vmul.f32 %v2210, %v5895
        %v5908 = vmul.f32 %v2211, %v5895
        %v5909 = vmul.f32 %v2212, %v5895
        %v5910 = vmul.f32 %v2213, %v5895
        %v5911 = vmul.f32 %v2214, %v5895
        %v5912 = vmul.f32 %v2215, %v5895
        %v5913 = vmul.f32 %v2216, %v5895
        %v5914 = vmul.f32 %v2217, %v5895
        %v5915 = vmul.f32 %v2218, %v5895
        %v5916 = vmul.f32 %v2219, %v5895
        %v5917 = vmul.f32 %v2220, %v5895
        %v5918 = vmul.f32 %v2221, %v5895
        %v5919 = vmul.f32 %v2222, %v5895
        %v5920 = vmul.f32 %v2223, %v5895
        %v5921 = vmul.f32 %v2224, %v5895
        %v5922 = vmul.f32 %v2225, %v5895
        %v5923 = vmul.f32 %v2226, %v5895
        %v5924 = vmul.f32 %v2227, %v5895
        %v5925 = vmul.f32 %v2228, %v5895
        %v5926 = vmul.f32 %v3321, %v5895
        %v5927 = vmul.f32 %v4810, %v5895
        %v5928 = vmul.f32 %v5891, %v5895
        %v5962 = vrot.slane %v5896, 4
        %v5963 = vrot.slane %v5897, 4
        %v5964 = vsel %vm2984, %v5962, %v5963
        %v5965 = vrot.slane %v5898, 4
        %v5966 = vsel %vm2984, %v5963, %v5965
        %v5967 = vrot.slane %v5899, 4
        %v5968 = vsel %vm2984, %v5965, %v5967
        %v5969 = vrot.slane %v5900, 4
        %v5970 = vsel %vm2984, %v5967, %v5969
        %v5971 = vrot.slane %v5901, 4
        %v5972 = vsel %vm2984, %v5969, %v5971
        %v5973 = vrot.slane %v5902, 4
        %v5974 = vsel %vm2984, %v5971, %v5973
        %v5975 = vrot.slane %v5903, 4
        %v5976 = vsel %vm2984, %v5973, %v5975
        %v5977 = vrot.slane %v5904, 4
        %v5978 = vsel %vm2984, %v5975, %v5977
        %v5979 = vrot.slane %v5905, 4
        %v5980 = vsel %vm2984, %v5977, %v5979
        %v5981 = vrot.slane %v5906, 4
        %v5982 = vsel %vm2984, %v5979, %v5981
        %v5983 = vrot.slane %v5907, 4
        %v5984 = vsel %vm2984, %v5981, %v5983
        %v5985 = vrot.slane %v5908, 4
        %v5986 = vsel %vm2984, %v5983, %v5985
        %v5987 = vrot.slane %v5909, 4
        %v5988 = vsel %vm2984, %v5985, %v5987
        %v5989 = vrot.slane %v5910, 4
        %v5990 = vsel %vm2984, %v5987, %v5989
        %v5991 = vrot.slane %v5911, 4
        %v5992 = vsel %vm2984, %v5989, %v5991
        %v5993 = vrot.slane %v5912, 4
        %v5994 = vsel %vm2984, %v5991, %v5993
        %v5995 = vrot.slane %v5913, 4
        %v5996 = vsel %vm2984, %v5993, %v5995
        %v5997 = vrot.slane %v5914, 4
        %v5998 = vsel %vm2984, %v5995, %v5997
        %v5999 = vrot.slane %v5915, 4
        %v6000 = vsel %vm2984, %v5997, %v5999
        %v6001 = vrot.slane %v5916, 4
        %v6002 = vsel %vm2984, %v5999, %v6001
        %v6003 = vrot.slane %v5917, 4
        %v6004 = vsel %vm2984, %v6001, %v6003
        %v6005 = vrot.slane %v5918, 4
        %v6006 = vsel %vm2984, %v6003, %v6005
        %v6007 = vrot.slane %v5919, 4
        %v6008 = vsel %vm2984, %v6005, %v6007
        %v6009 = vrot.slane %v5920, 4
        %v6010 = vsel %vm2984, %v6007, %v6009
        %v6011 = vrot.slane %v5921, 4
        %v6012 = vsel %vm2984, %v6009, %v6011
        %v6013 = vrot.slane %v5922, 4
        %v6014 = vsel %vm2984, %v6011, %v6013
        %v6015 = vrot.slane %v5923, 4
        %v6016 = vsel %vm2984, %v6013, %v6015
        %v6017 = vrot.slane %v5924, 4
        %v6018 = vsel %vm2984, %v6015, %v6017
        %v6019 = vrot.slane %v5925, 4
        %v6020 = vsel %vm2984, %v6017, %v6019
        %v6021 = vrot.slane %v5926, 4
        %v6022 = vsel %vm2984, %v6019, %v6021
        %v6023 = vrot.slane %v5927, 4
        %v6024 = vsel %vm2984, %v6021, %v6023
        %v6025 = vrot.slane %v5928, 4
        %v6026 = vsel %vm2984, %v6023, %v6025
        %v6060 = vadd.f32 %v5857, %v5964
        %v6061 = vadd.f32 %v5858, %v5966
        %v6062 = vadd.f32 %v5859, %v5968
        %v6063 = vadd.f32 %v5860, %v5970
        %v6064 = vadd.f32 %v5861, %v5972
        %v6065 = vadd.f32 %v5862, %v5974
        %v6066 = vadd.f32 %v5863, %v5976
        %v6067 = vadd.f32 %v5864, %v5978
        %v6068 = vadd.f32 %v5865, %v5980
        %v6069 = vadd.f32 %v5866, %v5982
        %v6070 = vadd.f32 %v5867, %v5984
        %v6071 = vadd.f32 %v5868, %v5986
        %v6072 = vadd.f32 %v5869, %v5988
        %v6073 = vadd.f32 %v5870, %v5990
        %v6074 = vadd.f32 %v5871, %v5992
        %v6075 = vadd.f32 %v5872, %v5994
        %v6076 = vadd.f32 %v5873, %v5996
        %v6077 = vadd.f32 %v5874, %v5998
        %v6078 = vadd.f32 %v5875, %v6000
        %v6079 = vadd.f32 %v5876, %v6002
        %v6080 = vadd.f32 %v5877, %v6004
        %v6081 = vadd.f32 %v5878, %v6006
        %v6082 = vadd.f32 %v5879, %v6008
        %v6083 = vadd.f32 %v5880, %v6010
        %v6084 = vadd.f32 %v5881, %v6012
        %v6085 = vadd.f32 %v5882, %v6014
        %v6086 = vadd.f32 %v5883, %v6016
        %v6087 = vadd.f32 %v5884, %v6018
        %v6088 = vadd.f32 %v5885, %v6020
        %v6089 = vadd.f32 %v5886, %v6022
        %v6090 = vadd.f32 %v5887, %v6024
        %v6091 = vadd.f32 %v5888, %v6026
        %v6092 = vadd.f32 %v5889, %v6025
        %v6093 = vld [vmem:[#allocation4 + $0x8] sm:$0x8]
        %v6094 = vunpack.c.l.bf16 %v6093
        %v6095 = vlaneseq
        %v6096 = vshrl.u32 %v6095, 7
        %v6097 = vsub.s32 5, %v6096
        %v6098 = vrot.slane %v2162, %v6097
        %v6099 = vmul.f32 %v6094, %v6098
        %v6100 = vmul.f32 %v2200, %v6098
        %v6101 = vmul.f32 %v2201, %v6098
        %v6102 = vmul.f32 %v2202, %v6098
        %v6103 = vmul.f32 %v2203, %v6098
        %v6104 = vmul.f32 %v2204, %v6098
        %v6105 = vmul.f32 %v2205, %v6098
        %v6106 = vmul.f32 %v2206, %v6098
        %v6107 = vmul.f32 %v2207, %v6098
        %v6108 = vmul.f32 %v2208, %v6098
        %v6109 = vmul.f32 %v2209, %v6098
        %v6110 = vmul.f32 %v2210, %v6098
        %v6111 = vmul.f32 %v2211, %v6098
        %v6112 = vmul.f32 %v2212, %v6098
        %v6113 = vmul.f32 %v2213, %v6098
        %v6114 = vmul.f32 %v2214, %v6098
        %v6115 = vmul.f32 %v2215, %v6098
        %v6116 = vmul.f32 %v2216, %v6098
        %v6117 = vmul.f32 %v2217, %v6098
        %v6118 = vmul.f32 %v2218, %v6098
        %v6119 = vmul.f32 %v2219, %v6098
        %v6120 = vmul.f32 %v2220, %v6098
        %v6121 = vmul.f32 %v2221, %v6098
        %v6122 = vmul.f32 %v2222, %v6098
        %v6123 = vmul.f32 %v2223, %v6098
        %v6124 = vmul.f32 %v2224, %v6098
        %v6125 = vmul.f32 %v2225, %v6098
        %v6126 = vmul.f32 %v2226, %v6098
        %v6127 = vmul.f32 %v2227, %v6098
        %v6128 = vmul.f32 %v2228, %v6098
        %v6129 = vmul.f32 %v3321, %v6098
        %v6130 = vmul.f32 %v4810, %v6098
        %v6131 = vmul.f32 %v5891, %v6098
        %v6165 = vrot.slane %v6099, 5
        %v6166 = vrot.slane %v6100, 5
        %v6167 = vsel %vm3188, %v6165, %v6166
        %v6168 = vrot.slane %v6101, 5
        %v6169 = vsel %vm3188, %v6166, %v6168
        %v6170 = vrot.slane %v6102, 5
        %v6171 = vsel %vm3188, %v6168, %v6170
        %v6172 = vrot.slane %v6103, 5
        %v6173 = vsel %vm3188, %v6170, %v6172
        %v6174 = vrot.slane %v6104, 5
        %v6175 = vsel %vm3188, %v6172, %v6174
        %v6176 = vrot.slane %v6105, 5
        %v6177 = vsel %vm3188, %v6174, %v6176
        %v6178 = vrot.slane %v6106, 5
        %v6179 = vsel %vm3188, %v6176, %v6178
        %v6180 = vrot.slane %v6107, 5
        %v6181 = vsel %vm3188, %v6178, %v6180
        %v6182 = vrot.slane %v6108, 5
        %v6183 = vsel %vm3188, %v6180, %v6182
        %v6184 = vrot.slane %v6109, 5
        %v6185 = vsel %vm3188, %v6182, %v6184
        %v6186 = vrot.slane %v6110, 5
        %v6187 = vsel %vm3188, %v6184, %v6186
        %v6188 = vrot.slane %v6111, 5
        %v6189 = vsel %vm3188, %v6186, %v6188
        %v6190 = vrot.slane %v6112, 5
        %v6191 = vsel %vm3188, %v6188, %v6190
        %v6192 = vrot.slane %v6113, 5
        %v6193 = vsel %vm3188, %v6190, %v6192
        %v6194 = vrot.slane %v6114, 5
        %v6195 = vsel %vm3188, %v6192, %v6194
        %v6196 = vrot.slane %v6115, 5
        %v6197 = vsel %vm3188, %v6194, %v6196
        %v6198 = vrot.slane %v6116, 5
        %v6199 = vsel %vm3188, %v6196, %v6198
        %v6200 = vrot.slane %v6117, 5
        %v6201 = vsel %vm3188, %v6198, %v6200
        %v6202 = vrot.slane %v6118, 5
        %v6203 = vsel %vm3188, %v6200, %v6202
        %v6204 = vrot.slane %v6119, 5
        %v6205 = vsel %vm3188, %v6202, %v6204
        %v6206 = vrot.slane %v6120, 5
        %v6207 = vsel %vm3188, %v6204, %v6206
        %v6208 = vrot.slane %v6121, 5
        %v6209 = vsel %vm3188, %v6206, %v6208
        %v6210 = vrot.slane %v6122, 5
        %v6211 = vsel %vm3188, %v6208, %v6210
        %v6212 = vrot.slane %v6123, 5
        %v6213 = vsel %vm3188, %v6210, %v6212
        %v6214 = vrot.slane %v6124, 5
        %v6215 = vsel %vm3188, %v6212, %v6214
        %v6216 = vrot.slane %v6125, 5
        %v6217 = vsel %vm3188, %v6214, %v6216
        %v6218 = vrot.slane %v6126, 5
        %v6219 = vsel %vm3188, %v6216, %v6218
        %v6220 = vrot.slane %v6127, 5
        %v6221 = vsel %vm3188, %v6218, %v6220
        %v6222 = vrot.slane %v6128, 5
        %v6223 = vsel %vm3188, %v6220, %v6222
        %v6224 = vrot.slane %v6129, 5
        %v6225 = vsel %vm3188, %v6222, %v6224
        %v6226 = vrot.slane %v6130, 5
        %v6227 = vsel %vm3188, %v6224, %v6226
        %v6228 = vrot.slane %v6131, 5
        %v6229 = vsel %vm3188, %v6226, %v6228
        %v6263 = vadd.f32 %v6060, %v6167
        %v6264 = vadd.f32 %v6061, %v6169
        %v6265 = vadd.f32 %v6062, %v6171
        %v6266 = vadd.f32 %v6063, %v6173
        %v6267 = vadd.f32 %v6064, %v6175
        %v6268 = vadd.f32 %v6065, %v6177
        %v6269 = vadd.f32 %v6066, %v6179
        %v6270 = vadd.f32 %v6067, %v6181
        %v6271 = vadd.f32 %v6068, %v6183
        %v6272 = vadd.f32 %v6069, %v6185
        %v6273 = vadd.f32 %v6070, %v6187
        %v6274 = vadd.f32 %v6071, %v6189
        %v6275 = vadd.f32 %v6072, %v6191
        %v6276 = vadd.f32 %v6073, %v6193
        %v6277 = vadd.f32 %v6074, %v6195
        %v6278 = vadd.f32 %v6075, %v6197
        %v6279 = vadd.f32 %v6076, %v6199
        %v6280 = vadd.f32 %v6077, %v6201
        %v6281 = vadd.f32 %v6078, %v6203
        %v6282 = vadd.f32 %v6079, %v6205
        %v6283 = vadd.f32 %v6080, %v6207
        %v6284 = vadd.f32 %v6081, %v6209
        %v6285 = vadd.f32 %v6082, %v6211
        %v6286 = vadd.f32 %v6083, %v6213
        %v6287 = vadd.f32 %v6084, %v6215
        %v6288 = vadd.f32 %v6085, %v6217
        %v6289 = vadd.f32 %v6086, %v6219
        %v6290 = vadd.f32 %v6087, %v6221
        %v6291 = vadd.f32 %v6088, %v6223
        %v6292 = vadd.f32 %v6089, %v6225
        %v6293 = vadd.f32 %v6090, %v6227
        %v6294 = vadd.f32 %v6091, %v6229
        %v6295 = vadd.f32 %v6092, %v6228
        %v6296 = vld [vmem:[#allocation4 + $0x88] sm:$0xf]
        %v6297 = vunpack.c.l.bf16 %v6296
        %v6298 = vlaneseq
        %v6299 = vshrl.u32 %v6298, 7
        %v6300 = vsub.s32 6, %v6299
        %v6301 = vrot.slane %v2162, %v6300
        %v6302 = vmul.f32 %v6094, %v6301
        %v6303 = vmul.f32 %v2200, %v6301
        %v6304 = vmul.f32 %v2201, %v6301
        %v6305 = vmul.f32 %v2202, %v6301
        %v6306 = vmul.f32 %v2203, %v6301
        %v6307 = vmul.f32 %v2204, %v6301
        %v6308 = vmul.f32 %v2205, %v6301
        %v6309 = vmul.f32 %v2206, %v6301
        %v6310 = vmul.f32 %v2207, %v6301
        %v6311 = vmul.f32 %v2208, %v6301
        %v6312 = vmul.f32 %v2209, %v6301
        %v6313 = vmul.f32 %v2210, %v6301
        %v6314 = vmul.f32 %v2211, %v6301
        %v6315 = vmul.f32 %v2212, %v6301
        %v6316 = vmul.f32 %v2213, %v6301
        %v6317 = vmul.f32 %v2214, %v6301
        %v6318 = vmul.f32 %v2215, %v6301
        %v6319 = vmul.f32 %v2216, %v6301
        %v6320 = vmul.f32 %v2217, %v6301
        %v6321 = vmul.f32 %v2218, %v6301
        %v6322 = vmul.f32 %v2219, %v6301
        %v6323 = vmul.f32 %v2220, %v6301
        %v6324 = vmul.f32 %v2221, %v6301
        %v6325 = vmul.f32 %v2222, %v6301
        %v6326 = vmul.f32 %v2223, %v6301
        %v6327 = vmul.f32 %v2224, %v6301
        %v6328 = vmul.f32 %v2225, %v6301
        %v6329 = vmul.f32 %v2226, %v6301
        %v6330 = vmul.f32 %v2227, %v6301
        %v6331 = vmul.f32 %v2228, %v6301
        %v6332 = vmul.f32 %v3321, %v6301
        %v6333 = vmul.f32 %v4810, %v6301
        %v6334 = vmul.f32 %v6297, %v6301
        %v6368 = vrot.slane %v6302, 6
        %v6369 = vrot.slane %v6303, 6
        %v6370 = vsel %vm3392, %v6368, %v6369
        %v6371 = vrot.slane %v6304, 6
        %v6372 = vsel %vm3392, %v6369, %v6371
        %v6373 = vrot.slane %v6305, 6
        %v6374 = vsel %vm3392, %v6371, %v6373
        %v6375 = vrot.slane %v6306, 6
        %v6376 = vsel %vm3392, %v6373, %v6375
        %v6377 = vrot.slane %v6307, 6
        %v6378 = vsel %vm3392, %v6375, %v6377
        %v6379 = vrot.slane %v6308, 6
        %v6380 = vsel %vm3392, %v6377, %v6379
        %v6381 = vrot.slane %v6309, 6
        %v6382 = vsel %vm3392, %v6379, %v6381
        %v6383 = vrot.slane %v6310, 6
        %v6384 = vsel %vm3392, %v6381, %v6383
        %v6385 = vrot.slane %v6311, 6
        %v6386 = vsel %vm3392, %v6383, %v6385
        %v6387 = vrot.slane %v6312, 6
        %v6388 = vsel %vm3392, %v6385, %v6387
        %v6389 = vrot.slane %v6313, 6
        %v6390 = vsel %vm3392, %v6387, %v6389
        %v6391 = vrot.slane %v6314, 6
        %v6392 = vsel %vm3392, %v6389, %v6391
        %v6393 = vrot.slane %v6315, 6
        %v6394 = vsel %vm3392, %v6391, %v6393
        %v6395 = vrot.slane %v6316, 6
        %v6396 = vsel %vm3392, %v6393, %v6395
        %v6397 = vrot.slane %v6317, 6
        %v6398 = vsel %vm3392, %v6395, %v6397
        %v6399 = vrot.slane %v6318, 6
        %v6400 = vsel %vm3392, %v6397, %v6399
        %v6401 = vrot.slane %v6319, 6
        %v6402 = vsel %vm3392, %v6399, %v6401
        %v6403 = vrot.slane %v6320, 6
        %v6404 = vsel %vm3392, %v6401, %v6403
        %v6405 = vrot.slane %v6321, 6
        %v6406 = vsel %vm3392, %v6403, %v6405
        %v6407 = vrot.slane %v6322, 6
        %v6408 = vsel %vm3392, %v6405, %v6407
        %v6409 = vrot.slane %v6323, 6
        %v6410 = vsel %vm3392, %v6407, %v6409
        %v6411 = vrot.slane %v6324, 6
        %v6412 = vsel %vm3392, %v6409, %v6411
        %v6413 = vrot.slane %v6325, 6
        %v6414 = vsel %vm3392, %v6411, %v6413
        %v6415 = vrot.slane %v6326, 6
        %v6416 = vsel %vm3392, %v6413, %v6415
        %v6417 = vrot.slane %v6327, 6
        %v6418 = vsel %vm3392, %v6415, %v6417
        %v6419 = vrot.slane %v6328, 6
        %v6420 = vsel %vm3392, %v6417, %v6419
        %v6421 = vrot.slane %v6329, 6
        %v6422 = vsel %vm3392, %v6419, %v6421
        %v6423 = vrot.slane %v6330, 6
        %v6424 = vsel %vm3392, %v6421, %v6423
        %v6425 = vrot.slane %v6331, 6
        %v6426 = vsel %vm3392, %v6423, %v6425
        %v6427 = vrot.slane %v6332, 6
        %v6428 = vsel %vm3392, %v6425, %v6427
        %v6429 = vrot.slane %v6333, 6
        %v6430 = vsel %vm3392, %v6427, %v6429
        %v6431 = vrot.slane %v6334, 6
        %v6432 = vsel %vm3392, %v6429, %v6431
        %v6466 = vadd.f32 %v6263, %v6370
        %v6467 = vadd.f32 %v6264, %v6372
        %v6468 = vadd.f32 %v6265, %v6374
        %v6469 = vadd.f32 %v6266, %v6376
        %v6470 = vadd.f32 %v6267, %v6378
        %v6471 = vadd.f32 %v6268, %v6380
        %v6472 = vadd.f32 %v6269, %v6382
        %v6473 = vadd.f32 %v6270, %v6384
        %v6474 = vadd.f32 %v6271, %v6386
        %v6475 = vadd.f32 %v6272, %v6388
        %v6476 = vadd.f32 %v6273, %v6390
        %v6477 = vadd.f32 %v6274, %v6392
        %v6478 = vadd.f32 %v6275, %v6394
        %v6479 = vadd.f32 %v6276, %v6396
        %v6480 = vadd.f32 %v6277, %v6398
        %v6481 = vadd.f32 %v6278, %v6400
        %v6482 = vadd.f32 %v6279, %v6402
        %v6483 = vadd.f32 %v6280, %v6404
        %v6484 = vadd.f32 %v6281, %v6406
        %v6485 = vadd.f32 %v6282, %v6408
        %v6486 = vadd.f32 %v6283, %v6410
        %v6487 = vadd.f32 %v6284, %v6412
        %v6488 = vadd.f32 %v6285, %v6414
        %v6489 = vadd.f32 %v6286, %v6416
        %v6490 = vadd.f32 %v6287, %v6418
        %v6491 = vadd.f32 %v6288, %v6420
        %v6492 = vadd.f32 %v6289, %v6422
        %v6493 = vadd.f32 %v6290, %v6424
        %v6494 = vadd.f32 %v6291, %v6426
        %v6495 = vadd.f32 %v6292, %v6428
        %v6496 = vadd.f32 %v6293, %v6430
        %v6497 = vadd.f32 %v6294, %v6432
        %v6498 = vadd.f32 %v6295, %v6431
        %v6499 = vlaneseq
        %v6500 = vshrl.u32 %v6499, 7
        %v6501 = vsub.s32 7, %v6500
        %v6502 = vrot.slane %v2162, %v6501
        %v6503 = vmul.f32 %v2200, %v6502
        %v6504 = vmul.f32 %v2201, %v6502
        %v6505 = vmul.f32 %v2202, %v6502
        %v6506 = vmul.f32 %v2203, %v6502
        %v6507 = vmul.f32 %v2204, %v6502
        %v6508 = vmul.f32 %v2205, %v6502
        %v6509 = vmul.f32 %v2206, %v6502
        %v6510 = vmul.f32 %v2207, %v6502
        %v6511 = vmul.f32 %v2208, %v6502
        %v6512 = vmul.f32 %v2209, %v6502
        %v6513 = vmul.f32 %v2210, %v6502
        %v6514 = vmul.f32 %v2211, %v6502
        %v6515 = vmul.f32 %v2212, %v6502
        %v6516 = vmul.f32 %v2213, %v6502
        %v6517 = vmul.f32 %v2214, %v6502
        %v6518 = vmul.f32 %v2215, %v6502
        %v6519 = vmul.f32 %v2216, %v6502
        %v6520 = vmul.f32 %v2217, %v6502
        %v6521 = vmul.f32 %v2218, %v6502
        %v6522 = vmul.f32 %v2219, %v6502
        %v6523 = vmul.f32 %v2220, %v6502
        %v6524 = vmul.f32 %v2221, %v6502
        %v6525 = vmul.f32 %v2222, %v6502
        %v6526 = vmul.f32 %v2223, %v6502
        %v6527 = vmul.f32 %v2224, %v6502
        %v6528 = vmul.f32 %v2225, %v6502
        %v6529 = vmul.f32 %v2226, %v6502
        %v6530 = vmul.f32 %v2227, %v6502
        %v6531 = vmul.f32 %v2228, %v6502
        %v6532 = vmul.f32 %v3321, %v6502
        %v6533 = vmul.f32 %v4810, %v6502
        %v6534 = vmul.f32 %v6297, %v6502
        %v6567 = vrot.slane %v6503, 7
        %v6568 = vrot.slane %v6504, 7
        %v6569 = vsel %vm3592, %v6567, %v6568
        %v6570 = vrot.slane %v6505, 7
        %v6571 = vsel %vm3592, %v6568, %v6570
        %v6572 = vrot.slane %v6506, 7
        %v6573 = vsel %vm3592, %v6570, %v6572
        %v6574 = vrot.slane %v6507, 7
        %v6575 = vsel %vm3592, %v6572, %v6574
        %v6576 = vrot.slane %v6508, 7
        %v6577 = vsel %vm3592, %v6574, %v6576
        %v6578 = vrot.slane %v6509, 7
        %v6579 = vsel %vm3592, %v6576, %v6578
        %v6580 = vrot.slane %v6510, 7
        %v6581 = vsel %vm3592, %v6578, %v6580
        %v6582 = vrot.slane %v6511, 7
        %v6583 = vsel %vm3592, %v6580, %v6582
        %v6584 = vrot.slane %v6512, 7
        %v6585 = vsel %vm3592, %v6582, %v6584
        %v6586 = vrot.slane %v6513, 7
        %v6587 = vsel %vm3592, %v6584, %v6586
        %v6588 = vrot.slane %v6514, 7
        %v6589 = vsel %vm3592, %v6586, %v6588
        %v6590 = vrot.slane %v6515, 7
        %v6591 = vsel %vm3592, %v6588, %v6590
        %v6592 = vrot.slane %v6516, 7
        %v6593 = vsel %vm3592, %v6590, %v6592
        %v6594 = vrot.slane %v6517, 7
        %v6595 = vsel %vm3592, %v6592, %v6594
        %v6596 = vrot.slane %v6518, 7
        %v6597 = vsel %vm3592, %v6594, %v6596
        %v6598 = vrot.slane %v6519, 7
        %v6599 = vsel %vm3592, %v6596, %v6598
        %v6600 = vrot.slane %v6520, 7
        %v6601 = vsel %vm3592, %v6598, %v6600
        %v6602 = vrot.slane %v6521, 7
        %v6603 = vsel %vm3592, %v6600, %v6602
        %v6604 = vrot.slane %v6522, 7
        %v6605 = vsel %vm3592, %v6602, %v6604
        %v6606 = vrot.slane %v6523, 7
        %v6607 = vsel %vm3592, %v6604, %v6606
        %v6608 = vrot.slane %v6524, 7
        %v6609 = vsel %vm3592, %v6606, %v6608
        %v6610 = vrot.slane %v6525, 7
        %v6611 = vsel %vm3592, %v6608, %v6610
        %v6612 = vrot.slane %v6526, 7
        %v6613 = vsel %vm3592, %v6610, %v6612
        %v6614 = vrot.slane %v6527, 7
        %v6615 = vsel %vm3592, %v6612, %v6614
        %v6616 = vrot.slane %v6528, 7
        %v6617 = vsel %vm3592, %v6614, %v6616
        %v6618 = vrot.slane %v6529, 7
        %v6619 = vsel %vm3592, %v6616, %v6618
        %v6620 = vrot.slane %v6530, 7
        %v6621 = vsel %vm3592, %v6618, %v6620
        %v6622 = vrot.slane %v6531, 7
        %v6623 = vsel %vm3592, %v6620, %v6622
        %v6624 = vrot.slane %v6532, 7
        %v6625 = vsel %vm3592, %v6622, %v6624
        %v6626 = vrot.slane %v6533, 7
        %v6627 = vsel %vm3592, %v6624, %v6626
        %v6628 = vrot.slane %v6534, 7
        %v6629 = vsel %vm3592, %v6626, %v6628
        %v6663 = vadd.f32 %v6466, %v6567
        %v6664 = vadd.f32 %v6467, %v6569
        %v6665 = vadd.f32 %v6468, %v6571
        %v6666 = vadd.f32 %v6469, %v6573
        %v6667 = vadd.f32 %v6470, %v6575
        %v6668 = vadd.f32 %v6471, %v6577
        %v6669 = vadd.f32 %v6472, %v6579
        %v6670 = vadd.f32 %v6473, %v6581
        %v6671 = vadd.f32 %v6474, %v6583
        %v6672 = vadd.f32 %v6475, %v6585
        %v6673 = vadd.f32 %v6476, %v6587
        %v6674 = vadd.f32 %v6477, %v6589
        %v6675 = vadd.f32 %v6478, %v6591
        %v6676 = vadd.f32 %v6479, %v6593
        %v6677 = vadd.f32 %v6480, %v6595
        %v6678 = vadd.f32 %v6481, %v6597
        %v6679 = vadd.f32 %v6482, %v6599
        %v6680 = vadd.f32 %v6483, %v6601
        %v6681 = vadd.f32 %v6484, %v6603
        %v6682 = vadd.f32 %v6485, %v6605
        %v6683 = vadd.f32 %v6486, %v6607
        %v6684 = vadd.f32 %v6487, %v6609
        %v6685 = vadd.f32 %v6488, %v6611
        %v6686 = vadd.f32 %v6489, %v6613
        %v6687 = vadd.f32 %v6490, %v6615
        %v6688 = vadd.f32 %v6491, %v6617
        %v6689 = vadd.f32 %v6492, %v6619
        %v6690 = vadd.f32 %v6493, %v6621
        %v6691 = vadd.f32 %v6494, %v6623
        %v6692 = vadd.f32 %v6495, %v6625
        %v6693 = vadd.f32 %v6496, %v6627
        %v6694 = vadd.f32 %v6497, %v6629
        %v6695 = vadd.f32 %v6498, %v6628
        %v6696 = vld [vmem:[#allocation4 + $0xc] sm:$0xf]
        %v6697 = vld [vmem:[#allocation4 + $0x10] sm:$0xf]
        %v6698 = vld [vmem:[#allocation4 + $0x14] sm:$0xf]
        %v6699 = vld [vmem:[#allocation4 + $0x18] sm:$0xf]
        %v6700 = vld [vmem:[#allocation4 + $0x1c] sm:$0xf]
        %v6701 = vld [vmem:[#allocation4 + $0x20] sm:$0xf]
        %v6702 = vld [vmem:[#allocation4 + $0x24] sm:$0xf]
        %v6703 = vld [vmem:[#allocation4 + $0x28] sm:$0xf]
        %v6704 = vld [vmem:[#allocation4 + $0x2c] sm:$0xf]
        %v6705 = vld [vmem:[#allocation4 + $0x30] sm:$0xf]
        %v6706 = vld [vmem:[#allocation4 + $0x34] sm:$0xf]
        %v6707 = vld [vmem:[#allocation4 + $0x38] sm:$0xf]
        %v6708 = vld [vmem:[#allocation4 + $0x3c] sm:$0xf]
        %v6709 = vld [vmem:[#allocation4 + $0x40] sm:$0xf]
        %v6710 = vld [vmem:[#allocation4 + $0x44] sm:$0xf]
        %v6711 = vld [vmem:[#allocation4 + $0x48] sm:$0xf]
        %v6712 = vld [vmem:[#allocation4 + $0x4c] sm:$0xf]
        %v6713 = vld [vmem:[#allocation4 + $0x50] sm:$0xf]
        %v6714 = vld [vmem:[#allocation4 + $0x54] sm:$0xf]
        %v6715 = vld [vmem:[#allocation4 + $0x58] sm:$0xf]
        %v6716 = vld [vmem:[#allocation4 + $0x5c] sm:$0xf]
        %v6717 = vld [vmem:[#allocation4 + $0x60] sm:$0xf]
        %v6718 = vld [vmem:[#allocation4 + $0x64] sm:$0xf]
        %v6719 = vld [vmem:[#allocation4 + $0x68] sm:$0xf]
        %v6720 = vld [vmem:[#allocation4 + $0x6c] sm:$0xf]
        %v6721 = vld [vmem:[#allocation4 + $0x70] sm:$0xf]
        %v6722 = vld [vmem:[#allocation4 + $0x74] sm:$0xf]
        %v6723 = vld [vmem:[#allocation4 + $0x78] sm:$0xf]
        %v6724 = vld [vmem:[#allocation4 + $0x7c] sm:$0xf]
        %v6725 = vld [vmem:[#allocation4 + $0x80] sm:$0xf]
        %v6726 = vld [vmem:[#allocation4 + $0x84] sm:$0xf]
        %v6727 = vld [vmem:[#allocation4 + $0x88] sm:$0xf]
        %v6728 = vld [vmem:[#allocation4 + $0x8c] sm:$0x1]
        %v6729 = vunpack.c.l.bf16 %v6696
        %v6730 = vunpack.c.l.bf16 %v6697
        %v6731 = vunpack.c.l.bf16 %v6698
        %v6732 = vunpack.c.l.bf16 %v6699
        %v6733 = vunpack.c.l.bf16 %v6700
        %v6734 = vunpack.c.l.bf16 %v6701
        %v6735 = vunpack.c.l.bf16 %v6702
        %v6736 = vunpack.c.l.bf16 %v6703
        %v6737 = vunpack.c.l.bf16 %v6704
        %v6738 = vunpack.c.l.bf16 %v6705
        %v6739 = vunpack.c.l.bf16 %v6706
        %v6740 = vunpack.c.l.bf16 %v6707
        %v6741 = vunpack.c.l.bf16 %v6708
        %v6742 = vunpack.c.l.bf16 %v6709
        %v6743 = vunpack.c.l.bf16 %v6710
        %v6744 = vunpack.c.l.bf16 %v6711
        %v6745 = vunpack.c.l.bf16 %v6712
        %v6746 = vunpack.c.l.bf16 %v6713
        %v6747 = vunpack.c.l.bf16 %v6714
        %v6748 = vunpack.c.l.bf16 %v6715
        %v6749 = vunpack.c.l.bf16 %v6716
        %v6750 = vunpack.c.l.bf16 %v6717
        %v6751 = vunpack.c.l.bf16 %v6718
        %v6752 = vunpack.c.l.bf16 %v6719
        %v6753 = vunpack.c.l.bf16 %v6720
        %v6754 = vunpack.c.l.bf16 %v6721
        %v6755 = vunpack.c.l.bf16 %v6722
        %v6756 = vunpack.c.l.bf16 %v6723
        %v6757 = vunpack.c.l.bf16 %v6724
        %v6758 = vunpack.c.l.bf16 %v6725
        %v6759 = vunpack.c.l.bf16 %v6726
        %v6760 = vunpack.c.l.bf16 %v6727
        %v6761 = vunpack.c.l.bf16 %v6728
        %v6762 = vlaneseq
        %v6763 = vshrl.u32 %v6762, 7
        %v6764 = vsub.s32 0, %v6763
        %v6765 = vrot.slane %v2163, %v6764
        %v6766 = vmul.f32 %v6729, %v6765
        %v6767 = vmul.f32 %v6730, %v6765
        %v6768 = vmul.f32 %v6731, %v6765
        %v6769 = vmul.f32 %v6732, %v6765
        %v6770 = vmul.f32 %v6733, %v6765
        %v6771 = vmul.f32 %v6734, %v6765
        %v6772 = vmul.f32 %v6735, %v6765
        %v6773 = vmul.f32 %v6736, %v6765
        %v6774 = vmul.f32 %v6737, %v6765
        %v6775 = vmul.f32 %v6738, %v6765
        %v6776 = vmul.f32 %v6739, %v6765
        %v6777 = vmul.f32 %v6740, %v6765
        %v6778 = vmul.f32 %v6741, %v6765
        %v6779 = vmul.f32 %v6742, %v6765
        %v6780 = vmul.f32 %v6743, %v6765
        %v6781 = vmul.f32 %v6744, %v6765
        %v6782 = vmul.f32 %v6745, %v6765
        %v6783 = vmul.f32 %v6746, %v6765
        %v6784 = vmul.f32 %v6747, %v6765
        %v6785 = vmul.f32 %v6748, %v6765
        %v6786 = vmul.f32 %v6749, %v6765
        %v6787 = vmul.f32 %v6750, %v6765
        %v6788 = vmul.f32 %v6751, %v6765
        %v6789 = vmul.f32 %v6752, %v6765
        %v6790 = vmul.f32 %v6753, %v6765
        %v6791 = vmul.f32 %v6754, %v6765
        %v6792 = vmul.f32 %v6755, %v6765
        %v6793 = vmul.f32 %v6756, %v6765
        %v6794 = vmul.f32 %v6757, %v6765
        %v6795 = vmul.f32 %v6758, %v6765
        %v6796 = vmul.f32 %v6759, %v6765
        %v6797 = vmul.f32 %v6760, %v6765
        %v6798 = vmul.f32 %v6761, %v6765
        %v6799 = vadd.f32 %v6663, %v6766
        %v6800 = vadd.f32 %v6664, %v6767
        %v6801 = vadd.f32 %v6665, %v6768
        %v6802 = vadd.f32 %v6666, %v6769
        %v6803 = vadd.f32 %v6667, %v6770
        %v6804 = vadd.f32 %v6668, %v6771
        %v6805 = vadd.f32 %v6669, %v6772
        %v6806 = vadd.f32 %v6670, %v6773
        %v6807 = vadd.f32 %v6671, %v6774
        %v6808 = vadd.f32 %v6672, %v6775
        %v6809 = vadd.f32 %v6673, %v6776
        %v6810 = vadd.f32 %v6674, %v6777
        %v6811 = vadd.f32 %v6675, %v6778
        %v6812 = vadd.f32 %v6676, %v6779
        %v6813 = vadd.f32 %v6677, %v6780
        %v6814 = vadd.f32 %v6678, %v6781
        %v6815 = vadd.f32 %v6679, %v6782
        %v6816 = vadd.f32 %v6680, %v6783
        %v6817 = vadd.f32 %v6681, %v6784
        %v6818 = vadd.f32 %v6682, %v6785
        %v6819 = vadd.f32 %v6683, %v6786
        %v6820 = vadd.f32 %v6684, %v6787
        %v6821 = vadd.f32 %v6685, %v6788
        %v6822 = vadd.f32 %v6686, %v6789
        %v6823 = vadd.f32 %v6687, %v6790
        %v6824 = vadd.f32 %v6688, %v6791
        %v6825 = vadd.f32 %v6689, %v6792
        %v6826 = vadd.f32 %v6690, %v6793
        %v6827 = vadd.f32 %v6691, %v6794
        %v6828 = vadd.f32 %v6692, %v6795
        %v6829 = vadd.f32 %v6693, %v6796
        %v6830 = vadd.f32 %v6694, %v6797
        %v6831 = vadd.f32 %v6695, %v6798
        %v6832 = vld [vmem:[#allocation4 + $0xc] sm:$0xe]
        %v6833 = vunpack.c.l.bf16 %v6832
        %v6834 = vlaneseq
        %v6835 = vshrl.u32 %v6834, 7
        %v6836 = vsub.s32 1, %v6835
        %v6837 = vrot.slane %v2163, %v6836
        %v6838 = vmul.f32 %v6833, %v6837
        %v6839 = vmul.f32 %v6730, %v6837
        %v6840 = vmul.f32 %v6731, %v6837
        %v6841 = vmul.f32 %v6732, %v6837
        %v6842 = vmul.f32 %v6733, %v6837
        %v6843 = vmul.f32 %v6734, %v6837
        %v6844 = vmul.f32 %v6735, %v6837
        %v6845 = vmul.f32 %v6736, %v6837
        %v6846 = vmul.f32 %v6737, %v6837
        %v6847 = vmul.f32 %v6738, %v6837
        %v6848 = vmul.f32 %v6739, %v6837
        %v6849 = vmul.f32 %v6740, %v6837
        %v6850 = vmul.f32 %v6741, %v6837
        %v6851 = vmul.f32 %v6742, %v6837
        %v6852 = vmul.f32 %v6743, %v6837
        %v6853 = vmul.f32 %v6744, %v6837
        %v6854 = vmul.f32 %v6745, %v6837
        %v6855 = vmul.f32 %v6746, %v6837
        %v6856 = vmul.f32 %v6747, %v6837
        %v6857 = vmul.f32 %v6748, %v6837
        %v6858 = vmul.f32 %v6749, %v6837
        %v6859 = vmul.f32 %v6750, %v6837
        %v6860 = vmul.f32 %v6751, %v6837
        %v6861 = vmul.f32 %v6752, %v6837
        %v6862 = vmul.f32 %v6753, %v6837
        %v6863 = vmul.f32 %v6754, %v6837
        %v6864 = vmul.f32 %v6755, %v6837
        %v6865 = vmul.f32 %v6756, %v6837
        %v6866 = vmul.f32 %v6757, %v6837
        %v6867 = vmul.f32 %v6758, %v6837
        %v6868 = vmul.f32 %v6759, %v6837
        %v6869 = vmul.f32 %v6760, %v6837
        %v6870 = vmul.f32 %v6761, %v6837
        %v6904 = vrot.slane %v6838, 1
        %v6905 = vrot.slane %v6839, 1
        %v6906 = vsel %vm2372, %v6904, %v6905
        %v6907 = vrot.slane %v6840, 1
        %v6908 = vsel %vm2372, %v6905, %v6907
        %v6909 = vrot.slane %v6841, 1
        %v6910 = vsel %vm2372, %v6907, %v6909
        %v6911 = vrot.slane %v6842, 1
        %v6912 = vsel %vm2372, %v6909, %v6911
        %v6913 = vrot.slane %v6843, 1
        %v6914 = vsel %vm2372, %v6911, %v6913
        %v6915 = vrot.slane %v6844, 1
        %v6916 = vsel %vm2372, %v6913, %v6915
        %v6917 = vrot.slane %v6845, 1
        %v6918 = vsel %vm2372, %v6915, %v6917
        %v6919 = vrot.slane %v6846, 1
        %v6920 = vsel %vm2372, %v6917, %v6919
        %v6921 = vrot.slane %v6847, 1
        %v6922 = vsel %vm2372, %v6919, %v6921
        %v6923 = vrot.slane %v6848, 1
        %v6924 = vsel %vm2372, %v6921, %v6923
        %v6925 = vrot.slane %v6849, 1
        %v6926 = vsel %vm2372, %v6923, %v6925
        %v6927 = vrot.slane %v6850, 1
        %v6928 = vsel %vm2372, %v6925, %v6927
        %v6929 = vrot.slane %v6851, 1
        %v6930 = vsel %vm2372, %v6927, %v6929
        %v6931 = vrot.slane %v6852, 1
        %v6932 = vsel %vm2372, %v6929, %v6931
        %v6933 = vrot.slane %v6853, 1
        %v6934 = vsel %vm2372, %v6931, %v6933
        %v6935 = vrot.slane %v6854, 1
        %v6936 = vsel %vm2372, %v6933, %v6935
        %v6937 = vrot.slane %v6855, 1
        %v6938 = vsel %vm2372, %v6935, %v6937
        %v6939 = vrot.slane %v6856, 1
        %v6940 = vsel %vm2372, %v6937, %v6939
        %v6941 = vrot.slane %v6857, 1
        %v6942 = vsel %vm2372, %v6939, %v6941
        %v6943 = vrot.slane %v6858, 1
        %v6944 = vsel %vm2372, %v6941, %v6943
        %v6945 = vrot.slane %v6859, 1
        %v6946 = vsel %vm2372, %v6943, %v6945
        %v6947 = vrot.slane %v6860, 1
        %v6948 = vsel %vm2372, %v6945, %v6947
        %v6949 = vrot.slane %v6861, 1
        %v6950 = vsel %vm2372, %v6947, %v6949
        %v6951 = vrot.slane %v6862, 1
        %v6952 = vsel %vm2372, %v6949, %v6951
        %v6953 = vrot.slane %v6863, 1
        %v6954 = vsel %vm2372, %v6951, %v6953
        %v6955 = vrot.slane %v6864, 1
        %v6956 = vsel %vm2372, %v6953, %v6955
        %v6957 = vrot.slane %v6865, 1
        %v6958 = vsel %vm2372, %v6955, %v6957
        %v6959 = vrot.slane %v6866, 1
        %v6960 = vsel %vm2372, %v6957, %v6959
        %v6961 = vrot.slane %v6867, 1
        %v6962 = vsel %vm2372, %v6959, %v6961
        %v6963 = vrot.slane %v6868, 1
        %v6964 = vsel %vm2372, %v6961, %v6963
        %v6965 = vrot.slane %v6869, 1
        %v6966 = vsel %vm2372, %v6963, %v6965
        %v6967 = vrot.slane %v6870, 1
        %v6968 = vsel %vm2372, %v6965, %v6967
        %v7002 = vadd.f32 %v6799, %v6906
        %v7003 = vadd.f32 %v6800, %v6908
        %v7004 = vadd.f32 %v6801, %v6910
        %v7005 = vadd.f32 %v6802, %v6912
        %v7006 = vadd.f32 %v6803, %v6914
        %v7007 = vadd.f32 %v6804, %v6916
        %v7008 = vadd.f32 %v6805, %v6918
        %v7009 = vadd.f32 %v6806, %v6920
        %v7010 = vadd.f32 %v6807, %v6922
        %v7011 = vadd.f32 %v6808, %v6924
        %v7012 = vadd.f32 %v6809, %v6926
        %v7013 = vadd.f32 %v6810, %v6928
        %v7014 = vadd.f32 %v6811, %v6930
        %v7015 = vadd.f32 %v6812, %v6932
        %v7016 = vadd.f32 %v6813, %v6934
        %v7017 = vadd.f32 %v6814, %v6936
        %v7018 = vadd.f32 %v6815, %v6938
        %v7019 = vadd.f32 %v6816, %v6940
        %v7020 = vadd.f32 %v6817, %v6942
        %v7021 = vadd.f32 %v6818, %v6944
        %v7022 = vadd.f32 %v6819, %v6946
        %v7023 = vadd.f32 %v6820, %v6948
        %v7024 = vadd.f32 %v6821, %v6950
        %v7025 = vadd.f32 %v6822, %v6952
        %v7026 = vadd.f32 %v6823, %v6954
        %v7027 = vadd.f32 %v6824, %v6956
        %v7028 = vadd.f32 %v6825, %v6958
        %v7029 = vadd.f32 %v6826, %v6960
        %v7030 = vadd.f32 %v6827, %v6962
        %v7031 = vadd.f32 %v6828, %v6964
        %v7032 = vadd.f32 %v6829, %v6966
        %v7033 = vadd.f32 %v6830, %v6968
        %v7034 = vadd.f32 %v6831, %v6967
        %v7035 = vld [vmem:[#allocation4 + $0x8c] sm:$0x3]
        %v7036 = vunpack.c.l.bf16 %v7035
        %v7037 = vlaneseq
        %v7038 = vshrl.u32 %v7037, 7
        %v7039 = vsub.s32 2, %v7038
        %v7040 = vrot.slane %v2163, %v7039
        %v7041 = vmul.f32 %v6833, %v7040
        %v7042 = vmul.f32 %v6730, %v7040
        %v7043 = vmul.f32 %v6731, %v7040
        %v7044 = vmul.f32 %v6732, %v7040
        %v7045 = vmul.f32 %v6733, %v7040
        %v7046 = vmul.f32 %v6734, %v7040
        %v7047 = vmul.f32 %v6735, %v7040
        %v7048 = vmul.f32 %v6736, %v7040
        %v7049 = vmul.f32 %v6737, %v7040
        %v7050 = vmul.f32 %v6738, %v7040
        %v7051 = vmul.f32 %v6739, %v7040
        %v7052 = vmul.f32 %v6740, %v7040
        %v7053 = vmul.f32 %v6741, %v7040
        %v7054 = vmul.f32 %v6742, %v7040
        %v7055 = vmul.f32 %v6743, %v7040
        %v7056 = vmul.f32 %v6744, %v7040
        %v7057 = vmul.f32 %v6745, %v7040
        %v7058 = vmul.f32 %v6746, %v7040
        %v7059 = vmul.f32 %v6747, %v7040
        %v7060 = vmul.f32 %v6748, %v7040
        %v7061 = vmul.f32 %v6749, %v7040
        %v7062 = vmul.f32 %v6750, %v7040
        %v7063 = vmul.f32 %v6751, %v7040
        %v7064 = vmul.f32 %v6752, %v7040
        %v7065 = vmul.f32 %v6753, %v7040
        %v7066 = vmul.f32 %v6754, %v7040
        %v7067 = vmul.f32 %v6755, %v7040
        %v7068 = vmul.f32 %v6756, %v7040
        %v7069 = vmul.f32 %v6757, %v7040
        %v7070 = vmul.f32 %v6758, %v7040
        %v7071 = vmul.f32 %v6759, %v7040
        %v7072 = vmul.f32 %v6760, %v7040
        %v7073 = vmul.f32 %v7036, %v7040
        %v7107 = vrot.slane %v7041, 2
        %v7108 = vrot.slane %v7042, 2
        %v7109 = vsel %vm2576, %v7107, %v7108
        %v7110 = vrot.slane %v7043, 2
        %v7111 = vsel %vm2576, %v7108, %v7110
        %v7112 = vrot.slane %v7044, 2
        %v7113 = vsel %vm2576, %v7110, %v7112
        %v7114 = vrot.slane %v7045, 2
        %v7115 = vsel %vm2576, %v7112, %v7114
        %v7116 = vrot.slane %v7046, 2
        %v7117 = vsel %vm2576, %v7114, %v7116
        %v7118 = vrot.slane %v7047, 2
        %v7119 = vsel %vm2576, %v7116, %v7118
        %v7120 = vrot.slane %v7048, 2
        %v7121 = vsel %vm2576, %v7118, %v7120
        %v7122 = vrot.slane %v7049, 2
        %v7123 = vsel %vm2576, %v7120, %v7122
        %v7124 = vrot.slane %v7050, 2
        %v7125 = vsel %vm2576, %v7122, %v7124
        %v7126 = vrot.slane %v7051, 2
        %v7127 = vsel %vm2576, %v7124, %v7126
        %v7128 = vrot.slane %v7052, 2
        %v7129 = vsel %vm2576, %v7126, %v7128
        %v7130 = vrot.slane %v7053, 2
        %v7131 = vsel %vm2576, %v7128, %v7130
        %v7132 = vrot.slane %v7054, 2
        %v7133 = vsel %vm2576, %v7130, %v7132
        %v7134 = vrot.slane %v7055, 2
        %v7135 = vsel %vm2576, %v7132, %v7134
        %v7136 = vrot.slane %v7056, 2
        %v7137 = vsel %vm2576, %v7134, %v7136
        %v7138 = vrot.slane %v7057, 2
        %v7139 = vsel %vm2576, %v7136, %v7138
        %v7140 = vrot.slane %v7058, 2
        %v7141 = vsel %vm2576, %v7138, %v7140
        %v7142 = vrot.slane %v7059, 2
        %v7143 = vsel %vm2576, %v7140, %v7142
        %v7144 = vrot.slane %v7060, 2
        %v7145 = vsel %vm2576, %v7142, %v7144
        %v7146 = vrot.slane %v7061, 2
        %v7147 = vsel %vm2576, %v7144, %v7146
        %v7148 = vrot.slane %v7062, 2
        %v7149 = vsel %vm2576, %v7146, %v7148
        %v7150 = vrot.slane %v7063, 2
        %v7151 = vsel %vm2576, %v7148, %v7150
        %v7152 = vrot.slane %v7064, 2
        %v7153 = vsel %vm2576, %v7150, %v7152
        %v7154 = vrot.slane %v7065, 2
        %v7155 = vsel %vm2576, %v7152, %v7154
        %v7156 = vrot.slane %v7066, 2
        %v7157 = vsel %vm2576, %v7154, %v7156
        %v7158 = vrot.slane %v7067, 2
        %v7159 = vsel %vm2576, %v7156, %v7158
        %v7160 = vrot.slane %v7068, 2
        %v7161 = vsel %vm2576, %v7158, %v7160
        %v7162 = vrot.slane %v7069, 2
        %v7163 = vsel %vm2576, %v7160, %v7162
        %v7164 = vrot.slane %v7070, 2
        %v7165 = vsel %vm2576, %v7162, %v7164
        %v7166 = vrot.slane %v7071, 2
        %v7167 = vsel %vm2576, %v7164, %v7166
        %v7168 = vrot.slane %v7072, 2
        %v7169 = vsel %vm2576, %v7166, %v7168
        %v7170 = vrot.slane %v7073, 2
        %v7171 = vsel %vm2576, %v7168, %v7170
        %v7205 = vadd.f32 %v7002, %v7109
        %v7206 = vadd.f32 %v7003, %v7111
        %v7207 = vadd.f32 %v7004, %v7113
        %v7208 = vadd.f32 %v7005, %v7115
        %v7209 = vadd.f32 %v7006, %v7117
        %v7210 = vadd.f32 %v7007, %v7119
        %v7211 = vadd.f32 %v7008, %v7121
        %v7212 = vadd.f32 %v7009, %v7123
        %v7213 = vadd.f32 %v7010, %v7125
        %v7214 = vadd.f32 %v7011, %v7127
        %v7215 = vadd.f32 %v7012, %v7129
        %v7216 = vadd.f32 %v7013, %v7131
        %v7217 = vadd.f32 %v7014, %v7133
        %v7218 = vadd.f32 %v7015, %v7135
        %v7219 = vadd.f32 %v7016, %v7137
        %v7220 = vadd.f32 %v7017, %v7139
        %v7221 = vadd.f32 %v7018, %v7141
        %v7222 = vadd.f32 %v7019, %v7143
        %v7223 = vadd.f32 %v7020, %v7145
        %v7224 = vadd.f32 %v7021, %v7147
        %v7225 = vadd.f32 %v7022, %v7149
        %v7226 = vadd.f32 %v7023, %v7151
        %v7227 = vadd.f32 %v7024, %v7153
        %v7228 = vadd.f32 %v7025, %v7155
        %v7229 = vadd.f32 %v7026, %v7157
        %v7230 = vadd.f32 %v7027, %v7159
        %v7231 = vadd.f32 %v7028, %v7161
        %v7232 = vadd.f32 %v7029, %v7163
        %v7233 = vadd.f32 %v7030, %v7165
        %v7234 = vadd.f32 %v7031, %v7167
        %v7235 = vadd.f32 %v7032, %v7169
        %v7236 = vadd.f32 %v7033, %v7171
        %v7237 = vadd.f32 %v7034, %v7170
        %v7238 = vld [vmem:[#allocation4 + $0xc] sm:$0xc]
        %v7239 = vunpack.c.l.bf16 %v7238
        %v7240 = vlaneseq
        %v7241 = vshrl.u32 %v7240, 7
        %v7242 = vsub.s32 3, %v7241
        %v7243 = vrot.slane %v2163, %v7242
        %v7244 = vmul.f32 %v7239, %v7243
        %v7245 = vmul.f32 %v6730, %v7243
        %v7246 = vmul.f32 %v6731, %v7243
        %v7247 = vmul.f32 %v6732, %v7243
        %v7248 = vmul.f32 %v6733, %v7243
        %v7249 = vmul.f32 %v6734, %v7243
        %v7250 = vmul.f32 %v6735, %v7243
        %v7251 = vmul.f32 %v6736, %v7243
        %v7252 = vmul.f32 %v6737, %v7243
        %v7253 = vmul.f32 %v6738, %v7243
        %v7254 = vmul.f32 %v6739, %v7243
        %v7255 = vmul.f32 %v6740, %v7243
        %v7256 = vmul.f32 %v6741, %v7243
        %v7257 = vmul.f32 %v6742, %v7243
        %v7258 = vmul.f32 %v6743, %v7243
        %v7259 = vmul.f32 %v6744, %v7243
        %v7260 = vmul.f32 %v6745, %v7243
        %v7261 = vmul.f32 %v6746, %v7243
        %v7262 = vmul.f32 %v6747, %v7243
        %v7263 = vmul.f32 %v6748, %v7243
        %v7264 = vmul.f32 %v6749, %v7243
        %v7265 = vmul.f32 %v6750, %v7243
        %v7266 = vmul.f32 %v6751, %v7243
        %v7267 = vmul.f32 %v6752, %v7243
        %v7268 = vmul.f32 %v6753, %v7243
        %v7269 = vmul.f32 %v6754, %v7243
        %v7270 = vmul.f32 %v6755, %v7243
        %v7271 = vmul.f32 %v6756, %v7243
        %v7272 = vmul.f32 %v6757, %v7243
        %v7273 = vmul.f32 %v6758, %v7243
        %v7274 = vmul.f32 %v6759, %v7243
        %v7275 = vmul.f32 %v6760, %v7243
        %v7276 = vmul.f32 %v7036, %v7243
        %v7310 = vrot.slane %v7244, 3
        %v7311 = vrot.slane %v7245, 3
        %v7312 = vsel %vm2780, %v7310, %v7311
        %v7313 = vrot.slane %v7246, 3
        %v7314 = vsel %vm2780, %v7311, %v7313
        %v7315 = vrot.slane %v7247, 3
        %v7316 = vsel %vm2780, %v7313, %v7315
        %v7317 = vrot.slane %v7248, 3
        %v7318 = vsel %vm2780, %v7315, %v7317
        %v7319 = vrot.slane %v7249, 3
        %v7320 = vsel %vm2780, %v7317, %v7319
        %v7321 = vrot.slane %v7250, 3
        %v7322 = vsel %vm2780, %v7319, %v7321
        %v7323 = vrot.slane %v7251, 3
        %v7324 = vsel %vm2780, %v7321, %v7323
        %v7325 = vrot.slane %v7252, 3
        %v7326 = vsel %vm2780, %v7323, %v7325
        %v7327 = vrot.slane %v7253, 3
        %v7328 = vsel %vm2780, %v7325, %v7327
        %v7329 = vrot.slane %v7254, 3
        %v7330 = vsel %vm2780, %v7327, %v7329
        %v7331 = vrot.slane %v7255, 3
        %v7332 = vsel %vm2780, %v7329, %v7331
        %v7333 = vrot.slane %v7256, 3
        %v7334 = vsel %vm2780, %v7331, %v7333
        %v7335 = vrot.slane %v7257, 3
        %v7336 = vsel %vm2780, %v7333, %v7335
        %v7337 = vrot.slane %v7258, 3
        %v7338 = vsel %vm2780, %v7335, %v7337
        %v7339 = vrot.slane %v7259, 3
        %v7340 = vsel %vm2780, %v7337, %v7339
        %v7341 = vrot.slane %v7260, 3
        %v7342 = vsel %vm2780, %v7339, %v7341
        %v7343 = vrot.slane %v7261, 3
        %v7344 = vsel %vm2780, %v7341, %v7343
        %v7345 = vrot.slane %v7262, 3
        %v7346 = vsel %vm2780, %v7343, %v7345
        %v7347 = vrot.slane %v7263, 3
        %v7348 = vsel %vm2780, %v7345, %v7347
        %v7349 = vrot.slane %v7264, 3
        %v7350 = vsel %vm2780, %v7347, %v7349
        %v7351 = vrot.slane %v7265, 3
        %v7352 = vsel %vm2780, %v7349, %v7351
        %v7353 = vrot.slane %v7266, 3
        %v7354 = vsel %vm2780, %v7351, %v7353
        %v7355 = vrot.slane %v7267, 3
        %v7356 = vsel %vm2780, %v7353, %v7355
        %v7357 = vrot.slane %v7268, 3
        %v7358 = vsel %vm2780, %v7355, %v7357
        %v7359 = vrot.slane %v7269, 3
        %v7360 = vsel %vm2780, %v7357, %v7359
        %v7361 = vrot.slane %v7270, 3
        %v7362 = vsel %vm2780, %v7359, %v7361
        %v7363 = vrot.slane %v7271, 3
        %v7364 = vsel %vm2780, %v7361, %v7363
        %v7365 = vrot.slane %v7272, 3
        %v7366 = vsel %vm2780, %v7363, %v7365
        %v7367 = vrot.slane %v7273, 3
        %v7368 = vsel %vm2780, %v7365, %v7367
        %v7369 = vrot.slane %v7274, 3
        %v7370 = vsel %vm2780, %v7367, %v7369
        %v7371 = vrot.slane %v7275, 3
        %v7372 = vsel %vm2780, %v7369, %v7371
        %v7373 = vrot.slane %v7276, 3
        %v7374 = vsel %vm2780, %v7371, %v7373
        %v7408 = vadd.f32 %v7205, %v7312
        %v7409 = vadd.f32 %v7206, %v7314
        %v7410 = vadd.f32 %v7207, %v7316
        %v7411 = vadd.f32 %v7208, %v7318
        %v7412 = vadd.f32 %v7209, %v7320
        %v7413 = vadd.f32 %v7210, %v7322
        %v7414 = vadd.f32 %v7211, %v7324
        %v7415 = vadd.f32 %v7212, %v7326
        %v7416 = vadd.f32 %v7213, %v7328
        %v7417 = vadd.f32 %v7214, %v7330
        %v7418 = vadd.f32 %v7215, %v7332
        %v7419 = vadd.f32 %v7216, %v7334
        %v7420 = vadd.f32 %v7217, %v7336
        %v7421 = vadd.f32 %v7218, %v7338
        %v7422 = vadd.f32 %v7219, %v7340
        %v7423 = vadd.f32 %v7220, %v7342
        %v7424 = vadd.f32 %v7221, %v7344
        %v7425 = vadd.f32 %v7222, %v7346
        %v7426 = vadd.f32 %v7223, %v7348
        %v7427 = vadd.f32 %v7224, %v7350
        %v7428 = vadd.f32 %v7225, %v7352
        %v7429 = vadd.f32 %v7226, %v7354
        %v7430 = vadd.f32 %v7227, %v7356
        %v7431 = vadd.f32 %v7228, %v7358
        %v7432 = vadd.f32 %v7229, %v7360
        %v7433 = vadd.f32 %v7230, %v7362
        %v7434 = vadd.f32 %v7231, %v7364
        %v7435 = vadd.f32 %v7232, %v7366
        %v7436 = vadd.f32 %v7233, %v7368
        %v7437 = vadd.f32 %v7234, %v7370
        %v7438 = vadd.f32 %v7235, %v7372
        %v7439 = vadd.f32 %v7236, %v7374
        %v7440 = vadd.f32 %v7237, %v7373
        %v7441 = vld [vmem:[#allocation4 + $0x8c] sm:$0x7]
        %v7442 = vunpack.c.l.bf16 %v7441
        %v7443 = vlaneseq
        %v7444 = vshrl.u32 %v7443, 7
        %v7445 = vsub.s32 4, %v7444
        %v7446 = vrot.slane %v2163, %v7445
        %v7447 = vmul.f32 %v7239, %v7446
        %v7448 = vmul.f32 %v6730, %v7446
        %v7449 = vmul.f32 %v6731, %v7446
        %v7450 = vmul.f32 %v6732, %v7446
        %v7451 = vmul.f32 %v6733, %v7446
        %v7452 = vmul.f32 %v6734, %v7446
        %v7453 = vmul.f32 %v6735, %v7446
        %v7454 = vmul.f32 %v6736, %v7446
        %v7455 = vmul.f32 %v6737, %v7446
        %v7456 = vmul.f32 %v6738, %v7446
        %v7457 = vmul.f32 %v6739, %v7446
        %v7458 = vmul.f32 %v6740, %v7446
        %v7459 = vmul.f32 %v6741, %v7446
        %v7460 = vmul.f32 %v6742, %v7446
        %v7461 = vmul.f32 %v6743, %v7446
        %v7462 = vmul.f32 %v6744, %v7446
        %v7463 = vmul.f32 %v6745, %v7446
        %v7464 = vmul.f32 %v6746, %v7446
        %v7465 = vmul.f32 %v6747, %v7446
        %v7466 = vmul.f32 %v6748, %v7446
        %v7467 = vmul.f32 %v6749, %v7446
        %v7468 = vmul.f32 %v6750, %v7446
        %v7469 = vmul.f32 %v6751, %v7446
        %v7470 = vmul.f32 %v6752, %v7446
        %v7471 = vmul.f32 %v6753, %v7446
        %v7472 = vmul.f32 %v6754, %v7446
        %v7473 = vmul.f32 %v6755, %v7446
        %v7474 = vmul.f32 %v6756, %v7446
        %v7475 = vmul.f32 %v6757, %v7446
        %v7476 = vmul.f32 %v6758, %v7446
        %v7477 = vmul.f32 %v6759, %v7446
        %v7478 = vmul.f32 %v6760, %v7446
        %v7479 = vmul.f32 %v7442, %v7446
        %v7513 = vrot.slane %v7447, 4
        %v7514 = vrot.slane %v7448, 4
        %v7515 = vsel %vm2984, %v7513, %v7514
        %v7516 = vrot.slane %v7449, 4
        %v7517 = vsel %vm2984, %v7514, %v7516
        %v7518 = vrot.slane %v7450, 4
        %v7519 = vsel %vm2984, %v7516, %v7518
        %v7520 = vrot.slane %v7451, 4
        %v7521 = vsel %vm2984, %v7518, %v7520
        %v7522 = vrot.slane %v7452, 4
        %v7523 = vsel %vm2984, %v7520, %v7522
        %v7524 = vrot.slane %v7453, 4
        %v7525 = vsel %vm2984, %v7522, %v7524
        %v7526 = vrot.slane %v7454, 4
        %v7527 = vsel %vm2984, %v7524, %v7526
        %v7528 = vrot.slane %v7455, 4
        %v7529 = vsel %vm2984, %v7526, %v7528
        %v7530 = vrot.slane %v7456, 4
        %v7531 = vsel %vm2984, %v7528, %v7530
        %v7532 = vrot.slane %v7457, 4
        %v7533 = vsel %vm2984, %v7530, %v7532
        %v7534 = vrot.slane %v7458, 4
        %v7535 = vsel %vm2984, %v7532, %v7534
        %v7536 = vrot.slane %v7459, 4
        %v7537 = vsel %vm2984, %v7534, %v7536
        %v7538 = vrot.slane %v7460, 4
        %v7539 = vsel %vm2984, %v7536, %v7538
        %v7540 = vrot.slane %v7461, 4
        %v7541 = vsel %vm2984, %v7538, %v7540
        %v7542 = vrot.slane %v7462, 4
        %v7543 = vsel %vm2984, %v7540, %v7542
        %v7544 = vrot.slane %v7463, 4
        %v7545 = vsel %vm2984, %v7542, %v7544
        %v7546 = vrot.slane %v7464, 4
        %v7547 = vsel %vm2984, %v7544, %v7546
        %v7548 = vrot.slane %v7465, 4
        %v7549 = vsel %vm2984, %v7546, %v7548
        %v7550 = vrot.slane %v7466, 4
        %v7551 = vsel %vm2984, %v7548, %v7550
        %v7552 = vrot.slane %v7467, 4
        %v7553 = vsel %vm2984, %v7550, %v7552
        %v7554 = vrot.slane %v7468, 4
        %v7555 = vsel %vm2984, %v7552, %v7554
        %v7556 = vrot.slane %v7469, 4
        %v7557 = vsel %vm2984, %v7554, %v7556
        %v7558 = vrot.slane %v7470, 4
        %v7559 = vsel %vm2984, %v7556, %v7558
        %v7560 = vrot.slane %v7471, 4
        %v7561 = vsel %vm2984, %v7558, %v7560
        %v7562 = vrot.slane %v7472, 4
        %v7563 = vsel %vm2984, %v7560, %v7562
        %v7564 = vrot.slane %v7473, 4
        %v7565 = vsel %vm2984, %v7562, %v7564
        %v7566 = vrot.slane %v7474, 4
        %v7567 = vsel %vm2984, %v7564, %v7566
        %v7568 = vrot.slane %v7475, 4
        %v7569 = vsel %vm2984, %v7566, %v7568
        %v7570 = vrot.slane %v7476, 4
        %v7571 = vsel %vm2984, %v7568, %v7570
        %v7572 = vrot.slane %v7477, 4
        %v7573 = vsel %vm2984, %v7570, %v7572
        %v7574 = vrot.slane %v7478, 4
        %v7575 = vsel %vm2984, %v7572, %v7574
        %v7576 = vrot.slane %v7479, 4
        %v7577 = vsel %vm2984, %v7574, %v7576
        %v7611 = vadd.f32 %v7408, %v7515
        %v7612 = vadd.f32 %v7409, %v7517
        %v7613 = vadd.f32 %v7410, %v7519
        %v7614 = vadd.f32 %v7411, %v7521
        %v7615 = vadd.f32 %v7412, %v7523
        %v7616 = vadd.f32 %v7413, %v7525
        %v7617 = vadd.f32 %v7414, %v7527
        %v7618 = vadd.f32 %v7415, %v7529
        %v7619 = vadd.f32 %v7416, %v7531
        %v7620 = vadd.f32 %v7417, %v7533
        %v7621 = vadd.f32 %v7418, %v7535
        %v7622 = vadd.f32 %v7419, %v7537
        %v7623 = vadd.f32 %v7420, %v7539
        %v7624 = vadd.f32 %v7421, %v7541
        %v7625 = vadd.f32 %v7422, %v7543
        %v7626 = vadd.f32 %v7423, %v7545
        %v7627 = vadd.f32 %v7424, %v7547
        %v7628 = vadd.f32 %v7425, %v7549
        %v7629 = vadd.f32 %v7426, %v7551
        %v7630 = vadd.f32 %v7427, %v7553
        %v7631 = vadd.f32 %v7428, %v7555
        %v7632 = vadd.f32 %v7429, %v7557
        %v7633 = vadd.f32 %v7430, %v7559
        %v7634 = vadd.f32 %v7431, %v7561
        %v7635 = vadd.f32 %v7432, %v7563
        %v7636 = vadd.f32 %v7433, %v7565
        %v7637 = vadd.f32 %v7434, %v7567
        %v7638 = vadd.f32 %v7435, %v7569
        %v7639 = vadd.f32 %v7436, %v7571
        %v7640 = vadd.f32 %v7437, %v7573
        %v7641 = vadd.f32 %v7438, %v7575
        %v7642 = vadd.f32 %v7439, %v7577
        %v7643 = vadd.f32 %v7440, %v7576
        %v7644 = vld [vmem:[#allocation4 + $0xc] sm:$0x8]
        %v7645 = vunpack.c.l.bf16 %v7644
        %v7646 = vlaneseq
        %v7647 = vshrl.u32 %v7646, 7
        %v7648 = vsub.s32 5, %v7647
        %v7649 = vrot.slane %v2163, %v7648
        %v7650 = vmul.f32 %v7645, %v7649
        %v7651 = vmul.f32 %v6730, %v7649
        %v7652 = vmul.f32 %v6731, %v7649
        %v7653 = vmul.f32 %v6732, %v7649
        %v7654 = vmul.f32 %v6733, %v7649
        %v7655 = vmul.f32 %v6734, %v7649
        %v7656 = vmul.f32 %v6735, %v7649
        %v7657 = vmul.f32 %v6736, %v7649
        %v7658 = vmul.f32 %v6737, %v7649
        %v7659 = vmul.f32 %v6738, %v7649
        %v7660 = vmul.f32 %v6739, %v7649
        %v7661 = vmul.f32 %v6740, %v7649
        %v7662 = vmul.f32 %v6741, %v7649
        %v7663 = vmul.f32 %v6742, %v7649
        %v7664 = vmul.f32 %v6743, %v7649
        %v7665 = vmul.f32 %v6744, %v7649
        %v7666 = vmul.f32 %v6745, %v7649
        %v7667 = vmul.f32 %v6746, %v7649
        %v7668 = vmul.f32 %v6747, %v7649
        %v7669 = vmul.f32 %v6748, %v7649
        %v7670 = vmul.f32 %v6749, %v7649
        %v7671 = vmul.f32 %v6750, %v7649
        %v7672 = vmul.f32 %v6751, %v7649
        %v7673 = vmul.f32 %v6752, %v7649
        %v7674 = vmul.f32 %v6753, %v7649
        %v7675 = vmul.f32 %v6754, %v7649
        %v7676 = vmul.f32 %v6755, %v7649
        %v7677 = vmul.f32 %v6756, %v7649
        %v7678 = vmul.f32 %v6757, %v7649
        %v7679 = vmul.f32 %v6758, %v7649
        %v7680 = vmul.f32 %v6759, %v7649
        %v7681 = vmul.f32 %v6760, %v7649
        %v7682 = vmul.f32 %v7442, %v7649
        %v7716 = vrot.slane %v7650, 5
        %v7717 = vrot.slane %v7651, 5
        %v7718 = vsel %vm3188, %v7716, %v7717
        %v7719 = vrot.slane %v7652, 5
        %v7720 = vsel %vm3188, %v7717, %v7719
        %v7721 = vrot.slane %v7653, 5
        %v7722 = vsel %vm3188, %v7719, %v7721
        %v7723 = vrot.slane %v7654, 5
        %v7724 = vsel %vm3188, %v7721, %v7723
        %v7725 = vrot.slane %v7655, 5
        %v7726 = vsel %vm3188, %v7723, %v7725
        %v7727 = vrot.slane %v7656, 5
        %v7728 = vsel %vm3188, %v7725, %v7727
        %v7729 = vrot.slane %v7657, 5
        %v7730 = vsel %vm3188, %v7727, %v7729
        %v7731 = vrot.slane %v7658, 5
        %v7732 = vsel %vm3188, %v7729, %v7731
        %v7733 = vrot.slane %v7659, 5
        %v7734 = vsel %vm3188, %v7731, %v7733
        %v7735 = vrot.slane %v7660, 5
        %v7736 = vsel %vm3188, %v7733, %v7735
        %v7737 = vrot.slane %v7661, 5
        %v7738 = vsel %vm3188, %v7735, %v7737
        %v7739 = vrot.slane %v7662, 5
        %v7740 = vsel %vm3188, %v7737, %v7739
        %v7741 = vrot.slane %v7663, 5
        %v7742 = vsel %vm3188, %v7739, %v7741
        %v7743 = vrot.slane %v7664, 5
        %v7744 = vsel %vm3188, %v7741, %v7743
        %v7745 = vrot.slane %v7665, 5
        %v7746 = vsel %vm3188, %v7743, %v7745
        %v7747 = vrot.slane %v7666, 5
        %v7748 = vsel %vm3188, %v7745, %v7747
        %v7749 = vrot.slane %v7667, 5
        %v7750 = vsel %vm3188, %v7747, %v7749
        %v7751 = vrot.slane %v7668, 5
        %v7752 = vsel %vm3188, %v7749, %v7751
        %v7753 = vrot.slane %v7669, 5
        %v7754 = vsel %vm3188, %v7751, %v7753
        %v7755 = vrot.slane %v7670, 5
        %v7756 = vsel %vm3188, %v7753, %v7755
        %v7757 = vrot.slane %v7671, 5
        %v7758 = vsel %vm3188, %v7755, %v7757
        %v7759 = vrot.slane %v7672, 5
        %v7760 = vsel %vm3188, %v7757, %v7759
        %v7761 = vrot.slane %v7673, 5
        %v7762 = vsel %vm3188, %v7759, %v7761
        %v7763 = vrot.slane %v7674, 5
        %v7764 = vsel %vm3188, %v7761, %v7763
        %v7765 = vrot.slane %v7675, 5
        %v7766 = vsel %vm3188, %v7763, %v7765
        %v7767 = vrot.slane %v7676, 5
        %v7768 = vsel %vm3188, %v7765, %v7767
        %v7769 = vrot.slane %v7677, 5
        %v7770 = vsel %vm3188, %v7767, %v7769
        %v7771 = vrot.slane %v7678, 5
        %v7772 = vsel %vm3188, %v7769, %v7771
        %v7773 = vrot.slane %v7679, 5
        %v7774 = vsel %vm3188, %v7771, %v7773
        %v7775 = vrot.slane %v7680, 5
        %v7776 = vsel %vm3188, %v7773, %v7775
        %v7777 = vrot.slane %v7681, 5
        %v7778 = vsel %vm3188, %v7775, %v7777
        %v7779 = vrot.slane %v7682, 5
        %v7780 = vsel %vm3188, %v7777, %v7779
        %v7814 = vadd.f32 %v7611, %v7718
        %v7815 = vadd.f32 %v7612, %v7720
        %v7816 = vadd.f32 %v7613, %v7722
        %v7817 = vadd.f32 %v7614, %v7724
        %v7818 = vadd.f32 %v7615, %v7726
        %v7819 = vadd.f32 %v7616, %v7728
        %v7820 = vadd.f32 %v7617, %v7730
        %v7821 = vadd.f32 %v7618, %v7732
        %v7822 = vadd.f32 %v7619, %v7734
        %v7823 = vadd.f32 %v7620, %v7736
        %v7824 = vadd.f32 %v7621, %v7738
        %v7825 = vadd.f32 %v7622, %v7740
        %v7826 = vadd.f32 %v7623, %v7742
        %v7827 = vadd.f32 %v7624, %v7744
        %v7828 = vadd.f32 %v7625, %v7746
        %v7829 = vadd.f32 %v7626, %v7748
        %v7830 = vadd.f32 %v7627, %v7750
        %v7831 = vadd.f32 %v7628, %v7752
        %v7832 = vadd.f32 %v7629, %v7754
        %v7833 = vadd.f32 %v7630, %v7756
        %v7834 = vadd.f32 %v7631, %v7758
        %v7835 = vadd.f32 %v7632, %v7760
        %v7836 = vadd.f32 %v7633, %v7762
        %v7837 = vadd.f32 %v7634, %v7764
        %v7838 = vadd.f32 %v7635, %v7766
        %v7839 = vadd.f32 %v7636, %v7768
        %v7840 = vadd.f32 %v7637, %v7770
        %v7841 = vadd.f32 %v7638, %v7772
        %v7842 = vadd.f32 %v7639, %v7774
        %v7843 = vadd.f32 %v7640, %v7776
        %v7844 = vadd.f32 %v7641, %v7778
        %v7845 = vadd.f32 %v7642, %v7780
        %v7846 = vadd.f32 %v7643, %v7779
        %v7847 = vld [vmem:[#allocation4 + $0x8c] sm:$0xf]
        %v7848 = vunpack.c.l.bf16 %v7847
        %v7849 = vlaneseq
        %v7850 = vshrl.u32 %v7849, 7
        %v7851 = vsub.s32 6, %v7850
        %v7852 = vrot.slane %v2163, %v7851
        %v7853 = vmul.f32 %v7645, %v7852
        %v7854 = vmul.f32 %v6730, %v7852
        %v7855 = vmul.f32 %v6731, %v7852
        %v7856 = vmul.f32 %v6732, %v7852
        %v7857 = vmul.f32 %v6733, %v7852
        %v7858 = vmul.f32 %v6734, %v7852
        %v7859 = vmul.f32 %v6735, %v7852
        %v7860 = vmul.f32 %v6736, %v7852
        %v7861 = vmul.f32 %v6737, %v7852
        %v7862 = vmul.f32 %v6738, %v7852
        %v7863 = vmul.f32 %v6739, %v7852
        %v7864 = vmul.f32 %v6740, %v7852
        %v7865 = vmul.f32 %v6741, %v7852
        %v7866 = vmul.f32 %v6742, %v7852
        %v7867 = vmul.f32 %v6743, %v7852
        %v7868 = vmul.f32 %v6744, %v7852
        %v7869 = vmul.f32 %v6745, %v7852
        %v7870 = vmul.f32 %v6746, %v7852
        %v7871 = vmul.f32 %v6747, %v7852
        %v7872 = vmul.f32 %v6748, %v7852
        %v7873 = vmul.f32 %v6749, %v7852
        %v7874 = vmul.f32 %v6750, %v7852
        %v7875 = vmul.f32 %v6751, %v7852
        %v7876 = vmul.f32 %v6752, %v7852
        %v7877 = vmul.f32 %v6753, %v7852
        %v7878 = vmul.f32 %v6754, %v7852
        %v7879 = vmul.f32 %v6755, %v7852
        %v7880 = vmul.f32 %v6756, %v7852
        %v7881 = vmul.f32 %v6757, %v7852
        %v7882 = vmul.f32 %v6758, %v7852
        %v7883 = vmul.f32 %v6759, %v7852
        %v7884 = vmul.f32 %v6760, %v7852
        %v7885 = vmul.f32 %v7848, %v7852
        %v7919 = vrot.slane %v7853, 6
        %v7920 = vrot.slane %v7854, 6
        %v7921 = vsel %vm3392, %v7919, %v7920
        %v7922 = vrot.slane %v7855, 6
        %v7923 = vsel %vm3392, %v7920, %v7922
        %v7924 = vrot.slane %v7856, 6
        %v7925 = vsel %vm3392, %v7922, %v7924
        %v7926 = vrot.slane %v7857, 6
        %v7927 = vsel %vm3392, %v7924, %v7926
        %v7928 = vrot.slane %v7858, 6
        %v7929 = vsel %vm3392, %v7926, %v7928
        %v7930 = vrot.slane %v7859, 6
        %v7931 = vsel %vm3392, %v7928, %v7930
        %v7932 = vrot.slane %v7860, 6
        %v7933 = vsel %vm3392, %v7930, %v7932
        %v7934 = vrot.slane %v7861, 6
        %v7935 = vsel %vm3392, %v7932, %v7934
        %v7936 = vrot.slane %v7862, 6
        %v7937 = vsel %vm3392, %v7934, %v7936
        %v7938 = vrot.slane %v7863, 6
        %v7939 = vsel %vm3392, %v7936, %v7938
        %v7940 = vrot.slane %v7864, 6
        %v7941 = vsel %vm3392, %v7938, %v7940
        %v7942 = vrot.slane %v7865, 6
        %v7943 = vsel %vm3392, %v7940, %v7942
        %v7944 = vrot.slane %v7866, 6
        %v7945 = vsel %vm3392, %v7942, %v7944
        %v7946 = vrot.slane %v7867, 6
        %v7947 = vsel %vm3392, %v7944, %v7946
        %v7948 = vrot.slane %v7868, 6
        %v7949 = vsel %vm3392, %v7946, %v7948
        %v7950 = vrot.slane %v7869, 6
        %v7951 = vsel %vm3392, %v7948, %v7950
        %v7952 = vrot.slane %v7870, 6
        %v7953 = vsel %vm3392, %v7950, %v7952
        %v7954 = vrot.slane %v7871, 6
        %v7955 = vsel %vm3392, %v7952, %v7954
        %v7956 = vrot.slane %v7872, 6
        %v7957 = vsel %vm3392, %v7954, %v7956
        %v7958 = vrot.slane %v7873, 6
        %v7959 = vsel %vm3392, %v7956, %v7958
        %v7960 = vrot.slane %v7874, 6
        %v7961 = vsel %vm3392, %v7958, %v7960
        %v7962 = vrot.slane %v7875, 6
        %v7963 = vsel %vm3392, %v7960, %v7962
        %v7964 = vrot.slane %v7876, 6
        %v7965 = vsel %vm3392, %v7962, %v7964
        %v7966 = vrot.slane %v7877, 6
        %v7967 = vsel %vm3392, %v7964, %v7966
        %v7968 = vrot.slane %v7878, 6
        %v7969 = vsel %vm3392, %v7966, %v7968
        %v7970 = vrot.slane %v7879, 6
        %v7971 = vsel %vm3392, %v7968, %v7970
        %v7972 = vrot.slane %v7880, 6
        %v7973 = vsel %vm3392, %v7970, %v7972
        %v7974 = vrot.slane %v7881, 6
        %v7975 = vsel %vm3392, %v7972, %v7974
        %v7976 = vrot.slane %v7882, 6
        %v7977 = vsel %vm3392, %v7974, %v7976
        %v7978 = vrot.slane %v7883, 6
        %v7979 = vsel %vm3392, %v7976, %v7978
        %v7980 = vrot.slane %v7884, 6
        %v7981 = vsel %vm3392, %v7978, %v7980
        %v7982 = vrot.slane %v7885, 6
        %v7983 = vsel %vm3392, %v7980, %v7982
        %v8017 = vadd.f32 %v7814, %v7921
        %v8018 = vadd.f32 %v7815, %v7923
        %v8019 = vadd.f32 %v7816, %v7925
        %v8020 = vadd.f32 %v7817, %v7927
        %v8021 = vadd.f32 %v7818, %v7929
        %v8022 = vadd.f32 %v7819, %v7931
        %v8023 = vadd.f32 %v7820, %v7933
        %v8024 = vadd.f32 %v7821, %v7935
        %v8025 = vadd.f32 %v7822, %v7937
        %v8026 = vadd.f32 %v7823, %v7939
        %v8027 = vadd.f32 %v7824, %v7941
        %v8028 = vadd.f32 %v7825, %v7943
        %v8029 = vadd.f32 %v7826, %v7945
        %v8030 = vadd.f32 %v7827, %v7947
        %v8031 = vadd.f32 %v7828, %v7949
        %v8032 = vadd.f32 %v7829, %v7951
        %v8033 = vadd.f32 %v7830, %v7953
        %v8034 = vadd.f32 %v7831, %v7955
        %v8035 = vadd.f32 %v7832, %v7957
        %v8036 = vadd.f32 %v7833, %v7959
        %v8037 = vadd.f32 %v7834, %v7961
        %v8038 = vadd.f32 %v7835, %v7963
        %v8039 = vadd.f32 %v7836, %v7965
        %v8040 = vadd.f32 %v7837, %v7967
        %v8041 = vadd.f32 %v7838, %v7969
        %v8042 = vadd.f32 %v7839, %v7971
        %v8043 = vadd.f32 %v7840, %v7973
        %v8044 = vadd.f32 %v7841, %v7975
        %v8045 = vadd.f32 %v7842, %v7977
        %v8046 = vadd.f32 %v7843, %v7979
        %v8047 = vadd.f32 %v7844, %v7981
        %v8048 = vadd.f32 %v7845, %v7983
        %v8049 = vadd.f32 %v7846, %v7982
        %v8050 = vld [vmem:[%s6] sm:$0x1]
        %v8052 = vlaneseq
        %v8053 = vshrl.u32 %v8052, 7
        %v8054 = vsub.s32 0, %v8053
        %v8055 = vrot.slane %v8050, %v8054
        %v8057 = vadd.f32 %v8017, %v8055
        %v8058 = vadd.f32 %v8018, %v8055
        %v8059 = vadd.f32 %v8019, %v8055
        %v8060 = vadd.f32 %v8020, %v8055
        %v8061 = vadd.f32 %v8021, %v8055
        %v8062 = vadd.f32 %v8022, %v8055
        %v8063 = vadd.f32 %v8023, %v8055
        %v8064 = vadd.f32 %v8024, %v8055
        %v8065 = vadd.f32 %v8025, %v8055
        %v8066 = vadd.f32 %v8026, %v8055
        %v8067 = vadd.f32 %v8027, %v8055
        %v8068 = vadd.f32 %v8028, %v8055
        %v8069 = vadd.f32 %v8029, %v8055
        %v8070 = vadd.f32 %v8030, %v8055
        %v8071 = vadd.f32 %v8031, %v8055
        %v8072 = vadd.f32 %v8032, %v8055
        %v8073 = vadd.f32 %v8033, %v8055
        %v8074 = vadd.f32 %v8034, %v8055
        %v8075 = vadd.f32 %v8035, %v8055
        %v8076 = vadd.f32 %v8036, %v8055
        %v8077 = vadd.f32 %v8037, %v8055
        %v8078 = vadd.f32 %v8038, %v8055
        %v8079 = vadd.f32 %v8039, %v8055
        %v8080 = vadd.f32 %v8040, %v8055
        %v8081 = vadd.f32 %v8041, %v8055
        %v8082 = vadd.f32 %v8042, %v8055
        %v8083 = vadd.f32 %v8043, %v8055
        %v8084 = vadd.f32 %v8044, %v8055
        %v8085 = vadd.f32 %v8045, %v8055
        %v8086 = vadd.f32 %v8046, %v8055
        %v8087 = vadd.f32 %v8047, %v8055
        %v8088 = vadd.f32 %v8048, %v8055
        %v8089 = vadd.f32 %v8049, %v8055
        %v8090 = vsub.f32 0.0, %v8057
        %v8091 = vsub.f32 0.0, %v8058
        %v8092 = vsub.f32 0.0, %v8059
        %v8093 = vsub.f32 0.0, %v8060
        %v8094 = vsub.f32 0.0, %v8061
        %v8095 = vsub.f32 0.0, %v8062
        %v8096 = vsub.f32 0.0, %v8063
        %v8097 = vsub.f32 0.0, %v8064
        %v8098 = vsub.f32 0.0, %v8065
        %v8099 = vsub.f32 0.0, %v8066
        %v8100 = vsub.f32 0.0, %v8067
        %v8101 = vsub.f32 0.0, %v8068
        %v8102 = vsub.f32 0.0, %v8069
        %v8103 = vsub.f32 0.0, %v8070
        %v8104 = vsub.f32 0.0, %v8071
        %v8105 = vsub.f32 0.0, %v8072
        %v8106 = vsub.f32 0.0, %v8073
        %v8107 = vsub.f32 0.0, %v8074
        %v8108 = vsub.f32 0.0, %v8075
        %v8109 = vsub.f32 0.0, %v8076
        %v8110 = vsub.f32 0.0, %v8077
        %v8111 = vsub.f32 0.0, %v8078
        %v8112 = vsub.f32 0.0, %v8079
        %v8113 = vsub.f32 0.0, %v8080
        %v8114 = vsub.f32 0.0, %v8081
        %v8115 = vsub.f32 0.0, %v8082
        %v8116 = vsub.f32 0.0, %v8083
        %v8117 = vsub.f32 0.0, %v8084
        %v8118 = vsub.f32 0.0, %v8085
        %v8119 = vsub.f32 0.0, %v8086
        %v8120 = vsub.f32 0.0, %v8087
        %v8121 = vsub.f32 0.0, %v8088
        %v8122 = vsub.f32 0.0, %v8089
        %v8123 = vmul.f32 %v8090, 1.442695
        %v8124 = vpow.pop %v8123
        %v8125 = vmul.f32 %v8091, 1.442695
        %v8126 = vpow.pop %v8125
        %v8127 = vmul.f32 %v8092, 1.442695
        %v8128 = vpow.pop %v8127
        %v8129 = vmul.f32 %v8093, 1.442695
        %v8130 = vpow.pop %v8129
        %v8131 = vmul.f32 %v8094, 1.442695
        %v8132 = vpow.pop %v8131
        %v8133 = vmul.f32 %v8095, 1.442695
        %v8134 = vpow.pop %v8133
        %v8135 = vmul.f32 %v8096, 1.442695
        %v8136 = vpow.pop %v8135
        %v8137 = vmul.f32 %v8097, 1.442695
        %v8138 = vpow.pop %v8137
        %v8139 = vmul.f32 %v8098, 1.442695
        %v8140 = vpow.pop %v8139
        %v8141 = vmul.f32 %v8099, 1.442695
        %v8142 = vpow.pop %v8141
        %v8143 = vmul.f32 %v8100, 1.442695
        %v8144 = vpow.pop %v8143
        %v8145 = vmul.f32 %v8101, 1.442695
        %v8146 = vpow.pop %v8145
        %v8147 = vmul.f32 %v8102, 1.442695
        %v8148 = vpow.pop %v8147
        %v8149 = vmul.f32 %v8103, 1.442695
        %v8150 = vpow.pop %v8149
        %v8151 = vmul.f32 %v8104, 1.442695
        %v8152 = vpow.pop %v8151
        %v8153 = vmul.f32 %v8105, 1.442695
        %v8154 = vpow.pop %v8153
        %v8155 = vmul.f32 %v8106, 1.442695
        %v8156 = vpow.pop %v8155
        %v8157 = vmul.f32 %v8107, 1.442695
        %v8158 = vpow.pop %v8157
        %v8159 = vmul.f32 %v8108, 1.442695
        %v8160 = vpow.pop %v8159
        %v8161 = vmul.f32 %v8109, 1.442695
        %v8162 = vpow.pop %v8161
        %v8163 = vmul.f32 %v8110, 1.442695
        %v8164 = vpow.pop %v8163
        %v8165 = vmul.f32 %v8111, 1.442695
        %v8166 = vpow.pop %v8165
        %v8167 = vmul.f32 %v8112, 1.442695
        %v8168 = vpow.pop %v8167
        %v8169 = vmul.f32 %v8113, 1.442695
        %v8170 = vpow.pop %v8169
        %v8171 = vmul.f32 %v8114, 1.442695
        %v8172 = vpow.pop %v8171
        %v8173 = vmul.f32 %v8115, 1.442695
        %v8174 = vpow.pop %v8173
        %v8175 = vmul.f32 %v8116, 1.442695
        %v8176 = vpow.pop %v8175
        %v8177 = vmul.f32 %v8117, 1.442695
        %v8178 = vpow.pop %v8177
        %v8179 = vmul.f32 %v8118, 1.442695
        %v8180 = vpow.pop %v8179
        %v8181 = vmul.f32 %v8119, 1.442695
        %v8182 = vpow.pop %v8181
        %v8183 = vmul.f32 %v8120, 1.442695
        %v8184 = vpow.pop %v8183
        %v8185 = vmul.f32 %v8121, 1.442695
        %v8186 = vpow.pop %v8185
        %v8187 = vmul.f32 %v8122, 1.442695
        %v8188 = vpow.pop %v8187
        %v8189 = vadd.f32 %v8124, 1.0
        %v8190 = vadd.f32 %v8126, 1.0
        %v8191 = vadd.f32 %v8128, 1.0
        %v8192 = vadd.f32 %v8130, 1.0
        %v8193 = vadd.f32 %v8132, 1.0
        %v8194 = vadd.f32 %v8134, 1.0
        %v8195 = vadd.f32 %v8136, 1.0
        %v8196 = vadd.f32 %v8138, 1.0
        %v8197 = vadd.f32 %v8140, 1.0
        %v8198 = vadd.f32 %v8142, 1.0
        %v8199 = vadd.f32 %v8144, 1.0
        %v8200 = vadd.f32 %v8146, 1.0
        %v8201 = vadd.f32 %v8148, 1.0
        %v8202 = vadd.f32 %v8150, 1.0
        %v8203 = vadd.f32 %v8152, 1.0
        %v8204 = vadd.f32 %v8154, 1.0
        %v8205 = vadd.f32 %v8156, 1.0
        %v8206 = vadd.f32 %v8158, 1.0
        %v8207 = vadd.f32 %v8160, 1.0
        %v8208 = vadd.f32 %v8162, 1.0
        %v8209 = vadd.f32 %v8164, 1.0
        %v8210 = vadd.f32 %v8166, 1.0
        %v8211 = vadd.f32 %v8168, 1.0
        %v8212 = vadd.f32 %v8170, 1.0
        %v8213 = vadd.f32 %v8172, 1.0
        %v8214 = vadd.f32 %v8174, 1.0
        %v8215 = vadd.f32 %v8176, 1.0
        %v8216 = vadd.f32 %v8178, 1.0
        %v8217 = vadd.f32 %v8180, 1.0
        %v8218 = vadd.f32 %v8182, 1.0
        %v8219 = vadd.f32 %v8184, 1.0
        %v8220 = vadd.f32 %v8186, 1.0
        %v8221 = vadd.f32 %v8188, 1.0
        %v8222 = vrcp.pop %v8189
        %v8223 = vrcp.pop %v8190
        %v8224 = vrcp.pop %v8191
        %v8225 = vrcp.pop %v8192
        %v8226 = vrcp.pop %v8193
        %v8227 = vrcp.pop %v8194
        %v8228 = vrcp.pop %v8195
        %v8229 = vrcp.pop %v8196
        %v8230 = vrcp.pop %v8197
        %v8231 = vrcp.pop %v8198
        %v8232 = vrcp.pop %v8199
        %v8233 = vrcp.pop %v8200
        %v8234 = vrcp.pop %v8201
        %v8235 = vrcp.pop %v8202
        %v8236 = vrcp.pop %v8203
        %v8237 = vrcp.pop %v8204
        %v8238 = vrcp.pop %v8205
        %v8239 = vrcp.pop %v8206
        %v8240 = vrcp.pop %v8207
        %v8241 = vrcp.pop %v8208
        %v8242 = vrcp.pop %v8209
        %v8243 = vrcp.pop %v8210
        %v8244 = vrcp.pop %v8211
        %v8245 = vrcp.pop %v8212
        %v8246 = vrcp.pop %v8213
        %v8247 = vrcp.pop %v8214
        %v8248 = vrcp.pop %v8215
        %v8249 = vrcp.pop %v8216
        %v8250 = vrcp.pop %v8217
        %v8251 = vrcp.pop %v8218
        %v8252 = vrcp.pop %v8219
        %v8253 = vrcp.pop %v8220
        %v8254 = vrcp.pop %v8221
        %v8255 = vmul.f32 %v8057, %v8222
        %v8256 = vmul.f32 %v8058, %v8223
        %v8257 = vmul.f32 %v8059, %v8224
        %v8258 = vmul.f32 %v8060, %v8225
        %v8259 = vmul.f32 %v8061, %v8226
        %v8260 = vmul.f32 %v8062, %v8227
        %v8261 = vmul.f32 %v8063, %v8228
        %v8262 = vmul.f32 %v8064, %v8229
        %v8263 = vmul.f32 %v8065, %v8230
        %v8264 = vmul.f32 %v8066, %v8231
        %v8265 = vmul.f32 %v8067, %v8232
        %v8266 = vmul.f32 %v8068, %v8233
        %v8267 = vmul.f32 %v8069, %v8234
        %v8268 = vmul.f32 %v8070, %v8235
        %v8269 = vmul.f32 %v8071, %v8236
        %v8270 = vmul.f32 %v8072, %v8237
        %v8271 = vmul.f32 %v8073, %v8238
        %v8272 = vmul.f32 %v8074, %v8239
        %v8273 = vmul.f32 %v8075, %v8240
        %v8274 = vmul.f32 %v8076, %v8241
        %v8275 = vmul.f32 %v8077, %v8242
        %v8276 = vmul.f32 %v8078, %v8243
        %v8277 = vmul.f32 %v8079, %v8244
        %v8278 = vmul.f32 %v8080, %v8245
        %v8279 = vmul.f32 %v8081, %v8246
        %v8280 = vmul.f32 %v8082, %v8247
        %v8281 = vmul.f32 %v8083, %v8248
        %v8282 = vmul.f32 %v8084, %v8249
        %v8283 = vmul.f32 %v8085, %v8250
        %v8284 = vmul.f32 %v8086, %v8251
        %v8285 = vmul.f32 %v8087, %v8252
        %v8286 = vmul.f32 %v8088, %v8253
        %v8287 = vmul.f32 %v8089, %v8254
        %v8288 = vpack.c.bf16 %v8256, %v8255
        %v8289 = vpack.c.bf16 %v8258, %v8257
        %v8290 = vpack.c.bf16 %v8260, %v8259
        %v8291 = vpack.c.bf16 %v8262, %v8261
        %v8292 = vpack.c.bf16 %v8264, %v8263
        %v8293 = vpack.c.bf16 %v8266, %v8265
        %v8294 = vpack.c.bf16 %v8268, %v8267
        %v8295 = vpack.c.bf16 %v8270, %v8269
        %v8296 = vpack.c.bf16 %v8272, %v8271
        %v8297 = vpack.c.bf16 %v8274, %v8273
        %v8298 = vpack.c.bf16 %v8276, %v8275
        %v8299 = vpack.c.bf16 %v8278, %v8277
        %v8300 = vpack.c.bf16 %v8280, %v8279
        %v8301 = vpack.c.bf16 %v8282, %v8281
        %v8302 = vpack.c.bf16 %v8284, %v8283
        %v8303 = vpack.c.bf16 %v8286, %v8285
        %v8304 = vpack.c.bf16 %v8287, %v8287
        %v8305 = vld [vmem:[#allocation11] sm:$0xf]
        %v8306 = vld [vmem:[#allocation11 + $0x4] sm:$0xf]
        %v8307 = vld [vmem:[#allocation11 + $0x8] sm:$0xf]
        %v8308 = vld [vmem:[#allocation11 + $0xc] sm:$0xf]
        %v8309 = vld [vmem:[#allocation11 + $0x10] sm:$0xf]
        %v8310 = vld [vmem:[#allocation11 + $0x14] sm:$0xf]
        %v8311 = vld [vmem:[#allocation11 + $0x18] sm:$0xf]
        %v8312 = vld [vmem:[#allocation11 + $0x1c] sm:$0xf]
        %v8313 = vld [vmem:[#allocation11 + $0x20] sm:$0xf]
        %v8314 = vld [vmem:[#allocation11 + $0x24] sm:$0xf]
        %v8315 = vld [vmem:[#allocation11 + $0x28] sm:$0xf]
        %v8316 = vld [vmem:[#allocation11 + $0x2c] sm:$0xf]
        %v8317 = vld [vmem:[#allocation11 + $0x30] sm:$0xf]
        %v8318 = vld [vmem:[#allocation11 + $0x34] sm:$0xf]
        %v8319 = vld [vmem:[#allocation11 + $0x38] sm:$0xf]
        %v8320 = vld [vmem:[#allocation11 + $0x3c] sm:$0xf]
        %v8321 = vld [vmem:[%s8] sm:$0x1]
        %v8323 = vlaneseq
        %v8324 = vshrl.u32 %v8323, 7
        %v8325 = vsub.s32 0, %v8324
        %v8326 = vrot.slane %v8321, %v8325
        %vm8328 = vsmask.f32 7424
        %v8330 = vshrl.u32 %v8288, 16
        %v8332 = vshll.u32 %v8288, 16
        %v8334 = vrot.slane %v8332, 1
        %v8335 = vor.u32 %v8330, %v8334
        %v8337 = vshll.u32 %v8289, 16
        %v8339 = vrot.slane %v8337, 1
        %v8340 = vsel %vm8328, %v8335, %v8339
        %v8341 = vshrl.u32 %v8289, 16
        %v8343 = vor.u32 %v8341, %v8339
        %v8345 = vshll.u32 %v8290, 16
        %v8347 = vrot.slane %v8345, 1
        %v8348 = vsel %vm8328, %v8343, %v8347
        %v8349 = vshrl.u32 %v8290, 16
        %v8351 = vor.u32 %v8349, %v8347
        %v8353 = vshll.u32 %v8291, 16
        %v8355 = vrot.slane %v8353, 1
        %v8356 = vsel %vm8328, %v8351, %v8355
        %v8357 = vshrl.u32 %v8291, 16
        %v8359 = vor.u32 %v8357, %v8355
        %v8361 = vshll.u32 %v8292, 16
        %v8363 = vrot.slane %v8361, 1
        %v8364 = vsel %vm8328, %v8359, %v8363
        %v8365 = vshrl.u32 %v8292, 16
        %v8367 = vor.u32 %v8365, %v8363
        %v8369 = vshll.u32 %v8293, 16
        %v8371 = vrot.slane %v8369, 1
        %v8372 = vsel %vm8328, %v8367, %v8371
        %v8373 = vshrl.u32 %v8293, 16
        %v8375 = vor.u32 %v8373, %v8371
        %v8377 = vshll.u32 %v8294, 16
        %v8379 = vrot.slane %v8377, 1
        %v8380 = vsel %vm8328, %v8375, %v8379
        %v8381 = vshrl.u32 %v8294, 16
        %v8383 = vor.u32 %v8381, %v8379
        %v8385 = vshll.u32 %v8295, 16
        %v8387 = vrot.slane %v8385, 1
        %v8388 = vsel %vm8328, %v8383, %v8387
        %v8389 = vshrl.u32 %v8295, 16
        %v8391 = vor.u32 %v8389, %v8387
        %v8393 = vshll.u32 %v8296, 16
        %v8395 = vrot.slane %v8393, 1
        %v8396 = vsel %vm8328, %v8391, %v8395
        %v8397 = vshrl.u32 %v8296, 16
        %v8399 = vor.u32 %v8397, %v8395
        %v8401 = vshll.u32 %v8297, 16
        %v8403 = vrot.slane %v8401, 1
        %v8404 = vsel %vm8328, %v8399, %v8403
        %v8405 = vshrl.u32 %v8297, 16
        %v8407 = vor.u32 %v8405, %v8403
        %v8409 = vshll.u32 %v8298, 16
        %v8411 = vrot.slane %v8409, 1
        %v8412 = vsel %vm8328, %v8407, %v8411
        %v8413 = vshrl.u32 %v8298, 16
        %v8415 = vor.u32 %v8413, %v8411
        %v8417 = vshll.u32 %v8299, 16
        %v8419 = vrot.slane %v8417, 1
        %v8420 = vsel %vm8328, %v8415, %v8419
        %v8421 = vshrl.u32 %v8299, 16
        %v8423 = vor.u32 %v8421, %v8419
        %v8425 = vshll.u32 %v8300, 16
        %v8427 = vrot.slane %v8425, 1
        %v8428 = vsel %vm8328, %v8423, %v8427
        %v8429 = vshrl.u32 %v8300, 16
        %v8431 = vor.u32 %v8429, %v8427
        %v8433 = vshll.u32 %v8301, 16
        %v8435 = vrot.slane %v8433, 1
        %v8436 = vsel %vm8328, %v8431, %v8435
        %v8437 = vshrl.u32 %v8301, 16
        %v8439 = vor.u32 %v8437, %v8435
        %v8441 = vshll.u32 %v8302, 16
        %v8443 = vrot.slane %v8441, 1
        %v8444 = vsel %vm8328, %v8439, %v8443
        %v8445 = vshrl.u32 %v8302, 16
        %v8447 = vor.u32 %v8445, %v8443
        %v8449 = vshll.u32 %v8303, 16
        %v8451 = vrot.slane %v8449, 1
        %v8452 = vsel %vm8328, %v8447, %v8451
        %v8453 = vshrl.u32 %v8303, 16
        %v8455 = vor.u32 %v8453, %v8451
        %v8457 = vshll.u32 %v8304, 16
        %v8459 = vrot.slane %v8457, 1
        %v8460 = vsel %vm8328, %v8455, %v8459
        %v8493 = vunpack.c.l.b16 %v8305
        %v8494 = vunpack.c.l.b16 %v8306
        %v8495 = vunpack.c.l.b16 %v8307
        %v8496 = vunpack.c.l.b16 %v8308
        %v8497 = vunpack.c.l.b16 %v8309
        %v8498 = vunpack.c.l.b16 %v8310
        %v8499 = vunpack.c.l.b16 %v8311
        %v8500 = vunpack.c.l.b16 %v8312
        %v8501 = vunpack.c.l.b16 %v8313
        %v8502 = vunpack.c.l.b16 %v8314
        %v8503 = vunpack.c.l.b16 %v8315
        %v8504 = vunpack.c.l.b16 %v8316
        %v8505 = vunpack.c.l.b16 %v8317
        %v8506 = vunpack.c.l.b16 %v8318
        %v8507 = vunpack.c.l.b16 %v8319
        %v8508 = vunpack.c.l.b16 %v8320
        %v8509 = vpack.c.b16 %v8494, %v8493
        %v8510 = vpack.c.b16 %v8496, %v8495
        %v8511 = vpack.c.b16 %v8498, %v8497
        %v8512 = vpack.c.b16 %v8500, %v8499
        %v8513 = vpack.c.b16 %v8502, %v8501
        %v8514 = vpack.c.b16 %v8504, %v8503
        %v8515 = vpack.c.b16 %v8506, %v8505
        %v8516 = vpack.c.b16 %v8508, %v8507
        %8525 = vmatprep.subr.bf16.mxu0 0
        %8526 = vmatpush1.bf16.msra.mxu0 %v8516
        %8527 = vmatprep.subr.bf16.mxu0 0
        %8528 = vmatpush1.bf16.msra.mxu0 %v8515
        %8529 = vmatprep.subr.bf16.mxu0 0
        %8530 = vmatpush1.bf16.msra.mxu0 %v8514
        %8531 = vmatprep.subr.bf16.mxu0 0
        %8532 = vmatpush1.bf16.msra.mxu0 %v8513
        %8533 = vmatprep.subr.bf16.mxu0 0
        %8534 = vmatpush1.bf16.msra.mxu0 %v8512
        %8535 = vmatprep.subr.bf16.mxu0 0
        %8536 = vmatpush1.bf16.msra.mxu0 %v8511
        %8537 = vmatprep.subr.bf16.mxu0 0
        %8538 = vmatpush1.bf16.msra.mxu0 %v8510
        %8539 = vmatprep.subr.bf16.mxu0 0
        %8540 = vmatpush1.bf16.msra.mxu0 %v8509
        %8541 = vmatprep.subr.bf16.mxu0 0
        %8542 = vmatpush2.bf16.msra.mxu0 0
        %8543 = vmatprep.subr.bf16.mxu0 0
        %8544 = vmatpush2.bf16.msra.mxu0 0
        %8545 = vmatprep.subr.bf16.mxu0 0
        %8546 = vmatpush2.bf16.msra.mxu0 0
        %8547 = vmatprep.subr.bf16.mxu0 0
        %8548 = vmatpush2.bf16.msra.mxu0 0
        %8549 = vmatprep.subr.bf16.mxu0 0
        %8550 = vmatpush2.bf16.msra.mxu0 0
        %8551 = vmatprep.subr.bf16.mxu0 0
        %8552 = vmatpush2.bf16.msra.mxu0 0
        %8553 = vmatprep.subr.bf16.mxu0 0
        %8554 = vmatpush2.bf16.msra.mxu0 0
        %8555 = vmatprep.subr.bf16.mxu0 0
        %8556 = vmatpush2.bf16.msra.mxu0 0
        %8557 = vmatprep.mubr.bf16.mxu0 0
        %8558 = vmatmul.mubr.bf16.gmra.mxu0 %v8340
        %v8559 = vpop.f32.mrf.mxu0
        %v8560 = vadd.f32 %v8326, %v8559
        %v8561 = vpop.f32.mrf.mxu0
        %v8562 = vpop.f32.mrf.mxu0
        %v8563 = vadd.f32 %v8326, %v8562
        %v8564 = vpop.f32.mrf.mxu0
        %8565 = vmatprep.mubr.bf16.mxu0 0
        %8566 = vmatmul.mubr.bf16.gmra.mxu0 %v8348
        %v8567 = vpop.f32.mrf.mxu0
        %v8568 = vadd.f32 %v8326, %v8567
        %v8569 = vpop.f32.mrf.mxu0
        %v8570 = vpop.f32.mrf.mxu0
        %v8571 = vadd.f32 %v8326, %v8570
        %v8572 = vpop.f32.mrf.mxu0
        %8573 = vmatprep.mubr.bf16.mxu0 0
        %8574 = vmatmul.mubr.bf16.gmra.mxu0 %v8356
        %v8575 = vpop.f32.mrf.mxu0
        %v8576 = vadd.f32 %v8326, %v8575
        %v8577 = vpop.f32.mrf.mxu0
        %v8578 = vpop.f32.mrf.mxu0
        %v8579 = vadd.f32 %v8326, %v8578
        %v8580 = vpop.f32.mrf.mxu0
        %8581 = vmatprep.mubr.bf16.mxu0 0
        %8582 = vmatmul.mubr.bf16.gmra.mxu0 %v8364
        %v8583 = vpop.f32.mrf.mxu0
        %v8584 = vadd.f32 %v8326, %v8583
        %v8585 = vpop.f32.mrf.mxu0
        %v8586 = vpop.f32.mrf.mxu0
        %v8587 = vadd.f32 %v8326, %v8586
        %v8588 = vpop.f32.mrf.mxu0
        %8589 = vmatprep.mubr.bf16.mxu0 0
        %8590 = vmatmul.mubr.bf16.gmra.mxu0 %v8372
        %v8591 = vpop.f32.mrf.mxu0
        %v8592 = vadd.f32 %v8326, %v8591
        %v8593 = vpop.f32.mrf.mxu0
        %v8594 = vpop.f32.mrf.mxu0
        %v8595 = vadd.f32 %v8326, %v8594
        %v8596 = vpop.f32.mrf.mxu0
        %8597 = vmatprep.mubr.bf16.mxu0 0
        %8598 = vmatmul.mubr.bf16.gmra.mxu0 %v8380
        %v8599 = vpop.f32.mrf.mxu0
        %v8600 = vadd.f32 %v8326, %v8599
        %v8601 = vpop.f32.mrf.mxu0
        %v8602 = vpop.f32.mrf.mxu0
        %v8603 = vadd.f32 %v8326, %v8602
        %v8604 = vpop.f32.mrf.mxu0
        %8605 = vmatprep.mubr.bf16.mxu0 0
        %8606 = vmatmul.mubr.bf16.gmra.mxu0 %v8388
        %v8607 = vpop.f32.mrf.mxu0
        %v8608 = vadd.f32 %v8326, %v8607
        %v8609 = vpop.f32.mrf.mxu0
        %v8610 = vpop.f32.mrf.mxu0
        %v8611 = vadd.f32 %v8326, %v8610
        %v8612 = vpop.f32.mrf.mxu0
        %8613 = vmatprep.mubr.bf16.mxu0 0
        %8614 = vmatmul.mubr.bf16.gmra.mxu0 %v8396
        %v8615 = vpop.f32.mrf.mxu0
        %v8616 = vadd.f32 %v8326, %v8615
        %v8617 = vpop.f32.mrf.mxu0
        %v8618 = vpop.f32.mrf.mxu0
        %v8619 = vadd.f32 %v8326, %v8618
        %v8620 = vpop.f32.mrf.mxu0
        %8621 = vmatprep.mubr.bf16.mxu0 0
        %8622 = vmatmul.mubr.bf16.gmra.mxu0 %v8404
        %v8623 = vpop.f32.mrf.mxu0
        %v8624 = vadd.f32 %v8326, %v8623
        %v8625 = vpop.f32.mrf.mxu0
        %v8626 = vpop.f32.mrf.mxu0
        %v8627 = vadd.f32 %v8326, %v8626
        %v8628 = vpop.f32.mrf.mxu0
        %8629 = vmatprep.mubr.bf16.mxu0 0
        %8630 = vmatmul.mubr.bf16.gmra.mxu0 %v8412
        %v8631 = vpop.f32.mrf.mxu0
        %v8632 = vadd.f32 %v8326, %v8631
        %v8633 = vpop.f32.mrf.mxu0
        %v8634 = vpop.f32.mrf.mxu0
        %v8635 = vadd.f32 %v8326, %v8634
        %v8636 = vpop.f32.mrf.mxu0
        %8637 = vmatprep.mubr.bf16.mxu0 0
        %8638 = vmatmul.mubr.bf16.gmra.mxu0 %v8420
        %v8639 = vpop.f32.mrf.mxu0
        %v8640 = vadd.f32 %v8326, %v8639
        %v8641 = vpop.f32.mrf.mxu0
        %v8642 = vpop.f32.mrf.mxu0
        %v8643 = vadd.f32 %v8326, %v8642
        %v8644 = vpop.f32.mrf.mxu0
        %8645 = vmatprep.mubr.bf16.mxu0 0
        %8646 = vmatmul.mubr.bf16.gmra.mxu0 %v8428
        %v8647 = vpop.f32.mrf.mxu0
        %v8648 = vadd.f32 %v8326, %v8647
        %v8649 = vpop.f32.mrf.mxu0
        %v8650 = vpop.f32.mrf.mxu0
        %v8651 = vadd.f32 %v8326, %v8650
        %v8652 = vpop.f32.mrf.mxu0
        %8653 = vmatprep.mubr.bf16.mxu0 0
        %8654 = vmatmul.mubr.bf16.gmra.mxu0 %v8436
        %v8655 = vpop.f32.mrf.mxu0
        %v8656 = vadd.f32 %v8326, %v8655
        %v8657 = vpop.f32.mrf.mxu0
        %v8658 = vpop.f32.mrf.mxu0
        %v8659 = vadd.f32 %v8326, %v8658
        %v8660 = vpop.f32.mrf.mxu0
        %8661 = vmatprep.mubr.bf16.mxu0 0
        %8662 = vmatmul.mubr.bf16.gmra.mxu0 %v8444
        %v8663 = vpop.f32.mrf.mxu0
        %v8664 = vadd.f32 %v8326, %v8663
        %v8665 = vpop.f32.mrf.mxu0
        %v8666 = vpop.f32.mrf.mxu0
        %v8667 = vadd.f32 %v8326, %v8666
        %v8668 = vpop.f32.mrf.mxu0
        %8669 = vmatprep.mubr.bf16.mxu0 0
        %8670 = vmatmul.mubr.bf16.gmra.mxu0 %v8452
        %v8671 = vpop.f32.mrf.mxu0
        %v8672 = vadd.f32 %v8326, %v8671
        %v8673 = vpop.f32.mrf.mxu0
        %v8674 = vpop.f32.mrf.mxu0
        %v8675 = vadd.f32 %v8326, %v8674
        %v8676 = vpop.f32.mrf.mxu0
        %8677 = vmatprep.mubr.bf16.mxu0 0
        %8678 = vmatmul.mubr.bf16.gmra.mxu0 %v8460
        %v8679 = vpop.f32.mrf.mxu0
        %v8680 = vadd.f32 %v8326, %v8679
        %v8681 = vpop.f32.mrf.mxu0
        %v8682 = vpop.f32.mrf.mxu0
        %v8683 = vadd.f32 %v8326, %v8682
        %v8684 = vpop.f32.mrf.mxu0
        %8685 = vdwg.mxu0
        %v8686 = vadd.f32 %v8560, %v427
        %v8687 = vadd.f32 %v8563, %v428
        %v8688 = vadd.f32 %v8568, %v429
        %v8689 = vadd.f32 %v8571, %v430
        %v8690 = vadd.f32 %v8576, %v431
        %v8691 = vadd.f32 %v8579, %v432
        %v8692 = vadd.f32 %v8584, %v433
        %v8693 = vadd.f32 %v8587, %v434
        %v8694 = vadd.f32 %v8592, %v435
        %v8695 = vadd.f32 %v8595, %v436
        %v8696 = vadd.f32 %v8600, %v437
        %v8697 = vadd.f32 %v8603, %v438
        %v8698 = vadd.f32 %v8608, %v439
        %v8699 = vadd.f32 %v8611, %v440
        %v8700 = vadd.f32 %v8616, %v441
        %v8701 = vadd.f32 %v8619, %v442
        %v8702 = vadd.f32 %v8624, %v443
        %v8703 = vadd.f32 %v8627, %v444
        %v8704 = vadd.f32 %v8632, %v445
        %v8705 = vadd.f32 %v8635, %v446
        %v8706 = vadd.f32 %v8640, %v447
        %v8707 = vadd.f32 %v8643, %v448
        %v8708 = vadd.f32 %v8648, %v449
        %v8709 = vadd.f32 %v8651, %v450
        %v8710 = vadd.f32 %v8656, %v451
        %v8711 = vadd.f32 %v8659, %v452
        %v8712 = vadd.f32 %v8664, %v453
        %v8713 = vadd.f32 %v8667, %v454
        %v8714 = vadd.f32 %v8672, %v455
        %v8715 = vadd.f32 %v8675, %v456
        %v8716 = vadd.f32 %v8680, %v457
        %v8717 = vadd.f32 %v8683, %v458
        %8718 = vst [vmem:[%s355] sm:$0xff] %v8686
        %8719 = vst [vmem:[%s355 + $0x8] sm:$0xff] %v8687
        %8720 = vst [vmem:[%s355 + $0x10] sm:$0xff] %v8688
        %8721 = vst [vmem:[%s355 + $0x18] sm:$0xff] %v8689
        %8722 = vst [vmem:[%s355 + $0x20] sm:$0xff] %v8690
        %8723 = vst [vmem:[%s355 + $0x28] sm:$0xff] %v8691
        %8724 = vst [vmem:[%s355 + $0x30] sm:$0xff] %v8692
        %8725 = vst [vmem:[%s355 + $0x38] sm:$0xff] %v8693
        %8726 = vst [vmem:[%s355 + $0x40] sm:$0xff] %v8694
        %8727 = vst [vmem:[%s355 + $0x48] sm:$0xff] %v8695
        %8728 = vst [vmem:[%s355 + $0x50] sm:$0xff] %v8696
        %8729 = vst [vmem:[%s355 + $0x58] sm:$0xff] %v8697
        %8730 = vst [vmem:[%s355 + $0x60] sm:$0xff] %v8698
        %8731 = vst [vmem:[%s355 + $0x68] sm:$0xff] %v8699
        %8732 = vst [vmem:[%s355 + $0x70] sm:$0xff] %v8700
        %8733 = vst [vmem:[%s355 + $0x78] sm:$0xff] %v8701
        %8734 = vst [vmem:[%s355 + $0x80] sm:$0xff] %v8702
        %8735 = vst [vmem:[%s355 + $0x88] sm:$0xff] %v8703
        %8736 = vst [vmem:[%s355 + $0x90] sm:$0xff] %v8704
        %8737 = vst [vmem:[%s355 + $0x98] sm:$0xff] %v8705
        %8738 = vst [vmem:[%s355 + $0xa0] sm:$0xff] %v8706
        %8739 = vst [vmem:[%s355 + $0xa8] sm:$0xff] %v8707
        %8740 = vst [vmem:[%s355 + $0xb0] sm:$0xff] %v8708
        %8741 = vst [vmem:[%s355 + $0xb8] sm:$0xff] %v8709
        %8742 = vst [vmem:[%s355 + $0xc0] sm:$0xff] %v8710
        %8743 = vst [vmem:[%s355 + $0xc8] sm:$0xff] %v8711
        %8744 = vst [vmem:[%s355 + $0xd0] sm:$0xff] %v8712
        %8745 = vst [vmem:[%s355 + $0xd8] sm:$0xff] %v8713
        %8746 = vst [vmem:[%s355 + $0xe0] sm:$0xff] %v8714
        %8747 = vst [vmem:[%s355 + $0xe8] sm:$0xff] %v8715
        %8748 = vst [vmem:[%s355 + $0xf0] sm:$0xff] %v8716
        %8749 = vst [vmem:[%s355 + $0xf8] sm:$0xff] %v8717
        %s8750 = sand.u32 %s216, 1
        %s8751 = scalar_lea.sflag [#allocation7], %s8750
        %s8752 = sand.u32 %s216, 1
        %s8753 = smul.addr %s8752, 256
        %s8754 = scalar_lea.vmem [#allocation13], %s8753
        // Predicated region
        $region93: #{tpu_custom_call.1} parent=51 // pred_check
          %p8755 = pneg %p226
        $region94: #{tpu_custom_call.1} parent=51 // pred_check_branch
          %8757 = sbr.rel (%p8755) target = $region96
        $region95: #{tpu_custom_call.1} parent=51 // pred_region
          %s8758 = smul.u32 32, %s31
          %s8760 = ssub.s32 4096, 4096
          %8761 = vsyncadd %s8751, %s8760
          %s8762 = smul.addr %s30, 64
          %s8763 = sadd.s32 %s8758, %s8762
          %s8764 = smul.addr %s8763, 128
          %s8765 = scalar_lea.hbm %s9, %s8764
          %s8766 = sshll.u32 %s8754, 4
          %s8767 = int_to_ptr.vmem [resolvable:$true] %s8766
          %8772 = dma.vmem_to_hbm [thread:$0]  %s8767, 4096, %s8765, %s8751, 128, 128, 8
        $region96: #{tpu_custom_call.1} parent=51 // pred_fallthru
          _
      $region52: #{tpu_custom_call.1} parent=5 // pred_fallthru
        _
      %p8773 = scmp.le.s32.totalorder 2, %s21
      // Predicated region
      $region97: #{tpu_custom_call.1} parent=5 // pred_check
        %p8774 = pneg %p8773
      $region98: #{tpu_custom_call.1} parent=5 // pred_check_branch
        %8776 = sbr.rel (%p8774) target = $region100
      $region99: #{tpu_custom_call.1} parent=5 // pred_region
        %s8777 = ssub.s32 %s21, 2
        // Predicated region
        $region101: #{tpu_custom_call.1} parent=99 // pred_check
          %p8778 = pneg %p232
        $region102: #{tpu_custom_call.1} parent=99 // pred_check_branch
          %8780 = sbr.rel (%p8778) target = $region104
        $region103: #{tpu_custom_call.1} parent=99 // pred_region
          %s8781 = sand.u32 %s217, 1
          %s8782 = scalar_lea.sflag [#allocation7], %s8781
          %s8783 = sand.u32 %s217, 1
          %s8784 = smul.addr %s8783, 256
          %s8785 = scalar_lea.vmem [#allocation13], %s8784
          %8786 = dma.done %s8782, 4096
        $region104: #{tpu_custom_call.1} parent=99 // pred_fallthru
          _
      $region100: #{tpu_custom_call.1} parent=5 // pred_fallthru
        _
    $region6: #{tpu_custom_call.1} parent=1 // loop_footer
      %s25 = sadd.s32 1, %s21
    $region7: #{tpu_custom_call.1} parent=1 // loop_footer_branch
      %20 = sbr.rel target = $region3
    $region8: #{tpu_custom_call.1} parent=1 // loop_exit
      _
    %8787 = vsyncpa [#allocation6], 1
    %s8788 = scalar_lea.sflag [#allocation6], 1
    %8789 = vsyncpa %s8788, 1
    %8790 = vsyncpa [#allocation9], 1
    %8791 = vsyncpa [#allocation12], 1
    %8792 = vsyncpa [#allocation7], 1
    %s8793 = scalar_lea.sflag [#allocation7], 1
    %8794 = vsyncpa %s8793, 1
  %8795 = vsyncmov [#allocation3]
  %s8796 = vpop.sfrf %8795
  %p8797 = scmp.eq.s32.totalorder %s8796, 0
  %p8798 = pneg %p8797
  %8800 = shalt.err (%p8798)
  %s8801 = scalar_lea.sflag [#allocation3], 1
  %8802 = vsyncmov %s8801
  %s8803 = vpop.sfrf %8802
  %p8804 = scmp.eq.s32.totalorder %s8803, 0
  %p8805 = pneg %p8804
  %8807 = shalt.err (%p8805)

</llo_original>
